<compile_context>
chip_gen: v6e
topology: v6e:2x2x1
jax: 0.10.0
libtpu: 0.0.40
codegen_flags: <defaults>
</compile_context>

<pallas_src>
import functools

import numpy as np
import jax
import jax.numpy as jnp
from jax.experimental import pallas as pl
from jax.experimental.pallas import tpu as pltpu

LANES = 128   # channel padding / lane width
C1 = 24       # conv1 output channels
CB = 58       # oup_inc for stage_2 (116 // 2)


# ----------------------------------------------------------------------------
# The single fused kernel (one grid step == one image)
# ----------------------------------------------------------------------------
def _fused_kernel(xcol_ref, pw_ref, dwk_ref, bias_ref, tpool_ref, g8_ref, g4_ref,
                  o_ref):
    f32 = jnp.float32
    bf16 = jnp.bfloat16

    def bias(i):                       # (1, 128) f32
        return bias_ref[i:i + 1, :]

    def pw(z, widx, bidx):             # 1x1 conv (+ folded BN) on (M, 128) slab
        acc = jnp.dot(z.astype(bf16), pw_ref[widx], preferred_element_type=f32)
        return acc + bias(bidx)

    def dw(z, g_ref, widx, bidx):      # depthwise 3x3 (+ folded BN)
        # taps gathered with constant 0/1 matrices (spatial pad rows are all-zero
        # => exact zero-padding semantics); per-channel weights stay f32 (VPU).
        zb = z.astype(bf16)
        w = dwk_ref[widx]                                        # (9, 128) f32
        acc = jnp.dot(g_ref[0], zb, preferred_element_type=f32) * w[0:1, :]
        for k in range(1, 9):
            acc = acc + jnp.dot(g_ref[k], zb,
                                preferred_element_type=f32) * w[k:k + 1, :]
        return acc + bias(bidx)

    # --- conv1 (3x3, s2) + BN + ReLU6 : im2col matmul ------------------------
    xcol = xcol_ref[0]                                           # (M1, 128) bf16
    y1 = jnp.dot(xcol, pw_ref[0], preferred_element_type=f32) + bias(0)
    y1 = jnp.clip(y1, 0.0, 6.0)                                  # (M1, 128)

    # --- maxpool 3x3 s2 p1 : 9 tap-gather matmuls + elementwise max ----------
    # post-ReLU6 activations are >= 0, so the all-zero padding rows of the tap
    # matrices reproduce PyTorch's -inf-padded maxpool exactly.
    y1b = y1.astype(bf16)
    pooled = jnp.dot(tpool_ref[0], y1b, preferred_element_type=f32)
    for k in range(1, 9):
        pooled = jnp.maximum(
            pooled, jnp.dot(tpool_ref[k], y1b, preferred_element_type=f32))
    # pooled: (M2, 128), 24 real channels

    # --- block 0 : InvertedResidual(24, 116, stride=2, benchmodel=2) ---------
    # banch1: dw3x3(s2)+BN -> 1x1+BN+ReLU  (weights route output to EVEN lanes)
    b1 = dw(pooled, g8_ref, 0, 1)
    b1 = jnp.maximum(pw(b1, 1, 2), 0.0)
    # banch2: 1x1+BN+ReLU -> dw3x3(s2)+BN -> 1x1+BN+ReLU  (-> ODD lanes)
    b2 = jnp.maximum(pw(pooled, 2, 3), 0.0)
    b2 = dw(b2, g8_ref, 1, 4)
    b2 = jnp.maximum(pw(b2, 3, 5), 0.0)
    # concat + channel_shuffle(2) were folded into the lane permutation above.
    x = b1 + b2                                                  # (M3, 128), 116 real ch

    # --- blocks 1..3 : InvertedResidual(116, 116, stride=1, benchmodel=1) ----
    for i in range(3):
        z = jnp.maximum(pw(x, 4 + 2 * i, 6 + 3 * i), 0.0)        # 1x1 on x2 half
        z = dw(z, g4_ref, 2 + i, 7 + 3 * i)                      # dw3x3 s1 + BN
        z = jnp.maximum(pw(z, 5 + 2 * i, 8 + 3 * i), 0.0)        # 1x1 -> ODD lanes
        x1 = jnp.dot(x.astype(bf16), pw_ref[10],                 # x1 passthrough
                     preferred_element_type=f32)                 #   -> EVEN lanes
        x = x1 + z

    o_ref[0] = x.astype(o_ref.dtype)


# ----------------------------------------------------------------------------
# Constant spatial tap-selection matrices (0/1), built once per image size
# ----------------------------------------------------------------------------
@functools.lru_cache(maxsize=None)
def _tap_constants(hw):
    def taps(hin, hout, stride):
        t = np.zeros((9, hout * hout, hin * hin), np.float32)
        for ky in range(3):
            for kx in range(3):
                k = ky * 3 + kx
                for oh in range(hout):
                    ih = oh * stride - 1 + ky
                    if not 0 <= ih < hin:
                        continue
                    for ow in range(hout):
                        iw = ow * stride - 1 + kx
                        if 0 <= iw < hin:
                            t[k, oh * hout + ow, ih * hin + iw] = 1.0
        return jnp.asarray(t, jnp.bfloat16)

    h1, h2, h3 = hw // 2, hw // 4, hw // 8
    return taps(h1, h2, 2), taps(h2, h3, 2), taps(h3, h3, 1)


# ----------------------------------------------------------------------------
# Wrapper glue: conv1 im2col (raw input only) and the fused pallas_call
# ----------------------------------------------------------------------------
def _conv1_im2col(x_nchw):
    n, c, h, _ = x_nchw.shape
    h1 = h // 2
    x = jnp.transpose(x_nchw, (0, 2, 3, 1))                      # NHWC
    xp = jnp.pad(x, ((0, 0), (1, 1), (1, 1), (0, 0)))
    cols = [xp[:, ky:ky + 2 * h1:2, kx:kx + 2 * h1:2, :]
            for ky in range(3) for kx in range(3)]               # (ky,kx,cin) order
    xcol = jnp.concatenate(cols, axis=-1).reshape(n, h1 * h1, 9 * c)
    xcol = jnp.pad(xcol, ((0, 0), (0, 0), (0, LANES - 9 * c)))
    return xcol.astype(jnp.bfloat16)


def shufflenet_v2_8_forward(x_nchw, params):
    n, cin, h, w = x_nchw.shape
    assert cin == 3 and h == w and h % 8 == 0, (n, cin, h, w)
    h1, h3 = h // 2, h // 8
    m1, m2, m3 = h1 * h1, (h // 4) ** 2, h3 * h3

    tpool, g8, g4 = _tap_constants(h)
    xcol = _conv1_im2col(x_nchw)

    out = pl.pallas_call(
        _fused_kernel,
        grid=(n,),
        in_specs=[
            pl.BlockSpec((1, m1, LANES), lambda b: (b, 0, 0)),       # conv1 im2col
            pl.BlockSpec((11, LANES, LANES), lambda b: (0, 0, 0)),   # pointwise weights
            pl.BlockSpec((5, 9, LANES), lambda b: (0, 0, 0)),        # depthwise weights
            pl.BlockSpec((16, LANES), lambda b: (0, 0)),             # folded BN biases
            pl.BlockSpec((9, m2, m1), lambda b: (0, 0, 0)),          # maxpool taps
            pl.BlockSpec((9, m3, m2), lambda b: (0, 0, 0)),          # dw s2 taps
            pl.BlockSpec((9, m3, m3), lambda b: (0, 0, 0)),          # dw s1 taps
        ],
        out_specs=pl.BlockSpec((1, m3, LANES), lambda b: (b, 0, 0)),
        out_shape=jax.ShapeDtypeStruct((n, m3, LANES), jnp.float32),
        compiler_params=pltpu.CompilerParams(
            dimension_semantics=("parallel",)),
    )(xcol, params["pw"], params["dwk"], params["bias"], tpool, g8, g4)

    out = out.reshape(n, h3, h3, LANES)[..., :2 * CB]
    return jnp.transpose(out, (0, 3, 1, 2))                      # back to NCHW


# ----------------------------------------------------------------------------
# Deterministic synthetic parameters (shapes from the PyTorch module, eval-mode
# BN folded into weights/biases; channel shuffle folded into output lanes).
# ----------------------------------------------------------------------------
_EVEN = 2 * np.arange(CB)          # lanes 0,2,...,114  (branch1 / x1 channels)
_ODD = _EVEN + 1                   # lanes 1,3,...,115  (branch2 channels)


def _bn_fold(key, c, eps=1e-5):
    k1, k2, k3, k4 = jax.random.split(key, 4)
    gamma = 1.0 + 0.1 * jax.random.normal(k1, (c,), jnp.float32)
    beta = 0.1 * jax.random.normal(k2, (c,), jnp.float32)
    mean = 0.1 * jax.random.normal(k3, (c,), jnp.float32)
    var = 1.0 + 0.1 * jax.random.uniform(k4, (c,), jnp.float32)
    scale = gamma / jnp.sqrt(var + eps)
    bias = beta - mean * scale
    return scale, bias


def _fold_pw(w_oi, scale, in_start, out_lanes):
    # torch-layout (Cout, Cin) 1x1 weight, BN scale folded, placed into 128x128.
    cout, cin_ = w_oi.shape
    wf = (w_oi * scale[:, None]).T                               # (Cin, Cout)
    m = jnp.zeros((LANES, LANES), jnp.float32)
    return m.at[in_start:in_start + cin_, out_lanes].set(wf)


def _fold_dw(w, scale):
    # torch depthwise layout (C, 1, 3, 3), BN scale folded -> (9, 128)
    c = w.shape[0]
    wk = (w.reshape(c, 9) * scale[:, None]).T                    # (9, C)
    return jnp.zeros((9, LANES), jnp.float32).at[:, :c].set(wk)


def _place_bias(b, out_lanes):
    return jnp.zeros((LANES,), jnp.float32).at[out_lanes].set(b)


def init_params(key):
    ks = iter(jax.random.split(key, 64))

    def pw_w(cout, cin_):
        return 0.1 * jax.random.normal(next(ks), (cout, cin_), jnp.float32)

    def dw_w(c):
        return 0.1 * jax.random.normal(next(ks), (c, 1, 3, 3), jnp.float32)

    pw_list = [None] * 11
    dwk_list = []
    bias_rows = [jnp.zeros((LANES,), jnp.float32) for _ in range(16)]

    # conv1: Conv2d(3, 24, 3, s=2, p=1) + BN(24) + ReLU6 ; im2col cols = (ky,kx,ci)
    w1 = 0.1 * jax.random.normal(next(ks), (C1, 3, 3, 3), jnp.float32)
    s, b = _bn_fold(next(ks), C1)
    w1_col = jnp.transpose(w1, (0, 2, 3, 1)).reshape(C1, 27)
    pw_list[0] = _fold_pw(w1_col, s, 0, np.arange(C1))
    bias_rows[0] = _place_bias(b, np.arange(C1))

    # block0 banch1: dw3x3(s2)+BN -> 1x1+BN+ReLU (-> even lanes)
    wd = dw_w(C1); s, b = _bn_fold(next(ks), C1)
    dwk_list.append(_fold_dw(wd, s)); bias_rows[1] = _place_bias(b, np.arange(C1))
    wp = pw_w(CB, C1); s, b = _bn_fold(next(ks), CB)
    pw_list[1] = _fold_pw(wp, s, 0, _EVEN); bias_rows[2] = _place_bias(b, _EVEN)

    # block0 banch2: 1x1+BN+ReLU -> dw3x3(s2)+BN -> 1x1+BN+ReLU (-> odd lanes)
    wp = pw_w(CB, C1); s, b = _bn_fold(next(ks), CB)
    pw_list[2] = _fold_pw(wp, s, 0, np.arange(CB)); bias_rows[3] = _place_bias(b, np.arange(CB))
    wd = dw_w(CB); s, b = _bn_fold(next(ks), CB)
    dwk_list.append(_fold_dw(wd, s)); bias_rows[4] = _place_bias(b, np.arange(CB))
    wp = pw_w(CB, CB); s, b = _bn_fold(next(ks), CB)
    pw_list[3] = _fold_pw(wp, s, 0, _ODD); bias_rows[5] = _place_bias(b, _ODD)

    # blocks 1..3 (benchmodel 1): x2 lives in lanes 58..115 of the block input
    for i in range(3):
        wp = pw_w(CB, CB); s, b = _bn_fold(next(ks), CB)
        pw_list[4 + 2 * i] = _fold_pw(wp, s, CB, np.arange(CB))
        bias_rows[6 + 3 * i] = _place_bias(b, np.arange(CB))
        wd = dw_w(CB); s, b = _bn_fold(next(ks), CB)
        dwk_list.append(_fold_dw(wd, s))
        bias_rows[7 + 3 * i] = _place_bias(b, np.arange(CB))
        wp = pw_w(CB, CB); s, b = _bn_fold(next(ks), CB)
        pw_list[5 + 2 * i] = _fold_pw(wp, s, 0, _ODD)
        bias_rows[8 + 3 * i] = _place_bias(b, _ODD)

    # x1 passthrough of concat+shuffle: input lane k (k<58) -> output lane 2k
    pw_list[10] = jnp.zeros((LANES, LANES), jnp.float32).at[
        np.arange(CB), _EVEN].set(1.0)

    return {
        "pw": jnp.stack(pw_list).astype(jnp.bfloat16),    # (11, 128, 128) bf16
        "dwk": jnp.stack(dwk_list),                       # (5, 9, 128)   f32
        "bias": jnp.stack(bias_rows),                     # (16, 128)     f32
    }


if __name__ == "__main__":
    # NCHW input like PyTorch; conv1 requires 3 input channels.
    x = jax.random.normal(jax.random.PRNGKey(0), (2, 3, 32, 32), dtype=jnp.float32)
    params = init_params(jax.random.PRNGKey(42))

    fwd = jax.jit(shufflenet_v2_8_forward)
    out = jax.block_until_ready(fwd(x, params))

    # conv1 s2: 32->16, maxpool s2: 16->8, stage_2 first block s2: 8->4; C=116
    assert out.shape == (2, 116, 4, 4), out.shape
    assert bool(jnp.all(jnp.isfinite(out)))
    print("KERNEL_OK")
</pallas_src>

<mosaic_0001>
module attributes {stable_mosaic.version = 11 : i64} {
  func.func @_fused_kernel(%arg0: i32, %arg1: memref<1x256x128xbf16, #tpu.memory_space<vmem>>, %arg2: memref<11x128x128xbf16, #tpu.memory_space<vmem>>, %arg3: memref<5x9x128xf32, #tpu.memory_space<vmem>>, %arg4: memref<16x128xf32, #tpu.memory_space<vmem>>, %arg5: memref<9x64x256xbf16, #tpu.memory_space<vmem>>, %arg6: memref<9x16x64xbf16, #tpu.memory_space<vmem>>, %arg7: memref<9x16x16xbf16, #tpu.memory_space<vmem>>, %arg8: memref<1x16x128xf32, #tpu.memory_space<vmem>>) attributes {dimension_semantics = [#tpu.dimension_semantics<parallel>], iteration_bounds = array<i64: 2>, scalar_prefetch = 0 : i64, scratch_operands = 0 : i64, tpu.core_type = #tpu.core_type<tc>, window_params = [{transform_indices = @transform_0, window_bounds = array<i64: 1, 256, 128>}, {pipeline_mode = #tpu.pipeline_mode<synchronous>, transform_indices = @transform_1, window_bounds = array<i64: 11, 128, 128>}, {pipeline_mode = #tpu.pipeline_mode<synchronous>, transform_indices = @transform_2, window_bounds = array<i64: 5, 9, 128>}, {pipeline_mode = #tpu.pipeline_mode<synchronous>, transform_indices = @transform_3, window_bounds = array<i64: 16, 128>}, {pipeline_mode = #tpu.pipeline_mode<synchronous>, transform_indices = @transform_4, window_bounds = array<i64: 9, 64, 256>}, {pipeline_mode = #tpu.pipeline_mode<synchronous>, transform_indices = @transform_5, window_bounds = array<i64: 9, 16, 64>}, {pipeline_mode = #tpu.pipeline_mode<synchronous>, transform_indices = @transform_6, window_bounds = array<i64: 9, 16, 16>}, {transform_indices = @transform_7, window_bounds = array<i64: 1, 16, 128>}]} {
    %c0 = arith.constant 0 : index
    %c0_0 = arith.constant 0 : index
    %c0_1 = arith.constant 0 : index
    %0 = vector.load %arg1[%c0, %c0_0, %c0_1] : memref<1x256x128xbf16, #tpu.memory_space<vmem>>, vector<1x256x128xbf16>
    %1 = vector.shape_cast %0 : vector<1x256x128xbf16> to vector<256x128xbf16>
    %c0_2 = arith.constant 0 : index
    %c0_3 = arith.constant 0 : index
    %c0_4 = arith.constant 0 : index
    %2 = vector.load %arg2[%c0_2, %c0_3, %c0_4] : memref<11x128x128xbf16, #tpu.memory_space<vmem>>, vector<1x128x128xbf16>
    %3 = vector.shape_cast %2 : vector<1x128x128xbf16> to vector<128x128xbf16>
    %cst = arith.constant dense<0.000000e+00> : vector<256x128xf32>
    %4 = tpu.matmul %1, %3, %cst {dimension_numbers = #tpu.dot_dimension_numbers<[1], [0], [0], [1], [0, 0, 1, 1], [], []>} : vector<256x128xbf16>, vector<128x128xbf16>, vector<256x128xf32> -> vector<256x128xf32>
    %c0_5 = arith.constant 0 : index
    %c0_6 = arith.constant 0 : index
    %5 = vector.load %arg4[%c0_5, %c0_6] : memref<16x128xf32, #tpu.memory_space<vmem>>, vector<1x128xf32>
    %6 = vector.broadcast %5 : vector<1x128xf32> to vector<256x128xf32>
    %7 = arith.addf %4, %6 : vector<256x128xf32>
    %cst_7 = arith.constant 0.000000e+00 : f32
    %cst_8 = arith.constant 6.000000e+00 : f32
    %8 = vector.broadcast %cst_7 : f32 to vector<256x128xf32>
    %9 = arith.maximumf %8, %7 : vector<256x128xf32>
    %10 = vector.broadcast %cst_8 : f32 to vector<256x128xf32>
    %11 = arith.minimumf %10, %9 : vector<256x128xf32>
    %12 = arith.truncf %11 : vector<256x128xf32> to vector<256x128xbf16>
    %c0_9 = arith.constant 0 : index
    %c0_10 = arith.constant 0 : index
    %c0_11 = arith.constant 0 : index
    %13 = vector.load %arg5[%c0_9, %c0_10, %c0_11] : memref<9x64x256xbf16, #tpu.memory_space<vmem>>, vector<1x64x256xbf16>
    %14 = vector.shape_cast %13 : vector<1x64x256xbf16> to vector<64x256xbf16>
    %cst_12 = arith.constant dense<0.000000e+00> : vector<64x128xf32>
    %15 = tpu.matmul %14, %12, %cst_12 {dimension_numbers = #tpu.dot_dimension_numbers<[1], [0], [0], [1], [0, 0, 1, 1], [], []>} : vector<64x256xbf16>, vector<256x128xbf16>, vector<64x128xf32> -> vector<64x128xf32>
    %c1 = arith.constant 1 : index
    %c0_13 = arith.constant 0 : index
    %c0_14 = arith.constant 0 : index
    %16 = vector.load %arg5[%c1, %c0_13, %c0_14] : memref<9x64x256xbf16, #tpu.memory_space<vmem>>, vector<1x64x256xbf16>
    %17 = vector.shape_cast %16 : vector<1x64x256xbf16> to vector<64x256xbf16>
    %cst_15 = arith.constant dense<0.000000e+00> : vector<64x128xf32>
    %18 = tpu.matmul %17, %12, %cst_15 {dimension_numbers = #tpu.dot_dimension_numbers<[1], [0], [0], [1], [0, 0, 1, 1], [], []>} : vector<64x256xbf16>, vector<256x128xbf16>, vector<64x128xf32> -> vector<64x128xf32>
    %19 = arith.maximumf %15, %18 : vector<64x128xf32>
    %c2 = arith.constant 2 : index
    %c0_16 = arith.constant 0 : index
    %c0_17 = arith.constant 0 : index
    %20 = vector.load %arg5[%c2, %c0_16, %c0_17] : memref<9x64x256xbf16, #tpu.memory_space<vmem>>, vector<1x64x256xbf16>
    %21 = vector.shape_cast %20 : vector<1x64x256xbf16> to vector<64x256xbf16>
    %cst_18 = arith.constant dense<0.000000e+00> : vector<64x128xf32>
    %22 = tpu.matmul %21, %12, %cst_18 {dimension_numbers = #tpu.dot_dimension_numbers<[1], [0], [0], [1], [0, 0, 1, 1], [], []>} : vector<64x256xbf16>, vector<256x128xbf16>, vector<64x128xf32> -> vector<64x128xf32>
    %23 = arith.maximumf %19, %22 : vector<64x128xf32>
    %c3 = arith.constant 3 : index
    %c0_19 = arith.constant 0 : index
    %c0_20 = arith.constant 0 : index
    %24 = vector.load %arg5[%c3, %c0_19, %c0_20] : memref<9x64x256xbf16, #tpu.memory_space<vmem>>, vector<1x64x256xbf16>
    %25 = vector.shape_cast %24 : vector<1x64x256xbf16> to vector<64x256xbf16>
    %cst_21 = arith.constant dense<0.000000e+00> : vector<64x128xf32>
    %26 = tpu.matmul %25, %12, %cst_21 {dimension_numbers = #tpu.dot_dimension_numbers<[1], [0], [0], [1], [0, 0, 1, 1], [], []>} : vector<64x256xbf16>, vector<256x128xbf16>, vector<64x128xf32> -> vector<64x128xf32>
    %27 = arith.maximumf %23, %26 : vector<64x128xf32>
    %c4 = arith.constant 4 : index
    %c0_22 = arith.constant 0 : index
    %c0_23 = arith.constant 0 : index
    %28 = vector.load %arg5[%c4, %c0_22, %c0_23] : memref<9x64x256xbf16, #tpu.memory_space<vmem>>, vector<1x64x256xbf16>
    %29 = vector.shape_cast %28 : vector<1x64x256xbf16> to vector<64x256xbf16>
    %cst_24 = arith.constant dense<0.000000e+00> : vector<64x128xf32>
    %30 = tpu.matmul %29, %12, %cst_24 {dimension_numbers = #tpu.dot_dimension_numbers<[1], [0], [0], [1], [0, 0, 1, 1], [], []>} : vector<64x256xbf16>, vector<256x128xbf16>, vector<64x128xf32> -> vector<64x128xf32>
    %31 = arith.maximumf %27, %30 : vector<64x128xf32>
    %c5 = arith.constant 5 : index
    %c0_25 = arith.constant 0 : index
    %c0_26 = arith.constant 0 : index
    %32 = vector.load %arg5[%c5, %c0_25, %c0_26] : memref<9x64x256xbf16, #tpu.memory_space<vmem>>, vector<1x64x256xbf16>
    %33 = vector.shape_cast %32 : vector<1x64x256xbf16> to vector<64x256xbf16>
    %cst_27 = arith.constant dense<0.000000e+00> : vector<64x128xf32>
    %34 = tpu.matmul %33, %12, %cst_27 {dimension_numbers = #tpu.dot_dimension_numbers<[1], [0], [0], [1], [0, 0, 1, 1], [], []>} : vector<64x256xbf16>, vector<256x128xbf16>, vector<64x128xf32> -> vector<64x128xf32>
    %35 = arith.maximumf %31, %34 : vector<64x128xf32>
    %c6 = arith.constant 6 : index
    %c0_28 = arith.constant 0 : index
    %c0_29 = arith.constant 0 : index
    %36 = vector.load %arg5[%c6, %c0_28, %c0_29] : memref<9x64x256xbf16, #tpu.memory_space<vmem>>, vector<1x64x256xbf16>
    %37 = vector.shape_cast %36 : vector<1x64x256xbf16> to vector<64x256xbf16>
    %cst_30 = arith.constant dense<0.000000e+00> : vector<64x128xf32>
    %38 = tpu.matmul %37, %12, %cst_30 {dimension_numbers = #tpu.dot_dimension_numbers<[1], [0], [0], [1], [0, 0, 1, 1], [], []>} : vector<64x256xbf16>, vector<256x128xbf16>, vector<64x128xf32> -> vector<64x128xf32>
    %39 = arith.maximumf %35, %38 : vector<64x128xf32>
    %c7 = arith.constant 7 : index
    %c0_31 = arith.constant 0 : index
    %c0_32 = arith.constant 0 : index
    %40 = vector.load %arg5[%c7, %c0_31, %c0_32] : memref<9x64x256xbf16, #tpu.memory_space<vmem>>, vector<1x64x256xbf16>
    %41 = vector.shape_cast %40 : vector<1x64x256xbf16> to vector<64x256xbf16>
    %cst_33 = arith.constant dense<0.000000e+00> : vector<64x128xf32>
    %42 = tpu.matmul %41, %12, %cst_33 {dimension_numbers = #tpu.dot_dimension_numbers<[1], [0], [0], [1], [0, 0, 1, 1], [], []>} : vector<64x256xbf16>, vector<256x128xbf16>, vector<64x128xf32> -> vector<64x128xf32>
    %43 = arith.maximumf %39, %42 : vector<64x128xf32>
    %c8 = arith.constant 8 : index
    %c0_34 = arith.constant 0 : index
    %c0_35 = arith.constant 0 : index
    %44 = vector.load %arg5[%c8, %c0_34, %c0_35] : memref<9x64x256xbf16, #tpu.memory_space<vmem>>, vector<1x64x256xbf16>
    %45 = vector.shape_cast %44 : vector<1x64x256xbf16> to vector<64x256xbf16>
    %cst_36 = arith.constant dense<0.000000e+00> : vector<64x128xf32>
    %46 = tpu.matmul %45, %12, %cst_36 {dimension_numbers = #tpu.dot_dimension_numbers<[1], [0], [0], [1], [0, 0, 1, 1], [], []>} : vector<64x256xbf16>, vector<256x128xbf16>, vector<64x128xf32> -> vector<64x128xf32>
    %47 = arith.maximumf %43, %46 : vector<64x128xf32>
    %48 = arith.truncf %47 : vector<64x128xf32> to vector<64x128xbf16>
    %c0_37 = arith.constant 0 : index
    %c0_38 = arith.constant 0 : index
    %c0_39 = arith.constant 0 : index
    %49 = vector.load %arg3[%c0_37, %c0_38, %c0_39] : memref<5x9x128xf32, #tpu.memory_space<vmem>>, vector<1x9x128xf32>
    %50 = vector.shape_cast %49 : vector<1x9x128xf32> to vector<9x128xf32>
    %c0_40 = arith.constant 0 : index
    %c0_41 = arith.constant 0 : index
    %c0_42 = arith.constant 0 : index
    %51 = vector.load %arg6[%c0_40, %c0_41, %c0_42] : memref<9x16x64xbf16, #tpu.memory_space<vmem>>, vector<1x16x64xbf16>
    %52 = vector.shape_cast %51 : vector<1x16x64xbf16> to vector<16x64xbf16>
    %cst_43 = arith.constant dense<0.000000e+00> : vector<16x128xf32>
    %53 = tpu.matmul %52, %48, %cst_43 {dimension_numbers = #tpu.dot_dimension_numbers<[1], [0], [0], [1], [0, 0, 1, 1], [], []>} : vector<16x64xbf16>, vector<64x128xbf16>, vector<16x128xf32> -> vector<16x128xf32>
    %54 = vector.extract_strided_slice %50 {offsets = [0, 0], sizes = [1, 128], strides = [1, 1]} : vector<9x128xf32> to vector<1x128xf32>
    %55 = vector.broadcast %54 : vector<1x128xf32> to vector<16x128xf32>
    %56 = arith.mulf %53, %55 : vector<16x128xf32>
    %c1_44 = arith.constant 1 : index
    %c0_45 = arith.constant 0 : index
    %c0_46 = arith.constant 0 : index
    %57 = vector.load %arg6[%c1_44, %c0_45, %c0_46] : memref<9x16x64xbf16, #tpu.memory_space<vmem>>, vector<1x16x64xbf16>
    %58 = vector.shape_cast %57 : vector<1x16x64xbf16> to vector<16x64xbf16>
    %cst_47 = arith.constant dense<0.000000e+00> : vector<16x128xf32>
    %59 = tpu.matmul %58, %48, %cst_47 {dimension_numbers = #tpu.dot_dimension_numbers<[1], [0], [0], [1], [0, 0, 1, 1], [], []>} : vector<16x64xbf16>, vector<64x128xbf16>, vector<16x128xf32> -> vector<16x128xf32>
    %60 = vector.extract_strided_slice %50 {offsets = [1, 0], sizes = [1, 128], strides = [1, 1]} : vector<9x128xf32> to vector<1x128xf32>
    %61 = vector.broadcast %60 : vector<1x128xf32> to vector<16x128xf32>
    %62 = arith.mulf %59, %61 : vector<16x128xf32>
    %63 = arith.addf %56, %62 : vector<16x128xf32>
    %c2_48 = arith.constant 2 : index
    %c0_49 = arith.constant 0 : index
    %c0_50 = arith.constant 0 : index
    %64 = vector.load %arg6[%c2_48, %c0_49, %c0_50] : memref<9x16x64xbf16, #tpu.memory_space<vmem>>, vector<1x16x64xbf16>
    %65 = vector.shape_cast %64 : vector<1x16x64xbf16> to vector<16x64xbf16>
    %cst_51 = arith.constant dense<0.000000e+00> : vector<16x128xf32>
    %66 = tpu.matmul %65, %48, %cst_51 {dimension_numbers = #tpu.dot_dimension_numbers<[1], [0], [0], [1], [0, 0, 1, 1], [], []>} : vector<16x64xbf16>, vector<64x128xbf16>, vector<16x128xf32> -> vector<16x128xf32>
    %67 = vector.extract_strided_slice %50 {offsets = [2, 0], sizes = [1, 128], strides = [1, 1]} : vector<9x128xf32> to vector<1x128xf32>
    %68 = vector.broadcast %67 : vector<1x128xf32> to vector<16x128xf32>
    %69 = arith.mulf %66, %68 : vector<16x128xf32>
    %70 = arith.addf %63, %69 : vector<16x128xf32>
    %c3_52 = arith.constant 3 : index
    %c0_53 = arith.constant 0 : index
    %c0_54 = arith.constant 0 : index
    %71 = vector.load %arg6[%c3_52, %c0_53, %c0_54] : memref<9x16x64xbf16, #tpu.memory_space<vmem>>, vector<1x16x64xbf16>
    %72 = vector.shape_cast %71 : vector<1x16x64xbf16> to vector<16x64xbf16>
    %cst_55 = arith.constant dense<0.000000e+00> : vector<16x128xf32>
    %73 = tpu.matmul %72, %48, %cst_55 {dimension_numbers = #tpu.dot_dimension_numbers<[1], [0], [0], [1], [0, 0, 1, 1], [], []>} : vector<16x64xbf16>, vector<64x128xbf16>, vector<16x128xf32> -> vector<16x128xf32>
    %74 = vector.extract_strided_slice %50 {offsets = [3, 0], sizes = [1, 128], strides = [1, 1]} : vector<9x128xf32> to vector<1x128xf32>
    %75 = vector.broadcast %74 : vector<1x128xf32> to vector<16x128xf32>
    %76 = arith.mulf %73, %75 : vector<16x128xf32>
    %77 = arith.addf %70, %76 : vector<16x128xf32>
    %c4_56 = arith.constant 4 : index
    %c0_57 = arith.constant 0 : index
    %c0_58 = arith.constant 0 : index
    %78 = vector.load %arg6[%c4_56, %c0_57, %c0_58] : memref<9x16x64xbf16, #tpu.memory_space<vmem>>, vector<1x16x64xbf16>
    %79 = vector.shape_cast %78 : vector<1x16x64xbf16> to vector<16x64xbf16>
    %cst_59 = arith.constant dense<0.000000e+00> : vector<16x128xf32>
    %80 = tpu.matmul %79, %48, %cst_59 {dimension_numbers = #tpu.dot_dimension_numbers<[1], [0], [0], [1], [0, 0, 1, 1], [], []>} : vector<16x64xbf16>, vector<64x128xbf16>, vector<16x128xf32> -> vector<16x128xf32>
    %81 = vector.extract_strided_slice %50 {offsets = [4, 0], sizes = [1, 128], strides = [1, 1]} : vector<9x128xf32> to vector<1x128xf32>
    %82 = vector.broadcast %81 : vector<1x128xf32> to vector<16x128xf32>
    %83 = arith.mulf %80, %82 : vector<16x128xf32>
    %84 = arith.addf %77, %83 : vector<16x128xf32>
    %c5_60 = arith.constant 5 : index
    %c0_61 = arith.constant 0 : index
    %c0_62 = arith.constant 0 : index
    %85 = vector.load %arg6[%c5_60, %c0_61, %c0_62] : memref<9x16x64xbf16, #tpu.memory_space<vmem>>, vector<1x16x64xbf16>
    %86 = vector.shape_cast %85 : vector<1x16x64xbf16> to vector<16x64xbf16>
    %cst_63 = arith.constant dense<0.000000e+00> : vector<16x128xf32>
    %87 = tpu.matmul %86, %48, %cst_63 {dimension_numbers = #tpu.dot_dimension_numbers<[1], [0], [0], [1], [0, 0, 1, 1], [], []>} : vector<16x64xbf16>, vector<64x128xbf16>, vector<16x128xf32> -> vector<16x128xf32>
    %88 = vector.extract_strided_slice %50 {offsets = [5, 0], sizes = [1, 128], strides = [1, 1]} : vector<9x128xf32> to vector<1x128xf32>
    %89 = vector.broadcast %88 : vector<1x128xf32> to vector<16x128xf32>
    %90 = arith.mulf %87, %89 : vector<16x128xf32>
    %91 = arith.addf %84, %90 : vector<16x128xf32>
    %c6_64 = arith.constant 6 : index
    %c0_65 = arith.constant 0 : index
    %c0_66 = arith.constant 0 : index
    %92 = vector.load %arg6[%c6_64, %c0_65, %c0_66] : memref<9x16x64xbf16, #tpu.memory_space<vmem>>, vector<1x16x64xbf16>
    %93 = vector.shape_cast %92 : vector<1x16x64xbf16> to vector<16x64xbf16>
    %cst_67 = arith.constant dense<0.000000e+00> : vector<16x128xf32>
    %94 = tpu.matmul %93, %48, %cst_67 {dimension_numbers = #tpu.dot_dimension_numbers<[1], [0], [0], [1], [0, 0, 1, 1], [], []>} : vector<16x64xbf16>, vector<64x128xbf16>, vector<16x128xf32> -> vector<16x128xf32>
    %95 = vector.extract_strided_slice %50 {offsets = [6, 0], sizes = [1, 128], strides = [1, 1]} : vector<9x128xf32> to vector<1x128xf32>
    %96 = vector.broadcast %95 : vector<1x128xf32> to vector<16x128xf32>
    %97 = arith.mulf %94, %96 : vector<16x128xf32>
    %98 = arith.addf %91, %97 : vector<16x128xf32>
    %c7_68 = arith.constant 7 : index
    %c0_69 = arith.constant 0 : index
    %c0_70 = arith.constant 0 : index
    %99 = vector.load %arg6[%c7_68, %c0_69, %c0_70] : memref<9x16x64xbf16, #tpu.memory_space<vmem>>, vector<1x16x64xbf16>
    %100 = vector.shape_cast %99 : vector<1x16x64xbf16> to vector<16x64xbf16>
    %cst_71 = arith.constant dense<0.000000e+00> : vector<16x128xf32>
    %101 = tpu.matmul %100, %48, %cst_71 {dimension_numbers = #tpu.dot_dimension_numbers<[1], [0], [0], [1], [0, 0, 1, 1], [], []>} : vector<16x64xbf16>, vector<64x128xbf16>, vector<16x128xf32> -> vector<16x128xf32>
    %102 = vector.extract_strided_slice %50 {offsets = [7, 0], sizes = [1, 128], strides = [1, 1]} : vector<9x128xf32> to vector<1x128xf32>
    %103 = vector.broadcast %102 : vector<1x128xf32> to vector<16x128xf32>
    %104 = arith.mulf %101, %103 : vector<16x128xf32>
    %105 = arith.addf %98, %104 : vector<16x128xf32>
    %c8_72 = arith.constant 8 : index
    %c0_73 = arith.constant 0 : index
    %c0_74 = arith.constant 0 : index
    %106 = vector.load %arg6[%c8_72, %c0_73, %c0_74] : memref<9x16x64xbf16, #tpu.memory_space<vmem>>, vector<1x16x64xbf16>
    %107 = vector.shape_cast %106 : vector<1x16x64xbf16> to vector<16x64xbf16>
    %cst_75 = arith.constant dense<0.000000e+00> : vector<16x128xf32>
    %108 = tpu.matmul %107, %48, %cst_75 {dimension_numbers = #tpu.dot_dimension_numbers<[1], [0], [0], [1], [0, 0, 1, 1], [], []>} : vector<16x64xbf16>, vector<64x128xbf16>, vector<16x128xf32> -> vector<16x128xf32>
    %109 = vector.extract_strided_slice %50 {offsets = [8, 0], sizes = [1, 128], strides = [1, 1]} : vector<9x128xf32> to vector<1x128xf32>
    %110 = vector.broadcast %109 : vector<1x128xf32> to vector<16x128xf32>
    %111 = arith.mulf %108, %110 : vector<16x128xf32>
    %112 = arith.addf %105, %111 : vector<16x128xf32>
    %c1_76 = arith.constant 1 : index
    %c0_77 = arith.constant 0 : index
    %113 = vector.load %arg4[%c1_76, %c0_77] : memref<16x128xf32, #tpu.memory_space<vmem>>, vector<1x128xf32>
    %114 = vector.broadcast %113 : vector<1x128xf32> to vector<16x128xf32>
    %115 = arith.addf %112, %114 : vector<16x128xf32>
    %116 = arith.truncf %115 : vector<16x128xf32> to vector<16x128xbf16>
    %c1_78 = arith.constant 1 : index
    %c0_79 = arith.constant 0 : index
    %c0_80 = arith.constant 0 : index
    %117 = vector.load %arg2[%c1_78, %c0_79, %c0_80] : memref<11x128x128xbf16, #tpu.memory_space<vmem>>, vector<1x128x128xbf16>
    %118 = vector.shape_cast %117 : vector<1x128x128xbf16> to vector<128x128xbf16>
    %cst_81 = arith.constant dense<0.000000e+00> : vector<16x128xf32>
    %119 = tpu.matmul %116, %118, %cst_81 {dimension_numbers = #tpu.dot_dimension_numbers<[1], [0], [0], [1], [0, 0, 1, 1], [], []>} : vector<16x128xbf16>, vector<128x128xbf16>, vector<16x128xf32> -> vector<16x128xf32>
    %c2_82 = arith.constant 2 : index
    %c0_83 = arith.constant 0 : index
    %120 = vector.load %arg4[%c2_82, %c0_83] : memref<16x128xf32, #tpu.memory_space<vmem>>, vector<1x128xf32>
    %121 = vector.broadcast %120 : vector<1x128xf32> to vector<16x128xf32>
    %122 = arith.addf %119, %121 : vector<16x128xf32>
    %cst_84 = arith.constant 0.000000e+00 : f32
    %123 = vector.broadcast %cst_84 : f32 to vector<16x128xf32>
    %124 = arith.maximumf %122, %123 : vector<16x128xf32>
    %125 = arith.truncf %47 : vector<64x128xf32> to vector<64x128xbf16>
    %c2_85 = arith.constant 2 : index
    %c0_86 = arith.constant 0 : index
    %c0_87 = arith.constant 0 : index
    %126 = vector.load %arg2[%c2_85, %c0_86, %c0_87] : memref<11x128x128xbf16, #tpu.memory_space<vmem>>, vector<1x128x128xbf16>
    %127 = vector.shape_cast %126 : vector<1x128x128xbf16> to vector<128x128xbf16>
    %cst_88 = arith.constant dense<0.000000e+00> : vector<64x128xf32>
    %128 = tpu.matmul %125, %127, %cst_88 {dimension_numbers = #tpu.dot_dimension_numbers<[1], [0], [0], [1], [0, 0, 1, 1], [], []>} : vector<64x128xbf16>, vector<128x128xbf16>, vector<64x128xf32> -> vector<64x128xf32>
    %c3_89 = arith.constant 3 : index
    %c0_90 = arith.constant 0 : index
    %129 = vector.load %arg4[%c3_89, %c0_90] : memref<16x128xf32, #tpu.memory_space<vmem>>, vector<1x128xf32>
    %130 = vector.broadcast %129 : vector<1x128xf32> to vector<64x128xf32>
    %131 = arith.addf %128, %130 : vector<64x128xf32>
    %cst_91 = arith.constant 0.000000e+00 : f32
    %132 = vector.broadcast %cst_91 : f32 to vector<64x128xf32>
    %133 = arith.maximumf %131, %132 : vector<64x128xf32>
    %134 = arith.truncf %133 : vector<64x128xf32> to vector<64x128xbf16>
    %c1_92 = arith.constant 1 : index
    %c0_93 = arith.constant 0 : index
    %c0_94 = arith.constant 0 : index
    %135 = vector.load %arg3[%c1_92, %c0_93, %c0_94] : memref<5x9x128xf32, #tpu.memory_space<vmem>>, vector<1x9x128xf32>
    %136 = vector.shape_cast %135 : vector<1x9x128xf32> to vector<9x128xf32>
    %c0_95 = arith.constant 0 : index
    %c0_96 = arith.constant 0 : index
    %c0_97 = arith.constant 0 : index
    %137 = vector.load %arg6[%c0_95, %c0_96, %c0_97] : memref<9x16x64xbf16, #tpu.memory_space<vmem>>, vector<1x16x64xbf16>
    %138 = vector.shape_cast %137 : vector<1x16x64xbf16> to vector<16x64xbf16>
    %cst_98 = arith.constant dense<0.000000e+00> : vector<16x128xf32>
    %139 = tpu.matmul %138, %134, %cst_98 {dimension_numbers = #tpu.dot_dimension_numbers<[1], [0], [0], [1], [0, 0, 1, 1], [], []>} : vector<16x64xbf16>, vector<64x128xbf16>, vector<16x128xf32> -> vector<16x128xf32>
    %140 = vector.extract_strided_slice %136 {offsets = [0, 0], sizes = [1, 128], strides = [1, 1]} : vector<9x128xf32> to vector<1x128xf32>
    %141 = vector.broadcast %140 : vector<1x128xf32> to vector<16x128xf32>
    %142 = arith.mulf %139, %141 : vector<16x128xf32>
    %c1_99 = arith.constant 1 : index
    %c0_100 = arith.constant 0 : index
    %c0_101 = arith.constant 0 : index
    %143 = vector.load %arg6[%c1_99, %c0_100, %c0_101] : memref<9x16x64xbf16, #tpu.memory_space<vmem>>, vector<1x16x64xbf16>
    %144 = vector.shape_cast %143 : vector<1x16x64xbf16> to vector<16x64xbf16>
    %cst_102 = arith.constant dense<0.000000e+00> : vector<16x128xf32>
    %145 = tpu.matmul %144, %134, %cst_102 {dimension_numbers = #tpu.dot_dimension_numbers<[1], [0], [0], [1], [0, 0, 1, 1], [], []>} : vector<16x64xbf16>, vector<64x128xbf16>, vector<16x128xf32> -> vector<16x128xf32>
    %146 = vector.extract_strided_slice %136 {offsets = [1, 0], sizes = [1, 128], strides = [1, 1]} : vector<9x128xf32> to vector<1x128xf32>
    %147 = vector.broadcast %146 : vector<1x128xf32> to vector<16x128xf32>
    %148 = arith.mulf %145, %147 : vector<16x128xf32>
    %149 = arith.addf %142, %148 : vector<16x128xf32>
    %c2_103 = arith.constant 2 : index
    %c0_104 = arith.constant 0 : index
    %c0_105 = arith.constant 0 : index
    %150 = vector.load %arg6[%c2_103, %c0_104, %c0_105] : memref<9x16x64xbf16, #tpu.memory_space<vmem>>, vector<1x16x64xbf16>
    %151 = vector.shape_cast %150 : vector<1x16x64xbf16> to vector<16x64xbf16>
    %cst_106 = arith.constant dense<0.000000e+00> : vector<16x128xf32>
    %152 = tpu.matmul %151, %134, %cst_106 {dimension_numbers = #tpu.dot_dimension_numbers<[1], [0], [0], [1], [0, 0, 1, 1], [], []>} : vector<16x64xbf16>, vector<64x128xbf16>, vector<16x128xf32> -> vector<16x128xf32>
    %153 = vector.extract_strided_slice %136 {offsets = [2, 0], sizes = [1, 128], strides = [1, 1]} : vector<9x128xf32> to vector<1x128xf32>
    %154 = vector.broadcast %153 : vector<1x128xf32> to vector<16x128xf32>
    %155 = arith.mulf %152, %154 : vector<16x128xf32>
    %156 = arith.addf %149, %155 : vector<16x128xf32>
    %c3_107 = arith.constant 3 : index
    %c0_108 = arith.constant 0 : index
    %c0_109 = arith.constant 0 : index
    %157 = vector.load %arg6[%c3_107, %c0_108, %c0_109] : memref<9x16x64xbf16, #tpu.memory_space<vmem>>, vector<1x16x64xbf16>
    %158 = vector.shape_cast %157 : vector<1x16x64xbf16> to vector<16x64xbf16>
    %cst_110 = arith.constant dense<0.000000e+00> : vector<16x128xf32>
    %159 = tpu.matmul %158, %134, %cst_110 {dimension_numbers = #tpu.dot_dimension_numbers<[1], [0], [0], [1], [0, 0, 1, 1], [], []>} : vector<16x64xbf16>, vector<64x128xbf16>, vector<16x128xf32> -> vector<16x128xf32>
    %160 = vector.extract_strided_slice %136 {offsets = [3, 0], sizes = [1, 128], strides = [1, 1]} : vector<9x128xf32> to vector<1x128xf32>
    %161 = vector.broadcast %160 : vector<1x128xf32> to vector<16x128xf32>
    %162 = arith.mulf %159, %161 : vector<16x128xf32>
    %163 = arith.addf %156, %162 : vector<16x128xf32>
    %c4_111 = arith.constant 4 : index
    %c0_112 = arith.constant 0 : index
    %c0_113 = arith.constant 0 : index
    %164 = vector.load %arg6[%c4_111, %c0_112, %c0_113] : memref<9x16x64xbf16, #tpu.memory_space<vmem>>, vector<1x16x64xbf16>
    %165 = vector.shape_cast %164 : vector<1x16x64xbf16> to vector<16x64xbf16>
    %cst_114 = arith.constant dense<0.000000e+00> : vector<16x128xf32>
    %166 = tpu.matmul %165, %134, %cst_114 {dimension_numbers = #tpu.dot_dimension_numbers<[1], [0], [0], [1], [0, 0, 1, 1], [], []>} : vector<16x64xbf16>, vector<64x128xbf16>, vector<16x128xf32> -> vector<16x128xf32>
    %167 = vector.extract_strided_slice %136 {offsets = [4, 0], sizes = [1, 128], strides = [1, 1]} : vector<9x128xf32> to vector<1x128xf32>
    %168 = vector.broadcast %167 : vector<1x128xf32> to vector<16x128xf32>
    %169 = arith.mulf %166, %168 : vector<16x128xf32>
    %170 = arith.addf %163, %169 : vector<16x128xf32>
    %c5_115 = arith.constant 5 : index
    %c0_116 = arith.constant 0 : index
    %c0_117 = arith.constant 0 : index
    %171 = vector.load %arg6[%c5_115, %c0_116, %c0_117] : memref<9x16x64xbf16, #tpu.memory_space<vmem>>, vector<1x16x64xbf16>
    %172 = vector.shape_cast %171 : vector<1x16x64xbf16> to vector<16x64xbf16>
    %cst_118 = arith.constant dense<0.000000e+00> : vector<16x128xf32>
    %173 = tpu.matmul %172, %134, %cst_118 {dimension_numbers = #tpu.dot_dimension_numbers<[1], [0], [0], [1], [0, 0, 1, 1], [], []>} : vector<16x64xbf16>, vector<64x128xbf16>, vector<16x128xf32> -> vector<16x128xf32>
    %174 = vector.extract_strided_slice %136 {offsets = [5, 0], sizes = [1, 128], strides = [1, 1]} : vector<9x128xf32> to vector<1x128xf32>
    %175 = vector.broadcast %174 : vector<1x128xf32> to vector<16x128xf32>
    %176 = arith.mulf %173, %175 : vector<16x128xf32>
    %177 = arith.addf %170, %176 : vector<16x128xf32>
    %c6_119 = arith.constant 6 : index
    %c0_120 = arith.constant 0 : index
    %c0_121 = arith.constant 0 : index
    %178 = vector.load %arg6[%c6_119, %c0_120, %c0_121] : memref<9x16x64xbf16, #tpu.memory_space<vmem>>, vector<1x16x64xbf16>
    %179 = vector.shape_cast %178 : vector<1x16x64xbf16> to vector<16x64xbf16>
    %cst_122 = arith.constant dense<0.000000e+00> : vector<16x128xf32>
    %180 = tpu.matmul %179, %134, %cst_122 {dimension_numbers = #tpu.dot_dimension_numbers<[1], [0], [0], [1], [0, 0, 1, 1], [], []>} : vector<16x64xbf16>, vector<64x128xbf16>, vector<16x128xf32> -> vector<16x128xf32>
    %181 = vector.extract_strided_slice %136 {offsets = [6, 0], sizes = [1, 128], strides = [1, 1]} : vector<9x128xf32> to vector<1x128xf32>
    %182 = vector.broadcast %181 : vector<1x128xf32> to vector<16x128xf32>
    %183 = arith.mulf %180, %182 : vector<16x128xf32>
    %184 = arith.addf %177, %183 : vector<16x128xf32>
    %c7_123 = arith.constant 7 : index
    %c0_124 = arith.constant 0 : index
    %c0_125 = arith.constant 0 : index
    %185 = vector.load %arg6[%c7_123, %c0_124, %c0_125] : memref<9x16x64xbf16, #tpu.memory_space<vmem>>, vector<1x16x64xbf16>
    %186 = vector.shape_cast %185 : vector<1x16x64xbf16> to vector<16x64xbf16>
    %cst_126 = arith.constant dense<0.000000e+00> : vector<16x128xf32>
    %187 = tpu.matmul %186, %134, %cst_126 {dimension_numbers = #tpu.dot_dimension_numbers<[1], [0], [0], [1], [0, 0, 1, 1], [], []>} : vector<16x64xbf16>, vector<64x128xbf16>, vector<16x128xf32> -> vector<16x128xf32>
    %188 = vector.extract_strided_slice %136 {offsets = [7, 0], sizes = [1, 128], strides = [1, 1]} : vector<9x128xf32> to vector<1x128xf32>
    %189 = vector.broadcast %188 : vector<1x128xf32> to vector<16x128xf32>
    %190 = arith.mulf %187, %189 : vector<16x128xf32>
    %191 = arith.addf %184, %190 : vector<16x128xf32>
    %c8_127 = arith.constant 8 : index
    %c0_128 = arith.constant 0 : index
    %c0_129 = arith.constant 0 : index
    %192 = vector.load %arg6[%c8_127, %c0_128, %c0_129] : memref<9x16x64xbf16, #tpu.memory_space<vmem>>, vector<1x16x64xbf16>
    %193 = vector.shape_cast %192 : vector<1x16x64xbf16> to vector<16x64xbf16>
    %cst_130 = arith.constant dense<0.000000e+00> : vector<16x128xf32>
    %194 = tpu.matmul %193, %134, %cst_130 {dimension_numbers = #tpu.dot_dimension_numbers<[1], [0], [0], [1], [0, 0, 1, 1], [], []>} : vector<16x64xbf16>, vector<64x128xbf16>, vector<16x128xf32> -> vector<16x128xf32>
    %195 = vector.extract_strided_slice %136 {offsets = [8, 0], sizes = [1, 128], strides = [1, 1]} : vector<9x128xf32> to vector<1x128xf32>
    %196 = vector.broadcast %195 : vector<1x128xf32> to vector<16x128xf32>
    %197 = arith.mulf %194, %196 : vector<16x128xf32>
    %198 = arith.addf %191, %197 : vector<16x128xf32>
    %c4_131 = arith.constant 4 : index
    %c0_132 = arith.constant 0 : index
    %199 = vector.load %arg4[%c4_131, %c0_132] : memref<16x128xf32, #tpu.memory_space<vmem>>, vector<1x128xf32>
    %200 = vector.broadcast %199 : vector<1x128xf32> to vector<16x128xf32>
    %201 = arith.addf %198, %200 : vector<16x128xf32>
    %202 = arith.truncf %201 : vector<16x128xf32> to vector<16x128xbf16>
    %c3_133 = arith.constant 3 : index
    %c0_134 = arith.constant 0 : index
    %c0_135 = arith.constant 0 : index
    %203 = vector.load %arg2[%c3_133, %c0_134, %c0_135] : memref<11x128x128xbf16, #tpu.memory_space<vmem>>, vector<1x128x128xbf16>
    %204 = vector.shape_cast %203 : vector<1x128x128xbf16> to vector<128x128xbf16>
    %cst_136 = arith.constant dense<0.000000e+00> : vector<16x128xf32>
    %205 = tpu.matmul %202, %204, %cst_136 {dimension_numbers = #tpu.dot_dimension_numbers<[1], [0], [0], [1], [0, 0, 1, 1], [], []>} : vector<16x128xbf16>, vector<128x128xbf16>, vector<16x128xf32> -> vector<16x128xf32>
    %c5_137 = arith.constant 5 : index
    %c0_138 = arith.constant 0 : index
    %206 = vector.load %arg4[%c5_137, %c0_138] : memref<16x128xf32, #tpu.memory_space<vmem>>, vector<1x128xf32>
    %207 = vector.broadcast %206 : vector<1x128xf32> to vector<16x128xf32>
    %208 = arith.addf %205, %207 : vector<16x128xf32>
    %cst_139 = arith.constant 0.000000e+00 : f32
    %209 = vector.broadcast %cst_139 : f32 to vector<16x128xf32>
    %210 = arith.maximumf %208, %209 : vector<16x128xf32>
    %211 = arith.addf %124, %210 : vector<16x128xf32>
    %212 = arith.truncf %211 : vector<16x128xf32> to vector<16x128xbf16>
    %c4_140 = arith.constant 4 : index
    %c0_141 = arith.constant 0 : index
    %c0_142 = arith.constant 0 : index
    %213 = vector.load %arg2[%c4_140, %c0_141, %c0_142] : memref<11x128x128xbf16, #tpu.memory_space<vmem>>, vector<1x128x128xbf16>
    %214 = vector.shape_cast %213 : vector<1x128x128xbf16> to vector<128x128xbf16>
    %cst_143 = arith.constant dense<0.000000e+00> : vector<16x128xf32>
    %215 = tpu.matmul %212, %214, %cst_143 {dimension_numbers = #tpu.dot_dimension_numbers<[1], [0], [0], [1], [0, 0, 1, 1], [], []>} : vector<16x128xbf16>, vector<128x128xbf16>, vector<16x128xf32> -> vector<16x128xf32>
    %c6_144 = arith.constant 6 : index
    %c0_145 = arith.constant 0 : index
    %216 = vector.load %arg4[%c6_144, %c0_145] : memref<16x128xf32, #tpu.memory_space<vmem>>, vector<1x128xf32>
    %217 = vector.broadcast %216 : vector<1x128xf32> to vector<16x128xf32>
    %218 = arith.addf %215, %217 : vector<16x128xf32>
    %cst_146 = arith.constant 0.000000e+00 : f32
    %219 = vector.broadcast %cst_146 : f32 to vector<16x128xf32>
    %220 = arith.maximumf %218, %219 : vector<16x128xf32>
    %221 = arith.truncf %220 : vector<16x128xf32> to vector<16x128xbf16>
    %c2_147 = arith.constant 2 : index
    %c0_148 = arith.constant 0 : index
    %c0_149 = arith.constant 0 : index
    %222 = vector.load %arg3[%c2_147, %c0_148, %c0_149] : memref<5x9x128xf32, #tpu.memory_space<vmem>>, vector<1x9x128xf32>
    %223 = vector.shape_cast %222 : vector<1x9x128xf32> to vector<9x128xf32>
    %c0_150 = arith.constant 0 : index
    %c0_151 = arith.constant 0 : index
    %c0_152 = arith.constant 0 : index
    %224 = vector.load %arg7[%c0_150, %c0_151, %c0_152] : memref<9x16x16xbf16, #tpu.memory_space<vmem>>, vector<1x16x16xbf16>
    %225 = vector.shape_cast %224 : vector<1x16x16xbf16> to vector<16x16xbf16>
    %cst_153 = arith.constant dense<0.000000e+00> : vector<16x128xf32>
    %226 = tpu.matmul %225, %221, %cst_153 {dimension_numbers = #tpu.dot_dimension_numbers<[1], [0], [0], [1], [0, 0, 1, 1], [], []>} : vector<16x16xbf16>, vector<16x128xbf16>, vector<16x128xf32> -> vector<16x128xf32>
    %227 = vector.extract_strided_slice %223 {offsets = [0, 0], sizes = [1, 128], strides = [1, 1]} : vector<9x128xf32> to vector<1x128xf32>
    %228 = vector.broadcast %227 : vector<1x128xf32> to vector<16x128xf32>
    %229 = arith.mulf %226, %228 : vector<16x128xf32>
    %c1_154 = arith.constant 1 : index
    %c0_155 = arith.constant 0 : index
    %c0_156 = arith.constant 0 : index
    %230 = vector.load %arg7[%c1_154, %c0_155, %c0_156] : memref<9x16x16xbf16, #tpu.memory_space<vmem>>, vector<1x16x16xbf16>
    %231 = vector.shape_cast %230 : vector<1x16x16xbf16> to vector<16x16xbf16>
    %cst_157 = arith.constant dense<0.000000e+00> : vector<16x128xf32>
    %232 = tpu.matmul %231, %221, %cst_157 {dimension_numbers = #tpu.dot_dimension_numbers<[1], [0], [0], [1], [0, 0, 1, 1], [], []>} : vector<16x16xbf16>, vector<16x128xbf16>, vector<16x128xf32> -> vector<16x128xf32>
    %233 = vector.extract_strided_slice %223 {offsets = [1, 0], sizes = [1, 128], strides = [1, 1]} : vector<9x128xf32> to vector<1x128xf32>
    %234 = vector.broadcast %233 : vector<1x128xf32> to vector<16x128xf32>
    %235 = arith.mulf %232, %234 : vector<16x128xf32>
    %236 = arith.addf %229, %235 : vector<16x128xf32>
    %c2_158 = arith.constant 2 : index
    %c0_159 = arith.constant 0 : index
    %c0_160 = arith.constant 0 : index
    %237 = vector.load %arg7[%c2_158, %c0_159, %c0_160] : memref<9x16x16xbf16, #tpu.memory_space<vmem>>, vector<1x16x16xbf16>
    %238 = vector.shape_cast %237 : vector<1x16x16xbf16> to vector<16x16xbf16>
    %cst_161 = arith.constant dense<0.000000e+00> : vector<16x128xf32>
    %239 = tpu.matmul %238, %221, %cst_161 {dimension_numbers = #tpu.dot_dimension_numbers<[1], [0], [0], [1], [0, 0, 1, 1], [], []>} : vector<16x16xbf16>, vector<16x128xbf16>, vector<16x128xf32> -> vector<16x128xf32>
    %240 = vector.extract_strided_slice %223 {offsets = [2, 0], sizes = [1, 128], strides = [1, 1]} : vector<9x128xf32> to vector<1x128xf32>
    %241 = vector.broadcast %240 : vector<1x128xf32> to vector<16x128xf32>
    %242 = arith.mulf %239, %241 : vector<16x128xf32>
    %243 = arith.addf %236, %242 : vector<16x128xf32>
    %c3_162 = arith.constant 3 : index
    %c0_163 = arith.constant 0 : index
    %c0_164 = arith.constant 0 : index
    %244 = vector.load %arg7[%c3_162, %c0_163, %c0_164] : memref<9x16x16xbf16, #tpu.memory_space<vmem>>, vector<1x16x16xbf16>
    %245 = vector.shape_cast %244 : vector<1x16x16xbf16> to vector<16x16xbf16>
    %cst_165 = arith.constant dense<0.000000e+00> : vector<16x128xf32>
    %246 = tpu.matmul %245, %221, %cst_165 {dimension_numbers = #tpu.dot_dimension_numbers<[1], [0], [0], [1], [0, 0, 1, 1], [], []>} : vector<16x16xbf16>, vector<16x128xbf16>, vector<16x128xf32> -> vector<16x128xf32>
    %247 = vector.extract_strided_slice %223 {offsets = [3, 0], sizes = [1, 128], strides = [1, 1]} : vector<9x128xf32> to vector<1x128xf32>
    %248 = vector.broadcast %247 : vector<1x128xf32> to vector<16x128xf32>
    %249 = arith.mulf %246, %248 : vector<16x128xf32>
    %250 = arith.addf %243, %249 : vector<16x128xf32>
    %c4_166 = arith.constant 4 : index
    %c0_167 = arith.constant 0 : index
    %c0_168 = arith.constant 0 : index
    %251 = vector.load %arg7[%c4_166, %c0_167, %c0_168] : memref<9x16x16xbf16, #tpu.memory_space<vmem>>, vector<1x16x16xbf16>
    %252 = vector.shape_cast %251 : vector<1x16x16xbf16> to vector<16x16xbf16>
    %cst_169 = arith.constant dense<0.000000e+00> : vector<16x128xf32>
    %253 = tpu.matmul %252, %221, %cst_169 {dimension_numbers = #tpu.dot_dimension_numbers<[1], [0], [0], [1], [0, 0, 1, 1], [], []>} : vector<16x16xbf16>, vector<16x128xbf16>, vector<16x128xf32> -> vector<16x128xf32>
    %254 = vector.extract_strided_slice %223 {offsets = [4, 0], sizes = [1, 128], strides = [1, 1]} : vector<9x128xf32> to vector<1x128xf32>
    %255 = vector.broadcast %254 : vector<1x128xf32> to vector<16x128xf32>
    %256 = arith.mulf %253, %255 : vector<16x128xf32>
    %257 = arith.addf %250, %256 : vector<16x128xf32>
    %c5_170 = arith.constant 5 : index
    %c0_171 = arith.constant 0 : index
    %c0_172 = arith.constant 0 : index
    %258 = vector.load %arg7[%c5_170, %c0_171, %c0_172] : memref<9x16x16xbf16, #tpu.memory_space<vmem>>, vector<1x16x16xbf16>
    %259 = vector.shape_cast %258 : vector<1x16x16xbf16> to vector<16x16xbf16>
    %cst_173 = arith.constant dense<0.000000e+00> : vector<16x128xf32>
    %260 = tpu.matmul %259, %221, %cst_173 {dimension_numbers = #tpu.dot_dimension_numbers<[1], [0], [0], [1], [0, 0, 1, 1], [], []>} : vector<16x16xbf16>, vector<16x128xbf16>, vector<16x128xf32> -> vector<16x128xf32>
    %261 = vector.extract_strided_slice %223 {offsets = [5, 0], sizes = [1, 128], strides = [1, 1]} : vector<9x128xf32> to vector<1x128xf32>
    %262 = vector.broadcast %261 : vector<1x128xf32> to vector<16x128xf32>
    %263 = arith.mulf %260, %262 : vector<16x128xf32>
    %264 = arith.addf %257, %263 : vector<16x128xf32>
    %c6_174 = arith.constant 6 : index
    %c0_175 = arith.constant 0 : index
    %c0_176 = arith.constant 0 : index
    %265 = vector.load %arg7[%c6_174, %c0_175, %c0_176] : memref<9x16x16xbf16, #tpu.memory_space<vmem>>, vector<1x16x16xbf16>
    %266 = vector.shape_cast %265 : vector<1x16x16xbf16> to vector<16x16xbf16>
    %cst_177 = arith.constant dense<0.000000e+00> : vector<16x128xf32>
    %267 = tpu.matmul %266, %221, %cst_177 {dimension_numbers = #tpu.dot_dimension_numbers<[1], [0], [0], [1], [0, 0, 1, 1], [], []>} : vector<16x16xbf16>, vector<16x128xbf16>, vector<16x128xf32> -> vector<16x128xf32>
    %268 = vector.extract_strided_slice %223 {offsets = [6, 0], sizes = [1, 128], strides = [1, 1]} : vector<9x128xf32> to vector<1x128xf32>
    %269 = vector.broadcast %268 : vector<1x128xf32> to vector<16x128xf32>
    %270 = arith.mulf %267, %269 : vector<16x128xf32>
    %271 = arith.addf %264, %270 : vector<16x128xf32>
    %c7_178 = arith.constant 7 : index
    %c0_179 = arith.constant 0 : index
    %c0_180 = arith.constant 0 : index
    %272 = vector.load %arg7[%c7_178, %c0_179, %c0_180] : memref<9x16x16xbf16, #tpu.memory_space<vmem>>, vector<1x16x16xbf16>
    %273 = vector.shape_cast %272 : vector<1x16x16xbf16> to vector<16x16xbf16>
    %cst_181 = arith.constant dense<0.000000e+00> : vector<16x128xf32>
    %274 = tpu.matmul %273, %221, %cst_181 {dimension_numbers = #tpu.dot_dimension_numbers<[1], [0], [0], [1], [0, 0, 1, 1], [], []>} : vector<16x16xbf16>, vector<16x128xbf16>, vector<16x128xf32> -> vector<16x128xf32>
    %275 = vector.extract_strided_slice %223 {offsets = [7, 0], sizes = [1, 128], strides = [1, 1]} : vector<9x128xf32> to vector<1x128xf32>
    %276 = vector.broadcast %275 : vector<1x128xf32> to vector<16x128xf32>
    %277 = arith.mulf %274, %276 : vector<16x128xf32>
    %278 = arith.addf %271, %277 : vector<16x128xf32>
    %c8_182 = arith.constant 8 : index
    %c0_183 = arith.constant 0 : index
    %c0_184 = arith.constant 0 : index
    %279 = vector.load %arg7[%c8_182, %c0_183, %c0_184] : memref<9x16x16xbf16, #tpu.memory_space<vmem>>, vector<1x16x16xbf16>
    %280 = vector.shape_cast %279 : vector<1x16x16xbf16> to vector<16x16xbf16>
    %cst_185 = arith.constant dense<0.000000e+00> : vector<16x128xf32>
    %281 = tpu.matmul %280, %221, %cst_185 {dimension_numbers = #tpu.dot_dimension_numbers<[1], [0], [0], [1], [0, 0, 1, 1], [], []>} : vector<16x16xbf16>, vector<16x128xbf16>, vector<16x128xf32> -> vector<16x128xf32>
    %282 = vector.extract_strided_slice %223 {offsets = [8, 0], sizes = [1, 128], strides = [1, 1]} : vector<9x128xf32> to vector<1x128xf32>
    %283 = vector.broadcast %282 : vector<1x128xf32> to vector<16x128xf32>
    %284 = arith.mulf %281, %283 : vector<16x128xf32>
    %285 = arith.addf %278, %284 : vector<16x128xf32>
    %c7_186 = arith.constant 7 : index
    %c0_187 = arith.constant 0 : index
    %286 = vector.load %arg4[%c7_186, %c0_187] : memref<16x128xf32, #tpu.memory_space<vmem>>, vector<1x128xf32>
    %287 = vector.broadcast %286 : vector<1x128xf32> to vector<16x128xf32>
    %288 = arith.addf %285, %287 : vector<16x128xf32>
    %289 = arith.truncf %288 : vector<16x128xf32> to vector<16x128xbf16>
    %c5_188 = arith.constant 5 : index
    %c0_189 = arith.constant 0 : index
    %c0_190 = arith.constant 0 : index
    %290 = vector.load %arg2[%c5_188, %c0_189, %c0_190] : memref<11x128x128xbf16, #tpu.memory_space<vmem>>, vector<1x128x128xbf16>
    %291 = vector.shape_cast %290 : vector<1x128x128xbf16> to vector<128x128xbf16>
    %cst_191 = arith.constant dense<0.000000e+00> : vector<16x128xf32>
    %292 = tpu.matmul %289, %291, %cst_191 {dimension_numbers = #tpu.dot_dimension_numbers<[1], [0], [0], [1], [0, 0, 1, 1], [], []>} : vector<16x128xbf16>, vector<128x128xbf16>, vector<16x128xf32> -> vector<16x128xf32>
    %c8_192 = arith.constant 8 : index
    %c0_193 = arith.constant 0 : index
    %293 = vector.load %arg4[%c8_192, %c0_193] : memref<16x128xf32, #tpu.memory_space<vmem>>, vector<1x128xf32>
    %294 = vector.broadcast %293 : vector<1x128xf32> to vector<16x128xf32>
    %295 = arith.addf %292, %294 : vector<16x128xf32>
    %cst_194 = arith.constant 0.000000e+00 : f32
    %296 = vector.broadcast %cst_194 : f32 to vector<16x128xf32>
    %297 = arith.maximumf %295, %296 : vector<16x128xf32>
    %298 = arith.truncf %211 : vector<16x128xf32> to vector<16x128xbf16>
    %c10 = arith.constant 10 : index
    %c0_195 = arith.constant 0 : index
    %c0_196 = arith.constant 0 : index
    %299 = vector.load %arg2[%c10, %c0_195, %c0_196] : memref<11x128x128xbf16, #tpu.memory_space<vmem>>, vector<1x128x128xbf16>
    %300 = vector.shape_cast %299 : vector<1x128x128xbf16> to vector<128x128xbf16>
    %cst_197 = arith.constant dense<0.000000e+00> : vector<16x128xf32>
    %301 = tpu.matmul %298, %300, %cst_197 {dimension_numbers = #tpu.dot_dimension_numbers<[1], [0], [0], [1], [0, 0, 1, 1], [], []>} : vector<16x128xbf16>, vector<128x128xbf16>, vector<16x128xf32> -> vector<16x128xf32>
    %302 = arith.addf %301, %297 : vector<16x128xf32>
    %303 = arith.truncf %302 : vector<16x128xf32> to vector<16x128xbf16>
    %c6_198 = arith.constant 6 : index
    %c0_199 = arith.constant 0 : index
    %c0_200 = arith.constant 0 : index
    %304 = vector.load %arg2[%c6_198, %c0_199, %c0_200] : memref<11x128x128xbf16, #tpu.memory_space<vmem>>, vector<1x128x128xbf16>
    %305 = vector.shape_cast %304 : vector<1x128x128xbf16> to vector<128x128xbf16>
    %cst_201 = arith.constant dense<0.000000e+00> : vector<16x128xf32>
    %306 = tpu.matmul %303, %305, %cst_201 {dimension_numbers = #tpu.dot_dimension_numbers<[1], [0], [0], [1], [0, 0, 1, 1], [], []>} : vector<16x128xbf16>, vector<128x128xbf16>, vector<16x128xf32> -> vector<16x128xf32>
    %c9 = arith.constant 9 : index
    %c0_202 = arith.constant 0 : index
    %307 = vector.load %arg4[%c9, %c0_202] : memref<16x128xf32, #tpu.memory_space<vmem>>, vector<1x128xf32>
    %308 = vector.broadcast %307 : vector<1x128xf32> to vector<16x128xf32>
    %309 = arith.addf %306, %308 : vector<16x128xf32>
    %cst_203 = arith.constant 0.000000e+00 : f32
    %310 = vector.broadcast %cst_203 : f32 to vector<16x128xf32>
    %311 = arith.maximumf %309, %310 : vector<16x128xf32>
    %312 = arith.truncf %311 : vector<16x128xf32> to vector<16x128xbf16>
    %c3_204 = arith.constant 3 : index
    %c0_205 = arith.constant 0 : index
    %c0_206 = arith.constant 0 : index
    %313 = vector.load %arg3[%c3_204, %c0_205, %c0_206] : memref<5x9x128xf32, #tpu.memory_space<vmem>>, vector<1x9x128xf32>
    %314 = vector.shape_cast %313 : vector<1x9x128xf32> to vector<9x128xf32>
    %c0_207 = arith.constant 0 : index
    %c0_208 = arith.constant 0 : index
    %c0_209 = arith.constant 0 : index
    %315 = vector.load %arg7[%c0_207, %c0_208, %c0_209] : memref<9x16x16xbf16, #tpu.memory_space<vmem>>, vector<1x16x16xbf16>
    %316 = vector.shape_cast %315 : vector<1x16x16xbf16> to vector<16x16xbf16>
    %cst_210 = arith.constant dense<0.000000e+00> : vector<16x128xf32>
    %317 = tpu.matmul %316, %312, %cst_210 {dimension_numbers = #tpu.dot_dimension_numbers<[1], [0], [0], [1], [0, 0, 1, 1], [], []>} : vector<16x16xbf16>, vector<16x128xbf16>, vector<16x128xf32> -> vector<16x128xf32>
    %318 = vector.extract_strided_slice %314 {offsets = [0, 0], sizes = [1, 128], strides = [1, 1]} : vector<9x128xf32> to vector<1x128xf32>
    %319 = vector.broadcast %318 : vector<1x128xf32> to vector<16x128xf32>
    %320 = arith.mulf %317, %319 : vector<16x128xf32>
    %c1_211 = arith.constant 1 : index
    %c0_212 = arith.constant 0 : index
    %c0_213 = arith.constant 0 : index
    %321 = vector.load %arg7[%c1_211, %c0_212, %c0_213] : memref<9x16x16xbf16, #tpu.memory_space<vmem>>, vector<1x16x16xbf16>
    %322 = vector.shape_cast %321 : vector<1x16x16xbf16> to vector<16x16xbf16>
    %cst_214 = arith.constant dense<0.000000e+00> : vector<16x128xf32>
    %323 = tpu.matmul %322, %312, %cst_214 {dimension_numbers = #tpu.dot_dimension_numbers<[1], [0], [0], [1], [0, 0, 1, 1], [], []>} : vector<16x16xbf16>, vector<16x128xbf16>, vector<16x128xf32> -> vector<16x128xf32>
    %324 = vector.extract_strided_slice %314 {offsets = [1, 0], sizes = [1, 128], strides = [1, 1]} : vector<9x128xf32> to vector<1x128xf32>
    %325 = vector.broadcast %324 : vector<1x128xf32> to vector<16x128xf32>
    %326 = arith.mulf %323, %325 : vector<16x128xf32>
    %327 = arith.addf %320, %326 : vector<16x128xf32>
    %c2_215 = arith.constant 2 : index
    %c0_216 = arith.constant 0 : index
    %c0_217 = arith.constant 0 : index
    %328 = vector.load %arg7[%c2_215, %c0_216, %c0_217] : memref<9x16x16xbf16, #tpu.memory_space<vmem>>, vector<1x16x16xbf16>
    %329 = vector.shape_cast %328 : vector<1x16x16xbf16> to vector<16x16xbf16>
    %cst_218 = arith.constant dense<0.000000e+00> : vector<16x128xf32>
    %330 = tpu.matmul %329, %312, %cst_218 {dimension_numbers = #tpu.dot_dimension_numbers<[1], [0], [0], [1], [0, 0, 1, 1], [], []>} : vector<16x16xbf16>, vector<16x128xbf16>, vector<16x128xf32> -> vector<16x128xf32>
    %331 = vector.extract_strided_slice %314 {offsets = [2, 0], sizes = [1, 128], strides = [1, 1]} : vector<9x128xf32> to vector<1x128xf32>
    %332 = vector.broadcast %331 : vector<1x128xf32> to vector<16x128xf32>
    %333 = arith.mulf %330, %332 : vector<16x128xf32>
    %334 = arith.addf %327, %333 : vector<16x128xf32>
    %c3_219 = arith.constant 3 : index
    %c0_220 = arith.constant 0 : index
    %c0_221 = arith.constant 0 : index
    %335 = vector.load %arg7[%c3_219, %c0_220, %c0_221] : memref<9x16x16xbf16, #tpu.memory_space<vmem>>, vector<1x16x16xbf16>
    %336 = vector.shape_cast %335 : vector<1x16x16xbf16> to vector<16x16xbf16>
    %cst_222 = arith.constant dense<0.000000e+00> : vector<16x128xf32>
    %337 = tpu.matmul %336, %312, %cst_222 {dimension_numbers = #tpu.dot_dimension_numbers<[1], [0], [0], [1], [0, 0, 1, 1], [], []>} : vector<16x16xbf16>, vector<16x128xbf16>, vector<16x128xf32> -> vector<16x128xf32>
    %338 = vector.extract_strided_slice %314 {offsets = [3, 0], sizes = [1, 128], strides = [1, 1]} : vector<9x128xf32> to vector<1x128xf32>
    %339 = vector.broadcast %338 : vector<1x128xf32> to vector<16x128xf32>
    %340 = arith.mulf %337, %339 : vector<16x128xf32>
    %341 = arith.addf %334, %340 : vector<16x128xf32>
    %c4_223 = arith.constant 4 : index
    %c0_224 = arith.constant 0 : index
    %c0_225 = arith.constant 0 : index
    %342 = vector.load %arg7[%c4_223, %c0_224, %c0_225] : memref<9x16x16xbf16, #tpu.memory_space<vmem>>, vector<1x16x16xbf16>
    %343 = vector.shape_cast %342 : vector<1x16x16xbf16> to vector<16x16xbf16>
    %cst_226 = arith.constant dense<0.000000e+00> : vector<16x128xf32>
    %344 = tpu.matmul %343, %312, %cst_226 {dimension_numbers = #tpu.dot_dimension_numbers<[1], [0], [0], [1], [0, 0, 1, 1], [], []>} : vector<16x16xbf16>, vector<16x128xbf16>, vector<16x128xf32> -> vector<16x128xf32>
    %345 = vector.extract_strided_slice %314 {offsets = [4, 0], sizes = [1, 128], strides = [1, 1]} : vector<9x128xf32> to vector<1x128xf32>
    %346 = vector.broadcast %345 : vector<1x128xf32> to vector<16x128xf32>
    %347 = arith.mulf %344, %346 : vector<16x128xf32>
    %348 = arith.addf %341, %347 : vector<16x128xf32>
    %c5_227 = arith.constant 5 : index
    %c0_228 = arith.constant 0 : index
    %c0_229 = arith.constant 0 : index
    %349 = vector.load %arg7[%c5_227, %c0_228, %c0_229] : memref<9x16x16xbf16, #tpu.memory_space<vmem>>, vector<1x16x16xbf16>
    %350 = vector.shape_cast %349 : vector<1x16x16xbf16> to vector<16x16xbf16>
    %cst_230 = arith.constant dense<0.000000e+00> : vector<16x128xf32>
    %351 = tpu.matmul %350, %312, %cst_230 {dimension_numbers = #tpu.dot_dimension_numbers<[1], [0], [0], [1], [0, 0, 1, 1], [], []>} : vector<16x16xbf16>, vector<16x128xbf16>, vector<16x128xf32> -> vector<16x128xf32>
    %352 = vector.extract_strided_slice %314 {offsets = [5, 0], sizes = [1, 128], strides = [1, 1]} : vector<9x128xf32> to vector<1x128xf32>
    %353 = vector.broadcast %352 : vector<1x128xf32> to vector<16x128xf32>
    %354 = arith.mulf %351, %353 : vector<16x128xf32>
    %355 = arith.addf %348, %354 : vector<16x128xf32>
    %c6_231 = arith.constant 6 : index
    %c0_232 = arith.constant 0 : index
    %c0_233 = arith.constant 0 : index
    %356 = vector.load %arg7[%c6_231, %c0_232, %c0_233] : memref<9x16x16xbf16, #tpu.memory_space<vmem>>, vector<1x16x16xbf16>
    %357 = vector.shape_cast %356 : vector<1x16x16xbf16> to vector<16x16xbf16>
    %cst_234 = arith.constant dense<0.000000e+00> : vector<16x128xf32>
    %358 = tpu.matmul %357, %312, %cst_234 {dimension_numbers = #tpu.dot_dimension_numbers<[1], [0], [0], [1], [0, 0, 1, 1], [], []>} : vector<16x16xbf16>, vector<16x128xbf16>, vector<16x128xf32> -> vector<16x128xf32>
    %359 = vector.extract_strided_slice %314 {offsets = [6, 0], sizes = [1, 128], strides = [1, 1]} : vector<9x128xf32> to vector<1x128xf32>
    %360 = vector.broadcast %359 : vector<1x128xf32> to vector<16x128xf32>
    %361 = arith.mulf %358, %360 : vector<16x128xf32>
    %362 = arith.addf %355, %361 : vector<16x128xf32>
    %c7_235 = arith.constant 7 : index
    %c0_236 = arith.constant 0 : index
    %c0_237 = arith.constant 0 : index
    %363 = vector.load %arg7[%c7_235, %c0_236, %c0_237] : memref<9x16x16xbf16, #tpu.memory_space<vmem>>, vector<1x16x16xbf16>
    %364 = vector.shape_cast %363 : vector<1x16x16xbf16> to vector<16x16xbf16>
    %cst_238 = arith.constant dense<0.000000e+00> : vector<16x128xf32>
    %365 = tpu.matmul %364, %312, %cst_238 {dimension_numbers = #tpu.dot_dimension_numbers<[1], [0], [0], [1], [0, 0, 1, 1], [], []>} : vector<16x16xbf16>, vector<16x128xbf16>, vector<16x128xf32> -> vector<16x128xf32>
    %366 = vector.extract_strided_slice %314 {offsets = [7, 0], sizes = [1, 128], strides = [1, 1]} : vector<9x128xf32> to vector<1x128xf32>
    %367 = vector.broadcast %366 : vector<1x128xf32> to vector<16x128xf32>
    %368 = arith.mulf %365, %367 : vector<16x128xf32>
    %369 = arith.addf %362, %368 : vector<16x128xf32>
    %c8_239 = arith.constant 8 : index
    %c0_240 = arith.constant 0 : index
    %c0_241 = arith.constant 0 : index
    %370 = vector.load %arg7[%c8_239, %c0_240, %c0_241] : memref<9x16x16xbf16, #tpu.memory_space<vmem>>, vector<1x16x16xbf16>
    %371 = vector.shape_cast %370 : vector<1x16x16xbf16> to vector<16x16xbf16>
    %cst_242 = arith.constant dense<0.000000e+00> : vector<16x128xf32>
    %372 = tpu.matmul %371, %312, %cst_242 {dimension_numbers = #tpu.dot_dimension_numbers<[1], [0], [0], [1], [0, 0, 1, 1], [], []>} : vector<16x16xbf16>, vector<16x128xbf16>, vector<16x128xf32> -> vector<16x128xf32>
    %373 = vector.extract_strided_slice %314 {offsets = [8, 0], sizes = [1, 128], strides = [1, 1]} : vector<9x128xf32> to vector<1x128xf32>
    %374 = vector.broadcast %373 : vector<1x128xf32> to vector<16x128xf32>
    %375 = arith.mulf %372, %374 : vector<16x128xf32>
    %376 = arith.addf %369, %375 : vector<16x128xf32>
    %c10_243 = arith.constant 10 : index
    %c0_244 = arith.constant 0 : index
    %377 = vector.load %arg4[%c10_243, %c0_244] : memref<16x128xf32, #tpu.memory_space<vmem>>, vector<1x128xf32>
    %378 = vector.broadcast %377 : vector<1x128xf32> to vector<16x128xf32>
    %379 = arith.addf %376, %378 : vector<16x128xf32>
    %380 = arith.truncf %379 : vector<16x128xf32> to vector<16x128xbf16>
    %c7_245 = arith.constant 7 : index
    %c0_246 = arith.constant 0 : index
    %c0_247 = arith.constant 0 : index
    %381 = vector.load %arg2[%c7_245, %c0_246, %c0_247] : memref<11x128x128xbf16, #tpu.memory_space<vmem>>, vector<1x128x128xbf16>
    %382 = vector.shape_cast %381 : vector<1x128x128xbf16> to vector<128x128xbf16>
    %cst_248 = arith.constant dense<0.000000e+00> : vector<16x128xf32>
    %383 = tpu.matmul %380, %382, %cst_248 {dimension_numbers = #tpu.dot_dimension_numbers<[1], [0], [0], [1], [0, 0, 1, 1], [], []>} : vector<16x128xbf16>, vector<128x128xbf16>, vector<16x128xf32> -> vector<16x128xf32>
    %c11 = arith.constant 11 : index
    %c0_249 = arith.constant 0 : index
    %384 = vector.load %arg4[%c11, %c0_249] : memref<16x128xf32, #tpu.memory_space<vmem>>, vector<1x128xf32>
    %385 = vector.broadcast %384 : vector<1x128xf32> to vector<16x128xf32>
    %386 = arith.addf %383, %385 : vector<16x128xf32>
    %cst_250 = arith.constant 0.000000e+00 : f32
    %387 = vector.broadcast %cst_250 : f32 to vector<16x128xf32>
    %388 = arith.maximumf %386, %387 : vector<16x128xf32>
    %389 = arith.truncf %302 : vector<16x128xf32> to vector<16x128xbf16>
    %c10_251 = arith.constant 10 : index
    %c0_252 = arith.constant 0 : index
    %c0_253 = arith.constant 0 : index
    %390 = vector.load %arg2[%c10_251, %c0_252, %c0_253] : memref<11x128x128xbf16, #tpu.memory_space<vmem>>, vector<1x128x128xbf16>
    %391 = vector.shape_cast %390 : vector<1x128x128xbf16> to vector<128x128xbf16>
    %cst_254 = arith.constant dense<0.000000e+00> : vector<16x128xf32>
    %392 = tpu.matmul %389, %391, %cst_254 {dimension_numbers = #tpu.dot_dimension_numbers<[1], [0], [0], [1], [0, 0, 1, 1], [], []>} : vector<16x128xbf16>, vector<128x128xbf16>, vector<16x128xf32> -> vector<16x128xf32>
    %393 = arith.addf %392, %388 : vector<16x128xf32>
    %394 = arith.truncf %393 : vector<16x128xf32> to vector<16x128xbf16>
    %c8_255 = arith.constant 8 : index
    %c0_256 = arith.constant 0 : index
    %c0_257 = arith.constant 0 : index
    %395 = vector.load %arg2[%c8_255, %c0_256, %c0_257] : memref<11x128x128xbf16, #tpu.memory_space<vmem>>, vector<1x128x128xbf16>
    %396 = vector.shape_cast %395 : vector<1x128x128xbf16> to vector<128x128xbf16>
    %cst_258 = arith.constant dense<0.000000e+00> : vector<16x128xf32>
    %397 = tpu.matmul %394, %396, %cst_258 {dimension_numbers = #tpu.dot_dimension_numbers<[1], [0], [0], [1], [0, 0, 1, 1], [], []>} : vector<16x128xbf16>, vector<128x128xbf16>, vector<16x128xf32> -> vector<16x128xf32>
    %c12 = arith.constant 12 : index
    %c0_259 = arith.constant 0 : index
    %398 = vector.load %arg4[%c12, %c0_259] : memref<16x128xf32, #tpu.memory_space<vmem>>, vector<1x128xf32>
    %399 = vector.broadcast %398 : vector<1x128xf32> to vector<16x128xf32>
    %400 = arith.addf %397, %399 : vector<16x128xf32>
    %cst_260 = arith.constant 0.000000e+00 : f32
    %401 = vector.broadcast %cst_260 : f32 to vector<16x128xf32>
    %402 = arith.maximumf %400, %401 : vector<16x128xf32>
    %403 = arith.truncf %402 : vector<16x128xf32> to vector<16x128xbf16>
    %c4_261 = arith.constant 4 : index
    %c0_262 = arith.constant 0 : index
    %c0_263 = arith.constant 0 : index
    %404 = vector.load %arg3[%c4_261, %c0_262, %c0_263] : memref<5x9x128xf32, #tpu.memory_space<vmem>>, vector<1x9x128xf32>
    %405 = vector.shape_cast %404 : vector<1x9x128xf32> to vector<9x128xf32>
    %c0_264 = arith.constant 0 : index
    %c0_265 = arith.constant 0 : index
    %c0_266 = arith.constant 0 : index
    %406 = vector.load %arg7[%c0_264, %c0_265, %c0_266] : memref<9x16x16xbf16, #tpu.memory_space<vmem>>, vector<1x16x16xbf16>
    %407 = vector.shape_cast %406 : vector<1x16x16xbf16> to vector<16x16xbf16>
    %cst_267 = arith.constant dense<0.000000e+00> : vector<16x128xf32>
    %408 = tpu.matmul %407, %403, %cst_267 {dimension_numbers = #tpu.dot_dimension_numbers<[1], [0], [0], [1], [0, 0, 1, 1], [], []>} : vector<16x16xbf16>, vector<16x128xbf16>, vector<16x128xf32> -> vector<16x128xf32>
    %409 = vector.extract_strided_slice %405 {offsets = [0, 0], sizes = [1, 128], strides = [1, 1]} : vector<9x128xf32> to vector<1x128xf32>
    %410 = vector.broadcast %409 : vector<1x128xf32> to vector<16x128xf32>
    %411 = arith.mulf %408, %410 : vector<16x128xf32>
    %c1_268 = arith.constant 1 : index
    %c0_269 = arith.constant 0 : index
    %c0_270 = arith.constant 0 : index
    %412 = vector.load %arg7[%c1_268, %c0_269, %c0_270] : memref<9x16x16xbf16, #tpu.memory_space<vmem>>, vector<1x16x16xbf16>
    %413 = vector.shape_cast %412 : vector<1x16x16xbf16> to vector<16x16xbf16>
    %cst_271 = arith.constant dense<0.000000e+00> : vector<16x128xf32>
    %414 = tpu.matmul %413, %403, %cst_271 {dimension_numbers = #tpu.dot_dimension_numbers<[1], [0], [0], [1], [0, 0, 1, 1], [], []>} : vector<16x16xbf16>, vector<16x128xbf16>, vector<16x128xf32> -> vector<16x128xf32>
    %415 = vector.extract_strided_slice %405 {offsets = [1, 0], sizes = [1, 128], strides = [1, 1]} : vector<9x128xf32> to vector<1x128xf32>
    %416 = vector.broadcast %415 : vector<1x128xf32> to vector<16x128xf32>
    %417 = arith.mulf %414, %416 : vector<16x128xf32>
    %418 = arith.addf %411, %417 : vector<16x128xf32>
    %c2_272 = arith.constant 2 : index
    %c0_273 = arith.constant 0 : index
    %c0_274 = arith.constant 0 : index
    %419 = vector.load %arg7[%c2_272, %c0_273, %c0_274] : memref<9x16x16xbf16, #tpu.memory_space<vmem>>, vector<1x16x16xbf16>
    %420 = vector.shape_cast %419 : vector<1x16x16xbf16> to vector<16x16xbf16>
    %cst_275 = arith.constant dense<0.000000e+00> : vector<16x128xf32>
    %421 = tpu.matmul %420, %403, %cst_275 {dimension_numbers = #tpu.dot_dimension_numbers<[1], [0], [0], [1], [0, 0, 1, 1], [], []>} : vector<16x16xbf16>, vector<16x128xbf16>, vector<16x128xf32> -> vector<16x128xf32>
    %422 = vector.extract_strided_slice %405 {offsets = [2, 0], sizes = [1, 128], strides = [1, 1]} : vector<9x128xf32> to vector<1x128xf32>
    %423 = vector.broadcast %422 : vector<1x128xf32> to vector<16x128xf32>
    %424 = arith.mulf %421, %423 : vector<16x128xf32>
    %425 = arith.addf %418, %424 : vector<16x128xf32>
    %c3_276 = arith.constant 3 : index
    %c0_277 = arith.constant 0 : index
    %c0_278 = arith.constant 0 : index
    %426 = vector.load %arg7[%c3_276, %c0_277, %c0_278] : memref<9x16x16xbf16, #tpu.memory_space<vmem>>, vector<1x16x16xbf16>
    %427 = vector.shape_cast %426 : vector<1x16x16xbf16> to vector<16x16xbf16>
    %cst_279 = arith.constant dense<0.000000e+00> : vector<16x128xf32>
    %428 = tpu.matmul %427, %403, %cst_279 {dimension_numbers = #tpu.dot_dimension_numbers<[1], [0], [0], [1], [0, 0, 1, 1], [], []>} : vector<16x16xbf16>, vector<16x128xbf16>, vector<16x128xf32> -> vector<16x128xf32>
    %429 = vector.extract_strided_slice %405 {offsets = [3, 0], sizes = [1, 128], strides = [1, 1]} : vector<9x128xf32> to vector<1x128xf32>
    %430 = vector.broadcast %429 : vector<1x128xf32> to vector<16x128xf32>
    %431 = arith.mulf %428, %430 : vector<16x128xf32>
    %432 = arith.addf %425, %431 : vector<16x128xf32>
    %c4_280 = arith.constant 4 : index
    %c0_281 = arith.constant 0 : index
    %c0_282 = arith.constant 0 : index
    %433 = vector.load %arg7[%c4_280, %c0_281, %c0_282] : memref<9x16x16xbf16, #tpu.memory_space<vmem>>, vector<1x16x16xbf16>
    %434 = vector.shape_cast %433 : vector<1x16x16xbf16> to vector<16x16xbf16>
    %cst_283 = arith.constant dense<0.000000e+00> : vector<16x128xf32>
    %435 = tpu.matmul %434, %403, %cst_283 {dimension_numbers = #tpu.dot_dimension_numbers<[1], [0], [0], [1], [0, 0, 1, 1], [], []>} : vector<16x16xbf16>, vector<16x128xbf16>, vector<16x128xf32> -> vector<16x128xf32>
    %436 = vector.extract_strided_slice %405 {offsets = [4, 0], sizes = [1, 128], strides = [1, 1]} : vector<9x128xf32> to vector<1x128xf32>
    %437 = vector.broadcast %436 : vector<1x128xf32> to vector<16x128xf32>
    %438 = arith.mulf %435, %437 : vector<16x128xf32>
    %439 = arith.addf %432, %438 : vector<16x128xf32>
    %c5_284 = arith.constant 5 : index
    %c0_285 = arith.constant 0 : index
    %c0_286 = arith.constant 0 : index
    %440 = vector.load %arg7[%c5_284, %c0_285, %c0_286] : memref<9x16x16xbf16, #tpu.memory_space<vmem>>, vector<1x16x16xbf16>
    %441 = vector.shape_cast %440 : vector<1x16x16xbf16> to vector<16x16xbf16>
    %cst_287 = arith.constant dense<0.000000e+00> : vector<16x128xf32>
    %442 = tpu.matmul %441, %403, %cst_287 {dimension_numbers = #tpu.dot_dimension_numbers<[1], [0], [0], [1], [0, 0, 1, 1], [], []>} : vector<16x16xbf16>, vector<16x128xbf16>, vector<16x128xf32> -> vector<16x128xf32>
    %443 = vector.extract_strided_slice %405 {offsets = [5, 0], sizes = [1, 128], strides = [1, 1]} : vector<9x128xf32> to vector<1x128xf32>
    %444 = vector.broadcast %443 : vector<1x128xf32> to vector<16x128xf32>
    %445 = arith.mulf %442, %444 : vector<16x128xf32>
    %446 = arith.addf %439, %445 : vector<16x128xf32>
    %c6_288 = arith.constant 6 : index
    %c0_289 = arith.constant 0 : index
    %c0_290 = arith.constant 0 : index
    %447 = vector.load %arg7[%c6_288, %c0_289, %c0_290] : memref<9x16x16xbf16, #tpu.memory_space<vmem>>, vector<1x16x16xbf16>
    %448 = vector.shape_cast %447 : vector<1x16x16xbf16> to vector<16x16xbf16>
    %cst_291 = arith.constant dense<0.000000e+00> : vector<16x128xf32>
    %449 = tpu.matmul %448, %403, %cst_291 {dimension_numbers = #tpu.dot_dimension_numbers<[1], [0], [0], [1], [0, 0, 1, 1], [], []>} : vector<16x16xbf16>, vector<16x128xbf16>, vector<16x128xf32> -> vector<16x128xf32>
    %450 = vector.extract_strided_slice %405 {offsets = [6, 0], sizes = [1, 128], strides = [1, 1]} : vector<9x128xf32> to vector<1x128xf32>
    %451 = vector.broadcast %450 : vector<1x128xf32> to vector<16x128xf32>
    %452 = arith.mulf %449, %451 : vector<16x128xf32>
    %453 = arith.addf %446, %452 : vector<16x128xf32>
    %c7_292 = arith.constant 7 : index
    %c0_293 = arith.constant 0 : index
    %c0_294 = arith.constant 0 : index
    %454 = vector.load %arg7[%c7_292, %c0_293, %c0_294] : memref<9x16x16xbf16, #tpu.memory_space<vmem>>, vector<1x16x16xbf16>
    %455 = vector.shape_cast %454 : vector<1x16x16xbf16> to vector<16x16xbf16>
    %cst_295 = arith.constant dense<0.000000e+00> : vector<16x128xf32>
    %456 = tpu.matmul %455, %403, %cst_295 {dimension_numbers = #tpu.dot_dimension_numbers<[1], [0], [0], [1], [0, 0, 1, 1], [], []>} : vector<16x16xbf16>, vector<16x128xbf16>, vector<16x128xf32> -> vector<16x128xf32>
    %457 = vector.extract_strided_slice %405 {offsets = [7, 0], sizes = [1, 128], strides = [1, 1]} : vector<9x128xf32> to vector<1x128xf32>
    %458 = vector.broadcast %457 : vector<1x128xf32> to vector<16x128xf32>
    %459 = arith.mulf %456, %458 : vector<16x128xf32>
    %460 = arith.addf %453, %459 : vector<16x128xf32>
    %c8_296 = arith.constant 8 : index
    %c0_297 = arith.constant 0 : index
    %c0_298 = arith.constant 0 : index
    %461 = vector.load %arg7[%c8_296, %c0_297, %c0_298] : memref<9x16x16xbf16, #tpu.memory_space<vmem>>, vector<1x16x16xbf16>
    %462 = vector.shape_cast %461 : vector<1x16x16xbf16> to vector<16x16xbf16>
    %cst_299 = arith.constant dense<0.000000e+00> : vector<16x128xf32>
    %463 = tpu.matmul %462, %403, %cst_299 {dimension_numbers = #tpu.dot_dimension_numbers<[1], [0], [0], [1], [0, 0, 1, 1], [], []>} : vector<16x16xbf16>, vector<16x128xbf16>, vector<16x128xf32> -> vector<16x128xf32>
    %464 = vector.extract_strided_slice %405 {offsets = [8, 0], sizes = [1, 128], strides = [1, 1]} : vector<9x128xf32> to vector<1x128xf32>
    %465 = vector.broadcast %464 : vector<1x128xf32> to vector<16x128xf32>
    %466 = arith.mulf %463, %465 : vector<16x128xf32>
    %467 = arith.addf %460, %466 : vector<16x128xf32>
    %c13 = arith.constant 13 : index
    %c0_300 = arith.constant 0 : index
    %468 = vector.load %arg4[%c13, %c0_300] : memref<16x128xf32, #tpu.memory_space<vmem>>, vector<1x128xf32>
    %469 = vector.broadcast %468 : vector<1x128xf32> to vector<16x128xf32>
    %470 = arith.addf %467, %469 : vector<16x128xf32>
    %471 = arith.truncf %470 : vector<16x128xf32> to vector<16x128xbf16>
    %c9_301 = arith.constant 9 : index
    %c0_302 = arith.constant 0 : index
    %c0_303 = arith.constant 0 : index
    %472 = vector.load %arg2[%c9_301, %c0_302, %c0_303] : memref<11x128x128xbf16, #tpu.memory_space<vmem>>, vector<1x128x128xbf16>
    %473 = vector.shape_cast %472 : vector<1x128x128xbf16> to vector<128x128xbf16>
    %cst_304 = arith.constant dense<0.000000e+00> : vector<16x128xf32>
    %474 = tpu.matmul %471, %473, %cst_304 {dimension_numbers = #tpu.dot_dimension_numbers<[1], [0], [0], [1], [0, 0, 1, 1], [], []>} : vector<16x128xbf16>, vector<128x128xbf16>, vector<16x128xf32> -> vector<16x128xf32>
    %c14 = arith.constant 14 : index
    %c0_305 = arith.constant 0 : index
    %475 = vector.load %arg4[%c14, %c0_305] : memref<16x128xf32, #tpu.memory_space<vmem>>, vector<1x128xf32>
    %476 = vector.broadcast %475 : vector<1x128xf32> to vector<16x128xf32>
    %477 = arith.addf %474, %476 : vector<16x128xf32>
    %cst_306 = arith.constant 0.000000e+00 : f32
    %478 = vector.broadcast %cst_306 : f32 to vector<16x128xf32>
    %479 = arith.maximumf %477, %478 : vector<16x128xf32>
    %480 = arith.truncf %393 : vector<16x128xf32> to vector<16x128xbf16>
    %c10_307 = arith.constant 10 : index
    %c0_308 = arith.constant 0 : index
    %c0_309 = arith.constant 0 : index
    %481 = vector.load %arg2[%c10_307, %c0_308, %c0_309] : memref<11x128x128xbf16, #tpu.memory_space<vmem>>, vector<1x128x128xbf16>
    %482 = vector.shape_cast %481 : vector<1x128x128xbf16> to vector<128x128xbf16>
    %cst_310 = arith.constant dense<0.000000e+00> : vector<16x128xf32>
    %483 = tpu.matmul %480, %482, %cst_310 {dimension_numbers = #tpu.dot_dimension_numbers<[1], [0], [0], [1], [0, 0, 1, 1], [], []>} : vector<16x128xbf16>, vector<128x128xbf16>, vector<16x128xf32> -> vector<16x128xf32>
    %484 = arith.addf %483, %479 : vector<16x128xf32>
    %c0_311 = arith.constant 0 : index
    %c0_312 = arith.constant 0 : index
    %c0_313 = arith.constant 0 : index
    %485 = vector.load %arg8[%c0_311, %c0_312, %c0_313] : memref<1x16x128xf32, #tpu.memory_space<vmem>>, vector<1x16x128xf32>
    %486 = vector.shape_cast %485 : vector<1x16x128xf32> to vector<16x128xf32>
    %487 = vector.shape_cast %484 : vector<16x128xf32> to vector<1x16x128xf32>
    tpu.vector_store %arg8[%c0_311, %c0_312, %c0_313], %487 {strides = array<i32>} : memref<1x16x128xf32, #tpu.memory_space<vmem>>, vector<1x16x128xf32>,
    return
  }
  func.func @transform_0(%arg0: i32) -> (i32, i32, i32) {
    %c0_i32 = arith.constant 0 : i32
    %c0_i32_0 = arith.constant 0 : i32
    %c0_i32_1 = arith.constant 0 : i32
    return %arg0, %c0_i32, %c0_i32_0 : i32, i32, i32
  }
  func.func @transform_1(%arg0: i32) -> (i32, i32, i32) {
    %c0_i32 = arith.constant 0 : i32
    %c0_i32_0 = arith.constant 0 : i32
    %c0_i32_1 = arith.constant 0 : i32
    %c0_i32_2 = arith.constant 0 : i32
    return %c0_i32, %c0_i32_0, %c0_i32_1 : i32, i32, i32
  }
  func.func @transform_2(%arg0: i32) -> (i32, i32, i32) {
    %c0_i32 = arith.constant 0 : i32
    %c0_i32_0 = arith.constant 0 : i32
    %c0_i32_1 = arith.constant 0 : i32
    %c0_i32_2 = arith.constant 0 : i32
    return %c0_i32, %c0_i32_0, %c0_i32_1 : i32, i32, i32
  }
  func.func @transform_3(%arg0: i32) -> (i32, i32) {
    %c0_i32 = arith.constant 0 : i32
    %c0_i32_0 = arith.constant 0 : i32
    %c0_i32_1 = arith.constant 0 : i32
    return %c0_i32, %c0_i32_0 : i32, i32
  }
  func.func @transform_4(%arg0: i32) -> (i32, i32, i32) {
    %c0_i32 = arith.constant 0 : i32
    %c0_i32_0 = arith.constant 0 : i32
    %c0_i32_1 = arith.constant 0 : i32
    %c0_i32_2 = arith.constant 0 : i32
    return %c0_i32, %c0_i32_0, %c0_i32_1 : i32, i32, i32
  }
  func.func @transform_5(%arg0: i32) -> (i32, i32, i32) {
    %c0_i32 = arith.constant 0 : i32
    %c0_i32_0 = arith.constant 0 : i32
    %c0_i32_1 = arith.constant 0 : i32
    %c0_i32_2 = arith.constant 0 : i32
    return %c0_i32, %c0_i32_0, %c0_i32_1 : i32, i32, i32
  }
  func.func @transform_6(%arg0: i32) -> (i32, i32, i32) {
    %c0_i32 = arith.constant 0 : i32
    %c0_i32_0 = arith.constant 0 : i32
    %c0_i32_1 = arith.constant 0 : i32
    %c0_i32_2 = arith.constant 0 : i32
    return %c0_i32, %c0_i32_0, %c0_i32_1 : i32, i32, i32
  }
  func.func @transform_7(%arg0: i32) -> (i32, i32, i32) {
    %c0_i32 = arith.constant 0 : i32
    %c0_i32_0 = arith.constant 0 : i32
    %c0_i32_1 = arith.constant 0 : i32
    return %arg0, %c0_i32, %c0_i32_0 : i32, i32, i32
  }
}

</mosaic_0001>

<llo_original>
// kernel: shufflenet_v2_8_forward.1
$region0: #{shufflenet_v2_8_forward.1}
  #allocation0 [shape = 'u32[]', space=smem, size = 0x4, offset = 0x4, fixed_abs, tag = 'smem constant byte address 0x4 - core index']
  #allocation1 [shape = 'u32[144,128]{1,0:T(1,128)}', space=vmem, size = 0x12000, scoped, tag = 'internal scratch']
  %s0 = inlined_call_operand.vmem [shape: bf16[2,256,128], index: 0, kind: input, shape index: {}]
  %s1 = inlined_call_operand.vmem [shape: bf16[11,128,128], index: 1, kind: input, shape index: {}]
  %s2 = inlined_call_operand.vmem [shape: f32[5,9,128], index: 2, kind: input, shape index: {}]
  %s3 = inlined_call_operand.vmem [shape: f32[16,128], index: 3, kind: input, shape index: {}]
  %s4 = inlined_call_operand.vmem [shape: bf16[9,64,256], index: 4, kind: input, shape index: {}]
  %s5 = inlined_call_operand.vmem [shape: bf16[9,16,64], index: 5, kind: input, shape index: {}]
  %s6 = inlined_call_operand.vmem [shape: bf16[9,16,16], index: 6, kind: input, shape index: {}]
  %s7 = inlined_call_operand.vmem [shape: f32[2,16,128], index: 7, kind: output, shape index: {}]
  %s8 = sld [smem:[#allocation0]]
  $region61: #{shufflenet_v2_8_forward.1} parent=0
    _
  %s10 = ssub.s32 1, %s8
  %s11 = scalar_select 0, %s10, %s8
  loop: start=0, step=1, limit=4
  $region2: #{shufflenet_v2_8_forward.1} parent=0 // loop_pre_header
    _
  $region3: #{shufflenet_v2_8_forward.1} parent=0 // loop_header
    %s13 = sphi 0, %s17
    %p14 = scmp.ge.s32.totalorder %s13, 4
    %s23 = sphi 0, %s25
    %s26 = sphi 0, %s23
    %s27 = sphi 0, %s26
    %s43 = sphi 0, %s27
    %s47 = sphi 0, %s47
    %s49 = sphi 0, %s47
    %s50 = sphi 0, %s49
    %s64 = sphi 0, %s50
    %s68 = sphi 0, %s68
    %s70 = sphi 0, %s68
    %s71 = sphi 0, %s70
    %s85 = sphi 0, %s71
    %s89 = sphi 0, %s89
    %s91 = sphi 0, %s89
    %s92 = sphi 0, %s91
    %s106 = sphi 0, %s92
    %s110 = sphi 0, %s110
    %s112 = sphi 0, %s110
    %s113 = sphi 0, %s112
    %s127 = sphi 0, %s113
    %s131 = sphi 0, %s131
    %s133 = sphi 0, %s131
    %s134 = sphi 0, %s133
    %s148 = sphi 0, %s134
    %s152 = sphi 0, %s152
    %s154 = sphi 0, %s152
    %s155 = sphi 0, %s154
    %s169 = sphi 0, %s155
    %s175 = sphi 0, %s177
    %s178 = sphi 0, %s175
    %s179 = sphi 0, %s178
    %s195 = sphi 0, %s179
  $region4: #{shufflenet_v2_8_forward.1} parent=0 // loop_header_branch
    %16 = sbr.rel (%p14) target = $region8
  $region5: #{shufflenet_v2_8_forward.1} parent=0 // loop_body
    %s18 = ssub.s32 %s13, 1
    %s19 = ssub.s32 %s13, 2
    %s20 = sadd.s32 %s13, 1
    %s21 = ssub.s32 %s13, %s20
    %p22 = scmp.eq.s32.totalorder %s21, 0
    %s24 = sadd.s32 %s23, 1
    %s25 = scalar_select %p22, %s23, %s24
    %p28 = pneg %p22
    %p29 = scmp.eq.s32.totalorder %s13, 1
    %p30 = por %p28, %p29
    %p31 = scmp.ne.s32.totalorder %s23, %s26
    %p32 = scmp.eq.s32.totalorder %s13, 0
    %p33 = por %p31, %p32
    %p34 = scmp.ne.s32.totalorder %s23, %s26
    %p35 = scmp.eq.s32.totalorder %s18, 1
    %p36 = por %p34, %p35
    %p37 = scmp.ne.s32.totalorder %s26, %s27
    %p38 = scmp.eq.s32.totalorder %s18, 0
    %p39 = por %p37, %p38
    %p40 = scmp.ne.s32.totalorder %s26, %s27
    %p41 = scmp.eq.s32.totalorder %s19, 1
    %p42 = por %p40, %p41
    %p44 = scmp.ne.s32.totalorder %s27, %s43
    %p45 = scmp.eq.s32.totalorder %s19, 0
    %p46 = por %p44, %p45
    %s48 = sadd.s32 %s47, 1
    %p51 = scmp.eq.s32.totalorder %s13, 1
    %p52 = scmp.ne.s32.totalorder %s47, %s49
    %p53 = scmp.eq.s32.totalorder %s13, 0
    %p54 = por %p52, %p53
    %p55 = scmp.ne.s32.totalorder %s47, %s49
    %p56 = scmp.eq.s32.totalorder %s18, 1
    %p57 = por %p55, %p56
    %p58 = scmp.ne.s32.totalorder %s49, %s50
    %p59 = scmp.eq.s32.totalorder %s18, 0
    %p60 = por %p58, %p59
    %p61 = scmp.ne.s32.totalorder %s49, %s50
    %p62 = scmp.eq.s32.totalorder %s19, 1
    %p63 = por %p61, %p62
    %p65 = scmp.ne.s32.totalorder %s50, %s64
    %p66 = scmp.eq.s32.totalorder %s19, 0
    %p67 = por %p65, %p66
    %s69 = sadd.s32 %s68, 1
    %p72 = scmp.eq.s32.totalorder %s13, 1
    %p73 = scmp.ne.s32.totalorder %s68, %s70
    %p74 = scmp.eq.s32.totalorder %s13, 0
    %p75 = por %p73, %p74
    %p76 = scmp.ne.s32.totalorder %s68, %s70
    %p77 = scmp.eq.s32.totalorder %s18, 1
    %p78 = por %p76, %p77
    %p79 = scmp.ne.s32.totalorder %s70, %s71
    %p80 = scmp.eq.s32.totalorder %s18, 0
    %p81 = por %p79, %p80
    %p82 = scmp.ne.s32.totalorder %s70, %s71
    %p83 = scmp.eq.s32.totalorder %s19, 1
    %p84 = por %p82, %p83
    %p86 = scmp.ne.s32.totalorder %s71, %s85
    %p87 = scmp.eq.s32.totalorder %s19, 0
    %p88 = por %p86, %p87
    %s90 = sadd.s32 %s89, 1
    %p93 = scmp.eq.s32.totalorder %s13, 1
    %p94 = scmp.ne.s32.totalorder %s89, %s91
    %p95 = scmp.eq.s32.totalorder %s13, 0
    %p96 = por %p94, %p95
    %p97 = scmp.ne.s32.totalorder %s89, %s91
    %p98 = scmp.eq.s32.totalorder %s18, 1
    %p99 = por %p97, %p98
    %p100 = scmp.ne.s32.totalorder %s91, %s92
    %p101 = scmp.eq.s32.totalorder %s18, 0
    %p102 = por %p100, %p101
    %p103 = scmp.ne.s32.totalorder %s91, %s92
    %p104 = scmp.eq.s32.totalorder %s19, 1
    %p105 = por %p103, %p104
    %p107 = scmp.ne.s32.totalorder %s92, %s106
    %p108 = scmp.eq.s32.totalorder %s19, 0
    %p109 = por %p107, %p108
    %s111 = sadd.s32 %s110, 1
    %p114 = scmp.eq.s32.totalorder %s13, 1
    %p115 = scmp.ne.s32.totalorder %s110, %s112
    %p116 = scmp.eq.s32.totalorder %s13, 0
    %p117 = por %p115, %p116
    %p118 = scmp.ne.s32.totalorder %s110, %s112
    %p119 = scmp.eq.s32.totalorder %s18, 1
    %p120 = por %p118, %p119
    %p121 = scmp.ne.s32.totalorder %s112, %s113
    %p122 = scmp.eq.s32.totalorder %s18, 0
    %p123 = por %p121, %p122
    %p124 = scmp.ne.s32.totalorder %s112, %s113
    %p125 = scmp.eq.s32.totalorder %s19, 1
    %p126 = por %p124, %p125
    %p128 = scmp.ne.s32.totalorder %s113, %s127
    %p129 = scmp.eq.s32.totalorder %s19, 0
    %p130 = por %p128, %p129
    %s132 = sadd.s32 %s131, 1
    %p135 = scmp.eq.s32.totalorder %s13, 1
    %p136 = scmp.ne.s32.totalorder %s131, %s133
    %p137 = scmp.eq.s32.totalorder %s13, 0
    %p138 = por %p136, %p137
    %p139 = scmp.ne.s32.totalorder %s131, %s133
    %p140 = scmp.eq.s32.totalorder %s18, 1
    %p141 = por %p139, %p140
    %p142 = scmp.ne.s32.totalorder %s133, %s134
    %p143 = scmp.eq.s32.totalorder %s18, 0
    %p144 = por %p142, %p143
    %p145 = scmp.ne.s32.totalorder %s133, %s134
    %p146 = scmp.eq.s32.totalorder %s19, 1
    %p147 = por %p145, %p146
    %p149 = scmp.ne.s32.totalorder %s134, %s148
    %p150 = scmp.eq.s32.totalorder %s19, 0
    %p151 = por %p149, %p150
    %s153 = sadd.s32 %s152, 1
    %p156 = scmp.eq.s32.totalorder %s13, 1
    %p157 = scmp.ne.s32.totalorder %s152, %s154
    %p158 = scmp.eq.s32.totalorder %s13, 0
    %p159 = por %p157, %p158
    %p160 = scmp.ne.s32.totalorder %s152, %s154
    %p161 = scmp.eq.s32.totalorder %s18, 1
    %p162 = por %p160, %p161
    %p163 = scmp.ne.s32.totalorder %s154, %s155
    %p164 = scmp.eq.s32.totalorder %s18, 0
    %p165 = por %p163, %p164
    %p166 = scmp.ne.s32.totalorder %s154, %s155
    %p167 = scmp.eq.s32.totalorder %s19, 1
    %p168 = por %p166, %p167
    %p170 = scmp.ne.s32.totalorder %s155, %s169
    %p171 = scmp.eq.s32.totalorder %s19, 0
    %p172 = por %p170, %p171
    %s173 = ssub.s32 %s13, %s20
    %p174 = scmp.eq.s32.totalorder %s173, 0
    %s176 = sadd.s32 %s175, 1
    %s177 = scalar_select %p174, %s175, %s176
    %p180 = pneg %p174
    %p181 = scmp.eq.s32.totalorder %s13, 1
    %p182 = por %p180, %p181
    %p183 = scmp.ne.s32.totalorder %s175, %s178
    %p184 = scmp.eq.s32.totalorder %s13, 0
    %p185 = por %p183, %p184
    %p186 = scmp.ne.s32.totalorder %s175, %s178
    %p187 = scmp.eq.s32.totalorder %s18, 1
    %p188 = por %p186, %p187
    %p189 = scmp.ne.s32.totalorder %s178, %s179
    %p190 = scmp.eq.s32.totalorder %s18, 0
    %p191 = por %p189, %p190
    %p192 = scmp.ne.s32.totalorder %s178, %s179
    %p193 = scmp.eq.s32.totalorder %s19, 1
    %p194 = por %p192, %p193
    %p196 = scmp.ne.s32.totalorder %s179, %s195
    %p197 = scmp.eq.s32.totalorder %s19, 0
    %p198 = por %p196, %p197
    %p199 = scmp.le.s32.totalorder 1, %s13
    %p200 = scmp.lt.s32.totalorder %s13, 3
    %p201 = pnand %p199, %p200
    %p202 = pneg %p201
    // Predicated region
    $region9: #{shufflenet_v2_8_forward.1} parent=5 // pred_check
      _
    $region10: #{shufflenet_v2_8_forward.1} parent=5 // pred_check_branch
      %204 = sbr.rel (%p201) target = $region12
    $region11: #{shufflenet_v2_8_forward.1} parent=5 // pred_region
      %s205 = ssub.s32 %s13, 1
      // Predicated region
      $region13: #{shufflenet_v2_8_forward.1} parent=11 // pred_check
        %p206 = pneg %p60
      $region14: #{shufflenet_v2_8_forward.1} parent=11 // pred_check_branch
        %208 = sbr.rel (%p206) target = $region16
      $region15: #{shufflenet_v2_8_forward.1} parent=11 // pred_region
        _
      $region16: #{shufflenet_v2_8_forward.1} parent=11 // pred_fallthru
        _
      // Predicated region
      $region17: #{shufflenet_v2_8_forward.1} parent=11 // pred_check
        %p209 = pneg %p81
      $region18: #{shufflenet_v2_8_forward.1} parent=11 // pred_check_branch
        %211 = sbr.rel (%p209) target = $region20
      $region19: #{shufflenet_v2_8_forward.1} parent=11 // pred_region
        _
      $region20: #{shufflenet_v2_8_forward.1} parent=11 // pred_fallthru
        _
      // Predicated region
      $region21: #{shufflenet_v2_8_forward.1} parent=11 // pred_check
        %p212 = pneg %p102
      $region22: #{shufflenet_v2_8_forward.1} parent=11 // pred_check_branch
        %214 = sbr.rel (%p212) target = $region24
      $region23: #{shufflenet_v2_8_forward.1} parent=11 // pred_region
        _
      $region24: #{shufflenet_v2_8_forward.1} parent=11 // pred_fallthru
        _
      // Predicated region
      $region25: #{shufflenet_v2_8_forward.1} parent=11 // pred_check
        %p215 = pneg %p123
      $region26: #{shufflenet_v2_8_forward.1} parent=11 // pred_check_branch
        %217 = sbr.rel (%p215) target = $region28
      $region27: #{shufflenet_v2_8_forward.1} parent=11 // pred_region
        _
      $region28: #{shufflenet_v2_8_forward.1} parent=11 // pred_fallthru
        _
      // Predicated region
      $region29: #{shufflenet_v2_8_forward.1} parent=11 // pred_check
        %p218 = pneg %p144
      $region30: #{shufflenet_v2_8_forward.1} parent=11 // pred_check_branch
        %220 = sbr.rel (%p218) target = $region32
      $region31: #{shufflenet_v2_8_forward.1} parent=11 // pred_region
        _
      $region32: #{shufflenet_v2_8_forward.1} parent=11 // pred_fallthru
        _
      // Predicated region
      $region33: #{shufflenet_v2_8_forward.1} parent=11 // pred_check
        %p221 = pneg %p165
      $region34: #{shufflenet_v2_8_forward.1} parent=11 // pred_check_branch
        %223 = sbr.rel (%p221) target = $region36
      $region35: #{shufflenet_v2_8_forward.1} parent=11 // pred_region
        _
      $region36: #{shufflenet_v2_8_forward.1} parent=11 // pred_fallthru
        _
    $region12: #{shufflenet_v2_8_forward.1} parent=5 // pred_fallthru
      _
    %p224 = scmp.lt.s32.totalorder %s13, 2
    // Predicated region
    $region37: #{shufflenet_v2_8_forward.1} parent=5 // pred_check
      %p225 = pneg %p224
    $region38: #{shufflenet_v2_8_forward.1} parent=5 // pred_check_branch
      %227 = sbr.rel (%p225) target = $region40
    $region39: #{shufflenet_v2_8_forward.1} parent=5 // pred_region
      // Predicated region
      $region41: #{shufflenet_v2_8_forward.1} parent=39 // pred_check
        %p228 = pneg %p33
      $region42: #{shufflenet_v2_8_forward.1} parent=39 // pred_check_branch
        %230 = sbr.rel (%p228) target = $region44
      $region43: #{shufflenet_v2_8_forward.1} parent=39 // pred_region
        %p231 = scmp.lt.s32.totalorder %s13, 1
        %s232 = scalar_select %p231, %s13, 1
        %s233 = smul.addr %s232, 32
        %s234 = smul.addr %s233, 4
        %s235 = scalar_lea.vmem %s0, %s234
      $region44: #{shufflenet_v2_8_forward.1} parent=39 // pred_fallthru
        _
    $region40: #{shufflenet_v2_8_forward.1} parent=5 // pred_fallthru
      _
    %p236 = scmp.le.s32.totalorder 1, %s13
    %p237 = scmp.lt.s32.totalorder %s13, 3
    %p238 = pnand %p236, %p237
    %p239 = pneg %p238
    // Predicated region
    $region45: #{shufflenet_v2_8_forward.1} parent=5 // pred_check
      _
    $region46: #{shufflenet_v2_8_forward.1} parent=5 // pred_check_branch
      %241 = sbr.rel (%p238) target = $region48
    $region47: #{shufflenet_v2_8_forward.1} parent=5 // pred_region
      %s242 = ssub.s32 %s13, 1
      %p243 = scmp.lt.s32.totalorder %s18, 1
      %s244 = scalar_select %p243, %s18, 1
      %s245 = smul.addr %s244, 32
      %s246 = smul.addr %s245, 4
      %s247 = scalar_lea.vmem %s0, %s246
      %p248 = pneg %p39
      %p249 = pneg %p36
      %p250 = pneg %p60
      %p251 = pneg %p57
      %p252 = pneg %p81
      %p253 = pneg %p78
      %p254 = pneg %p102
      %p255 = pneg %p99
      %p256 = pneg %p123
      %p257 = pneg %p120
      %p258 = pneg %p144
      %p259 = pneg %p141
      %p260 = pneg %p165
      %p261 = pneg %p162
      %p262 = pneg %p191
      %p263 = pneg %p188
      %p264 = scmp.lt.s32.totalorder %s18, 1
      %s265 = scalar_select %p264, %s18, 1
      %s266 = smul.addr %s265, 2
      %s267 = smul.addr %s266, 8
      %s268 = scalar_lea.vmem %s7, %s267
      %p269 = scmp.lt.s32.totalorder %s18, 1
      %s270 = scalar_select %p269, %s18, 1
      %s271 = smul.addr %s270, 32
      %s272 = smul.addr %s271, 4
      %s273 = scalar_lea.vmem %s0, %s272
      %p274 = scmp.lt.s32.totalorder %s18, 1
      %s275 = scalar_select %p274, %s18, 1
      %s276 = smul.addr %s275, 2
      %s277 = smul.addr %s276, 8
      %s278 = scalar_lea.vmem %s7, %s277
      %v280 = vld [vmem:[%s273] sm:$0xf]
      %v281 = vld [vmem:[%s273 + $0x4] sm:$0xf]
      %v282 = vld [vmem:[%s273 + $0x8] sm:$0xf]
      %v283 = vld [vmem:[%s273 + $0xc] sm:$0xf]
      %v284 = vld [vmem:[%s273 + $0x10] sm:$0xf]
      %v285 = vld [vmem:[%s273 + $0x14] sm:$0xf]
      %v286 = vld [vmem:[%s273 + $0x18] sm:$0xf]
      %v287 = vld [vmem:[%s273 + $0x1c] sm:$0xf]
      %v288 = vld [vmem:[%s273 + $0x20] sm:$0xf]
      %v289 = vld [vmem:[%s273 + $0x24] sm:$0xf]
      %v290 = vld [vmem:[%s273 + $0x28] sm:$0xf]
      %v291 = vld [vmem:[%s273 + $0x2c] sm:$0xf]
      %v292 = vld [vmem:[%s273 + $0x30] sm:$0xf]
      %v293 = vld [vmem:[%s273 + $0x34] sm:$0xf]
      %v294 = vld [vmem:[%s273 + $0x38] sm:$0xf]
      %v295 = vld [vmem:[%s273 + $0x3c] sm:$0xf]
      %v296 = vld [vmem:[%s273 + $0x40] sm:$0xf]
      %v297 = vld [vmem:[%s273 + $0x44] sm:$0xf]
      %v298 = vld [vmem:[%s273 + $0x48] sm:$0xf]
      %v299 = vld [vmem:[%s273 + $0x4c] sm:$0xf]
      %v300 = vld [vmem:[%s273 + $0x50] sm:$0xf]
      %v301 = vld [vmem:[%s273 + $0x54] sm:$0xf]
      %v302 = vld [vmem:[%s273 + $0x58] sm:$0xf]
      %v303 = vld [vmem:[%s273 + $0x5c] sm:$0xf]
      %v304 = vld [vmem:[%s273 + $0x60] sm:$0xf]
      %v305 = vld [vmem:[%s273 + $0x64] sm:$0xf]
      %v306 = vld [vmem:[%s273 + $0x68] sm:$0xf]
      %v307 = vld [vmem:[%s273 + $0x6c] sm:$0xf]
      %v308 = vld [vmem:[%s273 + $0x70] sm:$0xf]
      %v309 = vld [vmem:[%s273 + $0x74] sm:$0xf]
      %v310 = vld [vmem:[%s273 + $0x78] sm:$0xf]
      %v311 = vld [vmem:[%s273 + $0x7c] sm:$0xf]
      %v312 = vld [vmem:[%s1] sm:$0xf]
      %v313 = vld [vmem:[%s1 + $0x4] sm:$0xf]
      %v314 = vld [vmem:[%s1 + $0x8] sm:$0xf]
      %v315 = vld [vmem:[%s1 + $0xc] sm:$0xf]
      %v316 = vld [vmem:[%s1 + $0x10] sm:$0xf]
      %v317 = vld [vmem:[%s1 + $0x14] sm:$0xf]
      %v318 = vld [vmem:[%s1 + $0x18] sm:$0xf]
      %v319 = vld [vmem:[%s1 + $0x1c] sm:$0xf]
      %v320 = vld [vmem:[%s1 + $0x20] sm:$0xf]
      %v321 = vld [vmem:[%s1 + $0x24] sm:$0xf]
      %v322 = vld [vmem:[%s1 + $0x28] sm:$0xf]
      %v323 = vld [vmem:[%s1 + $0x2c] sm:$0xf]
      %v324 = vld [vmem:[%s1 + $0x30] sm:$0xf]
      %v325 = vld [vmem:[%s1 + $0x34] sm:$0xf]
      %v326 = vld [vmem:[%s1 + $0x38] sm:$0xf]
      %v327 = vld [vmem:[%s1 + $0x3c] sm:$0xf]
      %v328 = vld [vmem:[%s3] sm:$0x1]
      %v329 = vlaneseq
      %v330 = vshrl.u32 %v329, 7
      %v331 = vsub.s32 0, %v330
      %v332 = vrot.slane %v328, %v331
      %v365 = vunpack.c.l.b16 %v280
      %v366 = vunpack.c.l.b16 %v281
      %v367 = vunpack.c.l.b16 %v282
      %v368 = vunpack.c.l.b16 %v283
      %v369 = vunpack.c.l.b16 %v284
      %v370 = vunpack.c.l.b16 %v285
      %v371 = vunpack.c.l.b16 %v286
      %v372 = vunpack.c.l.b16 %v287
      %v373 = vunpack.c.l.b16 %v288
      %v374 = vunpack.c.l.b16 %v289
      %v375 = vunpack.c.l.b16 %v290
      %v376 = vunpack.c.l.b16 %v291
      %v377 = vunpack.c.l.b16 %v292
      %v378 = vunpack.c.l.b16 %v293
      %v379 = vunpack.c.l.b16 %v294
      %v380 = vunpack.c.l.b16 %v295
      %v381 = vunpack.c.l.b16 %v296
      %v382 = vunpack.c.l.b16 %v297
      %v383 = vunpack.c.l.b16 %v298
      %v384 = vunpack.c.l.b16 %v299
      %v385 = vunpack.c.l.b16 %v300
      %v386 = vunpack.c.l.b16 %v301
      %v387 = vunpack.c.l.b16 %v302
      %v388 = vunpack.c.l.b16 %v303
      %v389 = vunpack.c.l.b16 %v304
      %v390 = vunpack.c.l.b16 %v305
      %v391 = vunpack.c.l.b16 %v306
      %v392 = vunpack.c.l.b16 %v307
      %v393 = vunpack.c.l.b16 %v308
      %v394 = vunpack.c.l.b16 %v309
      %v395 = vunpack.c.l.b16 %v310
      %v396 = vunpack.c.l.b16 %v311
      %v397 = vpack.c.b16 %v366, %v365
      %v398 = vpack.c.b16 %v368, %v367
      %v399 = vpack.c.b16 %v370, %v369
      %v400 = vpack.c.b16 %v372, %v371
      %v401 = vpack.c.b16 %v374, %v373
      %v402 = vpack.c.b16 %v376, %v375
      %v403 = vpack.c.b16 %v378, %v377
      %v404 = vpack.c.b16 %v380, %v379
      %v405 = vpack.c.b16 %v382, %v381
      %v406 = vpack.c.b16 %v384, %v383
      %v407 = vpack.c.b16 %v386, %v385
      %v408 = vpack.c.b16 %v388, %v387
      %v409 = vpack.c.b16 %v390, %v389
      %v410 = vpack.c.b16 %v392, %v391
      %v411 = vpack.c.b16 %v394, %v393
      %v412 = vpack.c.b16 %v396, %v395
      %v445 = vunpack.c.l.b16 %v312
      %v446 = vunpack.c.l.b16 %v313
      %v447 = vunpack.c.l.b16 %v314
      %v448 = vunpack.c.l.b16 %v315
      %v449 = vunpack.c.l.b16 %v316
      %v450 = vunpack.c.l.b16 %v317
      %v451 = vunpack.c.l.b16 %v318
      %v452 = vunpack.c.l.b16 %v319
      %v453 = vunpack.c.l.b16 %v320
      %v454 = vunpack.c.l.b16 %v321
      %v455 = vunpack.c.l.b16 %v322
      %v456 = vunpack.c.l.b16 %v323
      %v457 = vunpack.c.l.b16 %v324
      %v458 = vunpack.c.l.b16 %v325
      %v459 = vunpack.c.l.b16 %v326
      %v460 = vunpack.c.l.b16 %v327
      %v461 = vpack.c.b16 %v446, %v445
      %v462 = vpack.c.b16 %v448, %v447
      %v463 = vpack.c.b16 %v450, %v449
      %v464 = vpack.c.b16 %v452, %v451
      %v465 = vpack.c.b16 %v454, %v453
      %v466 = vpack.c.b16 %v456, %v455
      %v467 = vpack.c.b16 %v458, %v457
      %v468 = vpack.c.b16 %v460, %v459
      %477 = vmatprep.subr.bf16.mxu0 0
      %478 = vmatpush1.bf16.msra.mxu0 %v468
      %479 = vmatprep.subr.bf16.mxu0 0
      %480 = vmatpush1.bf16.msra.mxu0 %v467
      %481 = vmatprep.subr.bf16.mxu0 0
      %482 = vmatpush1.bf16.msra.mxu0 %v466
      %483 = vmatprep.subr.bf16.mxu0 0
      %484 = vmatpush1.bf16.msra.mxu0 %v465
      %485 = vmatprep.subr.bf16.mxu0 0
      %486 = vmatpush1.bf16.msra.mxu0 %v464
      %487 = vmatprep.subr.bf16.mxu0 0
      %488 = vmatpush1.bf16.msra.mxu0 %v463
      %489 = vmatprep.subr.bf16.mxu0 0
      %490 = vmatpush1.bf16.msra.mxu0 %v462
      %491 = vmatprep.subr.bf16.mxu0 0
      %492 = vmatpush1.bf16.msra.mxu0 %v461
      %493 = vmatprep.subr.bf16.mxu0 0
      %494 = vmatpush2.bf16.msra.mxu0 0
      %495 = vmatprep.subr.bf16.mxu0 0
      %496 = vmatpush2.bf16.msra.mxu0 0
      %497 = vmatprep.subr.bf16.mxu0 0
      %498 = vmatpush2.bf16.msra.mxu0 0
      %499 = vmatprep.subr.bf16.mxu0 0
      %500 = vmatpush2.bf16.msra.mxu0 0
      %501 = vmatprep.subr.bf16.mxu0 0
      %502 = vmatpush2.bf16.msra.mxu0 0
      %503 = vmatprep.subr.bf16.mxu0 0
      %504 = vmatpush2.bf16.msra.mxu0 0
      %505 = vmatprep.subr.bf16.mxu0 0
      %506 = vmatpush2.bf16.msra.mxu0 0
      %507 = vmatprep.subr.bf16.mxu0 0
      %508 = vmatpush2.bf16.msra.mxu0 0
      %509 = vmatprep.mubr.bf16.mxu0 0
      %510 = vmatmul.mubr.bf16.gmra.mxu0 %v397
      %v511 = vpop.f32.mrf.mxu0
      %v512 = vadd.f32 %v332, %v511
      %v513 = vpop.f32.mrf.mxu0
      %v514 = vpop.f32.mrf.mxu0
      %v515 = vadd.f32 %v332, %v514
      %v516 = vpop.f32.mrf.mxu0
      %517 = vmatprep.mubr.bf16.mxu0 0
      %518 = vmatmul.mubr.bf16.gmra.mxu0 %v398
      %v519 = vpop.f32.mrf.mxu0
      %v520 = vadd.f32 %v332, %v519
      %v521 = vpop.f32.mrf.mxu0
      %v522 = vpop.f32.mrf.mxu0
      %v523 = vadd.f32 %v332, %v522
      %v524 = vpop.f32.mrf.mxu0
      %525 = vmatprep.mubr.bf16.mxu0 0
      %526 = vmatmul.mubr.bf16.gmra.mxu0 %v399
      %v527 = vpop.f32.mrf.mxu0
      %v528 = vadd.f32 %v332, %v527
      %v529 = vpop.f32.mrf.mxu0
      %v530 = vpop.f32.mrf.mxu0
      %v531 = vadd.f32 %v332, %v530
      %v532 = vpop.f32.mrf.mxu0
      %533 = vmatprep.mubr.bf16.mxu0 0
      %534 = vmatmul.mubr.bf16.gmra.mxu0 %v400
      %v535 = vpop.f32.mrf.mxu0
      %v536 = vadd.f32 %v332, %v535
      %v537 = vpop.f32.mrf.mxu0
      %v538 = vpop.f32.mrf.mxu0
      %v539 = vadd.f32 %v332, %v538
      %v540 = vpop.f32.mrf.mxu0
      %541 = vmatprep.mubr.bf16.mxu0 0
      %542 = vmatmul.mubr.bf16.gmra.mxu0 %v401
      %v543 = vpop.f32.mrf.mxu0
      %v544 = vadd.f32 %v332, %v543
      %v545 = vpop.f32.mrf.mxu0
      %v546 = vpop.f32.mrf.mxu0
      %v547 = vadd.f32 %v332, %v546
      %v548 = vpop.f32.mrf.mxu0
      %549 = vmatprep.mubr.bf16.mxu0 0
      %550 = vmatmul.mubr.bf16.gmra.mxu0 %v402
      %v551 = vpop.f32.mrf.mxu0
      %v552 = vadd.f32 %v332, %v551
      %v553 = vpop.f32.mrf.mxu0
      %v554 = vpop.f32.mrf.mxu0
      %v555 = vadd.f32 %v332, %v554
      %v556 = vpop.f32.mrf.mxu0
      %557 = vmatprep.mubr.bf16.mxu0 0
      %558 = vmatmul.mubr.bf16.gmra.mxu0 %v403
      %v559 = vpop.f32.mrf.mxu0
      %v560 = vadd.f32 %v332, %v559
      %v561 = vpop.f32.mrf.mxu0
      %v562 = vpop.f32.mrf.mxu0
      %v563 = vadd.f32 %v332, %v562
      %v564 = vpop.f32.mrf.mxu0
      %565 = vmatprep.mubr.bf16.mxu0 0
      %566 = vmatmul.mubr.bf16.gmra.mxu0 %v404
      %v567 = vpop.f32.mrf.mxu0
      %v568 = vadd.f32 %v332, %v567
      %v569 = vpop.f32.mrf.mxu0
      %v570 = vpop.f32.mrf.mxu0
      %v571 = vadd.f32 %v332, %v570
      %v572 = vpop.f32.mrf.mxu0
      %573 = vmatprep.mubr.bf16.mxu0 0
      %574 = vmatmul.mubr.bf16.gmra.mxu0 %v405
      %v575 = vpop.f32.mrf.mxu0
      %v576 = vadd.f32 %v332, %v575
      %v577 = vpop.f32.mrf.mxu0
      %v578 = vpop.f32.mrf.mxu0
      %v579 = vadd.f32 %v332, %v578
      %v580 = vpop.f32.mrf.mxu0
      %581 = vmatprep.mubr.bf16.mxu0 0
      %582 = vmatmul.mubr.bf16.gmra.mxu0 %v406
      %v583 = vpop.f32.mrf.mxu0
      %v584 = vadd.f32 %v332, %v583
      %v585 = vpop.f32.mrf.mxu0
      %v586 = vpop.f32.mrf.mxu0
      %v587 = vadd.f32 %v332, %v586
      %v588 = vpop.f32.mrf.mxu0
      %589 = vmatprep.mubr.bf16.mxu0 0
      %590 = vmatmul.mubr.bf16.gmra.mxu0 %v407
      %v591 = vpop.f32.mrf.mxu0
      %v592 = vadd.f32 %v332, %v591
      %v593 = vpop.f32.mrf.mxu0
      %v594 = vpop.f32.mrf.mxu0
      %v595 = vadd.f32 %v332, %v594
      %v596 = vpop.f32.mrf.mxu0
      %597 = vmatprep.mubr.bf16.mxu0 0
      %598 = vmatmul.mubr.bf16.gmra.mxu0 %v408
      %v599 = vpop.f32.mrf.mxu0
      %v600 = vadd.f32 %v332, %v599
      %v601 = vpop.f32.mrf.mxu0
      %v602 = vpop.f32.mrf.mxu0
      %v603 = vadd.f32 %v332, %v602
      %v604 = vpop.f32.mrf.mxu0
      %605 = vmatprep.mubr.bf16.mxu0 0
      %606 = vmatmul.mubr.bf16.gmra.mxu0 %v409
      %v607 = vpop.f32.mrf.mxu0
      %v608 = vadd.f32 %v332, %v607
      %v609 = vpop.f32.mrf.mxu0
      %v610 = vpop.f32.mrf.mxu0
      %v611 = vadd.f32 %v332, %v610
      %v612 = vpop.f32.mrf.mxu0
      %613 = vmatprep.mubr.bf16.mxu0 0
      %614 = vmatmul.mubr.bf16.gmra.mxu0 %v410
      %v615 = vpop.f32.mrf.mxu0
      %v616 = vadd.f32 %v332, %v615
      %v617 = vpop.f32.mrf.mxu0
      %v618 = vpop.f32.mrf.mxu0
      %v619 = vadd.f32 %v332, %v618
      %v620 = vpop.f32.mrf.mxu0
      %621 = vmatprep.mubr.bf16.mxu0 0
      %622 = vmatmul.mubr.bf16.gmra.mxu0 %v411
      %v623 = vpop.f32.mrf.mxu0
      %v624 = vadd.f32 %v332, %v623
      %v625 = vpop.f32.mrf.mxu0
      %v626 = vpop.f32.mrf.mxu0
      %v627 = vadd.f32 %v332, %v626
      %v628 = vpop.f32.mrf.mxu0
      %629 = vmatprep.mubr.bf16.mxu0 0
      %630 = vmatmul.mubr.bf16.gmra.mxu0 %v412
      %v631 = vpop.f32.mrf.mxu0
      %v632 = vadd.f32 %v332, %v631
      %v633 = vpop.f32.mrf.mxu0
      %v634 = vpop.f32.mrf.mxu0
      %v635 = vadd.f32 %v332, %v634
      %v636 = vpop.f32.mrf.mxu0
      %637 = vdwg.mxu0
      %v638 = vmax.f32 %v512, 0.0
      %v639 = vmax.f32 %v515, 0.0
      %v640 = vmax.f32 %v520, 0.0
      %v641 = vmax.f32 %v523, 0.0
      %v642 = vmax.f32 %v528, 0.0
      %v643 = vmax.f32 %v531, 0.0
      %v644 = vmax.f32 %v536, 0.0
      %v645 = vmax.f32 %v539, 0.0
      %v646 = vmax.f32 %v544, 0.0
      %v647 = vmax.f32 %v547, 0.0
      %v648 = vmax.f32 %v552, 0.0
      %v649 = vmax.f32 %v555, 0.0
      %v650 = vmax.f32 %v560, 0.0
      %v651 = vmax.f32 %v563, 0.0
      %v652 = vmax.f32 %v568, 0.0
      %v653 = vmax.f32 %v571, 0.0
      %v654 = vmax.f32 %v576, 0.0
      %v655 = vmax.f32 %v579, 0.0
      %v656 = vmax.f32 %v584, 0.0
      %v657 = vmax.f32 %v587, 0.0
      %v658 = vmax.f32 %v592, 0.0
      %v659 = vmax.f32 %v595, 0.0
      %v660 = vmax.f32 %v600, 0.0
      %v661 = vmax.f32 %v603, 0.0
      %v662 = vmax.f32 %v608, 0.0
      %v663 = vmax.f32 %v611, 0.0
      %v664 = vmax.f32 %v616, 0.0
      %v665 = vmax.f32 %v619, 0.0
      %v666 = vmax.f32 %v624, 0.0
      %v667 = vmax.f32 %v627, 0.0
      %v668 = vmax.f32 %v632, 0.0
      %v669 = vmax.f32 %v635, 0.0
      %v670 = vmin.f32 %v638, 6.0
      %v671 = vmin.f32 %v639, 6.0
      %v672 = vmin.f32 %v640, 6.0
      %v673 = vmin.f32 %v641, 6.0
      %v674 = vmin.f32 %v642, 6.0
      %v675 = vmin.f32 %v643, 6.0
      %v676 = vmin.f32 %v644, 6.0
      %v677 = vmin.f32 %v645, 6.0
      %v678 = vmin.f32 %v646, 6.0
      %v679 = vmin.f32 %v647, 6.0
      %v680 = vmin.f32 %v648, 6.0
      %v681 = vmin.f32 %v649, 6.0
      %v682 = vmin.f32 %v650, 6.0
      %v683 = vmin.f32 %v651, 6.0
      %v684 = vmin.f32 %v652, 6.0
      %v685 = vmin.f32 %v653, 6.0
      %v686 = vmin.f32 %v654, 6.0
      %v687 = vmin.f32 %v655, 6.0
      %v688 = vmin.f32 %v656, 6.0
      %v689 = vmin.f32 %v657, 6.0
      %v690 = vmin.f32 %v658, 6.0
      %v691 = vmin.f32 %v659, 6.0
      %v692 = vmin.f32 %v660, 6.0
      %v693 = vmin.f32 %v661, 6.0
      %v694 = vmin.f32 %v662, 6.0
      %v695 = vmin.f32 %v663, 6.0
      %v696 = vmin.f32 %v664, 6.0
      %v697 = vmin.f32 %v665, 6.0
      %v698 = vmin.f32 %v666, 6.0
      %v699 = vmin.f32 %v667, 6.0
      %v700 = vmin.f32 %v668, 6.0
      %v701 = vmin.f32 %v669, 6.0
      %v702 = vpack.c.bf16 %v671, %v670
      %v703 = vpack.c.bf16 %v673, %v672
      %v704 = vpack.c.bf16 %v675, %v674
      %v705 = vpack.c.bf16 %v677, %v676
      %v706 = vpack.c.bf16 %v679, %v678
      %v707 = vpack.c.bf16 %v681, %v680
      %v708 = vpack.c.bf16 %v683, %v682
      %v709 = vpack.c.bf16 %v685, %v684
      %v710 = vpack.c.bf16 %v687, %v686
      %v711 = vpack.c.bf16 %v689, %v688
      %v712 = vpack.c.bf16 %v691, %v690
      %v713 = vpack.c.bf16 %v693, %v692
      %v714 = vpack.c.bf16 %v695, %v694
      %v715 = vpack.c.bf16 %v697, %v696
      %v716 = vpack.c.bf16 %v699, %v698
      %v717 = vpack.c.bf16 %v701, %v700
      %v718 = vld [vmem:[%s4] sm:$0xff]
      %v719 = vld [vmem:[%s4 + $0x8] sm:$0xff]
      %v720 = vld [vmem:[%s4 + $0x10] sm:$0xff]
      %v721 = vld [vmem:[%s4 + $0x18] sm:$0xff]
      %v722 = vld [vmem:[%s4 + $0x20] sm:$0xff]
      %v723 = vld [vmem:[%s4 + $0x28] sm:$0xff]
      %v724 = vld [vmem:[%s4 + $0x30] sm:$0xff]
      %v725 = vld [vmem:[%s4 + $0x38] sm:$0xff]
      %v734 = vunpack.c.l.b16 %v718
      %v735 = vunpack.c.h.b16 %v718
      %v736 = vunpack.c.l.b16 %v719
      %v737 = vunpack.c.h.b16 %v719
      %v738 = vunpack.c.l.b16 %v720
      %v739 = vunpack.c.h.b16 %v720
      %v740 = vunpack.c.l.b16 %v721
      %v741 = vunpack.c.h.b16 %v721
      %v742 = vunpack.c.l.b16 %v722
      %v743 = vunpack.c.h.b16 %v722
      %v744 = vunpack.c.l.b16 %v723
      %v745 = vunpack.c.h.b16 %v723
      %v746 = vunpack.c.l.b16 %v724
      %v747 = vunpack.c.h.b16 %v724
      %v748 = vunpack.c.l.b16 %v725
      %v749 = vunpack.c.h.b16 %v725
      %v750 = vpack.c.b16 %v736, %v734
      %v751 = vpack.c.b16 %v737, %v735
      %v752 = vpack.c.b16 %v740, %v738
      %v753 = vpack.c.b16 %v741, %v739
      %v754 = vpack.c.b16 %v744, %v742
      %v755 = vpack.c.b16 %v745, %v743
      %v756 = vpack.c.b16 %v748, %v746
      %v757 = vpack.c.b16 %v749, %v747
      %766 = vmatprep.subr.bf16.mxu0 0
      %767 = vmatpush1.bf16.msra.mxu0 %v709
      %768 = vmatprep.subr.bf16.mxu0 0
      %769 = vmatpush1.bf16.msra.mxu0 %v708
      %770 = vmatprep.subr.bf16.mxu0 0
      %771 = vmatpush1.bf16.msra.mxu0 %v707
      %772 = vmatprep.subr.bf16.mxu0 0
      %773 = vmatpush1.bf16.msra.mxu0 %v706
      %774 = vmatprep.subr.bf16.mxu0 0
      %775 = vmatpush1.bf16.msra.mxu0 %v705
      %776 = vmatprep.subr.bf16.mxu0 0
      %777 = vmatpush1.bf16.msra.mxu0 %v704
      %778 = vmatprep.subr.bf16.mxu0 0
      %779 = vmatpush1.bf16.msra.mxu0 %v703
      %780 = vmatprep.subr.bf16.mxu0 0
      %781 = vmatpush1.bf16.msra.mxu0 %v702
      %782 = vmatprep.subr.bf16.mxu0 0
      %783 = vmatpush2.bf16.msra.mxu0 %v717
      %784 = vmatprep.subr.bf16.mxu0 0
      %785 = vmatpush2.bf16.msra.mxu0 %v716
      %786 = vmatprep.subr.bf16.mxu0 0
      %787 = vmatpush2.bf16.msra.mxu0 %v715
      %788 = vmatprep.subr.bf16.mxu0 0
      %789 = vmatpush2.bf16.msra.mxu0 %v714
      %790 = vmatprep.subr.bf16.mxu0 0
      %791 = vmatpush2.bf16.msra.mxu0 %v713
      %792 = vmatprep.subr.bf16.mxu0 0
      %793 = vmatpush2.bf16.msra.mxu0 %v712
      %794 = vmatprep.subr.bf16.mxu0 0
      %795 = vmatpush2.bf16.msra.mxu0 %v711
      %796 = vmatprep.subr.bf16.mxu0 0
      %797 = vmatpush2.bf16.msra.mxu0 %v710
      %798 = vmatprep.mubr.bf16.mxu0 %v751
      %799 = vmatmul.mubr.bf16.gmra.mxu0 %v750
      %v800 = vpop.f32.mrf.mxu0
      %v801 = vadd.f32 0.0, %v800
      %v802 = vpop.f32.mrf.mxu0
      %v803 = vpop.f32.mrf.mxu0
      %v804 = vadd.f32 0.0, %v803
      %v805 = vpop.f32.mrf.mxu0
      %806 = vmatprep.mubr.bf16.mxu0 %v753
      %807 = vmatmul.mubr.bf16.gmra.mxu0 %v752
      %v808 = vpop.f32.mrf.mxu0
      %v809 = vadd.f32 0.0, %v808
      %v810 = vpop.f32.mrf.mxu0
      %v811 = vpop.f32.mrf.mxu0
      %v812 = vadd.f32 0.0, %v811
      %v813 = vpop.f32.mrf.mxu0
      %814 = vmatprep.mubr.bf16.mxu0 %v755
      %815 = vmatmul.mubr.bf16.gmra.mxu0 %v754
      %v816 = vpop.f32.mrf.mxu0
      %v817 = vadd.f32 0.0, %v816
      %v818 = vpop.f32.mrf.mxu0
      %v819 = vpop.f32.mrf.mxu0
      %v820 = vadd.f32 0.0, %v819
      %v821 = vpop.f32.mrf.mxu0
      %822 = vmatprep.mubr.bf16.mxu0 %v757
      %823 = vmatmul.mubr.bf16.gmra.mxu0 %v756
      %v824 = vpop.f32.mrf.mxu0
      %v825 = vadd.f32 0.0, %v824
      %v826 = vpop.f32.mrf.mxu0
      %v827 = vpop.f32.mrf.mxu0
      %v828 = vadd.f32 0.0, %v827
      %v829 = vpop.f32.mrf.mxu0
      %830 = vdwg.mxu0
      %s831 = scalar_lea.vmem %s4, 64
      %v832 = vld [vmem:[%s831] sm:$0xff]
      %v833 = vld [vmem:[%s831 + $0x8] sm:$0xff]
      %v834 = vld [vmem:[%s831 + $0x10] sm:$0xff]
      %v835 = vld [vmem:[%s831 + $0x18] sm:$0xff]
      %v836 = vld [vmem:[%s831 + $0x20] sm:$0xff]
      %v837 = vld [vmem:[%s831 + $0x28] sm:$0xff]
      %v838 = vld [vmem:[%s831 + $0x30] sm:$0xff]
      %v839 = vld [vmem:[%s831 + $0x38] sm:$0xff]
      %v848 = vunpack.c.l.b16 %v832
      %v849 = vunpack.c.h.b16 %v832
      %v850 = vunpack.c.l.b16 %v833
      %v851 = vunpack.c.h.b16 %v833
      %v852 = vunpack.c.l.b16 %v834
      %v853 = vunpack.c.h.b16 %v834
      %v854 = vunpack.c.l.b16 %v835
      %v855 = vunpack.c.h.b16 %v835
      %v856 = vunpack.c.l.b16 %v836
      %v857 = vunpack.c.h.b16 %v836
      %v858 = vunpack.c.l.b16 %v837
      %v859 = vunpack.c.h.b16 %v837
      %v860 = vunpack.c.l.b16 %v838
      %v861 = vunpack.c.h.b16 %v838
      %v862 = vunpack.c.l.b16 %v839
      %v863 = vunpack.c.h.b16 %v839
      %v864 = vpack.c.b16 %v850, %v848
      %v865 = vpack.c.b16 %v851, %v849
      %v866 = vpack.c.b16 %v854, %v852
      %v867 = vpack.c.b16 %v855, %v853
      %v868 = vpack.c.b16 %v858, %v856
      %v869 = vpack.c.b16 %v859, %v857
      %v870 = vpack.c.b16 %v862, %v860
      %v871 = vpack.c.b16 %v863, %v861
      %880 = vmatprep.subr.bf16.mxu0 0
      %881 = vmatpush1.bf16.msra.mxu0 %v709
      %882 = vmatprep.subr.bf16.mxu0 0
      %883 = vmatpush1.bf16.msra.mxu0 %v708
      %884 = vmatprep.subr.bf16.mxu0 0
      %885 = vmatpush1.bf16.msra.mxu0 %v707
      %886 = vmatprep.subr.bf16.mxu0 0
      %887 = vmatpush1.bf16.msra.mxu0 %v706
      %888 = vmatprep.subr.bf16.mxu0 0
      %889 = vmatpush1.bf16.msra.mxu0 %v705
      %890 = vmatprep.subr.bf16.mxu0 0
      %891 = vmatpush1.bf16.msra.mxu0 %v704
      %892 = vmatprep.subr.bf16.mxu0 0
      %893 = vmatpush1.bf16.msra.mxu0 %v703
      %894 = vmatprep.subr.bf16.mxu0 0
      %895 = vmatpush1.bf16.msra.mxu0 %v702
      %896 = vmatprep.subr.bf16.mxu0 0
      %897 = vmatpush2.bf16.msra.mxu0 %v717
      %898 = vmatprep.subr.bf16.mxu0 0
      %899 = vmatpush2.bf16.msra.mxu0 %v716
      %900 = vmatprep.subr.bf16.mxu0 0
      %901 = vmatpush2.bf16.msra.mxu0 %v715
      %902 = vmatprep.subr.bf16.mxu0 0
      %903 = vmatpush2.bf16.msra.mxu0 %v714
      %904 = vmatprep.subr.bf16.mxu0 0
      %905 = vmatpush2.bf16.msra.mxu0 %v713
      %906 = vmatprep.subr.bf16.mxu0 0
      %907 = vmatpush2.bf16.msra.mxu0 %v712
      %908 = vmatprep.subr.bf16.mxu0 0
      %909 = vmatpush2.bf16.msra.mxu0 %v711
      %910 = vmatprep.subr.bf16.mxu0 0
      %911 = vmatpush2.bf16.msra.mxu0 %v710
      %912 = vmatprep.mubr.bf16.mxu0 %v865
      %913 = vmatmul.mubr.bf16.gmra.mxu0 %v864
      %v914 = vpop.f32.mrf.mxu0
      %v915 = vadd.f32 0.0, %v914
      %v916 = vpop.f32.mrf.mxu0
      %v917 = vpop.f32.mrf.mxu0
      %v918 = vadd.f32 0.0, %v917
      %v919 = vpop.f32.mrf.mxu0
      %920 = vmatprep.mubr.bf16.mxu0 %v867
      %921 = vmatmul.mubr.bf16.gmra.mxu0 %v866
      %v922 = vpop.f32.mrf.mxu0
      %v923 = vadd.f32 0.0, %v922
      %v924 = vpop.f32.mrf.mxu0
      %v925 = vpop.f32.mrf.mxu0
      %v926 = vadd.f32 0.0, %v925
      %v927 = vpop.f32.mrf.mxu0
      %928 = vmatprep.mubr.bf16.mxu0 %v869
      %929 = vmatmul.mubr.bf16.gmra.mxu0 %v868
      %v930 = vpop.f32.mrf.mxu0
      %v931 = vadd.f32 0.0, %v930
      %v932 = vpop.f32.mrf.mxu0
      %v933 = vpop.f32.mrf.mxu0
      %v934 = vadd.f32 0.0, %v933
      %v935 = vpop.f32.mrf.mxu0
      %936 = vmatprep.mubr.bf16.mxu0 %v871
      %937 = vmatmul.mubr.bf16.gmra.mxu0 %v870
      %v938 = vpop.f32.mrf.mxu0
      %v939 = vadd.f32 0.0, %v938
      %v940 = vpop.f32.mrf.mxu0
      %v941 = vpop.f32.mrf.mxu0
      %v942 = vadd.f32 0.0, %v941
      %v943 = vpop.f32.mrf.mxu0
      %944 = vdwg.mxu0
      %v945 = vmax.f32 %v801, %v915
      %v946 = vmax.f32 %v804, %v918
      %v947 = vmax.f32 %v809, %v923
      %v948 = vmax.f32 %v812, %v926
      %v949 = vmax.f32 %v817, %v931
      %v950 = vmax.f32 %v820, %v934
      %v951 = vmax.f32 %v825, %v939
      %v952 = vmax.f32 %v828, %v942
      %s953 = scalar_lea.vmem %s4, 128
      %v954 = vld [vmem:[%s953] sm:$0xff]
      %v955 = vld [vmem:[%s953 + $0x8] sm:$0xff]
      %v956 = vld [vmem:[%s953 + $0x10] sm:$0xff]
      %v957 = vld [vmem:[%s953 + $0x18] sm:$0xff]
      %v958 = vld [vmem:[%s953 + $0x20] sm:$0xff]
      %v959 = vld [vmem:[%s953 + $0x28] sm:$0xff]
      %v960 = vld [vmem:[%s953 + $0x30] sm:$0xff]
      %v961 = vld [vmem:[%s953 + $0x38] sm:$0xff]
      %v970 = vunpack.c.l.b16 %v954
      %v971 = vunpack.c.h.b16 %v954
      %v972 = vunpack.c.l.b16 %v955
      %v973 = vunpack.c.h.b16 %v955
      %v974 = vunpack.c.l.b16 %v956
      %v975 = vunpack.c.h.b16 %v956
      %v976 = vunpack.c.l.b16 %v957
      %v977 = vunpack.c.h.b16 %v957
      %v978 = vunpack.c.l.b16 %v958
      %v979 = vunpack.c.h.b16 %v958
      %v980 = vunpack.c.l.b16 %v959
      %v981 = vunpack.c.h.b16 %v959
      %v982 = vunpack.c.l.b16 %v960
      %v983 = vunpack.c.h.b16 %v960
      %v984 = vunpack.c.l.b16 %v961
      %v985 = vunpack.c.h.b16 %v961
      %v986 = vpack.c.b16 %v972, %v970
      %v987 = vpack.c.b16 %v973, %v971
      %v988 = vpack.c.b16 %v976, %v974
      %v989 = vpack.c.b16 %v977, %v975
      %v990 = vpack.c.b16 %v980, %v978
      %v991 = vpack.c.b16 %v981, %v979
      %v992 = vpack.c.b16 %v984, %v982
      %v993 = vpack.c.b16 %v985, %v983
      %1002 = vmatprep.subr.bf16.mxu0 0
      %1003 = vmatpush1.bf16.msra.mxu0 %v709
      %1004 = vmatprep.subr.bf16.mxu0 0
      %1005 = vmatpush1.bf16.msra.mxu0 %v708
      %1006 = vmatprep.subr.bf16.mxu0 0
      %1007 = vmatpush1.bf16.msra.mxu0 %v707
      %1008 = vmatprep.subr.bf16.mxu0 0
      %1009 = vmatpush1.bf16.msra.mxu0 %v706
      %1010 = vmatprep.subr.bf16.mxu0 0
      %1011 = vmatpush1.bf16.msra.mxu0 %v705
      %1012 = vmatprep.subr.bf16.mxu0 0
      %1013 = vmatpush1.bf16.msra.mxu0 %v704
      %1014 = vmatprep.subr.bf16.mxu0 0
      %1015 = vmatpush1.bf16.msra.mxu0 %v703
      %1016 = vmatprep.subr.bf16.mxu0 0
      %1017 = vmatpush1.bf16.msra.mxu0 %v702
      %1018 = vmatprep.subr.bf16.mxu0 0
      %1019 = vmatpush2.bf16.msra.mxu0 %v717
      %1020 = vmatprep.subr.bf16.mxu0 0
      %1021 = vmatpush2.bf16.msra.mxu0 %v716
      %1022 = vmatprep.subr.bf16.mxu0 0
      %1023 = vmatpush2.bf16.msra.mxu0 %v715
      %1024 = vmatprep.subr.bf16.mxu0 0
      %1025 = vmatpush2.bf16.msra.mxu0 %v714
      %1026 = vmatprep.subr.bf16.mxu0 0
      %1027 = vmatpush2.bf16.msra.mxu0 %v713
      %1028 = vmatprep.subr.bf16.mxu0 0
      %1029 = vmatpush2.bf16.msra.mxu0 %v712
      %1030 = vmatprep.subr.bf16.mxu0 0
      %1031 = vmatpush2.bf16.msra.mxu0 %v711
      %1032 = vmatprep.subr.bf16.mxu0 0
      %1033 = vmatpush2.bf16.msra.mxu0 %v710
      %1034 = vmatprep.mubr.bf16.mxu0 %v987
      %1035 = vmatmul.mubr.bf16.gmra.mxu0 %v986
      %v1036 = vpop.f32.mrf.mxu0
      %v1037 = vadd.f32 0.0, %v1036
      %v1038 = vpop.f32.mrf.mxu0
      %v1039 = vpop.f32.mrf.mxu0
      %v1040 = vadd.f32 0.0, %v1039
      %v1041 = vpop.f32.mrf.mxu0
      %1042 = vmatprep.mubr.bf16.mxu0 %v989
      %1043 = vmatmul.mubr.bf16.gmra.mxu0 %v988
      %v1044 = vpop.f32.mrf.mxu0
      %v1045 = vadd.f32 0.0, %v1044
      %v1046 = vpop.f32.mrf.mxu0
      %v1047 = vpop.f32.mrf.mxu0
      %v1048 = vadd.f32 0.0, %v1047
      %v1049 = vpop.f32.mrf.mxu0
      %1050 = vmatprep.mubr.bf16.mxu0 %v991
      %1051 = vmatmul.mubr.bf16.gmra.mxu0 %v990
      %v1052 = vpop.f32.mrf.mxu0
      %v1053 = vadd.f32 0.0, %v1052
      %v1054 = vpop.f32.mrf.mxu0
      %v1055 = vpop.f32.mrf.mxu0
      %v1056 = vadd.f32 0.0, %v1055
      %v1057 = vpop.f32.mrf.mxu0
      %1058 = vmatprep.mubr.bf16.mxu0 %v993
      %1059 = vmatmul.mubr.bf16.gmra.mxu0 %v992
      %v1060 = vpop.f32.mrf.mxu0
      %v1061 = vadd.f32 0.0, %v1060
      %v1062 = vpop.f32.mrf.mxu0
      %v1063 = vpop.f32.mrf.mxu0
      %v1064 = vadd.f32 0.0, %v1063
      %v1065 = vpop.f32.mrf.mxu0
      %1066 = vdwg.mxu0
      %v1067 = vmax.f32 %v945, %v1037
      %v1068 = vmax.f32 %v946, %v1040
      %v1069 = vmax.f32 %v947, %v1045
      %v1070 = vmax.f32 %v948, %v1048
      %v1071 = vmax.f32 %v949, %v1053
      %v1072 = vmax.f32 %v950, %v1056
      %v1073 = vmax.f32 %v951, %v1061
      %v1074 = vmax.f32 %v952, %v1064
      %s1075 = scalar_lea.vmem %s4, 192
      %v1076 = vld [vmem:[%s1075] sm:$0xff]
      %v1077 = vld [vmem:[%s1075 + $0x8] sm:$0xff]
      %v1078 = vld [vmem:[%s1075 + $0x10] sm:$0xff]
      %v1079 = vld [vmem:[%s1075 + $0x18] sm:$0xff]
      %v1080 = vld [vmem:[%s1075 + $0x20] sm:$0xff]
      %v1081 = vld [vmem:[%s1075 + $0x28] sm:$0xff]
      %v1082 = vld [vmem:[%s1075 + $0x30] sm:$0xff]
      %v1083 = vld [vmem:[%s1075 + $0x38] sm:$0xff]
      %v1092 = vunpack.c.l.b16 %v1076
      %v1093 = vunpack.c.h.b16 %v1076
      %v1094 = vunpack.c.l.b16 %v1077
      %v1095 = vunpack.c.h.b16 %v1077
      %v1096 = vunpack.c.l.b16 %v1078
      %v1097 = vunpack.c.h.b16 %v1078
      %v1098 = vunpack.c.l.b16 %v1079
      %v1099 = vunpack.c.h.b16 %v1079
      %v1100 = vunpack.c.l.b16 %v1080
      %v1101 = vunpack.c.h.b16 %v1080
      %v1102 = vunpack.c.l.b16 %v1081
      %v1103 = vunpack.c.h.b16 %v1081
      %v1104 = vunpack.c.l.b16 %v1082
      %v1105 = vunpack.c.h.b16 %v1082
      %v1106 = vunpack.c.l.b16 %v1083
      %v1107 = vunpack.c.h.b16 %v1083
      %v1108 = vpack.c.b16 %v1094, %v1092
      %v1109 = vpack.c.b16 %v1095, %v1093
      %v1110 = vpack.c.b16 %v1098, %v1096
      %v1111 = vpack.c.b16 %v1099, %v1097
      %v1112 = vpack.c.b16 %v1102, %v1100
      %v1113 = vpack.c.b16 %v1103, %v1101
      %v1114 = vpack.c.b16 %v1106, %v1104
      %v1115 = vpack.c.b16 %v1107, %v1105
      %1124 = vmatprep.subr.bf16.mxu0 0
      %1125 = vmatpush1.bf16.msra.mxu0 %v709
      %1126 = vmatprep.subr.bf16.mxu0 0
      %1127 = vmatpush1.bf16.msra.mxu0 %v708
      %1128 = vmatprep.subr.bf16.mxu0 0
      %1129 = vmatpush1.bf16.msra.mxu0 %v707
      %1130 = vmatprep.subr.bf16.mxu0 0
      %1131 = vmatpush1.bf16.msra.mxu0 %v706
      %1132 = vmatprep.subr.bf16.mxu0 0
      %1133 = vmatpush1.bf16.msra.mxu0 %v705
      %1134 = vmatprep.subr.bf16.mxu0 0
      %1135 = vmatpush1.bf16.msra.mxu0 %v704
      %1136 = vmatprep.subr.bf16.mxu0 0
      %1137 = vmatpush1.bf16.msra.mxu0 %v703
      %1138 = vmatprep.subr.bf16.mxu0 0
      %1139 = vmatpush1.bf16.msra.mxu0 %v702
      %1140 = vmatprep.subr.bf16.mxu0 0
      %1141 = vmatpush2.bf16.msra.mxu0 %v717
      %1142 = vmatprep.subr.bf16.mxu0 0
      %1143 = vmatpush2.bf16.msra.mxu0 %v716
      %1144 = vmatprep.subr.bf16.mxu0 0
      %1145 = vmatpush2.bf16.msra.mxu0 %v715
      %1146 = vmatprep.subr.bf16.mxu0 0
      %1147 = vmatpush2.bf16.msra.mxu0 %v714
      %1148 = vmatprep.subr.bf16.mxu0 0
      %1149 = vmatpush2.bf16.msra.mxu0 %v713
      %1150 = vmatprep.subr.bf16.mxu0 0
      %1151 = vmatpush2.bf16.msra.mxu0 %v712
      %1152 = vmatprep.subr.bf16.mxu0 0
      %1153 = vmatpush2.bf16.msra.mxu0 %v711
      %1154 = vmatprep.subr.bf16.mxu0 0
      %1155 = vmatpush2.bf16.msra.mxu0 %v710
      %1156 = vmatprep.mubr.bf16.mxu0 %v1109
      %1157 = vmatmul.mubr.bf16.gmra.mxu0 %v1108
      %v1158 = vpop.f32.mrf.mxu0
      %v1159 = vadd.f32 0.0, %v1158
      %v1160 = vpop.f32.mrf.mxu0
      %v1161 = vpop.f32.mrf.mxu0
      %v1162 = vadd.f32 0.0, %v1161
      %v1163 = vpop.f32.mrf.mxu0
      %1164 = vmatprep.mubr.bf16.mxu0 %v1111
      %1165 = vmatmul.mubr.bf16.gmra.mxu0 %v1110
      %v1166 = vpop.f32.mrf.mxu0
      %v1167 = vadd.f32 0.0, %v1166
      %v1168 = vpop.f32.mrf.mxu0
      %v1169 = vpop.f32.mrf.mxu0
      %v1170 = vadd.f32 0.0, %v1169
      %v1171 = vpop.f32.mrf.mxu0
      %1172 = vmatprep.mubr.bf16.mxu0 %v1113
      %1173 = vmatmul.mubr.bf16.gmra.mxu0 %v1112
      %v1174 = vpop.f32.mrf.mxu0
      %v1175 = vadd.f32 0.0, %v1174
      %v1176 = vpop.f32.mrf.mxu0
      %v1177 = vpop.f32.mrf.mxu0
      %v1178 = vadd.f32 0.0, %v1177
      %v1179 = vpop.f32.mrf.mxu0
      %1180 = vmatprep.mubr.bf16.mxu0 %v1115
      %1181 = vmatmul.mubr.bf16.gmra.mxu0 %v1114
      %v1182 = vpop.f32.mrf.mxu0
      %v1183 = vadd.f32 0.0, %v1182
      %v1184 = vpop.f32.mrf.mxu0
      %v1185 = vpop.f32.mrf.mxu0
      %v1186 = vadd.f32 0.0, %v1185
      %v1187 = vpop.f32.mrf.mxu0
      %1188 = vdwg.mxu0
      %v1189 = vmax.f32 %v1067, %v1159
      %v1190 = vmax.f32 %v1068, %v1162
      %v1191 = vmax.f32 %v1069, %v1167
      %v1192 = vmax.f32 %v1070, %v1170
      %v1193 = vmax.f32 %v1071, %v1175
      %v1194 = vmax.f32 %v1072, %v1178
      %v1195 = vmax.f32 %v1073, %v1183
      %v1196 = vmax.f32 %v1074, %v1186
      %s1197 = scalar_lea.vmem %s4, 256
      %v1198 = vld [vmem:[%s1197] sm:$0xff]
      %v1199 = vld [vmem:[%s1197 + $0x8] sm:$0xff]
      %v1200 = vld [vmem:[%s1197 + $0x10] sm:$0xff]
      %v1201 = vld [vmem:[%s1197 + $0x18] sm:$0xff]
      %v1202 = vld [vmem:[%s1197 + $0x20] sm:$0xff]
      %v1203 = vld [vmem:[%s1197 + $0x28] sm:$0xff]
      %v1204 = vld [vmem:[%s1197 + $0x30] sm:$0xff]
      %v1205 = vld [vmem:[%s1197 + $0x38] sm:$0xff]
      %v1214 = vunpack.c.l.b16 %v1198
      %v1215 = vunpack.c.h.b16 %v1198
      %v1216 = vunpack.c.l.b16 %v1199
      %v1217 = vunpack.c.h.b16 %v1199
      %v1218 = vunpack.c.l.b16 %v1200
      %v1219 = vunpack.c.h.b16 %v1200
      %v1220 = vunpack.c.l.b16 %v1201
      %v1221 = vunpack.c.h.b16 %v1201
      %v1222 = vunpack.c.l.b16 %v1202
      %v1223 = vunpack.c.h.b16 %v1202
      %v1224 = vunpack.c.l.b16 %v1203
      %v1225 = vunpack.c.h.b16 %v1203
      %v1226 = vunpack.c.l.b16 %v1204
      %v1227 = vunpack.c.h.b16 %v1204
      %v1228 = vunpack.c.l.b16 %v1205
      %v1229 = vunpack.c.h.b16 %v1205
      %v1230 = vpack.c.b16 %v1216, %v1214
      %v1231 = vpack.c.b16 %v1217, %v1215
      %v1232 = vpack.c.b16 %v1220, %v1218
      %v1233 = vpack.c.b16 %v1221, %v1219
      %v1234 = vpack.c.b16 %v1224, %v1222
      %v1235 = vpack.c.b16 %v1225, %v1223
      %v1236 = vpack.c.b16 %v1228, %v1226
      %v1237 = vpack.c.b16 %v1229, %v1227
      %1246 = vmatprep.subr.bf16.mxu0 0
      %1247 = vmatpush1.bf16.msra.mxu0 %v709
      %1248 = vmatprep.subr.bf16.mxu0 0
      %1249 = vmatpush1.bf16.msra.mxu0 %v708
      %1250 = vmatprep.subr.bf16.mxu0 0
      %1251 = vmatpush1.bf16.msra.mxu0 %v707
      %1252 = vmatprep.subr.bf16.mxu0 0
      %1253 = vmatpush1.bf16.msra.mxu0 %v706
      %1254 = vmatprep.subr.bf16.mxu0 0
      %1255 = vmatpush1.bf16.msra.mxu0 %v705
      %1256 = vmatprep.subr.bf16.mxu0 0
      %1257 = vmatpush1.bf16.msra.mxu0 %v704
      %1258 = vmatprep.subr.bf16.mxu0 0
      %1259 = vmatpush1.bf16.msra.mxu0 %v703
      %1260 = vmatprep.subr.bf16.mxu0 0
      %1261 = vmatpush1.bf16.msra.mxu0 %v702
      %1262 = vmatprep.subr.bf16.mxu0 0
      %1263 = vmatpush2.bf16.msra.mxu0 %v717
      %1264 = vmatprep.subr.bf16.mxu0 0
      %1265 = vmatpush2.bf16.msra.mxu0 %v716
      %1266 = vmatprep.subr.bf16.mxu0 0
      %1267 = vmatpush2.bf16.msra.mxu0 %v715
      %1268 = vmatprep.subr.bf16.mxu0 0
      %1269 = vmatpush2.bf16.msra.mxu0 %v714
      %1270 = vmatprep.subr.bf16.mxu0 0
      %1271 = vmatpush2.bf16.msra.mxu0 %v713
      %1272 = vmatprep.subr.bf16.mxu0 0
      %1273 = vmatpush2.bf16.msra.mxu0 %v712
      %1274 = vmatprep.subr.bf16.mxu0 0
      %1275 = vmatpush2.bf16.msra.mxu0 %v711
      %1276 = vmatprep.subr.bf16.mxu0 0
      %1277 = vmatpush2.bf16.msra.mxu0 %v710
      %1278 = vmatprep.mubr.bf16.mxu0 %v1231
      %1279 = vmatmul.mubr.bf16.gmra.mxu0 %v1230
      %v1280 = vpop.f32.mrf.mxu0
      %v1281 = vadd.f32 0.0, %v1280
      %v1282 = vpop.f32.mrf.mxu0
      %v1283 = vpop.f32.mrf.mxu0
      %v1284 = vadd.f32 0.0, %v1283
      %v1285 = vpop.f32.mrf.mxu0
      %1286 = vmatprep.mubr.bf16.mxu0 %v1233
      %1287 = vmatmul.mubr.bf16.gmra.mxu0 %v1232
      %v1288 = vpop.f32.mrf.mxu0
      %v1289 = vadd.f32 0.0, %v1288
      %v1290 = vpop.f32.mrf.mxu0
      %v1291 = vpop.f32.mrf.mxu0
      %v1292 = vadd.f32 0.0, %v1291
      %v1293 = vpop.f32.mrf.mxu0
      %1294 = vmatprep.mubr.bf16.mxu0 %v1235
      %1295 = vmatmul.mubr.bf16.gmra.mxu0 %v1234
      %v1296 = vpop.f32.mrf.mxu0
      %v1297 = vadd.f32 0.0, %v1296
      %v1298 = vpop.f32.mrf.mxu0
      %v1299 = vpop.f32.mrf.mxu0
      %v1300 = vadd.f32 0.0, %v1299
      %v1301 = vpop.f32.mrf.mxu0
      %1302 = vmatprep.mubr.bf16.mxu0 %v1237
      %1303 = vmatmul.mubr.bf16.gmra.mxu0 %v1236
      %v1304 = vpop.f32.mrf.mxu0
      %v1305 = vadd.f32 0.0, %v1304
      %v1306 = vpop.f32.mrf.mxu0
      %v1307 = vpop.f32.mrf.mxu0
      %v1308 = vadd.f32 0.0, %v1307
      %v1309 = vpop.f32.mrf.mxu0
      %1310 = vdwg.mxu0
      %v1311 = vmax.f32 %v1189, %v1281
      %v1312 = vmax.f32 %v1190, %v1284
      %v1313 = vmax.f32 %v1191, %v1289
      %v1314 = vmax.f32 %v1192, %v1292
      %v1315 = vmax.f32 %v1193, %v1297
      %v1316 = vmax.f32 %v1194, %v1300
      %v1317 = vmax.f32 %v1195, %v1305
      %v1318 = vmax.f32 %v1196, %v1308
      %s1319 = scalar_lea.vmem %s4, 320
      %v1320 = vld [vmem:[%s1319] sm:$0xff]
      %v1321 = vld [vmem:[%s1319 + $0x8] sm:$0xff]
      %v1322 = vld [vmem:[%s1319 + $0x10] sm:$0xff]
      %v1323 = vld [vmem:[%s1319 + $0x18] sm:$0xff]
      %v1324 = vld [vmem:[%s1319 + $0x20] sm:$0xff]
      %v1325 = vld [vmem:[%s1319 + $0x28] sm:$0xff]
      %v1326 = vld [vmem:[%s1319 + $0x30] sm:$0xff]
      %v1327 = vld [vmem:[%s1319 + $0x38] sm:$0xff]
      %v1336 = vunpack.c.l.b16 %v1320
      %v1337 = vunpack.c.h.b16 %v1320
      %v1338 = vunpack.c.l.b16 %v1321
      %v1339 = vunpack.c.h.b16 %v1321
      %v1340 = vunpack.c.l.b16 %v1322
      %v1341 = vunpack.c.h.b16 %v1322
      %v1342 = vunpack.c.l.b16 %v1323
      %v1343 = vunpack.c.h.b16 %v1323
      %v1344 = vunpack.c.l.b16 %v1324
      %v1345 = vunpack.c.h.b16 %v1324
      %v1346 = vunpack.c.l.b16 %v1325
      %v1347 = vunpack.c.h.b16 %v1325
      %v1348 = vunpack.c.l.b16 %v1326
      %v1349 = vunpack.c.h.b16 %v1326
      %v1350 = vunpack.c.l.b16 %v1327
      %v1351 = vunpack.c.h.b16 %v1327
      %v1352 = vpack.c.b16 %v1338, %v1336
      %v1353 = vpack.c.b16 %v1339, %v1337
      %v1354 = vpack.c.b16 %v1342, %v1340
      %v1355 = vpack.c.b16 %v1343, %v1341
      %v1356 = vpack.c.b16 %v1346, %v1344
      %v1357 = vpack.c.b16 %v1347, %v1345
      %v1358 = vpack.c.b16 %v1350, %v1348
      %v1359 = vpack.c.b16 %v1351, %v1349
      %1368 = vmatprep.subr.bf16.mxu0 0
      %1369 = vmatpush1.bf16.msra.mxu0 %v709
      %1370 = vmatprep.subr.bf16.mxu0 0
      %1371 = vmatpush1.bf16.msra.mxu0 %v708
      %1372 = vmatprep.subr.bf16.mxu0 0
      %1373 = vmatpush1.bf16.msra.mxu0 %v707
      %1374 = vmatprep.subr.bf16.mxu0 0
      %1375 = vmatpush1.bf16.msra.mxu0 %v706
      %1376 = vmatprep.subr.bf16.mxu0 0
      %1377 = vmatpush1.bf16.msra.mxu0 %v705
      %1378 = vmatprep.subr.bf16.mxu0 0
      %1379 = vmatpush1.bf16.msra.mxu0 %v704
      %1380 = vmatprep.subr.bf16.mxu0 0
      %1381 = vmatpush1.bf16.msra.mxu0 %v703
      %1382 = vmatprep.subr.bf16.mxu0 0
      %1383 = vmatpush1.bf16.msra.mxu0 %v702
      %1384 = vmatprep.subr.bf16.mxu0 0
      %1385 = vmatpush2.bf16.msra.mxu0 %v717
      %1386 = vmatprep.subr.bf16.mxu0 0
      %1387 = vmatpush2.bf16.msra.mxu0 %v716
      %1388 = vmatprep.subr.bf16.mxu0 0
      %1389 = vmatpush2.bf16.msra.mxu0 %v715
      %1390 = vmatprep.subr.bf16.mxu0 0
      %1391 = vmatpush2.bf16.msra.mxu0 %v714
      %1392 = vmatprep.subr.bf16.mxu0 0
      %1393 = vmatpush2.bf16.msra.mxu0 %v713
      %1394 = vmatprep.subr.bf16.mxu0 0
      %1395 = vmatpush2.bf16.msra.mxu0 %v712
      %1396 = vmatprep.subr.bf16.mxu0 0
      %1397 = vmatpush2.bf16.msra.mxu0 %v711
      %1398 = vmatprep.subr.bf16.mxu0 0
      %1399 = vmatpush2.bf16.msra.mxu0 %v710
      %1400 = vmatprep.mubr.bf16.mxu0 %v1353
      %1401 = vmatmul.mubr.bf16.gmra.mxu0 %v1352
      %v1402 = vpop.f32.mrf.mxu0
      %v1403 = vadd.f32 0.0, %v1402
      %v1404 = vpop.f32.mrf.mxu0
      %v1405 = vpop.f32.mrf.mxu0
      %v1406 = vadd.f32 0.0, %v1405
      %v1407 = vpop.f32.mrf.mxu0
      %1408 = vmatprep.mubr.bf16.mxu0 %v1355
      %1409 = vmatmul.mubr.bf16.gmra.mxu0 %v1354
      %v1410 = vpop.f32.mrf.mxu0
      %v1411 = vadd.f32 0.0, %v1410
      %v1412 = vpop.f32.mrf.mxu0
      %v1413 = vpop.f32.mrf.mxu0
      %v1414 = vadd.f32 0.0, %v1413
      %v1415 = vpop.f32.mrf.mxu0
      %1416 = vmatprep.mubr.bf16.mxu0 %v1357
      %1417 = vmatmul.mubr.bf16.gmra.mxu0 %v1356
      %v1418 = vpop.f32.mrf.mxu0
      %v1419 = vadd.f32 0.0, %v1418
      %v1420 = vpop.f32.mrf.mxu0
      %v1421 = vpop.f32.mrf.mxu0
      %v1422 = vadd.f32 0.0, %v1421
      %v1423 = vpop.f32.mrf.mxu0
      %1424 = vmatprep.mubr.bf16.mxu0 %v1359
      %1425 = vmatmul.mubr.bf16.gmra.mxu0 %v1358
      %v1426 = vpop.f32.mrf.mxu0
      %v1427 = vadd.f32 0.0, %v1426
      %v1428 = vpop.f32.mrf.mxu0
      %v1429 = vpop.f32.mrf.mxu0
      %v1430 = vadd.f32 0.0, %v1429
      %v1431 = vpop.f32.mrf.mxu0
      %1432 = vdwg.mxu0
      %v1433 = vmax.f32 %v1311, %v1403
      %v1434 = vmax.f32 %v1312, %v1406
      %v1435 = vmax.f32 %v1313, %v1411
      %v1436 = vmax.f32 %v1314, %v1414
      %v1437 = vmax.f32 %v1315, %v1419
      %v1438 = vmax.f32 %v1316, %v1422
      %v1439 = vmax.f32 %v1317, %v1427
      %v1440 = vmax.f32 %v1318, %v1430
      %s1441 = scalar_lea.vmem %s4, 384
      %v1442 = vld [vmem:[%s1441] sm:$0xff]
      %v1443 = vld [vmem:[%s1441 + $0x8] sm:$0xff]
      %v1444 = vld [vmem:[%s1441 + $0x10] sm:$0xff]
      %v1445 = vld [vmem:[%s1441 + $0x18] sm:$0xff]
      %v1446 = vld [vmem:[%s1441 + $0x20] sm:$0xff]
      %v1447 = vld [vmem:[%s1441 + $0x28] sm:$0xff]
      %v1448 = vld [vmem:[%s1441 + $0x30] sm:$0xff]
      %v1449 = vld [vmem:[%s1441 + $0x38] sm:$0xff]
      %v1458 = vunpack.c.l.b16 %v1442
      %v1459 = vunpack.c.h.b16 %v1442
      %v1460 = vunpack.c.l.b16 %v1443
      %v1461 = vunpack.c.h.b16 %v1443
      %v1462 = vunpack.c.l.b16 %v1444
      %v1463 = vunpack.c.h.b16 %v1444
      %v1464 = vunpack.c.l.b16 %v1445
      %v1465 = vunpack.c.h.b16 %v1445
      %v1466 = vunpack.c.l.b16 %v1446
      %v1467 = vunpack.c.h.b16 %v1446
      %v1468 = vunpack.c.l.b16 %v1447
      %v1469 = vunpack.c.h.b16 %v1447
      %v1470 = vunpack.c.l.b16 %v1448
      %v1471 = vunpack.c.h.b16 %v1448
      %v1472 = vunpack.c.l.b16 %v1449
      %v1473 = vunpack.c.h.b16 %v1449
      %v1474 = vpack.c.b16 %v1460, %v1458
      %v1475 = vpack.c.b16 %v1461, %v1459
      %v1476 = vpack.c.b16 %v1464, %v1462
      %v1477 = vpack.c.b16 %v1465, %v1463
      %v1478 = vpack.c.b16 %v1468, %v1466
      %v1479 = vpack.c.b16 %v1469, %v1467
      %v1480 = vpack.c.b16 %v1472, %v1470
      %v1481 = vpack.c.b16 %v1473, %v1471
      %1490 = vmatprep.subr.bf16.mxu0 0
      %1491 = vmatpush1.bf16.msra.mxu0 %v709
      %1492 = vmatprep.subr.bf16.mxu0 0
      %1493 = vmatpush1.bf16.msra.mxu0 %v708
      %1494 = vmatprep.subr.bf16.mxu0 0
      %1495 = vmatpush1.bf16.msra.mxu0 %v707
      %1496 = vmatprep.subr.bf16.mxu0 0
      %1497 = vmatpush1.bf16.msra.mxu0 %v706
      %1498 = vmatprep.subr.bf16.mxu0 0
      %1499 = vmatpush1.bf16.msra.mxu0 %v705
      %1500 = vmatprep.subr.bf16.mxu0 0
      %1501 = vmatpush1.bf16.msra.mxu0 %v704
      %1502 = vmatprep.subr.bf16.mxu0 0
      %1503 = vmatpush1.bf16.msra.mxu0 %v703
      %1504 = vmatprep.subr.bf16.mxu0 0
      %1505 = vmatpush1.bf16.msra.mxu0 %v702
      %1506 = vmatprep.subr.bf16.mxu0 0
      %1507 = vmatpush2.bf16.msra.mxu0 %v717
      %1508 = vmatprep.subr.bf16.mxu0 0
      %1509 = vmatpush2.bf16.msra.mxu0 %v716
      %1510 = vmatprep.subr.bf16.mxu0 0
      %1511 = vmatpush2.bf16.msra.mxu0 %v715
      %1512 = vmatprep.subr.bf16.mxu0 0
      %1513 = vmatpush2.bf16.msra.mxu0 %v714
      %1514 = vmatprep.subr.bf16.mxu0 0
      %1515 = vmatpush2.bf16.msra.mxu0 %v713
      %1516 = vmatprep.subr.bf16.mxu0 0
      %1517 = vmatpush2.bf16.msra.mxu0 %v712
      %1518 = vmatprep.subr.bf16.mxu0 0
      %1519 = vmatpush2.bf16.msra.mxu0 %v711
      %1520 = vmatprep.subr.bf16.mxu0 0
      %1521 = vmatpush2.bf16.msra.mxu0 %v710
      %1522 = vmatprep.mubr.bf16.mxu0 %v1475
      %1523 = vmatmul.mubr.bf16.gmra.mxu0 %v1474
      %v1524 = vpop.f32.mrf.mxu0
      %v1525 = vadd.f32 0.0, %v1524
      %v1526 = vpop.f32.mrf.mxu0
      %v1527 = vpop.f32.mrf.mxu0
      %v1528 = vadd.f32 0.0, %v1527
      %v1529 = vpop.f32.mrf.mxu0
      %1530 = vmatprep.mubr.bf16.mxu0 %v1477
      %1531 = vmatmul.mubr.bf16.gmra.mxu0 %v1476
      %v1532 = vpop.f32.mrf.mxu0
      %v1533 = vadd.f32 0.0, %v1532
      %v1534 = vpop.f32.mrf.mxu0
      %v1535 = vpop.f32.mrf.mxu0
      %v1536 = vadd.f32 0.0, %v1535
      %v1537 = vpop.f32.mrf.mxu0
      %1538 = vmatprep.mubr.bf16.mxu0 %v1479
      %1539 = vmatmul.mubr.bf16.gmra.mxu0 %v1478
      %v1540 = vpop.f32.mrf.mxu0
      %v1541 = vadd.f32 0.0, %v1540
      %v1542 = vpop.f32.mrf.mxu0
      %v1543 = vpop.f32.mrf.mxu0
      %v1544 = vadd.f32 0.0, %v1543
      %v1545 = vpop.f32.mrf.mxu0
      %1546 = vmatprep.mubr.bf16.mxu0 %v1481
      %1547 = vmatmul.mubr.bf16.gmra.mxu0 %v1480
      %v1548 = vpop.f32.mrf.mxu0
      %v1549 = vadd.f32 0.0, %v1548
      %v1550 = vpop.f32.mrf.mxu0
      %v1551 = vpop.f32.mrf.mxu0
      %v1552 = vadd.f32 0.0, %v1551
      %v1553 = vpop.f32.mrf.mxu0
      %1554 = vdwg.mxu0
      %v1555 = vmax.f32 %v1433, %v1525
      %v1556 = vmax.f32 %v1434, %v1528
      %v1557 = vmax.f32 %v1435, %v1533
      %v1558 = vmax.f32 %v1436, %v1536
      %v1559 = vmax.f32 %v1437, %v1541
      %v1560 = vmax.f32 %v1438, %v1544
      %v1561 = vmax.f32 %v1439, %v1549
      %v1562 = vmax.f32 %v1440, %v1552
      %s1563 = scalar_lea.vmem %s4, 448
      %v1564 = vld [vmem:[%s1563] sm:$0xff]
      %v1565 = vld [vmem:[%s1563 + $0x8] sm:$0xff]
      %v1566 = vld [vmem:[%s1563 + $0x10] sm:$0xff]
      %v1567 = vld [vmem:[%s1563 + $0x18] sm:$0xff]
      %v1568 = vld [vmem:[%s1563 + $0x20] sm:$0xff]
      %v1569 = vld [vmem:[%s1563 + $0x28] sm:$0xff]
      %v1570 = vld [vmem:[%s1563 + $0x30] sm:$0xff]
      %v1571 = vld [vmem:[%s1563 + $0x38] sm:$0xff]
      %v1580 = vunpack.c.l.b16 %v1564
      %v1581 = vunpack.c.h.b16 %v1564
      %v1582 = vunpack.c.l.b16 %v1565
      %v1583 = vunpack.c.h.b16 %v1565
      %v1584 = vunpack.c.l.b16 %v1566
      %v1585 = vunpack.c.h.b16 %v1566
      %v1586 = vunpack.c.l.b16 %v1567
      %v1587 = vunpack.c.h.b16 %v1567
      %v1588 = vunpack.c.l.b16 %v1568
      %v1589 = vunpack.c.h.b16 %v1568
      %v1590 = vunpack.c.l.b16 %v1569
      %v1591 = vunpack.c.h.b16 %v1569
      %v1592 = vunpack.c.l.b16 %v1570
      %v1593 = vunpack.c.h.b16 %v1570
      %v1594 = vunpack.c.l.b16 %v1571
      %v1595 = vunpack.c.h.b16 %v1571
      %v1596 = vpack.c.b16 %v1582, %v1580
      %v1597 = vpack.c.b16 %v1583, %v1581
      %v1598 = vpack.c.b16 %v1586, %v1584
      %v1599 = vpack.c.b16 %v1587, %v1585
      %v1600 = vpack.c.b16 %v1590, %v1588
      %v1601 = vpack.c.b16 %v1591, %v1589
      %v1602 = vpack.c.b16 %v1594, %v1592
      %v1603 = vpack.c.b16 %v1595, %v1593
      %1612 = vmatprep.subr.bf16.mxu0 0
      %1613 = vmatpush1.bf16.msra.mxu0 %v709
      %1614 = vmatprep.subr.bf16.mxu0 0
      %1615 = vmatpush1.bf16.msra.mxu0 %v708
      %1616 = vmatprep.subr.bf16.mxu0 0
      %1617 = vmatpush1.bf16.msra.mxu0 %v707
      %1618 = vmatprep.subr.bf16.mxu0 0
      %1619 = vmatpush1.bf16.msra.mxu0 %v706
      %1620 = vmatprep.subr.bf16.mxu0 0
      %1621 = vmatpush1.bf16.msra.mxu0 %v705
      %1622 = vmatprep.subr.bf16.mxu0 0
      %1623 = vmatpush1.bf16.msra.mxu0 %v704
      %1624 = vmatprep.subr.bf16.mxu0 0
      %1625 = vmatpush1.bf16.msra.mxu0 %v703
      %1626 = vmatprep.subr.bf16.mxu0 0
      %1627 = vmatpush1.bf16.msra.mxu0 %v702
      %1628 = vmatprep.subr.bf16.mxu0 0
      %1629 = vmatpush2.bf16.msra.mxu0 %v717
      %1630 = vmatprep.subr.bf16.mxu0 0
      %1631 = vmatpush2.bf16.msra.mxu0 %v716
      %1632 = vmatprep.subr.bf16.mxu0 0
      %1633 = vmatpush2.bf16.msra.mxu0 %v715
      %1634 = vmatprep.subr.bf16.mxu0 0
      %1635 = vmatpush2.bf16.msra.mxu0 %v714
      %1636 = vmatprep.subr.bf16.mxu0 0
      %1637 = vmatpush2.bf16.msra.mxu0 %v713
      %1638 = vmatprep.subr.bf16.mxu0 0
      %1639 = vmatpush2.bf16.msra.mxu0 %v712
      %1640 = vmatprep.subr.bf16.mxu0 0
      %1641 = vmatpush2.bf16.msra.mxu0 %v711
      %1642 = vmatprep.subr.bf16.mxu0 0
      %1643 = vmatpush2.bf16.msra.mxu0 %v710
      %1644 = vmatprep.mubr.bf16.mxu0 %v1597
      %1645 = vmatmul.mubr.bf16.gmra.mxu0 %v1596
      %v1646 = vpop.f32.mrf.mxu0
      %v1647 = vadd.f32 0.0, %v1646
      %v1648 = vpop.f32.mrf.mxu0
      %v1649 = vpop.f32.mrf.mxu0
      %v1650 = vadd.f32 0.0, %v1649
      %v1651 = vpop.f32.mrf.mxu0
      %1652 = vmatprep.mubr.bf16.mxu0 %v1599
      %1653 = vmatmul.mubr.bf16.gmra.mxu0 %v1598
      %v1654 = vpop.f32.mrf.mxu0
      %v1655 = vadd.f32 0.0, %v1654
      %v1656 = vpop.f32.mrf.mxu0
      %v1657 = vpop.f32.mrf.mxu0
      %v1658 = vadd.f32 0.0, %v1657
      %v1659 = vpop.f32.mrf.mxu0
      %1660 = vmatprep.mubr.bf16.mxu0 %v1601
      %1661 = vmatmul.mubr.bf16.gmra.mxu0 %v1600
      %v1662 = vpop.f32.mrf.mxu0
      %v1663 = vadd.f32 0.0, %v1662
      %v1664 = vpop.f32.mrf.mxu0
      %v1665 = vpop.f32.mrf.mxu0
      %v1666 = vadd.f32 0.0, %v1665
      %v1667 = vpop.f32.mrf.mxu0
      %1668 = vmatprep.mubr.bf16.mxu0 %v1603
      %1669 = vmatmul.mubr.bf16.gmra.mxu0 %v1602
      %v1670 = vpop.f32.mrf.mxu0
      %v1671 = vadd.f32 0.0, %v1670
      %v1672 = vpop.f32.mrf.mxu0
      %v1673 = vpop.f32.mrf.mxu0
      %v1674 = vadd.f32 0.0, %v1673
      %v1675 = vpop.f32.mrf.mxu0
      %1676 = vdwg.mxu0
      %v1677 = vmax.f32 %v1555, %v1647
      %v1678 = vmax.f32 %v1556, %v1650
      %v1679 = vmax.f32 %v1557, %v1655
      %v1680 = vmax.f32 %v1558, %v1658
      %v1681 = vmax.f32 %v1559, %v1663
      %v1682 = vmax.f32 %v1560, %v1666
      %v1683 = vmax.f32 %v1561, %v1671
      %v1684 = vmax.f32 %v1562, %v1674
      %s1685 = scalar_lea.vmem %s4, 512
      %v1686 = vld [vmem:[%s1685] sm:$0xff]
      %v1687 = vld [vmem:[%s1685 + $0x8] sm:$0xff]
      %v1688 = vld [vmem:[%s1685 + $0x10] sm:$0xff]
      %v1689 = vld [vmem:[%s1685 + $0x18] sm:$0xff]
      %v1690 = vld [vmem:[%s1685 + $0x20] sm:$0xff]
      %v1691 = vld [vmem:[%s1685 + $0x28] sm:$0xff]
      %v1692 = vld [vmem:[%s1685 + $0x30] sm:$0xff]
      %v1693 = vld [vmem:[%s1685 + $0x38] sm:$0xff]
      %v1702 = vunpack.c.l.b16 %v1686
      %v1703 = vunpack.c.h.b16 %v1686
      %v1704 = vunpack.c.l.b16 %v1687
      %v1705 = vunpack.c.h.b16 %v1687
      %v1706 = vunpack.c.l.b16 %v1688
      %v1707 = vunpack.c.h.b16 %v1688
      %v1708 = vunpack.c.l.b16 %v1689
      %v1709 = vunpack.c.h.b16 %v1689
      %v1710 = vunpack.c.l.b16 %v1690
      %v1711 = vunpack.c.h.b16 %v1690
      %v1712 = vunpack.c.l.b16 %v1691
      %v1713 = vunpack.c.h.b16 %v1691
      %v1714 = vunpack.c.l.b16 %v1692
      %v1715 = vunpack.c.h.b16 %v1692
      %v1716 = vunpack.c.l.b16 %v1693
      %v1717 = vunpack.c.h.b16 %v1693
      %v1718 = vpack.c.b16 %v1704, %v1702
      %v1719 = vpack.c.b16 %v1705, %v1703
      %v1720 = vpack.c.b16 %v1708, %v1706
      %v1721 = vpack.c.b16 %v1709, %v1707
      %v1722 = vpack.c.b16 %v1712, %v1710
      %v1723 = vpack.c.b16 %v1713, %v1711
      %v1724 = vpack.c.b16 %v1716, %v1714
      %v1725 = vpack.c.b16 %v1717, %v1715
      %1734 = vmatprep.subr.bf16.mxu0 0
      %1735 = vmatpush1.bf16.msra.mxu0 %v709
      %1736 = vmatprep.subr.bf16.mxu0 0
      %1737 = vmatpush1.bf16.msra.mxu0 %v708
      %1738 = vmatprep.subr.bf16.mxu0 0
      %1739 = vmatpush1.bf16.msra.mxu0 %v707
      %1740 = vmatprep.subr.bf16.mxu0 0
      %1741 = vmatpush1.bf16.msra.mxu0 %v706
      %1742 = vmatprep.subr.bf16.mxu0 0
      %1743 = vmatpush1.bf16.msra.mxu0 %v705
      %1744 = vmatprep.subr.bf16.mxu0 0
      %1745 = vmatpush1.bf16.msra.mxu0 %v704
      %1746 = vmatprep.subr.bf16.mxu0 0
      %1747 = vmatpush1.bf16.msra.mxu0 %v703
      %1748 = vmatprep.subr.bf16.mxu0 0
      %1749 = vmatpush1.bf16.msra.mxu0 %v702
      %1750 = vmatprep.subr.bf16.mxu0 0
      %1751 = vmatpush2.bf16.msra.mxu0 %v717
      %1752 = vmatprep.subr.bf16.mxu0 0
      %1753 = vmatpush2.bf16.msra.mxu0 %v716
      %1754 = vmatprep.subr.bf16.mxu0 0
      %1755 = vmatpush2.bf16.msra.mxu0 %v715
      %1756 = vmatprep.subr.bf16.mxu0 0
      %1757 = vmatpush2.bf16.msra.mxu0 %v714
      %1758 = vmatprep.subr.bf16.mxu0 0
      %1759 = vmatpush2.bf16.msra.mxu0 %v713
      %1760 = vmatprep.subr.bf16.mxu0 0
      %1761 = vmatpush2.bf16.msra.mxu0 %v712
      %1762 = vmatprep.subr.bf16.mxu0 0
      %1763 = vmatpush2.bf16.msra.mxu0 %v711
      %1764 = vmatprep.subr.bf16.mxu0 0
      %1765 = vmatpush2.bf16.msra.mxu0 %v710
      %1766 = vmatprep.mubr.bf16.mxu0 %v1719
      %1767 = vmatmul.mubr.bf16.gmra.mxu0 %v1718
      %v1768 = vpop.f32.mrf.mxu0
      %v1769 = vadd.f32 0.0, %v1768
      %v1770 = vpop.f32.mrf.mxu0
      %v1771 = vpop.f32.mrf.mxu0
      %v1772 = vadd.f32 0.0, %v1771
      %v1773 = vpop.f32.mrf.mxu0
      %1774 = vmatprep.mubr.bf16.mxu0 %v1721
      %1775 = vmatmul.mubr.bf16.gmra.mxu0 %v1720
      %v1776 = vpop.f32.mrf.mxu0
      %v1777 = vadd.f32 0.0, %v1776
      %v1778 = vpop.f32.mrf.mxu0
      %v1779 = vpop.f32.mrf.mxu0
      %v1780 = vadd.f32 0.0, %v1779
      %v1781 = vpop.f32.mrf.mxu0
      %1782 = vmatprep.mubr.bf16.mxu0 %v1723
      %1783 = vmatmul.mubr.bf16.gmra.mxu0 %v1722
      %v1784 = vpop.f32.mrf.mxu0
      %v1785 = vadd.f32 0.0, %v1784
      %v1786 = vpop.f32.mrf.mxu0
      %v1787 = vpop.f32.mrf.mxu0
      %v1788 = vadd.f32 0.0, %v1787
      %v1789 = vpop.f32.mrf.mxu0
      %1790 = vmatprep.mubr.bf16.mxu0 %v1725
      %1791 = vmatmul.mubr.bf16.gmra.mxu0 %v1724
      %v1792 = vpop.f32.mrf.mxu0
      %v1793 = vadd.f32 0.0, %v1792
      %v1794 = vpop.f32.mrf.mxu0
      %v1795 = vpop.f32.mrf.mxu0
      %v1796 = vadd.f32 0.0, %v1795
      %v1797 = vpop.f32.mrf.mxu0
      %1798 = vdwg.mxu0
      %v1799 = vmax.f32 %v1677, %v1769
      %v1800 = vmax.f32 %v1678, %v1772
      %v1801 = vmax.f32 %v1679, %v1777
      %v1802 = vmax.f32 %v1680, %v1780
      %v1803 = vmax.f32 %v1681, %v1785
      %v1804 = vmax.f32 %v1682, %v1788
      %v1805 = vmax.f32 %v1683, %v1793
      %v1806 = vmax.f32 %v1684, %v1796
      %v1807 = vpack.c.bf16 %v1800, %v1799
      %v1808 = vpack.c.bf16 %v1802, %v1801
      %v1809 = vpack.c.bf16 %v1804, %v1803
      %v1810 = vpack.c.bf16 %v1806, %v1805
      %v1811 = vld [vmem:[%s2] sm:$0xff]
      %v1812 = vld [vmem:[%s2 + $0x8] sm:$0x1]
      %v1813 = vld [vmem:[%s5] sm:$0xf]
      %v1814 = vld [vmem:[%s5 + $0x4] sm:$0xf]
      %v1817 = vunpack.c.l.b16 %v1813
      %v1818 = vunpack.c.l.b16 %v1814
      %v1819 = vpack.c.b16 %v1818, %v1817
      %vm1820 = vcmask 523264
      %v1822 = vsel %vm1820, %v1819, 0
      %1824 = vmatprep.subr.bf16.mxu0 0
      %1825 = vmatpush1.bf16.msra.mxu0 0
      %1826 = vmatprep.subr.bf16.mxu0 0
      %1827 = vmatpush1.bf16.msra.mxu0 0
      %1828 = vmatprep.subr.bf16.mxu0 0
      %1829 = vmatpush1.bf16.msra.mxu0 0
      %1830 = vmatprep.subr.bf16.mxu0 0
      %1831 = vmatpush1.bf16.msra.mxu0 0
      %1832 = vmatprep.subr.bf16.mxu0 0
      %1833 = vmatpush1.bf16.msra.mxu0 %v1810
      %1834 = vmatprep.subr.bf16.mxu0 0
      %1835 = vmatpush1.bf16.msra.mxu0 %v1809
      %1836 = vmatprep.subr.bf16.mxu0 0
      %1837 = vmatpush1.bf16.msra.mxu0 %v1808
      %1838 = vmatprep.subr.bf16.mxu0 0
      %1839 = vmatpush1.bf16.msra.mxu0 %v1807
      %1840 = vmatprep.subr.bf16.mxu0 0
      %1841 = vmatpush2.bf16.msra.mxu0 0
      %1842 = vmatprep.subr.bf16.mxu0 0
      %1843 = vmatpush2.bf16.msra.mxu0 0
      %1844 = vmatprep.subr.bf16.mxu0 0
      %1845 = vmatpush2.bf16.msra.mxu0 0
      %1846 = vmatprep.subr.bf16.mxu0 0
      %1847 = vmatpush2.bf16.msra.mxu0 0
      %1848 = vmatprep.subr.bf16.mxu0 0
      %1849 = vmatpush2.bf16.msra.mxu0 0
      %1850 = vmatprep.subr.bf16.mxu0 0
      %1851 = vmatpush2.bf16.msra.mxu0 0
      %1852 = vmatprep.subr.bf16.mxu0 0
      %1853 = vmatpush2.bf16.msra.mxu0 0
      %1854 = vmatprep.subr.bf16.mxu0 0
      %1855 = vmatpush2.bf16.msra.mxu0 0
      %1856 = vmatprep.mubr.bf16.mxu0 0
      %1857 = vmatmul.mubr.bf16.gmra.mxu0 %v1822
      %v1858 = vpop.f32.mrf.mxu0
      %v1859 = vadd.f32 0.0, %v1858
      %v1860 = vpop.f32.mrf.mxu0
      %v1861 = vpop.f32.mrf.mxu0
      %v1862 = vadd.f32 0.0, %v1861
      %v1863 = vpop.f32.mrf.mxu0
      %1864 = vdwg.mxu0
      %v1865 = vlaneseq
      %v1866 = vshrl.u32 %v1865, 7
      %v1867 = vsub.s32 0, %v1866
      %v1868 = vrot.slane %v1811, %v1867
      %v1869 = vmul.f32 %v1859, %v1868
      %v1870 = vmul.f32 %v1862, %v1868
      %s1871 = scalar_lea.vmem %s5, 8
      %v1872 = vld [vmem:[%s1871] sm:$0xf]
      %v1873 = vld [vmem:[%s1871 + $0x4] sm:$0xf]
      %v1876 = vunpack.c.l.b16 %v1872
      %v1877 = vunpack.c.l.b16 %v1873
      %v1878 = vpack.c.b16 %v1877, %v1876
      %v1880 = vsel %vm1820, %v1878, 0
      %1882 = vmatprep.subr.bf16.mxu0 0
      %1883 = vmatpush1.bf16.msra.mxu0 0
      %1884 = vmatprep.subr.bf16.mxu0 0
      %1885 = vmatpush1.bf16.msra.mxu0 0
      %1886 = vmatprep.subr.bf16.mxu0 0
      %1887 = vmatpush1.bf16.msra.mxu0 0
      %1888 = vmatprep.subr.bf16.mxu0 0
      %1889 = vmatpush1.bf16.msra.mxu0 0
      %1890 = vmatprep.subr.bf16.mxu0 0
      %1891 = vmatpush1.bf16.msra.mxu0 %v1810
      %1892 = vmatprep.subr.bf16.mxu0 0
      %1893 = vmatpush1.bf16.msra.mxu0 %v1809
      %1894 = vmatprep.subr.bf16.mxu0 0
      %1895 = vmatpush1.bf16.msra.mxu0 %v1808
      %1896 = vmatprep.subr.bf16.mxu0 0
      %1897 = vmatpush1.bf16.msra.mxu0 %v1807
      %1898 = vmatprep.subr.bf16.mxu0 0
      %1899 = vmatpush2.bf16.msra.mxu0 0
      %1900 = vmatprep.subr.bf16.mxu0 0
      %1901 = vmatpush2.bf16.msra.mxu0 0
      %1902 = vmatprep.subr.bf16.mxu0 0
      %1903 = vmatpush2.bf16.msra.mxu0 0
      %1904 = vmatprep.subr.bf16.mxu0 0
      %1905 = vmatpush2.bf16.msra.mxu0 0
      %1906 = vmatprep.subr.bf16.mxu0 0
      %1907 = vmatpush2.bf16.msra.mxu0 0
      %1908 = vmatprep.subr.bf16.mxu0 0
      %1909 = vmatpush2.bf16.msra.mxu0 0
      %1910 = vmatprep.subr.bf16.mxu0 0
      %1911 = vmatpush2.bf16.msra.mxu0 0
      %1912 = vmatprep.subr.bf16.mxu0 0
      %1913 = vmatpush2.bf16.msra.mxu0 0
      %1914 = vmatprep.mubr.bf16.mxu0 0
      %1915 = vmatmul.mubr.bf16.gmra.mxu0 %v1880
      %v1916 = vpop.f32.mrf.mxu0
      %v1917 = vadd.f32 0.0, %v1916
      %v1918 = vpop.f32.mrf.mxu0
      %v1919 = vpop.f32.mrf.mxu0
      %v1920 = vadd.f32 0.0, %v1919
      %v1921 = vpop.f32.mrf.mxu0
      %1922 = vdwg.mxu0
      %v1923 = vlaneseq
      %v1924 = vshrl.u32 %v1923, 7
      %v1925 = vsub.s32 1, %v1924
      %v1926 = vrot.slane %v1811, %v1925
      %v1927 = vmul.f32 %v1917, %v1926
      %v1928 = vmul.f32 %v1920, %v1926
      %v1929 = vadd.f32 %v1869, %v1927
      %v1930 = vadd.f32 %v1870, %v1928
      %s1931 = scalar_lea.vmem %s5, 16
      %v1932 = vld [vmem:[%s1931] sm:$0xf]
      %v1933 = vld [vmem:[%s1931 + $0x4] sm:$0xf]
      %v1936 = vunpack.c.l.b16 %v1932
      %v1937 = vunpack.c.l.b16 %v1933
      %v1938 = vpack.c.b16 %v1937, %v1936
      %v1940 = vsel %vm1820, %v1938, 0
      %1942 = vmatprep.subr.bf16.mxu0 0
      %1943 = vmatpush1.bf16.msra.mxu0 0
      %1944 = vmatprep.subr.bf16.mxu0 0
      %1945 = vmatpush1.bf16.msra.mxu0 0
      %1946 = vmatprep.subr.bf16.mxu0 0
      %1947 = vmatpush1.bf16.msra.mxu0 0
      %1948 = vmatprep.subr.bf16.mxu0 0
      %1949 = vmatpush1.bf16.msra.mxu0 0
      %1950 = vmatprep.subr.bf16.mxu0 0
      %1951 = vmatpush1.bf16.msra.mxu0 %v1810
      %1952 = vmatprep.subr.bf16.mxu0 0
      %1953 = vmatpush1.bf16.msra.mxu0 %v1809
      %1954 = vmatprep.subr.bf16.mxu0 0
      %1955 = vmatpush1.bf16.msra.mxu0 %v1808
      %1956 = vmatprep.subr.bf16.mxu0 0
      %1957 = vmatpush1.bf16.msra.mxu0 %v1807
      %1958 = vmatprep.subr.bf16.mxu0 0
      %1959 = vmatpush2.bf16.msra.mxu0 0
      %1960 = vmatprep.subr.bf16.mxu0 0
      %1961 = vmatpush2.bf16.msra.mxu0 0
      %1962 = vmatprep.subr.bf16.mxu0 0
      %1963 = vmatpush2.bf16.msra.mxu0 0
      %1964 = vmatprep.subr.bf16.mxu0 0
      %1965 = vmatpush2.bf16.msra.mxu0 0
      %1966 = vmatprep.subr.bf16.mxu0 0
      %1967 = vmatpush2.bf16.msra.mxu0 0
      %1968 = vmatprep.subr.bf16.mxu0 0
      %1969 = vmatpush2.bf16.msra.mxu0 0
      %1970 = vmatprep.subr.bf16.mxu0 0
      %1971 = vmatpush2.bf16.msra.mxu0 0
      %1972 = vmatprep.subr.bf16.mxu0 0
      %1973 = vmatpush2.bf16.msra.mxu0 0
      %1974 = vmatprep.mubr.bf16.mxu0 0
      %1975 = vmatmul.mubr.bf16.gmra.mxu0 %v1940
      %v1976 = vpop.f32.mrf.mxu0
      %v1977 = vadd.f32 0.0, %v1976
      %v1978 = vpop.f32.mrf.mxu0
      %v1979 = vpop.f32.mrf.mxu0
      %v1980 = vadd.f32 0.0, %v1979
      %v1981 = vpop.f32.mrf.mxu0
      %1982 = vdwg.mxu0
      %v1983 = vlaneseq
      %v1984 = vshrl.u32 %v1983, 7
      %v1985 = vsub.s32 2, %v1984
      %v1986 = vrot.slane %v1811, %v1985
      %v1987 = vmul.f32 %v1977, %v1986
      %v1988 = vmul.f32 %v1980, %v1986
      %v1989 = vadd.f32 %v1929, %v1987
      %v1990 = vadd.f32 %v1930, %v1988
      %s1991 = scalar_lea.vmem %s5, 24
      %v1992 = vld [vmem:[%s1991] sm:$0xf]
      %v1993 = vld [vmem:[%s1991 + $0x4] sm:$0xf]
      %v1996 = vunpack.c.l.b16 %v1992
      %v1997 = vunpack.c.l.b16 %v1993
      %v1998 = vpack.c.b16 %v1997, %v1996
      %v2000 = vsel %vm1820, %v1998, 0
      %2002 = vmatprep.subr.bf16.mxu0 0
      %2003 = vmatpush1.bf16.msra.mxu0 0
      %2004 = vmatprep.subr.bf16.mxu0 0
      %2005 = vmatpush1.bf16.msra.mxu0 0
      %2006 = vmatprep.subr.bf16.mxu0 0
      %2007 = vmatpush1.bf16.msra.mxu0 0
      %2008 = vmatprep.subr.bf16.mxu0 0
      %2009 = vmatpush1.bf16.msra.mxu0 0
      %2010 = vmatprep.subr.bf16.mxu0 0
      %2011 = vmatpush1.bf16.msra.mxu0 %v1810
      %2012 = vmatprep.subr.bf16.mxu0 0
      %2013 = vmatpush1.bf16.msra.mxu0 %v1809
      %2014 = vmatprep.subr.bf16.mxu0 0
      %2015 = vmatpush1.bf16.msra.mxu0 %v1808
      %2016 = vmatprep.subr.bf16.mxu0 0
      %2017 = vmatpush1.bf16.msra.mxu0 %v1807
      %2018 = vmatprep.subr.bf16.mxu0 0
      %2019 = vmatpush2.bf16.msra.mxu0 0
      %2020 = vmatprep.subr.bf16.mxu0 0
      %2021 = vmatpush2.bf16.msra.mxu0 0
      %2022 = vmatprep.subr.bf16.mxu0 0
      %2023 = vmatpush2.bf16.msra.mxu0 0
      %2024 = vmatprep.subr.bf16.mxu0 0
      %2025 = vmatpush2.bf16.msra.mxu0 0
      %2026 = vmatprep.subr.bf16.mxu0 0
      %2027 = vmatpush2.bf16.msra.mxu0 0
      %2028 = vmatprep.subr.bf16.mxu0 0
      %2029 = vmatpush2.bf16.msra.mxu0 0
      %2030 = vmatprep.subr.bf16.mxu0 0
      %2031 = vmatpush2.bf16.msra.mxu0 0
      %2032 = vmatprep.subr.bf16.mxu0 0
      %2033 = vmatpush2.bf16.msra.mxu0 0
      %2034 = vmatprep.mubr.bf16.mxu0 0
      %2035 = vmatmul.mubr.bf16.gmra.mxu0 %v2000
      %v2036 = vpop.f32.mrf.mxu0
      %v2037 = vadd.f32 0.0, %v2036
      %v2038 = vpop.f32.mrf.mxu0
      %v2039 = vpop.f32.mrf.mxu0
      %v2040 = vadd.f32 0.0, %v2039
      %v2041 = vpop.f32.mrf.mxu0
      %2042 = vdwg.mxu0
      %v2043 = vlaneseq
      %v2044 = vshrl.u32 %v2043, 7
      %v2045 = vsub.s32 3, %v2044
      %v2046 = vrot.slane %v1811, %v2045
      %v2047 = vmul.f32 %v2037, %v2046
      %v2048 = vmul.f32 %v2040, %v2046
      %v2049 = vadd.f32 %v1989, %v2047
      %v2050 = vadd.f32 %v1990, %v2048
      %s2051 = scalar_lea.vmem %s5, 32
      %v2052 = vld [vmem:[%s2051] sm:$0xf]
      %v2053 = vld [vmem:[%s2051 + $0x4] sm:$0xf]
      %v2056 = vunpack.c.l.b16 %v2052
      %v2057 = vunpack.c.l.b16 %v2053
      %v2058 = vpack.c.b16 %v2057, %v2056
      %v2060 = vsel %vm1820, %v2058, 0
      %2062 = vmatprep.subr.bf16.mxu0 0
      %2063 = vmatpush1.bf16.msra.mxu0 0
      %2064 = vmatprep.subr.bf16.mxu0 0
      %2065 = vmatpush1.bf16.msra.mxu0 0
      %2066 = vmatprep.subr.bf16.mxu0 0
      %2067 = vmatpush1.bf16.msra.mxu0 0
      %2068 = vmatprep.subr.bf16.mxu0 0
      %2069 = vmatpush1.bf16.msra.mxu0 0
      %2070 = vmatprep.subr.bf16.mxu0 0
      %2071 = vmatpush1.bf16.msra.mxu0 %v1810
      %2072 = vmatprep.subr.bf16.mxu0 0
      %2073 = vmatpush1.bf16.msra.mxu0 %v1809
      %2074 = vmatprep.subr.bf16.mxu0 0
      %2075 = vmatpush1.bf16.msra.mxu0 %v1808
      %2076 = vmatprep.subr.bf16.mxu0 0
      %2077 = vmatpush1.bf16.msra.mxu0 %v1807
      %2078 = vmatprep.subr.bf16.mxu0 0
      %2079 = vmatpush2.bf16.msra.mxu0 0
      %2080 = vmatprep.subr.bf16.mxu0 0
      %2081 = vmatpush2.bf16.msra.mxu0 0
      %2082 = vmatprep.subr.bf16.mxu0 0
      %2083 = vmatpush2.bf16.msra.mxu0 0
      %2084 = vmatprep.subr.bf16.mxu0 0
      %2085 = vmatpush2.bf16.msra.mxu0 0
      %2086 = vmatprep.subr.bf16.mxu0 0
      %2087 = vmatpush2.bf16.msra.mxu0 0
      %2088 = vmatprep.subr.bf16.mxu0 0
      %2089 = vmatpush2.bf16.msra.mxu0 0
      %2090 = vmatprep.subr.bf16.mxu0 0
      %2091 = vmatpush2.bf16.msra.mxu0 0
      %2092 = vmatprep.subr.bf16.mxu0 0
      %2093 = vmatpush2.bf16.msra.mxu0 0
      %2094 = vmatprep.mubr.bf16.mxu0 0
      %2095 = vmatmul.mubr.bf16.gmra.mxu0 %v2060
      %v2096 = vpop.f32.mrf.mxu0
      %v2097 = vadd.f32 0.0, %v2096
      %v2098 = vpop.f32.mrf.mxu0
      %v2099 = vpop.f32.mrf.mxu0
      %v2100 = vadd.f32 0.0, %v2099
      %v2101 = vpop.f32.mrf.mxu0
      %2102 = vdwg.mxu0
      %v2103 = vlaneseq
      %v2104 = vshrl.u32 %v2103, 7
      %v2105 = vsub.s32 4, %v2104
      %v2106 = vrot.slane %v1811, %v2105
      %v2107 = vmul.f32 %v2097, %v2106
      %v2108 = vmul.f32 %v2100, %v2106
      %v2109 = vadd.f32 %v2049, %v2107
      %v2110 = vadd.f32 %v2050, %v2108
      %s2111 = scalar_lea.vmem %s5, 40
      %v2112 = vld [vmem:[%s2111] sm:$0xf]
      %v2113 = vld [vmem:[%s2111 + $0x4] sm:$0xf]
      %v2116 = vunpack.c.l.b16 %v2112
      %v2117 = vunpack.c.l.b16 %v2113
      %v2118 = vpack.c.b16 %v2117, %v2116
      %v2120 = vsel %vm1820, %v2118, 0
      %2122 = vmatprep.subr.bf16.mxu0 0
      %2123 = vmatpush1.bf16.msra.mxu0 0
      %2124 = vmatprep.subr.bf16.mxu0 0
      %2125 = vmatpush1.bf16.msra.mxu0 0
      %2126 = vmatprep.subr.bf16.mxu0 0
      %2127 = vmatpush1.bf16.msra.mxu0 0
      %2128 = vmatprep.subr.bf16.mxu0 0
      %2129 = vmatpush1.bf16.msra.mxu0 0
      %2130 = vmatprep.subr.bf16.mxu0 0
      %2131 = vmatpush1.bf16.msra.mxu0 %v1810
      %2132 = vmatprep.subr.bf16.mxu0 0
      %2133 = vmatpush1.bf16.msra.mxu0 %v1809
      %2134 = vmatprep.subr.bf16.mxu0 0
      %2135 = vmatpush1.bf16.msra.mxu0 %v1808
      %2136 = vmatprep.subr.bf16.mxu0 0
      %2137 = vmatpush1.bf16.msra.mxu0 %v1807
      %2138 = vmatprep.subr.bf16.mxu0 0
      %2139 = vmatpush2.bf16.msra.mxu0 0
      %2140 = vmatprep.subr.bf16.mxu0 0
      %2141 = vmatpush2.bf16.msra.mxu0 0
      %2142 = vmatprep.subr.bf16.mxu0 0
      %2143 = vmatpush2.bf16.msra.mxu0 0
      %2144 = vmatprep.subr.bf16.mxu0 0
      %2145 = vmatpush2.bf16.msra.mxu0 0
      %2146 = vmatprep.subr.bf16.mxu0 0
      %2147 = vmatpush2.bf16.msra.mxu0 0
      %2148 = vmatprep.subr.bf16.mxu0 0
      %2149 = vmatpush2.bf16.msra.mxu0 0
      %2150 = vmatprep.subr.bf16.mxu0 0
      %2151 = vmatpush2.bf16.msra.mxu0 0
      %2152 = vmatprep.subr.bf16.mxu0 0
      %2153 = vmatpush2.bf16.msra.mxu0 0
      %2154 = vmatprep.mubr.bf16.mxu0 0
      %2155 = vmatmul.mubr.bf16.gmra.mxu0 %v2120
      %v2156 = vpop.f32.mrf.mxu0
      %v2157 = vadd.f32 0.0, %v2156
      %v2158 = vpop.f32.mrf.mxu0
      %v2159 = vpop.f32.mrf.mxu0
      %v2160 = vadd.f32 0.0, %v2159
      %v2161 = vpop.f32.mrf.mxu0
      %2162 = vdwg.mxu0
      %v2163 = vlaneseq
      %v2164 = vshrl.u32 %v2163, 7
      %v2165 = vsub.s32 5, %v2164
      %v2166 = vrot.slane %v1811, %v2165
      %v2167 = vmul.f32 %v2157, %v2166
      %v2168 = vmul.f32 %v2160, %v2166
      %v2169 = vadd.f32 %v2109, %v2167
      %v2170 = vadd.f32 %v2110, %v2168
      %s2171 = scalar_lea.vmem %s5, 48
      %v2172 = vld [vmem:[%s2171] sm:$0xf]
      %v2173 = vld [vmem:[%s2171 + $0x4] sm:$0xf]
      %v2176 = vunpack.c.l.b16 %v2172
      %v2177 = vunpack.c.l.b16 %v2173
      %v2178 = vpack.c.b16 %v2177, %v2176
      %v2180 = vsel %vm1820, %v2178, 0
      %2182 = vmatprep.subr.bf16.mxu0 0
      %2183 = vmatpush1.bf16.msra.mxu0 0
      %2184 = vmatprep.subr.bf16.mxu0 0
      %2185 = vmatpush1.bf16.msra.mxu0 0
      %2186 = vmatprep.subr.bf16.mxu0 0
      %2187 = vmatpush1.bf16.msra.mxu0 0
      %2188 = vmatprep.subr.bf16.mxu0 0
      %2189 = vmatpush1.bf16.msra.mxu0 0
      %2190 = vmatprep.subr.bf16.mxu0 0
      %2191 = vmatpush1.bf16.msra.mxu0 %v1810
      %2192 = vmatprep.subr.bf16.mxu0 0
      %2193 = vmatpush1.bf16.msra.mxu0 %v1809
      %2194 = vmatprep.subr.bf16.mxu0 0
      %2195 = vmatpush1.bf16.msra.mxu0 %v1808
      %2196 = vmatprep.subr.bf16.mxu0 0
      %2197 = vmatpush1.bf16.msra.mxu0 %v1807
      %2198 = vmatprep.subr.bf16.mxu0 0
      %2199 = vmatpush2.bf16.msra.mxu0 0
      %2200 = vmatprep.subr.bf16.mxu0 0
      %2201 = vmatpush2.bf16.msra.mxu0 0
      %2202 = vmatprep.subr.bf16.mxu0 0
      %2203 = vmatpush2.bf16.msra.mxu0 0
      %2204 = vmatprep.subr.bf16.mxu0 0
      %2205 = vmatpush2.bf16.msra.mxu0 0
      %2206 = vmatprep.subr.bf16.mxu0 0
      %2207 = vmatpush2.bf16.msra.mxu0 0
      %2208 = vmatprep.subr.bf16.mxu0 0
      %2209 = vmatpush2.bf16.msra.mxu0 0
      %2210 = vmatprep.subr.bf16.mxu0 0
      %2211 = vmatpush2.bf16.msra.mxu0 0
      %2212 = vmatprep.subr.bf16.mxu0 0
      %2213 = vmatpush2.bf16.msra.mxu0 0
      %2214 = vmatprep.mubr.bf16.mxu0 0
      %2215 = vmatmul.mubr.bf16.gmra.mxu0 %v2180
      %v2216 = vpop.f32.mrf.mxu0
      %v2217 = vadd.f32 0.0, %v2216
      %v2218 = vpop.f32.mrf.mxu0
      %v2219 = vpop.f32.mrf.mxu0
      %v2220 = vadd.f32 0.0, %v2219
      %v2221 = vpop.f32.mrf.mxu0
      %2222 = vdwg.mxu0
      %v2223 = vlaneseq
      %v2224 = vshrl.u32 %v2223, 7
      %v2225 = vsub.s32 6, %v2224
      %v2226 = vrot.slane %v1811, %v2225
      %v2227 = vmul.f32 %v2217, %v2226
      %v2228 = vmul.f32 %v2220, %v2226
      %v2229 = vadd.f32 %v2169, %v2227
      %v2230 = vadd.f32 %v2170, %v2228
      %s2231 = scalar_lea.vmem %s5, 56
      %v2232 = vld [vmem:[%s2231] sm:$0xf]
      %v2233 = vld [vmem:[%s2231 + $0x4] sm:$0xf]
      %v2236 = vunpack.c.l.b16 %v2232
      %v2237 = vunpack.c.l.b16 %v2233
      %v2238 = vpack.c.b16 %v2237, %v2236
      %v2240 = vsel %vm1820, %v2238, 0
      %2242 = vmatprep.subr.bf16.mxu0 0
      %2243 = vmatpush1.bf16.msra.mxu0 0
      %2244 = vmatprep.subr.bf16.mxu0 0
      %2245 = vmatpush1.bf16.msra.mxu0 0
      %2246 = vmatprep.subr.bf16.mxu0 0
      %2247 = vmatpush1.bf16.msra.mxu0 0
      %2248 = vmatprep.subr.bf16.mxu0 0
      %2249 = vmatpush1.bf16.msra.mxu0 0
      %2250 = vmatprep.subr.bf16.mxu0 0
      %2251 = vmatpush1.bf16.msra.mxu0 %v1810
      %2252 = vmatprep.subr.bf16.mxu0 0
      %2253 = vmatpush1.bf16.msra.mxu0 %v1809
      %2254 = vmatprep.subr.bf16.mxu0 0
      %2255 = vmatpush1.bf16.msra.mxu0 %v1808
      %2256 = vmatprep.subr.bf16.mxu0 0
      %2257 = vmatpush1.bf16.msra.mxu0 %v1807
      %2258 = vmatprep.subr.bf16.mxu0 0
      %2259 = vmatpush2.bf16.msra.mxu0 0
      %2260 = vmatprep.subr.bf16.mxu0 0
      %2261 = vmatpush2.bf16.msra.mxu0 0
      %2262 = vmatprep.subr.bf16.mxu0 0
      %2263 = vmatpush2.bf16.msra.mxu0 0
      %2264 = vmatprep.subr.bf16.mxu0 0
      %2265 = vmatpush2.bf16.msra.mxu0 0
      %2266 = vmatprep.subr.bf16.mxu0 0
      %2267 = vmatpush2.bf16.msra.mxu0 0
      %2268 = vmatprep.subr.bf16.mxu0 0
      %2269 = vmatpush2.bf16.msra.mxu0 0
      %2270 = vmatprep.subr.bf16.mxu0 0
      %2271 = vmatpush2.bf16.msra.mxu0 0
      %2272 = vmatprep.subr.bf16.mxu0 0
      %2273 = vmatpush2.bf16.msra.mxu0 0
      %2274 = vmatprep.mubr.bf16.mxu0 0
      %2275 = vmatmul.mubr.bf16.gmra.mxu0 %v2240
      %v2276 = vpop.f32.mrf.mxu0
      %v2277 = vadd.f32 0.0, %v2276
      %v2278 = vpop.f32.mrf.mxu0
      %v2279 = vpop.f32.mrf.mxu0
      %v2280 = vadd.f32 0.0, %v2279
      %v2281 = vpop.f32.mrf.mxu0
      %2282 = vdwg.mxu0
      %v2283 = vlaneseq
      %v2284 = vshrl.u32 %v2283, 7
      %v2285 = vsub.s32 7, %v2284
      %v2286 = vrot.slane %v1811, %v2285
      %v2287 = vmul.f32 %v2277, %v2286
      %v2288 = vmul.f32 %v2280, %v2286
      %v2289 = vadd.f32 %v2229, %v2287
      %v2290 = vadd.f32 %v2230, %v2288
      %s2291 = scalar_lea.vmem %s5, 64
      %v2292 = vld [vmem:[%s2291] sm:$0xf]
      %v2293 = vld [vmem:[%s2291 + $0x4] sm:$0xf]
      %v2296 = vunpack.c.l.b16 %v2292
      %v2297 = vunpack.c.l.b16 %v2293
      %v2298 = vpack.c.b16 %v2297, %v2296
      %v2300 = vsel %vm1820, %v2298, 0
      %2302 = vmatprep.subr.bf16.mxu0 0
      %2303 = vmatpush1.bf16.msra.mxu0 0
      %2304 = vmatprep.subr.bf16.mxu0 0
      %2305 = vmatpush1.bf16.msra.mxu0 0
      %2306 = vmatprep.subr.bf16.mxu0 0
      %2307 = vmatpush1.bf16.msra.mxu0 0
      %2308 = vmatprep.subr.bf16.mxu0 0
      %2309 = vmatpush1.bf16.msra.mxu0 0
      %2310 = vmatprep.subr.bf16.mxu0 0
      %2311 = vmatpush1.bf16.msra.mxu0 %v1810
      %2312 = vmatprep.subr.bf16.mxu0 0
      %2313 = vmatpush1.bf16.msra.mxu0 %v1809
      %2314 = vmatprep.subr.bf16.mxu0 0
      %2315 = vmatpush1.bf16.msra.mxu0 %v1808
      %2316 = vmatprep.subr.bf16.mxu0 0
      %2317 = vmatpush1.bf16.msra.mxu0 %v1807
      %2318 = vmatprep.subr.bf16.mxu0 0
      %2319 = vmatpush2.bf16.msra.mxu0 0
      %2320 = vmatprep.subr.bf16.mxu0 0
      %2321 = vmatpush2.bf16.msra.mxu0 0
      %2322 = vmatprep.subr.bf16.mxu0 0
      %2323 = vmatpush2.bf16.msra.mxu0 0
      %2324 = vmatprep.subr.bf16.mxu0 0
      %2325 = vmatpush2.bf16.msra.mxu0 0
      %2326 = vmatprep.subr.bf16.mxu0 0
      %2327 = vmatpush2.bf16.msra.mxu0 0
      %2328 = vmatprep.subr.bf16.mxu0 0
      %2329 = vmatpush2.bf16.msra.mxu0 0
      %2330 = vmatprep.subr.bf16.mxu0 0
      %2331 = vmatpush2.bf16.msra.mxu0 0
      %2332 = vmatprep.subr.bf16.mxu0 0
      %2333 = vmatpush2.bf16.msra.mxu0 0
      %2334 = vmatprep.mubr.bf16.mxu0 0
      %2335 = vmatmul.mubr.bf16.gmra.mxu0 %v2300
      %v2336 = vpop.f32.mrf.mxu0
      %v2337 = vadd.f32 0.0, %v2336
      %v2338 = vpop.f32.mrf.mxu0
      %v2339 = vpop.f32.mrf.mxu0
      %v2340 = vadd.f32 0.0, %v2339
      %v2341 = vpop.f32.mrf.mxu0
      %2342 = vdwg.mxu0
      %v2343 = vlaneseq
      %v2344 = vshrl.u32 %v2343, 7
      %v2345 = vsub.s32 0, %v2344
      %v2346 = vrot.slane %v1812, %v2345
      %v2347 = vmul.f32 %v2337, %v2346
      %v2348 = vmul.f32 %v2340, %v2346
      %v2349 = vadd.f32 %v2289, %v2347
      %v2350 = vadd.f32 %v2290, %v2348
      %v2351 = vld [vmem:[%s3 + $0x1] sm:$0x1]
      %v2352 = vlaneseq
      %v2353 = vshrl.u32 %v2352, 7
      %v2354 = vsub.s32 0, %v2353
      %v2355 = vrot.slane %v2351, %v2354
      %v2356 = vadd.f32 %v2349, %v2355
      %v2357 = vadd.f32 %v2350, %v2355
      %v2358 = vpack.c.bf16 %v2357, %v2356
      %s2359 = scalar_lea.vmem %s1, 64
      %v2360 = vld [vmem:[%s2359] sm:$0xf]
      %v2361 = vld [vmem:[%s2359 + $0x4] sm:$0xf]
      %v2362 = vld [vmem:[%s2359 + $0x8] sm:$0xf]
      %v2363 = vld [vmem:[%s2359 + $0xc] sm:$0xf]
      %v2364 = vld [vmem:[%s2359 + $0x10] sm:$0xf]
      %v2365 = vld [vmem:[%s2359 + $0x14] sm:$0xf]
      %v2366 = vld [vmem:[%s2359 + $0x18] sm:$0xf]
      %v2367 = vld [vmem:[%s2359 + $0x1c] sm:$0xf]
      %v2368 = vld [vmem:[%s2359 + $0x20] sm:$0xf]
      %v2369 = vld [vmem:[%s2359 + $0x24] sm:$0xf]
      %v2370 = vld [vmem:[%s2359 + $0x28] sm:$0xf]
      %v2371 = vld [vmem:[%s2359 + $0x2c] sm:$0xf]
      %v2372 = vld [vmem:[%s2359 + $0x30] sm:$0xf]
      %v2373 = vld [vmem:[%s2359 + $0x34] sm:$0xf]
      %v2374 = vld [vmem:[%s2359 + $0x38] sm:$0xf]
      %v2375 = vld [vmem:[%s2359 + $0x3c] sm:$0xf]
      %v2376 = vld [vmem:[%s3 + $0x2] sm:$0x1]
      %v2377 = vlaneseq
      %v2378 = vshrl.u32 %v2377, 7
      %v2379 = vsub.s32 0, %v2378
      %v2380 = vrot.slane %v2376, %v2379
      %v2397 = vunpack.c.l.b16 %v2360
      %v2398 = vunpack.c.l.b16 %v2361
      %v2399 = vunpack.c.l.b16 %v2362
      %v2400 = vunpack.c.l.b16 %v2363
      %v2401 = vunpack.c.l.b16 %v2364
      %v2402 = vunpack.c.l.b16 %v2365
      %v2403 = vunpack.c.l.b16 %v2366
      %v2404 = vunpack.c.l.b16 %v2367
      %v2405 = vunpack.c.l.b16 %v2368
      %v2406 = vunpack.c.l.b16 %v2369
      %v2407 = vunpack.c.l.b16 %v2370
      %v2408 = vunpack.c.l.b16 %v2371
      %v2409 = vunpack.c.l.b16 %v2372
      %v2410 = vunpack.c.l.b16 %v2373
      %v2411 = vunpack.c.l.b16 %v2374
      %v2412 = vunpack.c.l.b16 %v2375
      %v2413 = vpack.c.b16 %v2398, %v2397
      %v2414 = vpack.c.b16 %v2400, %v2399
      %v2415 = vpack.c.b16 %v2402, %v2401
      %v2416 = vpack.c.b16 %v2404, %v2403
      %v2417 = vpack.c.b16 %v2406, %v2405
      %v2418 = vpack.c.b16 %v2408, %v2407
      %v2419 = vpack.c.b16 %v2410, %v2409
      %v2420 = vpack.c.b16 %v2412, %v2411
      %2429 = vmatprep.subr.bf16.mxu0 0
      %2430 = vmatpush1.bf16.msra.mxu0 %v2420
      %2431 = vmatprep.subr.bf16.mxu0 0
      %2432 = vmatpush1.bf16.msra.mxu0 %v2419
      %2433 = vmatprep.subr.bf16.mxu0 0
      %2434 = vmatpush1.bf16.msra.mxu0 %v2418
      %2435 = vmatprep.subr.bf16.mxu0 0
      %2436 = vmatpush1.bf16.msra.mxu0 %v2417
      %2437 = vmatprep.subr.bf16.mxu0 0
      %2438 = vmatpush1.bf16.msra.mxu0 %v2416
      %2439 = vmatprep.subr.bf16.mxu0 0
      %2440 = vmatpush1.bf16.msra.mxu0 %v2415
      %2441 = vmatprep.subr.bf16.mxu0 0
      %2442 = vmatpush1.bf16.msra.mxu0 %v2414
      %2443 = vmatprep.subr.bf16.mxu0 0
      %2444 = vmatpush1.bf16.msra.mxu0 %v2413
      %2445 = vmatprep.subr.bf16.mxu0 0
      %2446 = vmatpush2.bf16.msra.mxu0 0
      %2447 = vmatprep.subr.bf16.mxu0 0
      %2448 = vmatpush2.bf16.msra.mxu0 0
      %2449 = vmatprep.subr.bf16.mxu0 0
      %2450 = vmatpush2.bf16.msra.mxu0 0
      %2451 = vmatprep.subr.bf16.mxu0 0
      %2452 = vmatpush2.bf16.msra.mxu0 0
      %2453 = vmatprep.subr.bf16.mxu0 0
      %2454 = vmatpush2.bf16.msra.mxu0 0
      %2455 = vmatprep.subr.bf16.mxu0 0
      %2456 = vmatpush2.bf16.msra.mxu0 0
      %2457 = vmatprep.subr.bf16.mxu0 0
      %2458 = vmatpush2.bf16.msra.mxu0 0
      %2459 = vmatprep.subr.bf16.mxu0 0
      %2460 = vmatpush2.bf16.msra.mxu0 0
      %2461 = vmatprep.mubr.bf16.mxu0 0
      %2462 = vmatmul.mubr.bf16.gmra.mxu0 %v2358
      %v2463 = vpop.f32.mrf.mxu0
      %v2464 = vadd.f32 %v2380, %v2463
      %v2465 = vpop.f32.mrf.mxu0
      %v2466 = vpop.f32.mrf.mxu0
      %v2467 = vadd.f32 %v2380, %v2466
      %v2468 = vpop.f32.mrf.mxu0
      %2469 = vdwg.mxu0
      %v2470 = vmax.f32 %v2464, 0.0
      %v2471 = vmax.f32 %v2467, 0.0
      %s2472 = scalar_lea.vmem %s1, 128
      %v2473 = vld [vmem:[%s2472] sm:$0xf]
      %v2474 = vld [vmem:[%s2472 + $0x4] sm:$0xf]
      %v2475 = vld [vmem:[%s2472 + $0x8] sm:$0xf]
      %v2476 = vld [vmem:[%s2472 + $0xc] sm:$0xf]
      %v2477 = vld [vmem:[%s2472 + $0x10] sm:$0xf]
      %v2478 = vld [vmem:[%s2472 + $0x14] sm:$0xf]
      %v2479 = vld [vmem:[%s2472 + $0x18] sm:$0xf]
      %v2480 = vld [vmem:[%s2472 + $0x1c] sm:$0xf]
      %v2481 = vld [vmem:[%s2472 + $0x20] sm:$0xf]
      %v2482 = vld [vmem:[%s2472 + $0x24] sm:$0xf]
      %v2483 = vld [vmem:[%s2472 + $0x28] sm:$0xf]
      %v2484 = vld [vmem:[%s2472 + $0x2c] sm:$0xf]
      %v2485 = vld [vmem:[%s2472 + $0x30] sm:$0xf]
      %v2486 = vld [vmem:[%s2472 + $0x34] sm:$0xf]
      %v2487 = vld [vmem:[%s2472 + $0x38] sm:$0xf]
      %v2488 = vld [vmem:[%s2472 + $0x3c] sm:$0xf]
      %v2489 = vld [vmem:[%s3 + $0x3] sm:$0x1]
      %v2490 = vlaneseq
      %v2491 = vshrl.u32 %v2490, 7
      %v2492 = vsub.s32 0, %v2491
      %v2493 = vrot.slane %v2489, %v2492
      %v2510 = vunpack.c.l.b16 %v2473
      %v2511 = vunpack.c.l.b16 %v2474
      %v2512 = vunpack.c.l.b16 %v2475
      %v2513 = vunpack.c.l.b16 %v2476
      %v2514 = vunpack.c.l.b16 %v2477
      %v2515 = vunpack.c.l.b16 %v2478
      %v2516 = vunpack.c.l.b16 %v2479
      %v2517 = vunpack.c.l.b16 %v2480
      %v2518 = vunpack.c.l.b16 %v2481
      %v2519 = vunpack.c.l.b16 %v2482
      %v2520 = vunpack.c.l.b16 %v2483
      %v2521 = vunpack.c.l.b16 %v2484
      %v2522 = vunpack.c.l.b16 %v2485
      %v2523 = vunpack.c.l.b16 %v2486
      %v2524 = vunpack.c.l.b16 %v2487
      %v2525 = vunpack.c.l.b16 %v2488
      %v2526 = vpack.c.b16 %v2511, %v2510
      %v2527 = vpack.c.b16 %v2513, %v2512
      %v2528 = vpack.c.b16 %v2515, %v2514
      %v2529 = vpack.c.b16 %v2517, %v2516
      %v2530 = vpack.c.b16 %v2519, %v2518
      %v2531 = vpack.c.b16 %v2521, %v2520
      %v2532 = vpack.c.b16 %v2523, %v2522
      %v2533 = vpack.c.b16 %v2525, %v2524
      %2542 = vmatprep.subr.bf16.mxu0 0
      %2543 = vmatpush1.bf16.msra.mxu0 %v2533
      %2544 = vmatprep.subr.bf16.mxu0 0
      %2545 = vmatpush1.bf16.msra.mxu0 %v2532
      %2546 = vmatprep.subr.bf16.mxu0 0
      %2547 = vmatpush1.bf16.msra.mxu0 %v2531
      %2548 = vmatprep.subr.bf16.mxu0 0
      %2549 = vmatpush1.bf16.msra.mxu0 %v2530
      %2550 = vmatprep.subr.bf16.mxu0 0
      %2551 = vmatpush1.bf16.msra.mxu0 %v2529
      %2552 = vmatprep.subr.bf16.mxu0 0
      %2553 = vmatpush1.bf16.msra.mxu0 %v2528
      %2554 = vmatprep.subr.bf16.mxu0 0
      %2555 = vmatpush1.bf16.msra.mxu0 %v2527
      %2556 = vmatprep.subr.bf16.mxu0 0
      %2557 = vmatpush1.bf16.msra.mxu0 %v2526
      %2558 = vmatprep.subr.bf16.mxu0 0
      %2559 = vmatpush2.bf16.msra.mxu0 0
      %2560 = vmatprep.subr.bf16.mxu0 0
      %2561 = vmatpush2.bf16.msra.mxu0 0
      %2562 = vmatprep.subr.bf16.mxu0 0
      %2563 = vmatpush2.bf16.msra.mxu0 0
      %2564 = vmatprep.subr.bf16.mxu0 0
      %2565 = vmatpush2.bf16.msra.mxu0 0
      %2566 = vmatprep.subr.bf16.mxu0 0
      %2567 = vmatpush2.bf16.msra.mxu0 0
      %2568 = vmatprep.subr.bf16.mxu0 0
      %2569 = vmatpush2.bf16.msra.mxu0 0
      %2570 = vmatprep.subr.bf16.mxu0 0
      %2571 = vmatpush2.bf16.msra.mxu0 0
      %2572 = vmatprep.subr.bf16.mxu0 0
      %2573 = vmatpush2.bf16.msra.mxu0 0
      %2574 = vmatprep.mubr.bf16.mxu0 0
      %2575 = vmatmul.mubr.bf16.gmra.mxu0 %v1807
      %v2576 = vpop.f32.mrf.mxu0
      %v2577 = vadd.f32 %v2493, %v2576
      %v2578 = vpop.f32.mrf.mxu0
      %v2579 = vpop.f32.mrf.mxu0
      %v2580 = vadd.f32 %v2493, %v2579
      %v2581 = vpop.f32.mrf.mxu0
      %2582 = vmatprep.mubr.bf16.mxu0 0
      %2583 = vmatmul.mubr.bf16.gmra.mxu0 %v1808
      %v2584 = vpop.f32.mrf.mxu0
      %v2585 = vadd.f32 %v2493, %v2584
      %v2586 = vpop.f32.mrf.mxu0
      %v2587 = vpop.f32.mrf.mxu0
      %v2588 = vadd.f32 %v2493, %v2587
      %v2589 = vpop.f32.mrf.mxu0
      %2590 = vmatprep.mubr.bf16.mxu0 0
      %2591 = vmatmul.mubr.bf16.gmra.mxu0 %v1809
      %v2592 = vpop.f32.mrf.mxu0
      %v2593 = vadd.f32 %v2493, %v2592
      %v2594 = vpop.f32.mrf.mxu0
      %v2595 = vpop.f32.mrf.mxu0
      %v2596 = vadd.f32 %v2493, %v2595
      %v2597 = vpop.f32.mrf.mxu0
      %2598 = vmatprep.mubr.bf16.mxu0 0
      %2599 = vmatmul.mubr.bf16.gmra.mxu0 %v1810
      %v2600 = vpop.f32.mrf.mxu0
      %v2601 = vadd.f32 %v2493, %v2600
      %v2602 = vpop.f32.mrf.mxu0
      %v2603 = vpop.f32.mrf.mxu0
      %v2604 = vadd.f32 %v2493, %v2603
      %v2605 = vpop.f32.mrf.mxu0
      %2606 = vdwg.mxu0
      %v2607 = vmax.f32 %v2577, 0.0
      %v2608 = vmax.f32 %v2580, 0.0
      %v2609 = vmax.f32 %v2585, 0.0
      %v2610 = vmax.f32 %v2588, 0.0
      %v2611 = vmax.f32 %v2593, 0.0
      %v2612 = vmax.f32 %v2596, 0.0
      %v2613 = vmax.f32 %v2601, 0.0
      %v2614 = vmax.f32 %v2604, 0.0
      %v2615 = vpack.c.bf16 %v2608, %v2607
      %v2616 = vpack.c.bf16 %v2610, %v2609
      %v2617 = vpack.c.bf16 %v2612, %v2611
      %v2618 = vpack.c.bf16 %v2614, %v2613
      %s2619 = scalar_lea.vmem %s2, 16
      %v2620 = vld [vmem:[%s2619] sm:$0xff]
      %v2621 = vld [vmem:[%s2619 + $0x8] sm:$0x1]
      %2622 = vmatprep.subr.bf16.mxu0 0
      %2623 = vmatpush1.bf16.msra.mxu0 0
      %2624 = vmatprep.subr.bf16.mxu0 0
      %2625 = vmatpush1.bf16.msra.mxu0 0
      %2626 = vmatprep.subr.bf16.mxu0 0
      %2627 = vmatpush1.bf16.msra.mxu0 0
      %2628 = vmatprep.subr.bf16.mxu0 0
      %2629 = vmatpush1.bf16.msra.mxu0 0
      %2630 = vmatprep.subr.bf16.mxu0 0
      %2631 = vmatpush1.bf16.msra.mxu0 %v2618
      %2632 = vmatprep.subr.bf16.mxu0 0
      %2633 = vmatpush1.bf16.msra.mxu0 %v2617
      %2634 = vmatprep.subr.bf16.mxu0 0
      %2635 = vmatpush1.bf16.msra.mxu0 %v2616
      %2636 = vmatprep.subr.bf16.mxu0 0
      %2637 = vmatpush1.bf16.msra.mxu0 %v2615
      %2638 = vmatprep.subr.bf16.mxu0 0
      %2639 = vmatpush2.bf16.msra.mxu0 0
      %2640 = vmatprep.subr.bf16.mxu0 0
      %2641 = vmatpush2.bf16.msra.mxu0 0
      %2642 = vmatprep.subr.bf16.mxu0 0
      %2643 = vmatpush2.bf16.msra.mxu0 0
      %2644 = vmatprep.subr.bf16.mxu0 0
      %2645 = vmatpush2.bf16.msra.mxu0 0
      %2646 = vmatprep.subr.bf16.mxu0 0
      %2647 = vmatpush2.bf16.msra.mxu0 0
      %2648 = vmatprep.subr.bf16.mxu0 0
      %2649 = vmatpush2.bf16.msra.mxu0 0
      %2650 = vmatprep.subr.bf16.mxu0 0
      %2651 = vmatpush2.bf16.msra.mxu0 0
      %2652 = vmatprep.subr.bf16.mxu0 0
      %2653 = vmatpush2.bf16.msra.mxu0 0
      %2654 = vmatprep.mubr.bf16.mxu0 0
      %2655 = vmatmul.mubr.bf16.gmra.mxu0 %v1822
      %v2656 = vpop.f32.mrf.mxu0
      %v2657 = vadd.f32 0.0, %v2656
      %v2658 = vpop.f32.mrf.mxu0
      %v2659 = vpop.f32.mrf.mxu0
      %v2660 = vadd.f32 0.0, %v2659
      %v2661 = vpop.f32.mrf.mxu0
      %2662 = vdwg.mxu0
      %v2663 = vlaneseq
      %v2664 = vshrl.u32 %v2663, 7
      %v2665 = vsub.s32 0, %v2664
      %v2666 = vrot.slane %v2620, %v2665
      %v2667 = vmul.f32 %v2657, %v2666
      %v2668 = vmul.f32 %v2660, %v2666
      %2669 = vmatprep.subr.bf16.mxu0 0
      %2670 = vmatpush1.bf16.msra.mxu0 0
      %2671 = vmatprep.subr.bf16.mxu0 0
      %2672 = vmatpush1.bf16.msra.mxu0 0
      %2673 = vmatprep.subr.bf16.mxu0 0
      %2674 = vmatpush1.bf16.msra.mxu0 0
      %2675 = vmatprep.subr.bf16.mxu0 0
      %2676 = vmatpush1.bf16.msra.mxu0 0
      %2677 = vmatprep.subr.bf16.mxu0 0
      %2678 = vmatpush1.bf16.msra.mxu0 %v2618
      %2679 = vmatprep.subr.bf16.mxu0 0
      %2680 = vmatpush1.bf16.msra.mxu0 %v2617
      %2681 = vmatprep.subr.bf16.mxu0 0
      %2682 = vmatpush1.bf16.msra.mxu0 %v2616
      %2683 = vmatprep.subr.bf16.mxu0 0
      %2684 = vmatpush1.bf16.msra.mxu0 %v2615
      %2685 = vmatprep.subr.bf16.mxu0 0
      %2686 = vmatpush2.bf16.msra.mxu0 0
      %2687 = vmatprep.subr.bf16.mxu0 0
      %2688 = vmatpush2.bf16.msra.mxu0 0
      %2689 = vmatprep.subr.bf16.mxu0 0
      %2690 = vmatpush2.bf16.msra.mxu0 0
      %2691 = vmatprep.subr.bf16.mxu0 0
      %2692 = vmatpush2.bf16.msra.mxu0 0
      %2693 = vmatprep.subr.bf16.mxu0 0
      %2694 = vmatpush2.bf16.msra.mxu0 0
      %2695 = vmatprep.subr.bf16.mxu0 0
      %2696 = vmatpush2.bf16.msra.mxu0 0
      %2697 = vmatprep.subr.bf16.mxu0 0
      %2698 = vmatpush2.bf16.msra.mxu0 0
      %2699 = vmatprep.subr.bf16.mxu0 0
      %2700 = vmatpush2.bf16.msra.mxu0 0
      %2701 = vmatprep.mubr.bf16.mxu0 0
      %2702 = vmatmul.mubr.bf16.gmra.mxu0 %v1880
      %v2703 = vpop.f32.mrf.mxu0
      %v2704 = vadd.f32 0.0, %v2703
      %v2705 = vpop.f32.mrf.mxu0
      %v2706 = vpop.f32.mrf.mxu0
      %v2707 = vadd.f32 0.0, %v2706
      %v2708 = vpop.f32.mrf.mxu0
      %2709 = vdwg.mxu0
      %v2710 = vlaneseq
      %v2711 = vshrl.u32 %v2710, 7
      %v2712 = vsub.s32 1, %v2711
      %v2713 = vrot.slane %v2620, %v2712
      %v2714 = vmul.f32 %v2704, %v2713
      %v2715 = vmul.f32 %v2707, %v2713
      %v2716 = vadd.f32 %v2667, %v2714
      %v2717 = vadd.f32 %v2668, %v2715
      %2718 = vmatprep.subr.bf16.mxu0 0
      %2719 = vmatpush1.bf16.msra.mxu0 0
      %2720 = vmatprep.subr.bf16.mxu0 0
      %2721 = vmatpush1.bf16.msra.mxu0 0
      %2722 = vmatprep.subr.bf16.mxu0 0
      %2723 = vmatpush1.bf16.msra.mxu0 0
      %2724 = vmatprep.subr.bf16.mxu0 0
      %2725 = vmatpush1.bf16.msra.mxu0 0
      %2726 = vmatprep.subr.bf16.mxu0 0
      %2727 = vmatpush1.bf16.msra.mxu0 %v2618
      %2728 = vmatprep.subr.bf16.mxu0 0
      %2729 = vmatpush1.bf16.msra.mxu0 %v2617
      %2730 = vmatprep.subr.bf16.mxu0 0
      %2731 = vmatpush1.bf16.msra.mxu0 %v2616
      %2732 = vmatprep.subr.bf16.mxu0 0
      %2733 = vmatpush1.bf16.msra.mxu0 %v2615
      %2734 = vmatprep.subr.bf16.mxu0 0
      %2735 = vmatpush2.bf16.msra.mxu0 0
      %2736 = vmatprep.subr.bf16.mxu0 0
      %2737 = vmatpush2.bf16.msra.mxu0 0
      %2738 = vmatprep.subr.bf16.mxu0 0
      %2739 = vmatpush2.bf16.msra.mxu0 0
      %2740 = vmatprep.subr.bf16.mxu0 0
      %2741 = vmatpush2.bf16.msra.mxu0 0
      %2742 = vmatprep.subr.bf16.mxu0 0
      %2743 = vmatpush2.bf16.msra.mxu0 0
      %2744 = vmatprep.subr.bf16.mxu0 0
      %2745 = vmatpush2.bf16.msra.mxu0 0
      %2746 = vmatprep.subr.bf16.mxu0 0
      %2747 = vmatpush2.bf16.msra.mxu0 0
      %2748 = vmatprep.subr.bf16.mxu0 0
      %2749 = vmatpush2.bf16.msra.mxu0 0
      %2750 = vmatprep.mubr.bf16.mxu0 0
      %2751 = vmatmul.mubr.bf16.gmra.mxu0 %v1940
      %v2752 = vpop.f32.mrf.mxu0
      %v2753 = vadd.f32 0.0, %v2752
      %v2754 = vpop.f32.mrf.mxu0
      %v2755 = vpop.f32.mrf.mxu0
      %v2756 = vadd.f32 0.0, %v2755
      %v2757 = vpop.f32.mrf.mxu0
      %2758 = vdwg.mxu0
      %v2759 = vlaneseq
      %v2760 = vshrl.u32 %v2759, 7
      %v2761 = vsub.s32 2, %v2760
      %v2762 = vrot.slane %v2620, %v2761
      %v2763 = vmul.f32 %v2753, %v2762
      %v2764 = vmul.f32 %v2756, %v2762
      %v2765 = vadd.f32 %v2716, %v2763
      %v2766 = vadd.f32 %v2717, %v2764
      %2767 = vmatprep.subr.bf16.mxu0 0
      %2768 = vmatpush1.bf16.msra.mxu0 0
      %2769 = vmatprep.subr.bf16.mxu0 0
      %2770 = vmatpush1.bf16.msra.mxu0 0
      %2771 = vmatprep.subr.bf16.mxu0 0
      %2772 = vmatpush1.bf16.msra.mxu0 0
      %2773 = vmatprep.subr.bf16.mxu0 0
      %2774 = vmatpush1.bf16.msra.mxu0 0
      %2775 = vmatprep.subr.bf16.mxu0 0
      %2776 = vmatpush1.bf16.msra.mxu0 %v2618
      %2777 = vmatprep.subr.bf16.mxu0 0
      %2778 = vmatpush1.bf16.msra.mxu0 %v2617
      %2779 = vmatprep.subr.bf16.mxu0 0
      %2780 = vmatpush1.bf16.msra.mxu0 %v2616
      %2781 = vmatprep.subr.bf16.mxu0 0
      %2782 = vmatpush1.bf16.msra.mxu0 %v2615
      %2783 = vmatprep.subr.bf16.mxu0 0
      %2784 = vmatpush2.bf16.msra.mxu0 0
      %2785 = vmatprep.subr.bf16.mxu0 0
      %2786 = vmatpush2.bf16.msra.mxu0 0
      %2787 = vmatprep.subr.bf16.mxu0 0
      %2788 = vmatpush2.bf16.msra.mxu0 0
      %2789 = vmatprep.subr.bf16.mxu0 0
      %2790 = vmatpush2.bf16.msra.mxu0 0
      %2791 = vmatprep.subr.bf16.mxu0 0
      %2792 = vmatpush2.bf16.msra.mxu0 0
      %2793 = vmatprep.subr.bf16.mxu0 0
      %2794 = vmatpush2.bf16.msra.mxu0 0
      %2795 = vmatprep.subr.bf16.mxu0 0
      %2796 = vmatpush2.bf16.msra.mxu0 0
      %2797 = vmatprep.subr.bf16.mxu0 0
      %2798 = vmatpush2.bf16.msra.mxu0 0
      %2799 = vmatprep.mubr.bf16.mxu0 0
      %2800 = vmatmul.mubr.bf16.gmra.mxu0 %v2000
      %v2801 = vpop.f32.mrf.mxu0
      %v2802 = vadd.f32 0.0, %v2801
      %v2803 = vpop.f32.mrf.mxu0
      %v2804 = vpop.f32.mrf.mxu0
      %v2805 = vadd.f32 0.0, %v2804
      %v2806 = vpop.f32.mrf.mxu0
      %2807 = vdwg.mxu0
      %v2808 = vlaneseq
      %v2809 = vshrl.u32 %v2808, 7
      %v2810 = vsub.s32 3, %v2809
      %v2811 = vrot.slane %v2620, %v2810
      %v2812 = vmul.f32 %v2802, %v2811
      %v2813 = vmul.f32 %v2805, %v2811
      %v2814 = vadd.f32 %v2765, %v2812
      %v2815 = vadd.f32 %v2766, %v2813
      %2816 = vmatprep.subr.bf16.mxu0 0
      %2817 = vmatpush1.bf16.msra.mxu0 0
      %2818 = vmatprep.subr.bf16.mxu0 0
      %2819 = vmatpush1.bf16.msra.mxu0 0
      %2820 = vmatprep.subr.bf16.mxu0 0
      %2821 = vmatpush1.bf16.msra.mxu0 0
      %2822 = vmatprep.subr.bf16.mxu0 0
      %2823 = vmatpush1.bf16.msra.mxu0 0
      %2824 = vmatprep.subr.bf16.mxu0 0
      %2825 = vmatpush1.bf16.msra.mxu0 %v2618
      %2826 = vmatprep.subr.bf16.mxu0 0
      %2827 = vmatpush1.bf16.msra.mxu0 %v2617
      %2828 = vmatprep.subr.bf16.mxu0 0
      %2829 = vmatpush1.bf16.msra.mxu0 %v2616
      %2830 = vmatprep.subr.bf16.mxu0 0
      %2831 = vmatpush1.bf16.msra.mxu0 %v2615
      %2832 = vmatprep.subr.bf16.mxu0 0
      %2833 = vmatpush2.bf16.msra.mxu0 0
      %2834 = vmatprep.subr.bf16.mxu0 0
      %2835 = vmatpush2.bf16.msra.mxu0 0
      %2836 = vmatprep.subr.bf16.mxu0 0
      %2837 = vmatpush2.bf16.msra.mxu0 0
      %2838 = vmatprep.subr.bf16.mxu0 0
      %2839 = vmatpush2.bf16.msra.mxu0 0
      %2840 = vmatprep.subr.bf16.mxu0 0
      %2841 = vmatpush2.bf16.msra.mxu0 0
      %2842 = vmatprep.subr.bf16.mxu0 0
      %2843 = vmatpush2.bf16.msra.mxu0 0
      %2844 = vmatprep.subr.bf16.mxu0 0
      %2845 = vmatpush2.bf16.msra.mxu0 0
      %2846 = vmatprep.subr.bf16.mxu0 0
      %2847 = vmatpush2.bf16.msra.mxu0 0
      %2848 = vmatprep.mubr.bf16.mxu0 0
      %2849 = vmatmul.mubr.bf16.gmra.mxu0 %v2060
      %v2850 = vpop.f32.mrf.mxu0
      %v2851 = vadd.f32 0.0, %v2850
      %v2852 = vpop.f32.mrf.mxu0
      %v2853 = vpop.f32.mrf.mxu0
      %v2854 = vadd.f32 0.0, %v2853
      %v2855 = vpop.f32.mrf.mxu0
      %2856 = vdwg.mxu0
      %v2857 = vlaneseq
      %v2858 = vshrl.u32 %v2857, 7
      %v2859 = vsub.s32 4, %v2858
      %v2860 = vrot.slane %v2620, %v2859
      %v2861 = vmul.f32 %v2851, %v2860
      %v2862 = vmul.f32 %v2854, %v2860
      %v2863 = vadd.f32 %v2814, %v2861
      %v2864 = vadd.f32 %v2815, %v2862
      %2865 = vmatprep.subr.bf16.mxu0 0
      %2866 = vmatpush1.bf16.msra.mxu0 0
      %2867 = vmatprep.subr.bf16.mxu0 0
      %2868 = vmatpush1.bf16.msra.mxu0 0
      %2869 = vmatprep.subr.bf16.mxu0 0
      %2870 = vmatpush1.bf16.msra.mxu0 0
      %2871 = vmatprep.subr.bf16.mxu0 0
      %2872 = vmatpush1.bf16.msra.mxu0 0
      %2873 = vmatprep.subr.bf16.mxu0 0
      %2874 = vmatpush1.bf16.msra.mxu0 %v2618
      %2875 = vmatprep.subr.bf16.mxu0 0
      %2876 = vmatpush1.bf16.msra.mxu0 %v2617
      %2877 = vmatprep.subr.bf16.mxu0 0
      %2878 = vmatpush1.bf16.msra.mxu0 %v2616
      %2879 = vmatprep.subr.bf16.mxu0 0
      %2880 = vmatpush1.bf16.msra.mxu0 %v2615
      %2881 = vmatprep.subr.bf16.mxu0 0
      %2882 = vmatpush2.bf16.msra.mxu0 0
      %2883 = vmatprep.subr.bf16.mxu0 0
      %2884 = vmatpush2.bf16.msra.mxu0 0
      %2885 = vmatprep.subr.bf16.mxu0 0
      %2886 = vmatpush2.bf16.msra.mxu0 0
      %2887 = vmatprep.subr.bf16.mxu0 0
      %2888 = vmatpush2.bf16.msra.mxu0 0
      %2889 = vmatprep.subr.bf16.mxu0 0
      %2890 = vmatpush2.bf16.msra.mxu0 0
      %2891 = vmatprep.subr.bf16.mxu0 0
      %2892 = vmatpush2.bf16.msra.mxu0 0
      %2893 = vmatprep.subr.bf16.mxu0 0
      %2894 = vmatpush2.bf16.msra.mxu0 0
      %2895 = vmatprep.subr.bf16.mxu0 0
      %2896 = vmatpush2.bf16.msra.mxu0 0
      %2897 = vmatprep.mubr.bf16.mxu0 0
      %2898 = vmatmul.mubr.bf16.gmra.mxu0 %v2120
      %v2899 = vpop.f32.mrf.mxu0
      %v2900 = vadd.f32 0.0, %v2899
      %v2901 = vpop.f32.mrf.mxu0
      %v2902 = vpop.f32.mrf.mxu0
      %v2903 = vadd.f32 0.0, %v2902
      %v2904 = vpop.f32.mrf.mxu0
      %2905 = vdwg.mxu0
      %v2906 = vlaneseq
      %v2907 = vshrl.u32 %v2906, 7
      %v2908 = vsub.s32 5, %v2907
      %v2909 = vrot.slane %v2620, %v2908
      %v2910 = vmul.f32 %v2900, %v2909
      %v2911 = vmul.f32 %v2903, %v2909
      %v2912 = vadd.f32 %v2863, %v2910
      %v2913 = vadd.f32 %v2864, %v2911
      %2914 = vmatprep.subr.bf16.mxu0 0
      %2915 = vmatpush1.bf16.msra.mxu0 0
      %2916 = vmatprep.subr.bf16.mxu0 0
      %2917 = vmatpush1.bf16.msra.mxu0 0
      %2918 = vmatprep.subr.bf16.mxu0 0
      %2919 = vmatpush1.bf16.msra.mxu0 0
      %2920 = vmatprep.subr.bf16.mxu0 0
      %2921 = vmatpush1.bf16.msra.mxu0 0
      %2922 = vmatprep.subr.bf16.mxu0 0
      %2923 = vmatpush1.bf16.msra.mxu0 %v2618
      %2924 = vmatprep.subr.bf16.mxu0 0
      %2925 = vmatpush1.bf16.msra.mxu0 %v2617
      %2926 = vmatprep.subr.bf16.mxu0 0
      %2927 = vmatpush1.bf16.msra.mxu0 %v2616
      %2928 = vmatprep.subr.bf16.mxu0 0
      %2929 = vmatpush1.bf16.msra.mxu0 %v2615
      %2930 = vmatprep.subr.bf16.mxu0 0
      %2931 = vmatpush2.bf16.msra.mxu0 0
      %2932 = vmatprep.subr.bf16.mxu0 0
      %2933 = vmatpush2.bf16.msra.mxu0 0
      %2934 = vmatprep.subr.bf16.mxu0 0
      %2935 = vmatpush2.bf16.msra.mxu0 0
      %2936 = vmatprep.subr.bf16.mxu0 0
      %2937 = vmatpush2.bf16.msra.mxu0 0
      %2938 = vmatprep.subr.bf16.mxu0 0
      %2939 = vmatpush2.bf16.msra.mxu0 0
      %2940 = vmatprep.subr.bf16.mxu0 0
      %2941 = vmatpush2.bf16.msra.mxu0 0
      %2942 = vmatprep.subr.bf16.mxu0 0
      %2943 = vmatpush2.bf16.msra.mxu0 0
      %2944 = vmatprep.subr.bf16.mxu0 0
      %2945 = vmatpush2.bf16.msra.mxu0 0
      %2946 = vmatprep.mubr.bf16.mxu0 0
      %2947 = vmatmul.mubr.bf16.gmra.mxu0 %v2180
      %v2948 = vpop.f32.mrf.mxu0
      %v2949 = vadd.f32 0.0, %v2948
      %v2950 = vpop.f32.mrf.mxu0
      %v2951 = vpop.f32.mrf.mxu0
      %v2952 = vadd.f32 0.0, %v2951
      %v2953 = vpop.f32.mrf.mxu0
      %2954 = vdwg.mxu0
      %v2955 = vlaneseq
      %v2956 = vshrl.u32 %v2955, 7
      %v2957 = vsub.s32 6, %v2956
      %v2958 = vrot.slane %v2620, %v2957
      %v2959 = vmul.f32 %v2949, %v2958
      %v2960 = vmul.f32 %v2952, %v2958
      %v2961 = vadd.f32 %v2912, %v2959
      %v2962 = vadd.f32 %v2913, %v2960
      %2963 = vmatprep.subr.bf16.mxu0 0
      %2964 = vmatpush1.bf16.msra.mxu0 0
      %2965 = vmatprep.subr.bf16.mxu0 0
      %2966 = vmatpush1.bf16.msra.mxu0 0
      %2967 = vmatprep.subr.bf16.mxu0 0
      %2968 = vmatpush1.bf16.msra.mxu0 0
      %2969 = vmatprep.subr.bf16.mxu0 0
      %2970 = vmatpush1.bf16.msra.mxu0 0
      %2971 = vmatprep.subr.bf16.mxu0 0
      %2972 = vmatpush1.bf16.msra.mxu0 %v2618
      %2973 = vmatprep.subr.bf16.mxu0 0
      %2974 = vmatpush1.bf16.msra.mxu0 %v2617
      %2975 = vmatprep.subr.bf16.mxu0 0
      %2976 = vmatpush1.bf16.msra.mxu0 %v2616
      %2977 = vmatprep.subr.bf16.mxu0 0
      %2978 = vmatpush1.bf16.msra.mxu0 %v2615
      %2979 = vmatprep.subr.bf16.mxu0 0
      %2980 = vmatpush2.bf16.msra.mxu0 0
      %2981 = vmatprep.subr.bf16.mxu0 0
      %2982 = vmatpush2.bf16.msra.mxu0 0
      %2983 = vmatprep.subr.bf16.mxu0 0
      %2984 = vmatpush2.bf16.msra.mxu0 0
      %2985 = vmatprep.subr.bf16.mxu0 0
      %2986 = vmatpush2.bf16.msra.mxu0 0
      %2987 = vmatprep.subr.bf16.mxu0 0
      %2988 = vmatpush2.bf16.msra.mxu0 0
      %2989 = vmatprep.subr.bf16.mxu0 0
      %2990 = vmatpush2.bf16.msra.mxu0 0
      %2991 = vmatprep.subr.bf16.mxu0 0
      %2992 = vmatpush2.bf16.msra.mxu0 0
      %2993 = vmatprep.subr.bf16.mxu0 0
      %2994 = vmatpush2.bf16.msra.mxu0 0
      %2995 = vmatprep.mubr.bf16.mxu0 0
      %2996 = vmatmul.mubr.bf16.gmra.mxu0 %v2240
      %v2997 = vpop.f32.mrf.mxu0
      %v2998 = vadd.f32 0.0, %v2997
      %v2999 = vpop.f32.mrf.mxu0
      %v3000 = vpop.f32.mrf.mxu0
      %v3001 = vadd.f32 0.0, %v3000
      %v3002 = vpop.f32.mrf.mxu0
      %3003 = vdwg.mxu0
      %v3004 = vlaneseq
      %v3005 = vshrl.u32 %v3004, 7
      %v3006 = vsub.s32 7, %v3005
      %v3007 = vrot.slane %v2620, %v3006
      %v3008 = vmul.f32 %v2998, %v3007
      %v3009 = vmul.f32 %v3001, %v3007
      %v3010 = vadd.f32 %v2961, %v3008
      %v3011 = vadd.f32 %v2962, %v3009
      %3012 = vmatprep.subr.bf16.mxu0 0
      %3013 = vmatpush1.bf16.msra.mxu0 0
      %3014 = vmatprep.subr.bf16.mxu0 0
      %3015 = vmatpush1.bf16.msra.mxu0 0
      %3016 = vmatprep.subr.bf16.mxu0 0
      %3017 = vmatpush1.bf16.msra.mxu0 0
      %3018 = vmatprep.subr.bf16.mxu0 0
      %3019 = vmatpush1.bf16.msra.mxu0 0
      %3020 = vmatprep.subr.bf16.mxu0 0
      %3021 = vmatpush1.bf16.msra.mxu0 %v2618
      %3022 = vmatprep.subr.bf16.mxu0 0
      %3023 = vmatpush1.bf16.msra.mxu0 %v2617
      %3024 = vmatprep.subr.bf16.mxu0 0
      %3025 = vmatpush1.bf16.msra.mxu0 %v2616
      %3026 = vmatprep.subr.bf16.mxu0 0
      %3027 = vmatpush1.bf16.msra.mxu0 %v2615
      %3028 = vmatprep.subr.bf16.mxu0 0
      %3029 = vmatpush2.bf16.msra.mxu0 0
      %3030 = vmatprep.subr.bf16.mxu0 0
      %3031 = vmatpush2.bf16.msra.mxu0 0
      %3032 = vmatprep.subr.bf16.mxu0 0
      %3033 = vmatpush2.bf16.msra.mxu0 0
      %3034 = vmatprep.subr.bf16.mxu0 0
      %3035 = vmatpush2.bf16.msra.mxu0 0
      %3036 = vmatprep.subr.bf16.mxu0 0
      %3037 = vmatpush2.bf16.msra.mxu0 0
      %3038 = vmatprep.subr.bf16.mxu0 0
      %3039 = vmatpush2.bf16.msra.mxu0 0
      %3040 = vmatprep.subr.bf16.mxu0 0
      %3041 = vmatpush2.bf16.msra.mxu0 0
      %3042 = vmatprep.subr.bf16.mxu0 0
      %3043 = vmatpush2.bf16.msra.mxu0 0
      %3044 = vmatprep.mubr.bf16.mxu0 0
      %3045 = vmatmul.mubr.bf16.gmra.mxu0 %v2300
      %v3046 = vpop.f32.mrf.mxu0
      %v3047 = vadd.f32 0.0, %v3046
      %v3048 = vpop.f32.mrf.mxu0
      %v3049 = vpop.f32.mrf.mxu0
      %v3050 = vadd.f32 0.0, %v3049
      %v3051 = vpop.f32.mrf.mxu0
      %3052 = vdwg.mxu0
      %v3053 = vlaneseq
      %v3054 = vshrl.u32 %v3053, 7
      %v3055 = vsub.s32 0, %v3054
      %v3056 = vrot.slane %v2621, %v3055
      %v3057 = vmul.f32 %v3047, %v3056
      %v3058 = vmul.f32 %v3050, %v3056
      %v3059 = vadd.f32 %v3010, %v3057
      %v3060 = vadd.f32 %v3011, %v3058
      %v3061 = vld [vmem:[%s3 + $0x4] sm:$0x1]
      %v3062 = vlaneseq
      %v3063 = vshrl.u32 %v3062, 7
      %v3064 = vsub.s32 0, %v3063
      %v3065 = vrot.slane %v3061, %v3064
      %v3066 = vadd.f32 %v3059, %v3065
      %v3067 = vadd.f32 %v3060, %v3065
      %v3068 = vpack.c.bf16 %v3067, %v3066
      %s3069 = scalar_lea.vmem %s1, 192
      %v3070 = vld [vmem:[%s3069] sm:$0xf]
      %v3071 = vld [vmem:[%s3069 + $0x4] sm:$0xf]
      %v3072 = vld [vmem:[%s3069 + $0x8] sm:$0xf]
      %v3073 = vld [vmem:[%s3069 + $0xc] sm:$0xf]
      %v3074 = vld [vmem:[%s3069 + $0x10] sm:$0xf]
      %v3075 = vld [vmem:[%s3069 + $0x14] sm:$0xf]
      %v3076 = vld [vmem:[%s3069 + $0x18] sm:$0xf]
      %v3077 = vld [vmem:[%s3069 + $0x1c] sm:$0xf]
      %v3078 = vld [vmem:[%s3069 + $0x20] sm:$0xf]
      %v3079 = vld [vmem:[%s3069 + $0x24] sm:$0xf]
      %v3080 = vld [vmem:[%s3069 + $0x28] sm:$0xf]
      %v3081 = vld [vmem:[%s3069 + $0x2c] sm:$0xf]
      %v3082 = vld [vmem:[%s3069 + $0x30] sm:$0xf]
      %v3083 = vld [vmem:[%s3069 + $0x34] sm:$0xf]
      %v3084 = vld [vmem:[%s3069 + $0x38] sm:$0xf]
      %v3085 = vld [vmem:[%s3069 + $0x3c] sm:$0xf]
      %v3086 = vld [vmem:[%s3 + $0x5] sm:$0x1]
      %v3087 = vlaneseq
      %v3088 = vshrl.u32 %v3087, 7
      %v3089 = vsub.s32 0, %v3088
      %v3090 = vrot.slane %v3086, %v3089
      %v3107 = vunpack.c.l.b16 %v3070
      %v3108 = vunpack.c.l.b16 %v3071
      %v3109 = vunpack.c.l.b16 %v3072
      %v3110 = vunpack.c.l.b16 %v3073
      %v3111 = vunpack.c.l.b16 %v3074
      %v3112 = vunpack.c.l.b16 %v3075
      %v3113 = vunpack.c.l.b16 %v3076
      %v3114 = vunpack.c.l.b16 %v3077
      %v3115 = vunpack.c.l.b16 %v3078
      %v3116 = vunpack.c.l.b16 %v3079
      %v3117 = vunpack.c.l.b16 %v3080
      %v3118 = vunpack.c.l.b16 %v3081
      %v3119 = vunpack.c.l.b16 %v3082
      %v3120 = vunpack.c.l.b16 %v3083
      %v3121 = vunpack.c.l.b16 %v3084
      %v3122 = vunpack.c.l.b16 %v3085
      %v3123 = vpack.c.b16 %v3108, %v3107
      %v3124 = vpack.c.b16 %v3110, %v3109
      %v3125 = vpack.c.b16 %v3112, %v3111
      %v3126 = vpack.c.b16 %v3114, %v3113
      %v3127 = vpack.c.b16 %v3116, %v3115
      %v3128 = vpack.c.b16 %v3118, %v3117
      %v3129 = vpack.c.b16 %v3120, %v3119
      %v3130 = vpack.c.b16 %v3122, %v3121
      %3139 = vmatprep.subr.bf16.mxu0 0
      %3140 = vmatpush1.bf16.msra.mxu0 %v3130
      %3141 = vmatprep.subr.bf16.mxu0 0
      %3142 = vmatpush1.bf16.msra.mxu0 %v3129
      %3143 = vmatprep.subr.bf16.mxu0 0
      %3144 = vmatpush1.bf16.msra.mxu0 %v3128
      %3145 = vmatprep.subr.bf16.mxu0 0
      %3146 = vmatpush1.bf16.msra.mxu0 %v3127
      %3147 = vmatprep.subr.bf16.mxu0 0
      %3148 = vmatpush1.bf16.msra.mxu0 %v3126
      %3149 = vmatprep.subr.bf16.mxu0 0
      %3150 = vmatpush1.bf16.msra.mxu0 %v3125
      %3151 = vmatprep.subr.bf16.mxu0 0
      %3152 = vmatpush1.bf16.msra.mxu0 %v3124
      %3153 = vmatprep.subr.bf16.mxu0 0
      %3154 = vmatpush1.bf16.msra.mxu0 %v3123
      %3155 = vmatprep.subr.bf16.mxu0 0
      %3156 = vmatpush2.bf16.msra.mxu0 0
      %3157 = vmatprep.subr.bf16.mxu0 0
      %3158 = vmatpush2.bf16.msra.mxu0 0
      %3159 = vmatprep.subr.bf16.mxu0 0
      %3160 = vmatpush2.bf16.msra.mxu0 0
      %3161 = vmatprep.subr.bf16.mxu0 0
      %3162 = vmatpush2.bf16.msra.mxu0 0
      %3163 = vmatprep.subr.bf16.mxu0 0
      %3164 = vmatpush2.bf16.msra.mxu0 0
      %3165 = vmatprep.subr.bf16.mxu0 0
      %3166 = vmatpush2.bf16.msra.mxu0 0
      %3167 = vmatprep.subr.bf16.mxu0 0
      %3168 = vmatpush2.bf16.msra.mxu0 0
      %3169 = vmatprep.subr.bf16.mxu0 0
      %3170 = vmatpush2.bf16.msra.mxu0 0
      %3171 = vmatprep.mubr.bf16.mxu0 0
      %3172 = vmatmul.mubr.bf16.gmra.mxu0 %v3068
      %v3173 = vpop.f32.mrf.mxu0
      %v3174 = vadd.f32 %v3090, %v3173
      %v3175 = vpop.f32.mrf.mxu0
      %v3176 = vpop.f32.mrf.mxu0
      %v3177 = vadd.f32 %v3090, %v3176
      %v3178 = vpop.f32.mrf.mxu0
      %3179 = vdwg.mxu0
      %v3180 = vmax.f32 %v3174, 0.0
      %v3181 = vmax.f32 %v3177, 0.0
      %v3182 = vadd.f32 %v2470, %v3180
      %v3183 = vadd.f32 %v2471, %v3181
      %v3184 = vpack.c.bf16 %v3183, %v3182
      %s3185 = scalar_lea.vmem %s1, 256
      %v3186 = vld [vmem:[%s3185] sm:$0xf]
      %v3187 = vld [vmem:[%s3185 + $0x4] sm:$0xf]
      %v3188 = vld [vmem:[%s3185 + $0x8] sm:$0xf]
      %v3189 = vld [vmem:[%s3185 + $0xc] sm:$0xf]
      %v3190 = vld [vmem:[%s3185 + $0x10] sm:$0xf]
      %v3191 = vld [vmem:[%s3185 + $0x14] sm:$0xf]
      %v3192 = vld [vmem:[%s3185 + $0x18] sm:$0xf]
      %v3193 = vld [vmem:[%s3185 + $0x1c] sm:$0xf]
      %v3194 = vld [vmem:[%s3185 + $0x20] sm:$0xf]
      %v3195 = vld [vmem:[%s3185 + $0x24] sm:$0xf]
      %v3196 = vld [vmem:[%s3185 + $0x28] sm:$0xf]
      %v3197 = vld [vmem:[%s3185 + $0x2c] sm:$0xf]
      %v3198 = vld [vmem:[%s3185 + $0x30] sm:$0xf]
      %v3199 = vld [vmem:[%s3185 + $0x34] sm:$0xf]
      %v3200 = vld [vmem:[%s3185 + $0x38] sm:$0xf]
      %v3201 = vld [vmem:[%s3185 + $0x3c] sm:$0xf]
      %v3202 = vld [vmem:[%s3 + $0x6] sm:$0x1]
      %v3203 = vlaneseq
      %v3204 = vshrl.u32 %v3203, 7
      %v3205 = vsub.s32 0, %v3204
      %v3206 = vrot.slane %v3202, %v3205
      %v3223 = vunpack.c.l.b16 %v3186
      %v3224 = vunpack.c.l.b16 %v3187
      %v3225 = vunpack.c.l.b16 %v3188
      %v3226 = vunpack.c.l.b16 %v3189
      %v3227 = vunpack.c.l.b16 %v3190
      %v3228 = vunpack.c.l.b16 %v3191
      %v3229 = vunpack.c.l.b16 %v3192
      %v3230 = vunpack.c.l.b16 %v3193
      %v3231 = vunpack.c.l.b16 %v3194
      %v3232 = vunpack.c.l.b16 %v3195
      %v3233 = vunpack.c.l.b16 %v3196
      %v3234 = vunpack.c.l.b16 %v3197
      %v3235 = vunpack.c.l.b16 %v3198
      %v3236 = vunpack.c.l.b16 %v3199
      %v3237 = vunpack.c.l.b16 %v3200
      %v3238 = vunpack.c.l.b16 %v3201
      %v3239 = vpack.c.b16 %v3224, %v3223
      %v3240 = vpack.c.b16 %v3226, %v3225
      %v3241 = vpack.c.b16 %v3228, %v3227
      %v3242 = vpack.c.b16 %v3230, %v3229
      %v3243 = vpack.c.b16 %v3232, %v3231
      %v3244 = vpack.c.b16 %v3234, %v3233
      %v3245 = vpack.c.b16 %v3236, %v3235
      %v3246 = vpack.c.b16 %v3238, %v3237
      %3255 = vmatprep.subr.bf16.mxu0 0
      %3256 = vmatpush1.bf16.msra.mxu0 %v3246
      %3257 = vmatprep.subr.bf16.mxu0 0
      %3258 = vmatpush1.bf16.msra.mxu0 %v3245
      %3259 = vmatprep.subr.bf16.mxu0 0
      %3260 = vmatpush1.bf16.msra.mxu0 %v3244
      %3261 = vmatprep.subr.bf16.mxu0 0
      %3262 = vmatpush1.bf16.msra.mxu0 %v3243
      %3263 = vmatprep.subr.bf16.mxu0 0
      %3264 = vmatpush1.bf16.msra.mxu0 %v3242
      %3265 = vmatprep.subr.bf16.mxu0 0
      %3266 = vmatpush1.bf16.msra.mxu0 %v3241
      %3267 = vmatprep.subr.bf16.mxu0 0
      %3268 = vmatpush1.bf16.msra.mxu0 %v3240
      %3269 = vmatprep.subr.bf16.mxu0 0
      %3270 = vmatpush1.bf16.msra.mxu0 %v3239
      %3271 = vmatprep.subr.bf16.mxu0 0
      %3272 = vmatpush2.bf16.msra.mxu0 0
      %3273 = vmatprep.subr.bf16.mxu0 0
      %3274 = vmatpush2.bf16.msra.mxu0 0
      %3275 = vmatprep.subr.bf16.mxu0 0
      %3276 = vmatpush2.bf16.msra.mxu0 0
      %3277 = vmatprep.subr.bf16.mxu0 0
      %3278 = vmatpush2.bf16.msra.mxu0 0
      %3279 = vmatprep.subr.bf16.mxu0 0
      %3280 = vmatpush2.bf16.msra.mxu0 0
      %3281 = vmatprep.subr.bf16.mxu0 0
      %3282 = vmatpush2.bf16.msra.mxu0 0
      %3283 = vmatprep.subr.bf16.mxu0 0
      %3284 = vmatpush2.bf16.msra.mxu0 0
      %3285 = vmatprep.subr.bf16.mxu0 0
      %3286 = vmatpush2.bf16.msra.mxu0 0
      %3287 = vmatprep.mubr.bf16.mxu0 0
      %3288 = vmatmul.mubr.bf16.gmra.mxu0 %v3184
      %v3289 = vpop.f32.mrf.mxu0
      %v3290 = vadd.f32 %v3206, %v3289
      %v3291 = vpop.f32.mrf.mxu0
      %v3292 = vpop.f32.mrf.mxu0
      %v3293 = vadd.f32 %v3206, %v3292
      %v3294 = vpop.f32.mrf.mxu0
      %3295 = vdwg.mxu0
      %v3296 = vmax.f32 %v3290, 0.0
      %v3297 = vmax.f32 %v3293, 0.0
      %v3298 = vpack.c.bf16 %v3297, %v3296
      %s3299 = scalar_lea.vmem %s2, 32
      %v3300 = vld [vmem:[%s3299] sm:$0xff]
      %v3301 = vld [vmem:[%s3299 + $0x8] sm:$0x1]
      %v3302 = vld [vmem:[%s6] sm:$0xf]
      %v3303 = vld [vmem:[%s6 + $0x4] sm:$0xf]
      %v3306 = vunpack.c.l.b16 %v3302
      %v3307 = vunpack.c.l.b16 %v3303
      %v3308 = vpack.c.b16 %v3307, %v3306
      %vm3309 = vcmask 130048
      %v3311 = vsel %vm3309, %v3308, 0
      %3313 = vmatprep.subr.bf16.mxu0 0
      %3314 = vmatpush1.bf16.msra.mxu0 0
      %3315 = vmatprep.subr.bf16.mxu0 0
      %3316 = vmatpush1.bf16.msra.mxu0 0
      %3317 = vmatprep.subr.bf16.mxu0 0
      %3318 = vmatpush1.bf16.msra.mxu0 0
      %3319 = vmatprep.subr.bf16.mxu0 0
      %3320 = vmatpush1.bf16.msra.mxu0 0
      %3321 = vmatprep.subr.bf16.mxu0 0
      %3322 = vmatpush1.bf16.msra.mxu0 0
      %3323 = vmatprep.subr.bf16.mxu0 0
      %3324 = vmatpush1.bf16.msra.mxu0 0
      %3325 = vmatprep.subr.bf16.mxu0 0
      %3326 = vmatpush1.bf16.msra.mxu0 0
      %3327 = vmatprep.subr.bf16.mxu0 0
      %3328 = vmatpush1.bf16.msra.mxu0 %v3298
      %3329 = vmatprep.subr.bf16.mxu0 0
      %3330 = vmatpush2.bf16.msra.mxu0 0
      %3331 = vmatprep.subr.bf16.mxu0 0
      %3332 = vmatpush2.bf16.msra.mxu0 0
      %3333 = vmatprep.subr.bf16.mxu0 0
      %3334 = vmatpush2.bf16.msra.mxu0 0
      %3335 = vmatprep.subr.bf16.mxu0 0
      %3336 = vmatpush2.bf16.msra.mxu0 0
      %3337 = vmatprep.subr.bf16.mxu0 0
      %3338 = vmatpush2.bf16.msra.mxu0 0
      %3339 = vmatprep.subr.bf16.mxu0 0
      %3340 = vmatpush2.bf16.msra.mxu0 0
      %3341 = vmatprep.subr.bf16.mxu0 0
      %3342 = vmatpush2.bf16.msra.mxu0 0
      %3343 = vmatprep.subr.bf16.mxu0 0
      %3344 = vmatpush2.bf16.msra.mxu0 0
      %3345 = vmatprep.mubr.bf16.mxu0 0
      %3346 = vmatmul.mubr.bf16.gmra.mxu0 %v3311
      %v3347 = vpop.f32.mrf.mxu0
      %v3348 = vadd.f32 0.0, %v3347
      %v3349 = vpop.f32.mrf.mxu0
      %v3350 = vpop.f32.mrf.mxu0
      %v3351 = vadd.f32 0.0, %v3350
      %v3352 = vpop.f32.mrf.mxu0
      %3353 = vdwg.mxu0
      %v3354 = vlaneseq
      %v3355 = vshrl.u32 %v3354, 7
      %v3356 = vsub.s32 0, %v3355
      %v3357 = vrot.slane %v3300, %v3356
      %v3358 = vmul.f32 %v3348, %v3357
      %v3359 = vmul.f32 %v3351, %v3357
      %s3360 = scalar_lea.vmem %s6, 8
      %v3361 = vld [vmem:[%s3360] sm:$0xf]
      %v3362 = vld [vmem:[%s3360 + $0x4] sm:$0xf]
      %v3365 = vunpack.c.l.b16 %v3361
      %v3366 = vunpack.c.l.b16 %v3362
      %v3367 = vpack.c.b16 %v3366, %v3365
      %v3369 = vsel %vm3309, %v3367, 0
      %3371 = vmatprep.subr.bf16.mxu0 0
      %3372 = vmatpush1.bf16.msra.mxu0 0
      %3373 = vmatprep.subr.bf16.mxu0 0
      %3374 = vmatpush1.bf16.msra.mxu0 0
      %3375 = vmatprep.subr.bf16.mxu0 0
      %3376 = vmatpush1.bf16.msra.mxu0 0
      %3377 = vmatprep.subr.bf16.mxu0 0
      %3378 = vmatpush1.bf16.msra.mxu0 0
      %3379 = vmatprep.subr.bf16.mxu0 0
      %3380 = vmatpush1.bf16.msra.mxu0 0
      %3381 = vmatprep.subr.bf16.mxu0 0
      %3382 = vmatpush1.bf16.msra.mxu0 0
      %3383 = vmatprep.subr.bf16.mxu0 0
      %3384 = vmatpush1.bf16.msra.mxu0 0
      %3385 = vmatprep.subr.bf16.mxu0 0
      %3386 = vmatpush1.bf16.msra.mxu0 %v3298
      %3387 = vmatprep.subr.bf16.mxu0 0
      %3388 = vmatpush2.bf16.msra.mxu0 0
      %3389 = vmatprep.subr.bf16.mxu0 0
      %3390 = vmatpush2.bf16.msra.mxu0 0
      %3391 = vmatprep.subr.bf16.mxu0 0
      %3392 = vmatpush2.bf16.msra.mxu0 0
      %3393 = vmatprep.subr.bf16.mxu0 0
      %3394 = vmatpush2.bf16.msra.mxu0 0
      %3395 = vmatprep.subr.bf16.mxu0 0
      %3396 = vmatpush2.bf16.msra.mxu0 0
      %3397 = vmatprep.subr.bf16.mxu0 0
      %3398 = vmatpush2.bf16.msra.mxu0 0
      %3399 = vmatprep.subr.bf16.mxu0 0
      %3400 = vmatpush2.bf16.msra.mxu0 0
      %3401 = vmatprep.subr.bf16.mxu0 0
      %3402 = vmatpush2.bf16.msra.mxu0 0
      %3403 = vmatprep.mubr.bf16.mxu0 0
      %3404 = vmatmul.mubr.bf16.gmra.mxu0 %v3369
      %v3405 = vpop.f32.mrf.mxu0
      %v3406 = vadd.f32 0.0, %v3405
      %v3407 = vpop.f32.mrf.mxu0
      %v3408 = vpop.f32.mrf.mxu0
      %v3409 = vadd.f32 0.0, %v3408
      %v3410 = vpop.f32.mrf.mxu0
      %3411 = vdwg.mxu0
      %v3412 = vlaneseq
      %v3413 = vshrl.u32 %v3412, 7
      %v3414 = vsub.s32 1, %v3413
      %v3415 = vrot.slane %v3300, %v3414
      %v3416 = vmul.f32 %v3406, %v3415
      %v3417 = vmul.f32 %v3409, %v3415
      %v3418 = vadd.f32 %v3358, %v3416
      %v3419 = vadd.f32 %v3359, %v3417
      %s3420 = scalar_lea.vmem %s6, 16
      %v3421 = vld [vmem:[%s3420] sm:$0xf]
      %v3422 = vld [vmem:[%s3420 + $0x4] sm:$0xf]
      %v3425 = vunpack.c.l.b16 %v3421
      %v3426 = vunpack.c.l.b16 %v3422
      %v3427 = vpack.c.b16 %v3426, %v3425
      %v3429 = vsel %vm3309, %v3427, 0
      %3431 = vmatprep.subr.bf16.mxu0 0
      %3432 = vmatpush1.bf16.msra.mxu0 0
      %3433 = vmatprep.subr.bf16.mxu0 0
      %3434 = vmatpush1.bf16.msra.mxu0 0
      %3435 = vmatprep.subr.bf16.mxu0 0
      %3436 = vmatpush1.bf16.msra.mxu0 0
      %3437 = vmatprep.subr.bf16.mxu0 0
      %3438 = vmatpush1.bf16.msra.mxu0 0
      %3439 = vmatprep.subr.bf16.mxu0 0
      %3440 = vmatpush1.bf16.msra.mxu0 0
      %3441 = vmatprep.subr.bf16.mxu0 0
      %3442 = vmatpush1.bf16.msra.mxu0 0
      %3443 = vmatprep.subr.bf16.mxu0 0
      %3444 = vmatpush1.bf16.msra.mxu0 0
      %3445 = vmatprep.subr.bf16.mxu0 0
      %3446 = vmatpush1.bf16.msra.mxu0 %v3298
      %3447 = vmatprep.subr.bf16.mxu0 0
      %3448 = vmatpush2.bf16.msra.mxu0 0
      %3449 = vmatprep.subr.bf16.mxu0 0
      %3450 = vmatpush2.bf16.msra.mxu0 0
      %3451 = vmatprep.subr.bf16.mxu0 0
      %3452 = vmatpush2.bf16.msra.mxu0 0
      %3453 = vmatprep.subr.bf16.mxu0 0
      %3454 = vmatpush2.bf16.msra.mxu0 0
      %3455 = vmatprep.subr.bf16.mxu0 0
      %3456 = vmatpush2.bf16.msra.mxu0 0
      %3457 = vmatprep.subr.bf16.mxu0 0
      %3458 = vmatpush2.bf16.msra.mxu0 0
      %3459 = vmatprep.subr.bf16.mxu0 0
      %3460 = vmatpush2.bf16.msra.mxu0 0
      %3461 = vmatprep.subr.bf16.mxu0 0
      %3462 = vmatpush2.bf16.msra.mxu0 0
      %3463 = vmatprep.mubr.bf16.mxu0 0
      %3464 = vmatmul.mubr.bf16.gmra.mxu0 %v3429
      %v3465 = vpop.f32.mrf.mxu0
      %v3466 = vadd.f32 0.0, %v3465
      %v3467 = vpop.f32.mrf.mxu0
      %v3468 = vpop.f32.mrf.mxu0
      %v3469 = vadd.f32 0.0, %v3468
      %v3470 = vpop.f32.mrf.mxu0
      %3471 = vdwg.mxu0
      %v3472 = vlaneseq
      %v3473 = vshrl.u32 %v3472, 7
      %v3474 = vsub.s32 2, %v3473
      %v3475 = vrot.slane %v3300, %v3474
      %v3476 = vmul.f32 %v3466, %v3475
      %v3477 = vmul.f32 %v3469, %v3475
      %v3478 = vadd.f32 %v3418, %v3476
      %v3479 = vadd.f32 %v3419, %v3477
      %s3480 = scalar_lea.vmem %s6, 24
      %v3481 = vld [vmem:[%s3480] sm:$0xf]
      %v3482 = vld [vmem:[%s3480 + $0x4] sm:$0xf]
      %v3485 = vunpack.c.l.b16 %v3481
      %v3486 = vunpack.c.l.b16 %v3482
      %v3487 = vpack.c.b16 %v3486, %v3485
      %v3489 = vsel %vm3309, %v3487, 0
      %3491 = vmatprep.subr.bf16.mxu0 0
      %3492 = vmatpush1.bf16.msra.mxu0 0
      %3493 = vmatprep.subr.bf16.mxu0 0
      %3494 = vmatpush1.bf16.msra.mxu0 0
      %3495 = vmatprep.subr.bf16.mxu0 0
      %3496 = vmatpush1.bf16.msra.mxu0 0
      %3497 = vmatprep.subr.bf16.mxu0 0
      %3498 = vmatpush1.bf16.msra.mxu0 0
      %3499 = vmatprep.subr.bf16.mxu0 0
      %3500 = vmatpush1.bf16.msra.mxu0 0
      %3501 = vmatprep.subr.bf16.mxu0 0
      %3502 = vmatpush1.bf16.msra.mxu0 0
      %3503 = vmatprep.subr.bf16.mxu0 0
      %3504 = vmatpush1.bf16.msra.mxu0 0
      %3505 = vmatprep.subr.bf16.mxu0 0
      %3506 = vmatpush1.bf16.msra.mxu0 %v3298
      %3507 = vmatprep.subr.bf16.mxu0 0
      %3508 = vmatpush2.bf16.msra.mxu0 0
      %3509 = vmatprep.subr.bf16.mxu0 0
      %3510 = vmatpush2.bf16.msra.mxu0 0
      %3511 = vmatprep.subr.bf16.mxu0 0
      %3512 = vmatpush2.bf16.msra.mxu0 0
      %3513 = vmatprep.subr.bf16.mxu0 0
      %3514 = vmatpush2.bf16.msra.mxu0 0
      %3515 = vmatprep.subr.bf16.mxu0 0
      %3516 = vmatpush2.bf16.msra.mxu0 0
      %3517 = vmatprep.subr.bf16.mxu0 0
      %3518 = vmatpush2.bf16.msra.mxu0 0
      %3519 = vmatprep.subr.bf16.mxu0 0
      %3520 = vmatpush2.bf16.msra.mxu0 0
      %3521 = vmatprep.subr.bf16.mxu0 0
      %3522 = vmatpush2.bf16.msra.mxu0 0
      %3523 = vmatprep.mubr.bf16.mxu0 0
      %3524 = vmatmul.mubr.bf16.gmra.mxu0 %v3489
      %v3525 = vpop.f32.mrf.mxu0
      %v3526 = vadd.f32 0.0, %v3525
      %v3527 = vpop.f32.mrf.mxu0
      %v3528 = vpop.f32.mrf.mxu0
      %v3529 = vadd.f32 0.0, %v3528
      %v3530 = vpop.f32.mrf.mxu0
      %3531 = vdwg.mxu0
      %v3532 = vlaneseq
      %v3533 = vshrl.u32 %v3532, 7
      %v3534 = vsub.s32 3, %v3533
      %v3535 = vrot.slane %v3300, %v3534
      %v3536 = vmul.f32 %v3526, %v3535
      %v3537 = vmul.f32 %v3529, %v3535
      %v3538 = vadd.f32 %v3478, %v3536
      %v3539 = vadd.f32 %v3479, %v3537
      %s3540 = scalar_lea.vmem %s6, 32
      %v3541 = vld [vmem:[%s3540] sm:$0xf]
      %v3542 = vld [vmem:[%s3540 + $0x4] sm:$0xf]
      %v3545 = vunpack.c.l.b16 %v3541
      %v3546 = vunpack.c.l.b16 %v3542
      %v3547 = vpack.c.b16 %v3546, %v3545
      %v3549 = vsel %vm3309, %v3547, 0
      %3551 = vmatprep.subr.bf16.mxu0 0
      %3552 = vmatpush1.bf16.msra.mxu0 0
      %3553 = vmatprep.subr.bf16.mxu0 0
      %3554 = vmatpush1.bf16.msra.mxu0 0
      %3555 = vmatprep.subr.bf16.mxu0 0
      %3556 = vmatpush1.bf16.msra.mxu0 0
      %3557 = vmatprep.subr.bf16.mxu0 0
      %3558 = vmatpush1.bf16.msra.mxu0 0
      %3559 = vmatprep.subr.bf16.mxu0 0
      %3560 = vmatpush1.bf16.msra.mxu0 0
      %3561 = vmatprep.subr.bf16.mxu0 0
      %3562 = vmatpush1.bf16.msra.mxu0 0
      %3563 = vmatprep.subr.bf16.mxu0 0
      %3564 = vmatpush1.bf16.msra.mxu0 0
      %3565 = vmatprep.subr.bf16.mxu0 0
      %3566 = vmatpush1.bf16.msra.mxu0 %v3298
      %3567 = vmatprep.subr.bf16.mxu0 0
      %3568 = vmatpush2.bf16.msra.mxu0 0
      %3569 = vmatprep.subr.bf16.mxu0 0
      %3570 = vmatpush2.bf16.msra.mxu0 0
      %3571 = vmatprep.subr.bf16.mxu0 0
      %3572 = vmatpush2.bf16.msra.mxu0 0
      %3573 = vmatprep.subr.bf16.mxu0 0
      %3574 = vmatpush2.bf16.msra.mxu0 0
      %3575 = vmatprep.subr.bf16.mxu0 0
      %3576 = vmatpush2.bf16.msra.mxu0 0
      %3577 = vmatprep.subr.bf16.mxu0 0
      %3578 = vmatpush2.bf16.msra.mxu0 0
      %3579 = vmatprep.subr.bf16.mxu0 0
      %3580 = vmatpush2.bf16.msra.mxu0 0
      %3581 = vmatprep.subr.bf16.mxu0 0
      %3582 = vmatpush2.bf16.msra.mxu0 0
      %3583 = vmatprep.mubr.bf16.mxu0 0
      %3584 = vmatmul.mubr.bf16.gmra.mxu0 %v3549
      %v3585 = vpop.f32.mrf.mxu0
      %v3586 = vadd.f32 0.0, %v3585
      %v3587 = vpop.f32.mrf.mxu0
      %v3588 = vpop.f32.mrf.mxu0
      %v3589 = vadd.f32 0.0, %v3588
      %v3590 = vpop.f32.mrf.mxu0
      %3591 = vdwg.mxu0
      %v3592 = vlaneseq
      %v3593 = vshrl.u32 %v3592, 7
      %v3594 = vsub.s32 4, %v3593
      %v3595 = vrot.slane %v3300, %v3594
      %v3596 = vmul.f32 %v3586, %v3595
      %v3597 = vmul.f32 %v3589, %v3595
      %v3598 = vadd.f32 %v3538, %v3596
      %v3599 = vadd.f32 %v3539, %v3597
      %s3600 = scalar_lea.vmem %s6, 40
      %v3601 = vld [vmem:[%s3600] sm:$0xf]
      %v3602 = vld [vmem:[%s3600 + $0x4] sm:$0xf]
      %v3605 = vunpack.c.l.b16 %v3601
      %v3606 = vunpack.c.l.b16 %v3602
      %v3607 = vpack.c.b16 %v3606, %v3605
      %v3609 = vsel %vm3309, %v3607, 0
      %3611 = vmatprep.subr.bf16.mxu0 0
      %3612 = vmatpush1.bf16.msra.mxu0 0
      %3613 = vmatprep.subr.bf16.mxu0 0
      %3614 = vmatpush1.bf16.msra.mxu0 0
      %3615 = vmatprep.subr.bf16.mxu0 0
      %3616 = vmatpush1.bf16.msra.mxu0 0
      %3617 = vmatprep.subr.bf16.mxu0 0
      %3618 = vmatpush1.bf16.msra.mxu0 0
      %3619 = vmatprep.subr.bf16.mxu0 0
      %3620 = vmatpush1.bf16.msra.mxu0 0
      %3621 = vmatprep.subr.bf16.mxu0 0
      %3622 = vmatpush1.bf16.msra.mxu0 0
      %3623 = vmatprep.subr.bf16.mxu0 0
      %3624 = vmatpush1.bf16.msra.mxu0 0
      %3625 = vmatprep.subr.bf16.mxu0 0
      %3626 = vmatpush1.bf16.msra.mxu0 %v3298
      %3627 = vmatprep.subr.bf16.mxu0 0
      %3628 = vmatpush2.bf16.msra.mxu0 0
      %3629 = vmatprep.subr.bf16.mxu0 0
      %3630 = vmatpush2.bf16.msra.mxu0 0
      %3631 = vmatprep.subr.bf16.mxu0 0
      %3632 = vmatpush2.bf16.msra.mxu0 0
      %3633 = vmatprep.subr.bf16.mxu0 0
      %3634 = vmatpush2.bf16.msra.mxu0 0
      %3635 = vmatprep.subr.bf16.mxu0 0
      %3636 = vmatpush2.bf16.msra.mxu0 0
      %3637 = vmatprep.subr.bf16.mxu0 0
      %3638 = vmatpush2.bf16.msra.mxu0 0
      %3639 = vmatprep.subr.bf16.mxu0 0
      %3640 = vmatpush2.bf16.msra.mxu0 0
      %3641 = vmatprep.subr.bf16.mxu0 0
      %3642 = vmatpush2.bf16.msra.mxu0 0
      %3643 = vmatprep.mubr.bf16.mxu0 0
      %3644 = vmatmul.mubr.bf16.gmra.mxu0 %v3609
      %v3645 = vpop.f32.mrf.mxu0
      %v3646 = vadd.f32 0.0, %v3645
      %v3647 = vpop.f32.mrf.mxu0
      %v3648 = vpop.f32.mrf.mxu0
      %v3649 = vadd.f32 0.0, %v3648
      %v3650 = vpop.f32.mrf.mxu0
      %3651 = vdwg.mxu0
      %v3652 = vlaneseq
      %v3653 = vshrl.u32 %v3652, 7
      %v3654 = vsub.s32 5, %v3653
      %v3655 = vrot.slane %v3300, %v3654
      %v3656 = vmul.f32 %v3646, %v3655
      %v3657 = vmul.f32 %v3649, %v3655
      %v3658 = vadd.f32 %v3598, %v3656
      %v3659 = vadd.f32 %v3599, %v3657
      %s3660 = scalar_lea.vmem %s6, 48
      %v3661 = vld [vmem:[%s3660] sm:$0xf]
      %v3662 = vld [vmem:[%s3660 + $0x4] sm:$0xf]
      %v3665 = vunpack.c.l.b16 %v3661
      %v3666 = vunpack.c.l.b16 %v3662
      %v3667 = vpack.c.b16 %v3666, %v3665
      %v3669 = vsel %vm3309, %v3667, 0
      %3671 = vmatprep.subr.bf16.mxu0 0
      %3672 = vmatpush1.bf16.msra.mxu0 0
      %3673 = vmatprep.subr.bf16.mxu0 0
      %3674 = vmatpush1.bf16.msra.mxu0 0
      %3675 = vmatprep.subr.bf16.mxu0 0
      %3676 = vmatpush1.bf16.msra.mxu0 0
      %3677 = vmatprep.subr.bf16.mxu0 0
      %3678 = vmatpush1.bf16.msra.mxu0 0
      %3679 = vmatprep.subr.bf16.mxu0 0
      %3680 = vmatpush1.bf16.msra.mxu0 0
      %3681 = vmatprep.subr.bf16.mxu0 0
      %3682 = vmatpush1.bf16.msra.mxu0 0
      %3683 = vmatprep.subr.bf16.mxu0 0
      %3684 = vmatpush1.bf16.msra.mxu0 0
      %3685 = vmatprep.subr.bf16.mxu0 0
      %3686 = vmatpush1.bf16.msra.mxu0 %v3298
      %3687 = vmatprep.subr.bf16.mxu0 0
      %3688 = vmatpush2.bf16.msra.mxu0 0
      %3689 = vmatprep.subr.bf16.mxu0 0
      %3690 = vmatpush2.bf16.msra.mxu0 0
      %3691 = vmatprep.subr.bf16.mxu0 0
      %3692 = vmatpush2.bf16.msra.mxu0 0
      %3693 = vmatprep.subr.bf16.mxu0 0
      %3694 = vmatpush2.bf16.msra.mxu0 0
      %3695 = vmatprep.subr.bf16.mxu0 0
      %3696 = vmatpush2.bf16.msra.mxu0 0
      %3697 = vmatprep.subr.bf16.mxu0 0
      %3698 = vmatpush2.bf16.msra.mxu0 0
      %3699 = vmatprep.subr.bf16.mxu0 0
      %3700 = vmatpush2.bf16.msra.mxu0 0
      %3701 = vmatprep.subr.bf16.mxu0 0
      %3702 = vmatpush2.bf16.msra.mxu0 0
      %3703 = vmatprep.mubr.bf16.mxu0 0
      %3704 = vmatmul.mubr.bf16.gmra.mxu0 %v3669
      %v3705 = vpop.f32.mrf.mxu0
      %v3706 = vadd.f32 0.0, %v3705
      %v3707 = vpop.f32.mrf.mxu0
      %v3708 = vpop.f32.mrf.mxu0
      %v3709 = vadd.f32 0.0, %v3708
      %v3710 = vpop.f32.mrf.mxu0
      %3711 = vdwg.mxu0
      %v3712 = vlaneseq
      %v3713 = vshrl.u32 %v3712, 7
      %v3714 = vsub.s32 6, %v3713
      %v3715 = vrot.slane %v3300, %v3714
      %v3716 = vmul.f32 %v3706, %v3715
      %v3717 = vmul.f32 %v3709, %v3715
      %v3718 = vadd.f32 %v3658, %v3716
      %v3719 = vadd.f32 %v3659, %v3717
      %s3720 = scalar_lea.vmem %s6, 56
      %v3721 = vld [vmem:[%s3720] sm:$0xf]
      %v3722 = vld [vmem:[%s3720 + $0x4] sm:$0xf]
      %v3725 = vunpack.c.l.b16 %v3721
      %v3726 = vunpack.c.l.b16 %v3722
      %v3727 = vpack.c.b16 %v3726, %v3725
      %v3729 = vsel %vm3309, %v3727, 0
      %3731 = vmatprep.subr.bf16.mxu0 0
      %3732 = vmatpush1.bf16.msra.mxu0 0
      %3733 = vmatprep.subr.bf16.mxu0 0
      %3734 = vmatpush1.bf16.msra.mxu0 0
      %3735 = vmatprep.subr.bf16.mxu0 0
      %3736 = vmatpush1.bf16.msra.mxu0 0
      %3737 = vmatprep.subr.bf16.mxu0 0
      %3738 = vmatpush1.bf16.msra.mxu0 0
      %3739 = vmatprep.subr.bf16.mxu0 0
      %3740 = vmatpush1.bf16.msra.mxu0 0
      %3741 = vmatprep.subr.bf16.mxu0 0
      %3742 = vmatpush1.bf16.msra.mxu0 0
      %3743 = vmatprep.subr.bf16.mxu0 0
      %3744 = vmatpush1.bf16.msra.mxu0 0
      %3745 = vmatprep.subr.bf16.mxu0 0
      %3746 = vmatpush1.bf16.msra.mxu0 %v3298
      %3747 = vmatprep.subr.bf16.mxu0 0
      %3748 = vmatpush2.bf16.msra.mxu0 0
      %3749 = vmatprep.subr.bf16.mxu0 0
      %3750 = vmatpush2.bf16.msra.mxu0 0
      %3751 = vmatprep.subr.bf16.mxu0 0
      %3752 = vmatpush2.bf16.msra.mxu0 0
      %3753 = vmatprep.subr.bf16.mxu0 0
      %3754 = vmatpush2.bf16.msra.mxu0 0
      %3755 = vmatprep.subr.bf16.mxu0 0
      %3756 = vmatpush2.bf16.msra.mxu0 0
      %3757 = vmatprep.subr.bf16.mxu0 0
      %3758 = vmatpush2.bf16.msra.mxu0 0
      %3759 = vmatprep.subr.bf16.mxu0 0
      %3760 = vmatpush2.bf16.msra.mxu0 0
      %3761 = vmatprep.subr.bf16.mxu0 0
      %3762 = vmatpush2.bf16.msra.mxu0 0
      %3763 = vmatprep.mubr.bf16.mxu0 0
      %3764 = vmatmul.mubr.bf16.gmra.mxu0 %v3729
      %v3765 = vpop.f32.mrf.mxu0
      %v3766 = vadd.f32 0.0, %v3765
      %v3767 = vpop.f32.mrf.mxu0
      %v3768 = vpop.f32.mrf.mxu0
      %v3769 = vadd.f32 0.0, %v3768
      %v3770 = vpop.f32.mrf.mxu0
      %3771 = vdwg.mxu0
      %v3772 = vlaneseq
      %v3773 = vshrl.u32 %v3772, 7
      %v3774 = vsub.s32 7, %v3773
      %v3775 = vrot.slane %v3300, %v3774
      %v3776 = vmul.f32 %v3766, %v3775
      %v3777 = vmul.f32 %v3769, %v3775
      %v3778 = vadd.f32 %v3718, %v3776
      %v3779 = vadd.f32 %v3719, %v3777
      %s3780 = scalar_lea.vmem %s6, 64
      %v3781 = vld [vmem:[%s3780] sm:$0xf]
      %v3782 = vld [vmem:[%s3780 + $0x4] sm:$0xf]
      %v3785 = vunpack.c.l.b16 %v3781
      %v3786 = vunpack.c.l.b16 %v3782
      %v3787 = vpack.c.b16 %v3786, %v3785
      %v3789 = vsel %vm3309, %v3787, 0
      %3791 = vmatprep.subr.bf16.mxu0 0
      %3792 = vmatpush1.bf16.msra.mxu0 0
      %3793 = vmatprep.subr.bf16.mxu0 0
      %3794 = vmatpush1.bf16.msra.mxu0 0
      %3795 = vmatprep.subr.bf16.mxu0 0
      %3796 = vmatpush1.bf16.msra.mxu0 0
      %3797 = vmatprep.subr.bf16.mxu0 0
      %3798 = vmatpush1.bf16.msra.mxu0 0
      %3799 = vmatprep.subr.bf16.mxu0 0
      %3800 = vmatpush1.bf16.msra.mxu0 0
      %3801 = vmatprep.subr.bf16.mxu0 0
      %3802 = vmatpush1.bf16.msra.mxu0 0
      %3803 = vmatprep.subr.bf16.mxu0 0
      %3804 = vmatpush1.bf16.msra.mxu0 0
      %3805 = vmatprep.subr.bf16.mxu0 0
      %3806 = vmatpush1.bf16.msra.mxu0 %v3298
      %3807 = vmatprep.subr.bf16.mxu0 0
      %3808 = vmatpush2.bf16.msra.mxu0 0
      %3809 = vmatprep.subr.bf16.mxu0 0
      %3810 = vmatpush2.bf16.msra.mxu0 0
      %3811 = vmatprep.subr.bf16.mxu0 0
      %3812 = vmatpush2.bf16.msra.mxu0 0
      %3813 = vmatprep.subr.bf16.mxu0 0
      %3814 = vmatpush2.bf16.msra.mxu0 0
      %3815 = vmatprep.subr.bf16.mxu0 0
      %3816 = vmatpush2.bf16.msra.mxu0 0
      %3817 = vmatprep.subr.bf16.mxu0 0
      %3818 = vmatpush2.bf16.msra.mxu0 0
      %3819 = vmatprep.subr.bf16.mxu0 0
      %3820 = vmatpush2.bf16.msra.mxu0 0
      %3821 = vmatprep.subr.bf16.mxu0 0
      %3822 = vmatpush2.bf16.msra.mxu0 0
      %3823 = vmatprep.mubr.bf16.mxu0 0
      %3824 = vmatmul.mubr.bf16.gmra.mxu0 %v3789
      %v3825 = vpop.f32.mrf.mxu0
      %v3826 = vadd.f32 0.0, %v3825
      %v3827 = vpop.f32.mrf.mxu0
      %v3828 = vpop.f32.mrf.mxu0
      %v3829 = vadd.f32 0.0, %v3828
      %v3830 = vpop.f32.mrf.mxu0
      %3831 = vdwg.mxu0
      %v3832 = vlaneseq
      %v3833 = vshrl.u32 %v3832, 7
      %v3834 = vsub.s32 0, %v3833
      %v3835 = vrot.slane %v3301, %v3834
      %v3836 = vmul.f32 %v3826, %v3835
      %v3837 = vmul.f32 %v3829, %v3835
      %v3838 = vadd.f32 %v3778, %v3836
      %v3839 = vadd.f32 %v3779, %v3837
      %v3840 = vld [vmem:[%s3 + $0x7] sm:$0x1]
      %v3841 = vlaneseq
      %v3842 = vshrl.u32 %v3841, 7
      %v3843 = vsub.s32 0, %v3842
      %v3844 = vrot.slane %v3840, %v3843
      %v3845 = vadd.f32 %v3838, %v3844
      %v3846 = vadd.f32 %v3839, %v3844
      %v3847 = vpack.c.bf16 %v3846, %v3845
      %s3848 = scalar_lea.vmem %s1, 320
      %v3849 = vld [vmem:[%s3848] sm:$0xf]
      %v3850 = vld [vmem:[%s3848 + $0x4] sm:$0xf]
      %v3851 = vld [vmem:[%s3848 + $0x8] sm:$0xf]
      %v3852 = vld [vmem:[%s3848 + $0xc] sm:$0xf]
      %v3853 = vld [vmem:[%s3848 + $0x10] sm:$0xf]
      %v3854 = vld [vmem:[%s3848 + $0x14] sm:$0xf]
      %v3855 = vld [vmem:[%s3848 + $0x18] sm:$0xf]
      %v3856 = vld [vmem:[%s3848 + $0x1c] sm:$0xf]
      %v3857 = vld [vmem:[%s3848 + $0x20] sm:$0xf]
      %v3858 = vld [vmem:[%s3848 + $0x24] sm:$0xf]
      %v3859 = vld [vmem:[%s3848 + $0x28] sm:$0xf]
      %v3860 = vld [vmem:[%s3848 + $0x2c] sm:$0xf]
      %v3861 = vld [vmem:[%s3848 + $0x30] sm:$0xf]
      %v3862 = vld [vmem:[%s3848 + $0x34] sm:$0xf]
      %v3863 = vld [vmem:[%s3848 + $0x38] sm:$0xf]
      %v3864 = vld [vmem:[%s3848 + $0x3c] sm:$0xf]
      %v3865 = vld [vmem:[%s3 + $0x8] sm:$0x1]
      %v3866 = vlaneseq
      %v3867 = vshrl.u32 %v3866, 7
      %v3868 = vsub.s32 0, %v3867
      %v3869 = vrot.slane %v3865, %v3868
      %v3886 = vunpack.c.l.b16 %v3849
      %v3887 = vunpack.c.l.b16 %v3850
      %v3888 = vunpack.c.l.b16 %v3851
      %v3889 = vunpack.c.l.b16 %v3852
      %v3890 = vunpack.c.l.b16 %v3853
      %v3891 = vunpack.c.l.b16 %v3854
      %v3892 = vunpack.c.l.b16 %v3855
      %v3893 = vunpack.c.l.b16 %v3856
      %v3894 = vunpack.c.l.b16 %v3857
      %v3895 = vunpack.c.l.b16 %v3858
      %v3896 = vunpack.c.l.b16 %v3859
      %v3897 = vunpack.c.l.b16 %v3860
      %v3898 = vunpack.c.l.b16 %v3861
      %v3899 = vunpack.c.l.b16 %v3862
      %v3900 = vunpack.c.l.b16 %v3863
      %v3901 = vunpack.c.l.b16 %v3864
      %v3902 = vpack.c.b16 %v3887, %v3886
      %v3903 = vpack.c.b16 %v3889, %v3888
      %v3904 = vpack.c.b16 %v3891, %v3890
      %v3905 = vpack.c.b16 %v3893, %v3892
      %v3906 = vpack.c.b16 %v3895, %v3894
      %v3907 = vpack.c.b16 %v3897, %v3896
      %v3908 = vpack.c.b16 %v3899, %v3898
      %v3909 = vpack.c.b16 %v3901, %v3900
      %3918 = vmatprep.subr.bf16.mxu0 0
      %3919 = vmatpush1.bf16.msra.mxu0 %v3909
      %3920 = vmatprep.subr.bf16.mxu0 0
      %3921 = vmatpush1.bf16.msra.mxu0 %v3908
      %3922 = vmatprep.subr.bf16.mxu0 0
      %3923 = vmatpush1.bf16.msra.mxu0 %v3907
      %3924 = vmatprep.subr.bf16.mxu0 0
      %3925 = vmatpush1.bf16.msra.mxu0 %v3906
      %3926 = vmatprep.subr.bf16.mxu0 0
      %3927 = vmatpush1.bf16.msra.mxu0 %v3905
      %3928 = vmatprep.subr.bf16.mxu0 0
      %3929 = vmatpush1.bf16.msra.mxu0 %v3904
      %3930 = vmatprep.subr.bf16.mxu0 0
      %3931 = vmatpush1.bf16.msra.mxu0 %v3903
      %3932 = vmatprep.subr.bf16.mxu0 0
      %3933 = vmatpush1.bf16.msra.mxu0 %v3902
      %3934 = vmatprep.subr.bf16.mxu0 0
      %3935 = vmatpush2.bf16.msra.mxu0 0
      %3936 = vmatprep.subr.bf16.mxu0 0
      %3937 = vmatpush2.bf16.msra.mxu0 0
      %3938 = vmatprep.subr.bf16.mxu0 0
      %3939 = vmatpush2.bf16.msra.mxu0 0
      %3940 = vmatprep.subr.bf16.mxu0 0
      %3941 = vmatpush2.bf16.msra.mxu0 0
      %3942 = vmatprep.subr.bf16.mxu0 0
      %3943 = vmatpush2.bf16.msra.mxu0 0
      %3944 = vmatprep.subr.bf16.mxu0 0
      %3945 = vmatpush2.bf16.msra.mxu0 0
      %3946 = vmatprep.subr.bf16.mxu0 0
      %3947 = vmatpush2.bf16.msra.mxu0 0
      %3948 = vmatprep.subr.bf16.mxu0 0
      %3949 = vmatpush2.bf16.msra.mxu0 0
      %3950 = vmatprep.mubr.bf16.mxu0 0
      %3951 = vmatmul.mubr.bf16.gmra.mxu0 %v3847
      %v3952 = vpop.f32.mrf.mxu0
      %v3953 = vadd.f32 %v3869, %v3952
      %v3954 = vpop.f32.mrf.mxu0
      %v3955 = vpop.f32.mrf.mxu0
      %v3956 = vadd.f32 %v3869, %v3955
      %v3957 = vpop.f32.mrf.mxu0
      %3958 = vdwg.mxu0
      %v3959 = vmax.f32 %v3953, 0.0
      %v3960 = vmax.f32 %v3956, 0.0
      %s3961 = scalar_lea.vmem %s1, 640
      %v3962 = vld [vmem:[%s3961] sm:$0xf]
      %v3963 = vld [vmem:[%s3961 + $0x4] sm:$0xf]
      %v3964 = vld [vmem:[%s3961 + $0x8] sm:$0xf]
      %v3965 = vld [vmem:[%s3961 + $0xc] sm:$0xf]
      %v3966 = vld [vmem:[%s3961 + $0x10] sm:$0xf]
      %v3967 = vld [vmem:[%s3961 + $0x14] sm:$0xf]
      %v3968 = vld [vmem:[%s3961 + $0x18] sm:$0xf]
      %v3969 = vld [vmem:[%s3961 + $0x1c] sm:$0xf]
      %v3970 = vld [vmem:[%s3961 + $0x20] sm:$0xf]
      %v3971 = vld [vmem:[%s3961 + $0x24] sm:$0xf]
      %v3972 = vld [vmem:[%s3961 + $0x28] sm:$0xf]
      %v3973 = vld [vmem:[%s3961 + $0x2c] sm:$0xf]
      %v3974 = vld [vmem:[%s3961 + $0x30] sm:$0xf]
      %v3975 = vld [vmem:[%s3961 + $0x34] sm:$0xf]
      %v3976 = vld [vmem:[%s3961 + $0x38] sm:$0xf]
      %v3977 = vld [vmem:[%s3961 + $0x3c] sm:$0xf]
      %v3994 = vunpack.c.l.b16 %v3962
      %v3995 = vunpack.c.l.b16 %v3963
      %v3996 = vunpack.c.l.b16 %v3964
      %v3997 = vunpack.c.l.b16 %v3965
      %v3998 = vunpack.c.l.b16 %v3966
      %v3999 = vunpack.c.l.b16 %v3967
      %v4000 = vunpack.c.l.b16 %v3968
      %v4001 = vunpack.c.l.b16 %v3969
      %v4002 = vunpack.c.l.b16 %v3970
      %v4003 = vunpack.c.l.b16 %v3971
      %v4004 = vunpack.c.l.b16 %v3972
      %v4005 = vunpack.c.l.b16 %v3973
      %v4006 = vunpack.c.l.b16 %v3974
      %v4007 = vunpack.c.l.b16 %v3975
      %v4008 = vunpack.c.l.b16 %v3976
      %v4009 = vunpack.c.l.b16 %v3977
      %v4010 = vpack.c.b16 %v3995, %v3994
      %v4011 = vpack.c.b16 %v3997, %v3996
      %v4012 = vpack.c.b16 %v3999, %v3998
      %v4013 = vpack.c.b16 %v4001, %v4000
      %v4014 = vpack.c.b16 %v4003, %v4002
      %v4015 = vpack.c.b16 %v4005, %v4004
      %v4016 = vpack.c.b16 %v4007, %v4006
      %v4017 = vpack.c.b16 %v4009, %v4008
      %4026 = vmatprep.subr.bf16.mxu0 0
      %4027 = vmatpush1.bf16.msra.mxu0 %v4017
      %4028 = vmatprep.subr.bf16.mxu0 0
      %4029 = vmatpush1.bf16.msra.mxu0 %v4016
      %4030 = vmatprep.subr.bf16.mxu0 0
      %4031 = vmatpush1.bf16.msra.mxu0 %v4015
      %4032 = vmatprep.subr.bf16.mxu0 0
      %4033 = vmatpush1.bf16.msra.mxu0 %v4014
      %4034 = vmatprep.subr.bf16.mxu0 0
      %4035 = vmatpush1.bf16.msra.mxu0 %v4013
      %4036 = vmatprep.subr.bf16.mxu0 0
      %4037 = vmatpush1.bf16.msra.mxu0 %v4012
      %4038 = vmatprep.subr.bf16.mxu0 0
      %4039 = vmatpush1.bf16.msra.mxu0 %v4011
      %4040 = vmatprep.subr.bf16.mxu0 0
      %4041 = vmatpush1.bf16.msra.mxu0 %v4010
      %4042 = vmatprep.subr.bf16.mxu0 0
      %4043 = vmatpush2.bf16.msra.mxu0 0
      %4044 = vmatprep.subr.bf16.mxu0 0
      %4045 = vmatpush2.bf16.msra.mxu0 0
      %4046 = vmatprep.subr.bf16.mxu0 0
      %4047 = vmatpush2.bf16.msra.mxu0 0
      %4048 = vmatprep.subr.bf16.mxu0 0
      %4049 = vmatpush2.bf16.msra.mxu0 0
      %4050 = vmatprep.subr.bf16.mxu0 0
      %4051 = vmatpush2.bf16.msra.mxu0 0
      %4052 = vmatprep.subr.bf16.mxu0 0
      %4053 = vmatpush2.bf16.msra.mxu0 0
      %4054 = vmatprep.subr.bf16.mxu0 0
      %4055 = vmatpush2.bf16.msra.mxu0 0
      %4056 = vmatprep.subr.bf16.mxu0 0
      %4057 = vmatpush2.bf16.msra.mxu0 0
      %4058 = vmatprep.mubr.bf16.mxu0 0
      %4059 = vmatmul.mubr.bf16.gmra.mxu0 %v3184
      %v4060 = vpop.f32.mrf.mxu0
      %v4061 = vadd.f32 %v3959, %v4060
      %v4062 = vpop.f32.mrf.mxu0
      %v4063 = vpop.f32.mrf.mxu0
      %v4064 = vadd.f32 %v3960, %v4063
      %v4065 = vpop.f32.mrf.mxu0
      %4066 = vdwg.mxu0
      %v4067 = vpack.c.bf16 %v4064, %v4061
      %s4068 = scalar_lea.vmem %s1, 384
      %v4069 = vld [vmem:[%s4068] sm:$0xf]
      %v4070 = vld [vmem:[%s4068 + $0x4] sm:$0xf]
      %v4071 = vld [vmem:[%s4068 + $0x8] sm:$0xf]
      %v4072 = vld [vmem:[%s4068 + $0xc] sm:$0xf]
      %v4073 = vld [vmem:[%s4068 + $0x10] sm:$0xf]
      %v4074 = vld [vmem:[%s4068 + $0x14] sm:$0xf]
      %v4075 = vld [vmem:[%s4068 + $0x18] sm:$0xf]
      %v4076 = vld [vmem:[%s4068 + $0x1c] sm:$0xf]
      %v4077 = vld [vmem:[%s4068 + $0x20] sm:$0xf]
      %v4078 = vld [vmem:[%s4068 + $0x24] sm:$0xf]
      %v4079 = vld [vmem:[%s4068 + $0x28] sm:$0xf]
      %v4080 = vld [vmem:[%s4068 + $0x2c] sm:$0xf]
      %v4081 = vld [vmem:[%s4068 + $0x30] sm:$0xf]
      %v4082 = vld [vmem:[%s4068 + $0x34] sm:$0xf]
      %v4083 = vld [vmem:[%s4068 + $0x38] sm:$0xf]
      %v4084 = vld [vmem:[%s4068 + $0x3c] sm:$0xf]
      %v4085 = vld [vmem:[%s3 + $0x9] sm:$0x1]
      %v4086 = vlaneseq
      %v4087 = vshrl.u32 %v4086, 7
      %v4088 = vsub.s32 0, %v4087
      %v4089 = vrot.slane %v4085, %v4088
      %v4106 = vunpack.c.l.b16 %v4069
      %v4107 = vunpack.c.l.b16 %v4070
      %v4108 = vunpack.c.l.b16 %v4071
      %v4109 = vunpack.c.l.b16 %v4072
      %v4110 = vunpack.c.l.b16 %v4073
      %v4111 = vunpack.c.l.b16 %v4074
      %v4112 = vunpack.c.l.b16 %v4075
      %v4113 = vunpack.c.l.b16 %v4076
      %v4114 = vunpack.c.l.b16 %v4077
      %v4115 = vunpack.c.l.b16 %v4078
      %v4116 = vunpack.c.l.b16 %v4079
      %v4117 = vunpack.c.l.b16 %v4080
      %v4118 = vunpack.c.l.b16 %v4081
      %v4119 = vunpack.c.l.b16 %v4082
      %v4120 = vunpack.c.l.b16 %v4083
      %v4121 = vunpack.c.l.b16 %v4084
      %v4122 = vpack.c.b16 %v4107, %v4106
      %v4123 = vpack.c.b16 %v4109, %v4108
      %v4124 = vpack.c.b16 %v4111, %v4110
      %v4125 = vpack.c.b16 %v4113, %v4112
      %v4126 = vpack.c.b16 %v4115, %v4114
      %v4127 = vpack.c.b16 %v4117, %v4116
      %v4128 = vpack.c.b16 %v4119, %v4118
      %v4129 = vpack.c.b16 %v4121, %v4120
      %4138 = vmatprep.subr.bf16.mxu0 0
      %4139 = vmatpush1.bf16.msra.mxu0 %v4129
      %4140 = vmatprep.subr.bf16.mxu0 0
      %4141 = vmatpush1.bf16.msra.mxu0 %v4128
      %4142 = vmatprep.subr.bf16.mxu0 0
      %4143 = vmatpush1.bf16.msra.mxu0 %v4127
      %4144 = vmatprep.subr.bf16.mxu0 0
      %4145 = vmatpush1.bf16.msra.mxu0 %v4126
      %4146 = vmatprep.subr.bf16.mxu0 0
      %4147 = vmatpush1.bf16.msra.mxu0 %v4125
      %4148 = vmatprep.subr.bf16.mxu0 0
      %4149 = vmatpush1.bf16.msra.mxu0 %v4124
      %4150 = vmatprep.subr.bf16.mxu0 0
      %4151 = vmatpush1.bf16.msra.mxu0 %v4123
      %4152 = vmatprep.subr.bf16.mxu0 0
      %4153 = vmatpush1.bf16.msra.mxu0 %v4122
      %4154 = vmatprep.subr.bf16.mxu0 0
      %4155 = vmatpush2.bf16.msra.mxu0 0
      %4156 = vmatprep.subr.bf16.mxu0 0
      %4157 = vmatpush2.bf16.msra.mxu0 0
      %4158 = vmatprep.subr.bf16.mxu0 0
      %4159 = vmatpush2.bf16.msra.mxu0 0
      %4160 = vmatprep.subr.bf16.mxu0 0
      %4161 = vmatpush2.bf16.msra.mxu0 0
      %4162 = vmatprep.subr.bf16.mxu0 0
      %4163 = vmatpush2.bf16.msra.mxu0 0
      %4164 = vmatprep.subr.bf16.mxu0 0
      %4165 = vmatpush2.bf16.msra.mxu0 0
      %4166 = vmatprep.subr.bf16.mxu0 0
      %4167 = vmatpush2.bf16.msra.mxu0 0
      %4168 = vmatprep.subr.bf16.mxu0 0
      %4169 = vmatpush2.bf16.msra.mxu0 0
      %4170 = vmatprep.mubr.bf16.mxu0 0
      %4171 = vmatmul.mubr.bf16.gmra.mxu0 %v4067
      %v4172 = vpop.f32.mrf.mxu0
      %v4173 = vadd.f32 %v4089, %v4172
      %v4174 = vpop.f32.mrf.mxu0
      %v4175 = vpop.f32.mrf.mxu0
      %v4176 = vadd.f32 %v4089, %v4175
      %v4177 = vpop.f32.mrf.mxu0
      %4178 = vdwg.mxu0
      %v4179 = vmax.f32 %v4173, 0.0
      %v4180 = vmax.f32 %v4176, 0.0
      %v4181 = vpack.c.bf16 %v4180, %v4179
      %s4182 = scalar_lea.vmem %s2, 48
      %v4183 = vld [vmem:[%s4182] sm:$0xff]
      %v4184 = vld [vmem:[%s4182 + $0x8] sm:$0x1]
      %4185 = vmatprep.subr.bf16.mxu0 0
      %4186 = vmatpush1.bf16.msra.mxu0 0
      %4187 = vmatprep.subr.bf16.mxu0 0
      %4188 = vmatpush1.bf16.msra.mxu0 0
      %4189 = vmatprep.subr.bf16.mxu0 0
      %4190 = vmatpush1.bf16.msra.mxu0 0
      %4191 = vmatprep.subr.bf16.mxu0 0
      %4192 = vmatpush1.bf16.msra.mxu0 0
      %4193 = vmatprep.subr.bf16.mxu0 0
      %4194 = vmatpush1.bf16.msra.mxu0 0
      %4195 = vmatprep.subr.bf16.mxu0 0
      %4196 = vmatpush1.bf16.msra.mxu0 0
      %4197 = vmatprep.subr.bf16.mxu0 0
      %4198 = vmatpush1.bf16.msra.mxu0 0
      %4199 = vmatprep.subr.bf16.mxu0 0
      %4200 = vmatpush1.bf16.msra.mxu0 %v4181
      %4201 = vmatprep.subr.bf16.mxu0 0
      %4202 = vmatpush2.bf16.msra.mxu0 0
      %4203 = vmatprep.subr.bf16.mxu0 0
      %4204 = vmatpush2.bf16.msra.mxu0 0
      %4205 = vmatprep.subr.bf16.mxu0 0
      %4206 = vmatpush2.bf16.msra.mxu0 0
      %4207 = vmatprep.subr.bf16.mxu0 0
      %4208 = vmatpush2.bf16.msra.mxu0 0
      %4209 = vmatprep.subr.bf16.mxu0 0
      %4210 = vmatpush2.bf16.msra.mxu0 0
      %4211 = vmatprep.subr.bf16.mxu0 0
      %4212 = vmatpush2.bf16.msra.mxu0 0
      %4213 = vmatprep.subr.bf16.mxu0 0
      %4214 = vmatpush2.bf16.msra.mxu0 0
      %4215 = vmatprep.subr.bf16.mxu0 0
      %4216 = vmatpush2.bf16.msra.mxu0 0
      %4217 = vmatprep.mubr.bf16.mxu0 0
      %4218 = vmatmul.mubr.bf16.gmra.mxu0 %v3311
      %v4219 = vpop.f32.mrf.mxu0
      %v4220 = vadd.f32 0.0, %v4219
      %v4221 = vpop.f32.mrf.mxu0
      %v4222 = vpop.f32.mrf.mxu0
      %v4223 = vadd.f32 0.0, %v4222
      %v4224 = vpop.f32.mrf.mxu0
      %4225 = vdwg.mxu0
      %v4226 = vlaneseq
      %v4227 = vshrl.u32 %v4226, 7
      %v4228 = vsub.s32 0, %v4227
      %v4229 = vrot.slane %v4183, %v4228
      %v4230 = vmul.f32 %v4220, %v4229
      %v4231 = vmul.f32 %v4223, %v4229
      %4232 = vmatprep.subr.bf16.mxu0 0
      %4233 = vmatpush1.bf16.msra.mxu0 0
      %4234 = vmatprep.subr.bf16.mxu0 0
      %4235 = vmatpush1.bf16.msra.mxu0 0
      %4236 = vmatprep.subr.bf16.mxu0 0
      %4237 = vmatpush1.bf16.msra.mxu0 0
      %4238 = vmatprep.subr.bf16.mxu0 0
      %4239 = vmatpush1.bf16.msra.mxu0 0
      %4240 = vmatprep.subr.bf16.mxu0 0
      %4241 = vmatpush1.bf16.msra.mxu0 0
      %4242 = vmatprep.subr.bf16.mxu0 0
      %4243 = vmatpush1.bf16.msra.mxu0 0
      %4244 = vmatprep.subr.bf16.mxu0 0
      %4245 = vmatpush1.bf16.msra.mxu0 0
      %4246 = vmatprep.subr.bf16.mxu0 0
      %4247 = vmatpush1.bf16.msra.mxu0 %v4181
      %4248 = vmatprep.subr.bf16.mxu0 0
      %4249 = vmatpush2.bf16.msra.mxu0 0
      %4250 = vmatprep.subr.bf16.mxu0 0
      %4251 = vmatpush2.bf16.msra.mxu0 0
      %4252 = vmatprep.subr.bf16.mxu0 0
      %4253 = vmatpush2.bf16.msra.mxu0 0
      %4254 = vmatprep.subr.bf16.mxu0 0
      %4255 = vmatpush2.bf16.msra.mxu0 0
      %4256 = vmatprep.subr.bf16.mxu0 0
      %4257 = vmatpush2.bf16.msra.mxu0 0
      %4258 = vmatprep.subr.bf16.mxu0 0
      %4259 = vmatpush2.bf16.msra.mxu0 0
      %4260 = vmatprep.subr.bf16.mxu0 0
      %4261 = vmatpush2.bf16.msra.mxu0 0
      %4262 = vmatprep.subr.bf16.mxu0 0
      %4263 = vmatpush2.bf16.msra.mxu0 0
      %4264 = vmatprep.mubr.bf16.mxu0 0
      %4265 = vmatmul.mubr.bf16.gmra.mxu0 %v3369
      %v4266 = vpop.f32.mrf.mxu0
      %v4267 = vadd.f32 0.0, %v4266
      %v4268 = vpop.f32.mrf.mxu0
      %v4269 = vpop.f32.mrf.mxu0
      %v4270 = vadd.f32 0.0, %v4269
      %v4271 = vpop.f32.mrf.mxu0
      %4272 = vdwg.mxu0
      %v4273 = vlaneseq
      %v4274 = vshrl.u32 %v4273, 7
      %v4275 = vsub.s32 1, %v4274
      %v4276 = vrot.slane %v4183, %v4275
      %v4277 = vmul.f32 %v4267, %v4276
      %v4278 = vmul.f32 %v4270, %v4276
      %v4279 = vadd.f32 %v4230, %v4277
      %v4280 = vadd.f32 %v4231, %v4278
      %4281 = vmatprep.subr.bf16.mxu0 0
      %4282 = vmatpush1.bf16.msra.mxu0 0
      %4283 = vmatprep.subr.bf16.mxu0 0
      %4284 = vmatpush1.bf16.msra.mxu0 0
      %4285 = vmatprep.subr.bf16.mxu0 0
      %4286 = vmatpush1.bf16.msra.mxu0 0
      %4287 = vmatprep.subr.bf16.mxu0 0
      %4288 = vmatpush1.bf16.msra.mxu0 0
      %4289 = vmatprep.subr.bf16.mxu0 0
      %4290 = vmatpush1.bf16.msra.mxu0 0
      %4291 = vmatprep.subr.bf16.mxu0 0
      %4292 = vmatpush1.bf16.msra.mxu0 0
      %4293 = vmatprep.subr.bf16.mxu0 0
      %4294 = vmatpush1.bf16.msra.mxu0 0
      %4295 = vmatprep.subr.bf16.mxu0 0
      %4296 = vmatpush1.bf16.msra.mxu0 %v4181
      %4297 = vmatprep.subr.bf16.mxu0 0
      %4298 = vmatpush2.bf16.msra.mxu0 0
      %4299 = vmatprep.subr.bf16.mxu0 0
      %4300 = vmatpush2.bf16.msra.mxu0 0
      %4301 = vmatprep.subr.bf16.mxu0 0
      %4302 = vmatpush2.bf16.msra.mxu0 0
      %4303 = vmatprep.subr.bf16.mxu0 0
      %4304 = vmatpush2.bf16.msra.mxu0 0
      %4305 = vmatprep.subr.bf16.mxu0 0
      %4306 = vmatpush2.bf16.msra.mxu0 0
      %4307 = vmatprep.subr.bf16.mxu0 0
      %4308 = vmatpush2.bf16.msra.mxu0 0
      %4309 = vmatprep.subr.bf16.mxu0 0
      %4310 = vmatpush2.bf16.msra.mxu0 0
      %4311 = vmatprep.subr.bf16.mxu0 0
      %4312 = vmatpush2.bf16.msra.mxu0 0
      %4313 = vmatprep.mubr.bf16.mxu0 0
      %4314 = vmatmul.mubr.bf16.gmra.mxu0 %v3429
      %v4315 = vpop.f32.mrf.mxu0
      %v4316 = vadd.f32 0.0, %v4315
      %v4317 = vpop.f32.mrf.mxu0
      %v4318 = vpop.f32.mrf.mxu0
      %v4319 = vadd.f32 0.0, %v4318
      %v4320 = vpop.f32.mrf.mxu0
      %4321 = vdwg.mxu0
      %v4322 = vlaneseq
      %v4323 = vshrl.u32 %v4322, 7
      %v4324 = vsub.s32 2, %v4323
      %v4325 = vrot.slane %v4183, %v4324
      %v4326 = vmul.f32 %v4316, %v4325
      %v4327 = vmul.f32 %v4319, %v4325
      %v4328 = vadd.f32 %v4279, %v4326
      %v4329 = vadd.f32 %v4280, %v4327
      %4330 = vmatprep.subr.bf16.mxu0 0
      %4331 = vmatpush1.bf16.msra.mxu0 0
      %4332 = vmatprep.subr.bf16.mxu0 0
      %4333 = vmatpush1.bf16.msra.mxu0 0
      %4334 = vmatprep.subr.bf16.mxu0 0
      %4335 = vmatpush1.bf16.msra.mxu0 0
      %4336 = vmatprep.subr.bf16.mxu0 0
      %4337 = vmatpush1.bf16.msra.mxu0 0
      %4338 = vmatprep.subr.bf16.mxu0 0
      %4339 = vmatpush1.bf16.msra.mxu0 0
      %4340 = vmatprep.subr.bf16.mxu0 0
      %4341 = vmatpush1.bf16.msra.mxu0 0
      %4342 = vmatprep.subr.bf16.mxu0 0
      %4343 = vmatpush1.bf16.msra.mxu0 0
      %4344 = vmatprep.subr.bf16.mxu0 0
      %4345 = vmatpush1.bf16.msra.mxu0 %v4181
      %4346 = vmatprep.subr.bf16.mxu0 0
      %4347 = vmatpush2.bf16.msra.mxu0 0
      %4348 = vmatprep.subr.bf16.mxu0 0
      %4349 = vmatpush2.bf16.msra.mxu0 0
      %4350 = vmatprep.subr.bf16.mxu0 0
      %4351 = vmatpush2.bf16.msra.mxu0 0
      %4352 = vmatprep.subr.bf16.mxu0 0
      %4353 = vmatpush2.bf16.msra.mxu0 0
      %4354 = vmatprep.subr.bf16.mxu0 0
      %4355 = vmatpush2.bf16.msra.mxu0 0
      %4356 = vmatprep.subr.bf16.mxu0 0
      %4357 = vmatpush2.bf16.msra.mxu0 0
      %4358 = vmatprep.subr.bf16.mxu0 0
      %4359 = vmatpush2.bf16.msra.mxu0 0
      %4360 = vmatprep.subr.bf16.mxu0 0
      %4361 = vmatpush2.bf16.msra.mxu0 0
      %4362 = vmatprep.mubr.bf16.mxu0 0
      %4363 = vmatmul.mubr.bf16.gmra.mxu0 %v3489
      %v4364 = vpop.f32.mrf.mxu0
      %v4365 = vadd.f32 0.0, %v4364
      %v4366 = vpop.f32.mrf.mxu0
      %v4367 = vpop.f32.mrf.mxu0
      %v4368 = vadd.f32 0.0, %v4367
      %v4369 = vpop.f32.mrf.mxu0
      %4370 = vdwg.mxu0
      %v4371 = vlaneseq
      %v4372 = vshrl.u32 %v4371, 7
      %v4373 = vsub.s32 3, %v4372
      %v4374 = vrot.slane %v4183, %v4373
      %v4375 = vmul.f32 %v4365, %v4374
      %v4376 = vmul.f32 %v4368, %v4374
      %v4377 = vadd.f32 %v4328, %v4375
      %v4378 = vadd.f32 %v4329, %v4376
      %4379 = vmatprep.subr.bf16.mxu0 0
      %4380 = vmatpush1.bf16.msra.mxu0 0
      %4381 = vmatprep.subr.bf16.mxu0 0
      %4382 = vmatpush1.bf16.msra.mxu0 0
      %4383 = vmatprep.subr.bf16.mxu0 0
      %4384 = vmatpush1.bf16.msra.mxu0 0
      %4385 = vmatprep.subr.bf16.mxu0 0
      %4386 = vmatpush1.bf16.msra.mxu0 0
      %4387 = vmatprep.subr.bf16.mxu0 0
      %4388 = vmatpush1.bf16.msra.mxu0 0
      %4389 = vmatprep.subr.bf16.mxu0 0
      %4390 = vmatpush1.bf16.msra.mxu0 0
      %4391 = vmatprep.subr.bf16.mxu0 0
      %4392 = vmatpush1.bf16.msra.mxu0 0
      %4393 = vmatprep.subr.bf16.mxu0 0
      %4394 = vmatpush1.bf16.msra.mxu0 %v4181
      %4395 = vmatprep.subr.bf16.mxu0 0
      %4396 = vmatpush2.bf16.msra.mxu0 0
      %4397 = vmatprep.subr.bf16.mxu0 0
      %4398 = vmatpush2.bf16.msra.mxu0 0
      %4399 = vmatprep.subr.bf16.mxu0 0
      %4400 = vmatpush2.bf16.msra.mxu0 0
      %4401 = vmatprep.subr.bf16.mxu0 0
      %4402 = vmatpush2.bf16.msra.mxu0 0
      %4403 = vmatprep.subr.bf16.mxu0 0
      %4404 = vmatpush2.bf16.msra.mxu0 0
      %4405 = vmatprep.subr.bf16.mxu0 0
      %4406 = vmatpush2.bf16.msra.mxu0 0
      %4407 = vmatprep.subr.bf16.mxu0 0
      %4408 = vmatpush2.bf16.msra.mxu0 0
      %4409 = vmatprep.subr.bf16.mxu0 0
      %4410 = vmatpush2.bf16.msra.mxu0 0
      %4411 = vmatprep.mubr.bf16.mxu0 0
      %4412 = vmatmul.mubr.bf16.gmra.mxu0 %v3549
      %v4413 = vpop.f32.mrf.mxu0
      %v4414 = vadd.f32 0.0, %v4413
      %v4415 = vpop.f32.mrf.mxu0
      %v4416 = vpop.f32.mrf.mxu0
      %v4417 = vadd.f32 0.0, %v4416
      %v4418 = vpop.f32.mrf.mxu0
      %4419 = vdwg.mxu0
      %v4420 = vlaneseq
      %v4421 = vshrl.u32 %v4420, 7
      %v4422 = vsub.s32 4, %v4421
      %v4423 = vrot.slane %v4183, %v4422
      %v4424 = vmul.f32 %v4414, %v4423
      %v4425 = vmul.f32 %v4417, %v4423
      %v4426 = vadd.f32 %v4377, %v4424
      %v4427 = vadd.f32 %v4378, %v4425
      %4428 = vmatprep.subr.bf16.mxu0 0
      %4429 = vmatpush1.bf16.msra.mxu0 0
      %4430 = vmatprep.subr.bf16.mxu0 0
      %4431 = vmatpush1.bf16.msra.mxu0 0
      %4432 = vmatprep.subr.bf16.mxu0 0
      %4433 = vmatpush1.bf16.msra.mxu0 0
      %4434 = vmatprep.subr.bf16.mxu0 0
      %4435 = vmatpush1.bf16.msra.mxu0 0
      %4436 = vmatprep.subr.bf16.mxu0 0
      %4437 = vmatpush1.bf16.msra.mxu0 0
      %4438 = vmatprep.subr.bf16.mxu0 0
      %4439 = vmatpush1.bf16.msra.mxu0 0
      %4440 = vmatprep.subr.bf16.mxu0 0
      %4441 = vmatpush1.bf16.msra.mxu0 0
      %4442 = vmatprep.subr.bf16.mxu0 0
      %4443 = vmatpush1.bf16.msra.mxu0 %v4181
      %4444 = vmatprep.subr.bf16.mxu0 0
      %4445 = vmatpush2.bf16.msra.mxu0 0
      %4446 = vmatprep.subr.bf16.mxu0 0
      %4447 = vmatpush2.bf16.msra.mxu0 0
      %4448 = vmatprep.subr.bf16.mxu0 0
      %4449 = vmatpush2.bf16.msra.mxu0 0
      %4450 = vmatprep.subr.bf16.mxu0 0
      %4451 = vmatpush2.bf16.msra.mxu0 0
      %4452 = vmatprep.subr.bf16.mxu0 0
      %4453 = vmatpush2.bf16.msra.mxu0 0
      %4454 = vmatprep.subr.bf16.mxu0 0
      %4455 = vmatpush2.bf16.msra.mxu0 0
      %4456 = vmatprep.subr.bf16.mxu0 0
      %4457 = vmatpush2.bf16.msra.mxu0 0
      %4458 = vmatprep.subr.bf16.mxu0 0
      %4459 = vmatpush2.bf16.msra.mxu0 0
      %4460 = vmatprep.mubr.bf16.mxu0 0
      %4461 = vmatmul.mubr.bf16.gmra.mxu0 %v3609
      %v4462 = vpop.f32.mrf.mxu0
      %v4463 = vadd.f32 0.0, %v4462
      %v4464 = vpop.f32.mrf.mxu0
      %v4465 = vpop.f32.mrf.mxu0
      %v4466 = vadd.f32 0.0, %v4465
      %v4467 = vpop.f32.mrf.mxu0
      %4468 = vdwg.mxu0
      %v4469 = vlaneseq
      %v4470 = vshrl.u32 %v4469, 7
      %v4471 = vsub.s32 5, %v4470
      %v4472 = vrot.slane %v4183, %v4471
      %v4473 = vmul.f32 %v4463, %v4472
      %v4474 = vmul.f32 %v4466, %v4472
      %v4475 = vadd.f32 %v4426, %v4473
      %v4476 = vadd.f32 %v4427, %v4474
      %4477 = vmatprep.subr.bf16.mxu0 0
      %4478 = vmatpush1.bf16.msra.mxu0 0
      %4479 = vmatprep.subr.bf16.mxu0 0
      %4480 = vmatpush1.bf16.msra.mxu0 0
      %4481 = vmatprep.subr.bf16.mxu0 0
      %4482 = vmatpush1.bf16.msra.mxu0 0
      %4483 = vmatprep.subr.bf16.mxu0 0
      %4484 = vmatpush1.bf16.msra.mxu0 0
      %4485 = vmatprep.subr.bf16.mxu0 0
      %4486 = vmatpush1.bf16.msra.mxu0 0
      %4487 = vmatprep.subr.bf16.mxu0 0
      %4488 = vmatpush1.bf16.msra.mxu0 0
      %4489 = vmatprep.subr.bf16.mxu0 0
      %4490 = vmatpush1.bf16.msra.mxu0 0
      %4491 = vmatprep.subr.bf16.mxu0 0
      %4492 = vmatpush1.bf16.msra.mxu0 %v4181
      %4493 = vmatprep.subr.bf16.mxu0 0
      %4494 = vmatpush2.bf16.msra.mxu0 0
      %4495 = vmatprep.subr.bf16.mxu0 0
      %4496 = vmatpush2.bf16.msra.mxu0 0
      %4497 = vmatprep.subr.bf16.mxu0 0
      %4498 = vmatpush2.bf16.msra.mxu0 0
      %4499 = vmatprep.subr.bf16.mxu0 0
      %4500 = vmatpush2.bf16.msra.mxu0 0
      %4501 = vmatprep.subr.bf16.mxu0 0
      %4502 = vmatpush2.bf16.msra.mxu0 0
      %4503 = vmatprep.subr.bf16.mxu0 0
      %4504 = vmatpush2.bf16.msra.mxu0 0
      %4505 = vmatprep.subr.bf16.mxu0 0
      %4506 = vmatpush2.bf16.msra.mxu0 0
      %4507 = vmatprep.subr.bf16.mxu0 0
      %4508 = vmatpush2.bf16.msra.mxu0 0
      %4509 = vmatprep.mubr.bf16.mxu0 0
      %4510 = vmatmul.mubr.bf16.gmra.mxu0 %v3669
      %v4511 = vpop.f32.mrf.mxu0
      %v4512 = vadd.f32 0.0, %v4511
      %v4513 = vpop.f32.mrf.mxu0
      %v4514 = vpop.f32.mrf.mxu0
      %v4515 = vadd.f32 0.0, %v4514
      %v4516 = vpop.f32.mrf.mxu0
      %4517 = vdwg.mxu0
      %v4518 = vlaneseq
      %v4519 = vshrl.u32 %v4518, 7
      %v4520 = vsub.s32 6, %v4519
      %v4521 = vrot.slane %v4183, %v4520
      %v4522 = vmul.f32 %v4512, %v4521
      %v4523 = vmul.f32 %v4515, %v4521
      %v4524 = vadd.f32 %v4475, %v4522
      %v4525 = vadd.f32 %v4476, %v4523
      %4526 = vmatprep.subr.bf16.mxu0 0
      %4527 = vmatpush1.bf16.msra.mxu0 0
      %4528 = vmatprep.subr.bf16.mxu0 0
      %4529 = vmatpush1.bf16.msra.mxu0 0
      %4530 = vmatprep.subr.bf16.mxu0 0
      %4531 = vmatpush1.bf16.msra.mxu0 0
      %4532 = vmatprep.subr.bf16.mxu0 0
      %4533 = vmatpush1.bf16.msra.mxu0 0
      %4534 = vmatprep.subr.bf16.mxu0 0
      %4535 = vmatpush1.bf16.msra.mxu0 0
      %4536 = vmatprep.subr.bf16.mxu0 0
      %4537 = vmatpush1.bf16.msra.mxu0 0
      %4538 = vmatprep.subr.bf16.mxu0 0
      %4539 = vmatpush1.bf16.msra.mxu0 0
      %4540 = vmatprep.subr.bf16.mxu0 0
      %4541 = vmatpush1.bf16.msra.mxu0 %v4181
      %4542 = vmatprep.subr.bf16.mxu0 0
      %4543 = vmatpush2.bf16.msra.mxu0 0
      %4544 = vmatprep.subr.bf16.mxu0 0
      %4545 = vmatpush2.bf16.msra.mxu0 0
      %4546 = vmatprep.subr.bf16.mxu0 0
      %4547 = vmatpush2.bf16.msra.mxu0 0
      %4548 = vmatprep.subr.bf16.mxu0 0
      %4549 = vmatpush2.bf16.msra.mxu0 0
      %4550 = vmatprep.subr.bf16.mxu0 0
      %4551 = vmatpush2.bf16.msra.mxu0 0
      %4552 = vmatprep.subr.bf16.mxu0 0
      %4553 = vmatpush2.bf16.msra.mxu0 0
      %4554 = vmatprep.subr.bf16.mxu0 0
      %4555 = vmatpush2.bf16.msra.mxu0 0
      %4556 = vmatprep.subr.bf16.mxu0 0
      %4557 = vmatpush2.bf16.msra.mxu0 0
      %4558 = vmatprep.mubr.bf16.mxu0 0
      %4559 = vmatmul.mubr.bf16.gmra.mxu0 %v3729
      %v4560 = vpop.f32.mrf.mxu0
      %v4561 = vadd.f32 0.0, %v4560
      %v4562 = vpop.f32.mrf.mxu0
      %v4563 = vpop.f32.mrf.mxu0
      %v4564 = vadd.f32 0.0, %v4563
      %v4565 = vpop.f32.mrf.mxu0
      %4566 = vdwg.mxu0
      %v4567 = vlaneseq
      %v4568 = vshrl.u32 %v4567, 7
      %v4569 = vsub.s32 7, %v4568
      %v4570 = vrot.slane %v4183, %v4569
      %v4571 = vmul.f32 %v4561, %v4570
      %v4572 = vmul.f32 %v4564, %v4570
      %v4573 = vadd.f32 %v4524, %v4571
      %v4574 = vadd.f32 %v4525, %v4572
      %4575 = vmatprep.subr.bf16.mxu0 0
      %4576 = vmatpush1.bf16.msra.mxu0 0
      %4577 = vmatprep.subr.bf16.mxu0 0
      %4578 = vmatpush1.bf16.msra.mxu0 0
      %4579 = vmatprep.subr.bf16.mxu0 0
      %4580 = vmatpush1.bf16.msra.mxu0 0
      %4581 = vmatprep.subr.bf16.mxu0 0
      %4582 = vmatpush1.bf16.msra.mxu0 0
      %4583 = vmatprep.subr.bf16.mxu0 0
      %4584 = vmatpush1.bf16.msra.mxu0 0
      %4585 = vmatprep.subr.bf16.mxu0 0
      %4586 = vmatpush1.bf16.msra.mxu0 0
      %4587 = vmatprep.subr.bf16.mxu0 0
      %4588 = vmatpush1.bf16.msra.mxu0 0
      %4589 = vmatprep.subr.bf16.mxu0 0
      %4590 = vmatpush1.bf16.msra.mxu0 %v4181
      %4591 = vmatprep.subr.bf16.mxu0 0
      %4592 = vmatpush2.bf16.msra.mxu0 0
      %4593 = vmatprep.subr.bf16.mxu0 0
      %4594 = vmatpush2.bf16.msra.mxu0 0
      %4595 = vmatprep.subr.bf16.mxu0 0
      %4596 = vmatpush2.bf16.msra.mxu0 0
      %4597 = vmatprep.subr.bf16.mxu0 0
      %4598 = vmatpush2.bf16.msra.mxu0 0
      %4599 = vmatprep.subr.bf16.mxu0 0
      %4600 = vmatpush2.bf16.msra.mxu0 0
      %4601 = vmatprep.subr.bf16.mxu0 0
      %4602 = vmatpush2.bf16.msra.mxu0 0
      %4603 = vmatprep.subr.bf16.mxu0 0
      %4604 = vmatpush2.bf16.msra.mxu0 0
      %4605 = vmatprep.subr.bf16.mxu0 0
      %4606 = vmatpush2.bf16.msra.mxu0 0
      %4607 = vmatprep.mubr.bf16.mxu0 0
      %4608 = vmatmul.mubr.bf16.gmra.mxu0 %v3789
      %v4609 = vpop.f32.mrf.mxu0
      %v4610 = vadd.f32 0.0, %v4609
      %v4611 = vpop.f32.mrf.mxu0
      %v4612 = vpop.f32.mrf.mxu0
      %v4613 = vadd.f32 0.0, %v4612
      %v4614 = vpop.f32.mrf.mxu0
      %4615 = vdwg.mxu0
      %v4616 = vlaneseq
      %v4617 = vshrl.u32 %v4616, 7
      %v4618 = vsub.s32 0, %v4617
      %v4619 = vrot.slane %v4184, %v4618
      %v4620 = vmul.f32 %v4610, %v4619
      %v4621 = vmul.f32 %v4613, %v4619
      %v4622 = vadd.f32 %v4573, %v4620
      %v4623 = vadd.f32 %v4574, %v4621
      %v4624 = vld [vmem:[%s3 + $0xa] sm:$0x1]
      %v4625 = vlaneseq
      %v4626 = vshrl.u32 %v4625, 7
      %v4627 = vsub.s32 0, %v4626
      %v4628 = vrot.slane %v4624, %v4627
      %v4629 = vadd.f32 %v4622, %v4628
      %v4630 = vadd.f32 %v4623, %v4628
      %v4631 = vpack.c.bf16 %v4630, %v4629
      %s4632 = scalar_lea.vmem %s1, 448
      %v4633 = vld [vmem:[%s4632] sm:$0xf]
      %v4634 = vld [vmem:[%s4632 + $0x4] sm:$0xf]
      %v4635 = vld [vmem:[%s4632 + $0x8] sm:$0xf]
      %v4636 = vld [vmem:[%s4632 + $0xc] sm:$0xf]
      %v4637 = vld [vmem:[%s4632 + $0x10] sm:$0xf]
      %v4638 = vld [vmem:[%s4632 + $0x14] sm:$0xf]
      %v4639 = vld [vmem:[%s4632 + $0x18] sm:$0xf]
      %v4640 = vld [vmem:[%s4632 + $0x1c] sm:$0xf]
      %v4641 = vld [vmem:[%s4632 + $0x20] sm:$0xf]
      %v4642 = vld [vmem:[%s4632 + $0x24] sm:$0xf]
      %v4643 = vld [vmem:[%s4632 + $0x28] sm:$0xf]
      %v4644 = vld [vmem:[%s4632 + $0x2c] sm:$0xf]
      %v4645 = vld [vmem:[%s4632 + $0x30] sm:$0xf]
      %v4646 = vld [vmem:[%s4632 + $0x34] sm:$0xf]
      %v4647 = vld [vmem:[%s4632 + $0x38] sm:$0xf]
      %v4648 = vld [vmem:[%s4632 + $0x3c] sm:$0xf]
      %v4649 = vld [vmem:[%s3 + $0xb] sm:$0x1]
      %v4650 = vlaneseq
      %v4651 = vshrl.u32 %v4650, 7
      %v4652 = vsub.s32 0, %v4651
      %v4653 = vrot.slane %v4649, %v4652
      %v4670 = vunpack.c.l.b16 %v4633
      %v4671 = vunpack.c.l.b16 %v4634
      %v4672 = vunpack.c.l.b16 %v4635
      %v4673 = vunpack.c.l.b16 %v4636
      %v4674 = vunpack.c.l.b16 %v4637
      %v4675 = vunpack.c.l.b16 %v4638
      %v4676 = vunpack.c.l.b16 %v4639
      %v4677 = vunpack.c.l.b16 %v4640
      %v4678 = vunpack.c.l.b16 %v4641
      %v4679 = vunpack.c.l.b16 %v4642
      %v4680 = vunpack.c.l.b16 %v4643
      %v4681 = vunpack.c.l.b16 %v4644
      %v4682 = vunpack.c.l.b16 %v4645
      %v4683 = vunpack.c.l.b16 %v4646
      %v4684 = vunpack.c.l.b16 %v4647
      %v4685 = vunpack.c.l.b16 %v4648
      %v4686 = vpack.c.b16 %v4671, %v4670
      %v4687 = vpack.c.b16 %v4673, %v4672
      %v4688 = vpack.c.b16 %v4675, %v4674
      %v4689 = vpack.c.b16 %v4677, %v4676
      %v4690 = vpack.c.b16 %v4679, %v4678
      %v4691 = vpack.c.b16 %v4681, %v4680
      %v4692 = vpack.c.b16 %v4683, %v4682
      %v4693 = vpack.c.b16 %v4685, %v4684
      %4702 = vmatprep.subr.bf16.mxu0 0
      %4703 = vmatpush1.bf16.msra.mxu0 %v4693
      %4704 = vmatprep.subr.bf16.mxu0 0
      %4705 = vmatpush1.bf16.msra.mxu0 %v4692
      %4706 = vmatprep.subr.bf16.mxu0 0
      %4707 = vmatpush1.bf16.msra.mxu0 %v4691
      %4708 = vmatprep.subr.bf16.mxu0 0
      %4709 = vmatpush1.bf16.msra.mxu0 %v4690
      %4710 = vmatprep.subr.bf16.mxu0 0
      %4711 = vmatpush1.bf16.msra.mxu0 %v4689
      %4712 = vmatprep.subr.bf16.mxu0 0
      %4713 = vmatpush1.bf16.msra.mxu0 %v4688
      %4714 = vmatprep.subr.bf16.mxu0 0
      %4715 = vmatpush1.bf16.msra.mxu0 %v4687
      %4716 = vmatprep.subr.bf16.mxu0 0
      %4717 = vmatpush1.bf16.msra.mxu0 %v4686
      %4718 = vmatprep.subr.bf16.mxu0 0
      %4719 = vmatpush2.bf16.msra.mxu0 0
      %4720 = vmatprep.subr.bf16.mxu0 0
      %4721 = vmatpush2.bf16.msra.mxu0 0
      %4722 = vmatprep.subr.bf16.mxu0 0
      %4723 = vmatpush2.bf16.msra.mxu0 0
      %4724 = vmatprep.subr.bf16.mxu0 0
      %4725 = vmatpush2.bf16.msra.mxu0 0
      %4726 = vmatprep.subr.bf16.mxu0 0
      %4727 = vmatpush2.bf16.msra.mxu0 0
      %4728 = vmatprep.subr.bf16.mxu0 0
      %4729 = vmatpush2.bf16.msra.mxu0 0
      %4730 = vmatprep.subr.bf16.mxu0 0
      %4731 = vmatpush2.bf16.msra.mxu0 0
      %4732 = vmatprep.subr.bf16.mxu0 0
      %4733 = vmatpush2.bf16.msra.mxu0 0
      %4734 = vmatprep.mubr.bf16.mxu0 0
      %4735 = vmatmul.mubr.bf16.gmra.mxu0 %v4631
      %v4736 = vpop.f32.mrf.mxu0
      %v4737 = vadd.f32 %v4653, %v4736
      %v4738 = vpop.f32.mrf.mxu0
      %v4739 = vpop.f32.mrf.mxu0
      %v4740 = vadd.f32 %v4653, %v4739
      %v4741 = vpop.f32.mrf.mxu0
      %4742 = vdwg.mxu0
      %v4743 = vmax.f32 %v4737, 0.0
      %v4744 = vmax.f32 %v4740, 0.0
      %4745 = vmatprep.subr.bf16.mxu0 0
      %4746 = vmatpush1.bf16.msra.mxu0 %v4017
      %4747 = vmatprep.subr.bf16.mxu0 0
      %4748 = vmatpush1.bf16.msra.mxu0 %v4016
      %4749 = vmatprep.subr.bf16.mxu0 0
      %4750 = vmatpush1.bf16.msra.mxu0 %v4015
      %4751 = vmatprep.subr.bf16.mxu0 0
      %4752 = vmatpush1.bf16.msra.mxu0 %v4014
      %4753 = vmatprep.subr.bf16.mxu0 0
      %4754 = vmatpush1.bf16.msra.mxu0 %v4013
      %4755 = vmatprep.subr.bf16.mxu0 0
      %4756 = vmatpush1.bf16.msra.mxu0 %v4012
      %4757 = vmatprep.subr.bf16.mxu0 0
      %4758 = vmatpush1.bf16.msra.mxu0 %v4011
      %4759 = vmatprep.subr.bf16.mxu0 0
      %4760 = vmatpush1.bf16.msra.mxu0 %v4010
      %4761 = vmatprep.subr.bf16.mxu0 0
      %4762 = vmatpush2.bf16.msra.mxu0 0
      %4763 = vmatprep.subr.bf16.mxu0 0
      %4764 = vmatpush2.bf16.msra.mxu0 0
      %4765 = vmatprep.subr.bf16.mxu0 0
      %4766 = vmatpush2.bf16.msra.mxu0 0
      %4767 = vmatprep.subr.bf16.mxu0 0
      %4768 = vmatpush2.bf16.msra.mxu0 0
      %4769 = vmatprep.subr.bf16.mxu0 0
      %4770 = vmatpush2.bf16.msra.mxu0 0
      %4771 = vmatprep.subr.bf16.mxu0 0
      %4772 = vmatpush2.bf16.msra.mxu0 0
      %4773 = vmatprep.subr.bf16.mxu0 0
      %4774 = vmatpush2.bf16.msra.mxu0 0
      %4775 = vmatprep.subr.bf16.mxu0 0
      %4776 = vmatpush2.bf16.msra.mxu0 0
      %4777 = vmatprep.mubr.bf16.mxu0 0
      %4778 = vmatmul.mubr.bf16.gmra.mxu0 %v4067
      %v4779 = vpop.f32.mrf.mxu0
      %v4780 = vadd.f32 %v4743, %v4779
      %v4781 = vpop.f32.mrf.mxu0
      %v4782 = vpop.f32.mrf.mxu0
      %v4783 = vadd.f32 %v4744, %v4782
      %v4784 = vpop.f32.mrf.mxu0
      %4785 = vdwg.mxu0
      %v4786 = vpack.c.bf16 %v4783, %v4780
      %s4787 = scalar_lea.vmem %s1, 512
      %v4788 = vld [vmem:[%s4787] sm:$0xf]
      %v4789 = vld [vmem:[%s4787 + $0x4] sm:$0xf]
      %v4790 = vld [vmem:[%s4787 + $0x8] sm:$0xf]
      %v4791 = vld [vmem:[%s4787 + $0xc] sm:$0xf]
      %v4792 = vld [vmem:[%s4787 + $0x10] sm:$0xf]
      %v4793 = vld [vmem:[%s4787 + $0x14] sm:$0xf]
      %v4794 = vld [vmem:[%s4787 + $0x18] sm:$0xf]
      %v4795 = vld [vmem:[%s4787 + $0x1c] sm:$0xf]
      %v4796 = vld [vmem:[%s4787 + $0x20] sm:$0xf]
      %v4797 = vld [vmem:[%s4787 + $0x24] sm:$0xf]
      %v4798 = vld [vmem:[%s4787 + $0x28] sm:$0xf]
      %v4799 = vld [vmem:[%s4787 + $0x2c] sm:$0xf]
      %v4800 = vld [vmem:[%s4787 + $0x30] sm:$0xf]
      %v4801 = vld [vmem:[%s4787 + $0x34] sm:$0xf]
      %v4802 = vld [vmem:[%s4787 + $0x38] sm:$0xf]
      %v4803 = vld [vmem:[%s4787 + $0x3c] sm:$0xf]
      %v4804 = vld [vmem:[%s3 + $0xc] sm:$0x1]
      %v4805 = vlaneseq
      %v4806 = vshrl.u32 %v4805, 7
      %v4807 = vsub.s32 0, %v4806
      %v4808 = vrot.slane %v4804, %v4807
      %v4825 = vunpack.c.l.b16 %v4788
      %v4826 = vunpack.c.l.b16 %v4789
      %v4827 = vunpack.c.l.b16 %v4790
      %v4828 = vunpack.c.l.b16 %v4791
      %v4829 = vunpack.c.l.b16 %v4792
      %v4830 = vunpack.c.l.b16 %v4793
      %v4831 = vunpack.c.l.b16 %v4794
      %v4832 = vunpack.c.l.b16 %v4795
      %v4833 = vunpack.c.l.b16 %v4796
      %v4834 = vunpack.c.l.b16 %v4797
      %v4835 = vunpack.c.l.b16 %v4798
      %v4836 = vunpack.c.l.b16 %v4799
      %v4837 = vunpack.c.l.b16 %v4800
      %v4838 = vunpack.c.l.b16 %v4801
      %v4839 = vunpack.c.l.b16 %v4802
      %v4840 = vunpack.c.l.b16 %v4803
      %v4841 = vpack.c.b16 %v4826, %v4825
      %v4842 = vpack.c.b16 %v4828, %v4827
      %v4843 = vpack.c.b16 %v4830, %v4829
      %v4844 = vpack.c.b16 %v4832, %v4831
      %v4845 = vpack.c.b16 %v4834, %v4833
      %v4846 = vpack.c.b16 %v4836, %v4835
      %v4847 = vpack.c.b16 %v4838, %v4837
      %v4848 = vpack.c.b16 %v4840, %v4839
      %4857 = vmatprep.subr.bf16.mxu0 0
      %4858 = vmatpush1.bf16.msra.mxu0 %v4848
      %4859 = vmatprep.subr.bf16.mxu0 0
      %4860 = vmatpush1.bf16.msra.mxu0 %v4847
      %4861 = vmatprep.subr.bf16.mxu0 0
      %4862 = vmatpush1.bf16.msra.mxu0 %v4846
      %4863 = vmatprep.subr.bf16.mxu0 0
      %4864 = vmatpush1.bf16.msra.mxu0 %v4845
      %4865 = vmatprep.subr.bf16.mxu0 0
      %4866 = vmatpush1.bf16.msra.mxu0 %v4844
      %4867 = vmatprep.subr.bf16.mxu0 0
      %4868 = vmatpush1.bf16.msra.mxu0 %v4843
      %4869 = vmatprep.subr.bf16.mxu0 0
      %4870 = vmatpush1.bf16.msra.mxu0 %v4842
      %4871 = vmatprep.subr.bf16.mxu0 0
      %4872 = vmatpush1.bf16.msra.mxu0 %v4841
      %4873 = vmatprep.subr.bf16.mxu0 0
      %4874 = vmatpush2.bf16.msra.mxu0 0
      %4875 = vmatprep.subr.bf16.mxu0 0
      %4876 = vmatpush2.bf16.msra.mxu0 0
      %4877 = vmatprep.subr.bf16.mxu0 0
      %4878 = vmatpush2.bf16.msra.mxu0 0
      %4879 = vmatprep.subr.bf16.mxu0 0
      %4880 = vmatpush2.bf16.msra.mxu0 0
      %4881 = vmatprep.subr.bf16.mxu0 0
      %4882 = vmatpush2.bf16.msra.mxu0 0
      %4883 = vmatprep.subr.bf16.mxu0 0
      %4884 = vmatpush2.bf16.msra.mxu0 0
      %4885 = vmatprep.subr.bf16.mxu0 0
      %4886 = vmatpush2.bf16.msra.mxu0 0
      %4887 = vmatprep.subr.bf16.mxu0 0
      %4888 = vmatpush2.bf16.msra.mxu0 0
      %4889 = vmatprep.mubr.bf16.mxu0 0
      %4890 = vmatmul.mubr.bf16.gmra.mxu0 %v4786
      %v4891 = vpop.f32.mrf.mxu0
      %v4892 = vadd.f32 %v4808, %v4891
      %v4893 = vpop.f32.mrf.mxu0
      %v4894 = vpop.f32.mrf.mxu0
      %v4895 = vadd.f32 %v4808, %v4894
      %v4896 = vpop.f32.mrf.mxu0
      %4897 = vdwg.mxu0
      %v4898 = vmax.f32 %v4892, 0.0
      %v4899 = vmax.f32 %v4895, 0.0
      %v4900 = vpack.c.bf16 %v4899, %v4898
      %s4901 = scalar_lea.vmem %s2, 64
      %v4902 = vld [vmem:[%s4901] sm:$0xff]
      %v4903 = vld [vmem:[%s4901 + $0x8] sm:$0x1]
      %4904 = vmatprep.subr.bf16.mxu0 0
      %4905 = vmatpush1.bf16.msra.mxu0 0
      %4906 = vmatprep.subr.bf16.mxu0 0
      %4907 = vmatpush1.bf16.msra.mxu0 0
      %4908 = vmatprep.subr.bf16.mxu0 0
      %4909 = vmatpush1.bf16.msra.mxu0 0
      %4910 = vmatprep.subr.bf16.mxu0 0
      %4911 = vmatpush1.bf16.msra.mxu0 0
      %4912 = vmatprep.subr.bf16.mxu0 0
      %4913 = vmatpush1.bf16.msra.mxu0 0
      %4914 = vmatprep.subr.bf16.mxu0 0
      %4915 = vmatpush1.bf16.msra.mxu0 0
      %4916 = vmatprep.subr.bf16.mxu0 0
      %4917 = vmatpush1.bf16.msra.mxu0 0
      %4918 = vmatprep.subr.bf16.mxu0 0
      %4919 = vmatpush1.bf16.msra.mxu0 %v4900
      %4920 = vmatprep.subr.bf16.mxu0 0
      %4921 = vmatpush2.bf16.msra.mxu0 0
      %4922 = vmatprep.subr.bf16.mxu0 0
      %4923 = vmatpush2.bf16.msra.mxu0 0
      %4924 = vmatprep.subr.bf16.mxu0 0
      %4925 = vmatpush2.bf16.msra.mxu0 0
      %4926 = vmatprep.subr.bf16.mxu0 0
      %4927 = vmatpush2.bf16.msra.mxu0 0
      %4928 = vmatprep.subr.bf16.mxu0 0
      %4929 = vmatpush2.bf16.msra.mxu0 0
      %4930 = vmatprep.subr.bf16.mxu0 0
      %4931 = vmatpush2.bf16.msra.mxu0 0
      %4932 = vmatprep.subr.bf16.mxu0 0
      %4933 = vmatpush2.bf16.msra.mxu0 0
      %4934 = vmatprep.subr.bf16.mxu0 0
      %4935 = vmatpush2.bf16.msra.mxu0 0
      %4936 = vmatprep.mubr.bf16.mxu0 0
      %4937 = vmatmul.mubr.bf16.gmra.mxu0 %v3311
      %v4938 = vpop.f32.mrf.mxu0
      %v4939 = vadd.f32 0.0, %v4938
      %v4940 = vpop.f32.mrf.mxu0
      %v4941 = vpop.f32.mrf.mxu0
      %v4942 = vadd.f32 0.0, %v4941
      %v4943 = vpop.f32.mrf.mxu0
      %4944 = vdwg.mxu0
      %v4945 = vlaneseq
      %v4946 = vshrl.u32 %v4945, 7
      %v4947 = vsub.s32 0, %v4946
      %v4948 = vrot.slane %v4902, %v4947
      %v4949 = vmul.f32 %v4939, %v4948
      %v4950 = vmul.f32 %v4942, %v4948
      %4951 = vmatprep.subr.bf16.mxu0 0
      %4952 = vmatpush1.bf16.msra.mxu0 0
      %4953 = vmatprep.subr.bf16.mxu0 0
      %4954 = vmatpush1.bf16.msra.mxu0 0
      %4955 = vmatprep.subr.bf16.mxu0 0
      %4956 = vmatpush1.bf16.msra.mxu0 0
      %4957 = vmatprep.subr.bf16.mxu0 0
      %4958 = vmatpush1.bf16.msra.mxu0 0
      %4959 = vmatprep.subr.bf16.mxu0 0
      %4960 = vmatpush1.bf16.msra.mxu0 0
      %4961 = vmatprep.subr.bf16.mxu0 0
      %4962 = vmatpush1.bf16.msra.mxu0 0
      %4963 = vmatprep.subr.bf16.mxu0 0
      %4964 = vmatpush1.bf16.msra.mxu0 0
      %4965 = vmatprep.subr.bf16.mxu0 0
      %4966 = vmatpush1.bf16.msra.mxu0 %v4900
      %4967 = vmatprep.subr.bf16.mxu0 0
      %4968 = vmatpush2.bf16.msra.mxu0 0
      %4969 = vmatprep.subr.bf16.mxu0 0
      %4970 = vmatpush2.bf16.msra.mxu0 0
      %4971 = vmatprep.subr.bf16.mxu0 0
      %4972 = vmatpush2.bf16.msra.mxu0 0
      %4973 = vmatprep.subr.bf16.mxu0 0
      %4974 = vmatpush2.bf16.msra.mxu0 0
      %4975 = vmatprep.subr.bf16.mxu0 0
      %4976 = vmatpush2.bf16.msra.mxu0 0
      %4977 = vmatprep.subr.bf16.mxu0 0
      %4978 = vmatpush2.bf16.msra.mxu0 0
      %4979 = vmatprep.subr.bf16.mxu0 0
      %4980 = vmatpush2.bf16.msra.mxu0 0
      %4981 = vmatprep.subr.bf16.mxu0 0
      %4982 = vmatpush2.bf16.msra.mxu0 0
      %4983 = vmatprep.mubr.bf16.mxu0 0
      %4984 = vmatmul.mubr.bf16.gmra.mxu0 %v3369
      %v4985 = vpop.f32.mrf.mxu0
      %v4986 = vadd.f32 0.0, %v4985
      %v4987 = vpop.f32.mrf.mxu0
      %v4988 = vpop.f32.mrf.mxu0
      %v4989 = vadd.f32 0.0, %v4988
      %v4990 = vpop.f32.mrf.mxu0
      %4991 = vdwg.mxu0
      %v4992 = vlaneseq
      %v4993 = vshrl.u32 %v4992, 7
      %v4994 = vsub.s32 1, %v4993
      %v4995 = vrot.slane %v4902, %v4994
      %v4996 = vmul.f32 %v4986, %v4995
      %v4997 = vmul.f32 %v4989, %v4995
      %v4998 = vadd.f32 %v4949, %v4996
      %v4999 = vadd.f32 %v4950, %v4997
      %5000 = vmatprep.subr.bf16.mxu0 0
      %5001 = vmatpush1.bf16.msra.mxu0 0
      %5002 = vmatprep.subr.bf16.mxu0 0
      %5003 = vmatpush1.bf16.msra.mxu0 0
      %5004 = vmatprep.subr.bf16.mxu0 0
      %5005 = vmatpush1.bf16.msra.mxu0 0
      %5006 = vmatprep.subr.bf16.mxu0 0
      %5007 = vmatpush1.bf16.msra.mxu0 0
      %5008 = vmatprep.subr.bf16.mxu0 0
      %5009 = vmatpush1.bf16.msra.mxu0 0
      %5010 = vmatprep.subr.bf16.mxu0 0
      %5011 = vmatpush1.bf16.msra.mxu0 0
      %5012 = vmatprep.subr.bf16.mxu0 0
      %5013 = vmatpush1.bf16.msra.mxu0 0
      %5014 = vmatprep.subr.bf16.mxu0 0
      %5015 = vmatpush1.bf16.msra.mxu0 %v4900
      %5016 = vmatprep.subr.bf16.mxu0 0
      %5017 = vmatpush2.bf16.msra.mxu0 0
      %5018 = vmatprep.subr.bf16.mxu0 0
      %5019 = vmatpush2.bf16.msra.mxu0 0
      %5020 = vmatprep.subr.bf16.mxu0 0
      %5021 = vmatpush2.bf16.msra.mxu0 0
      %5022 = vmatprep.subr.bf16.mxu0 0
      %5023 = vmatpush2.bf16.msra.mxu0 0
      %5024 = vmatprep.subr.bf16.mxu0 0
      %5025 = vmatpush2.bf16.msra.mxu0 0
      %5026 = vmatprep.subr.bf16.mxu0 0
      %5027 = vmatpush2.bf16.msra.mxu0 0
      %5028 = vmatprep.subr.bf16.mxu0 0
      %5029 = vmatpush2.bf16.msra.mxu0 0
      %5030 = vmatprep.subr.bf16.mxu0 0
      %5031 = vmatpush2.bf16.msra.mxu0 0
      %5032 = vmatprep.mubr.bf16.mxu0 0
      %5033 = vmatmul.mubr.bf16.gmra.mxu0 %v3429
      %v5034 = vpop.f32.mrf.mxu0
      %v5035 = vadd.f32 0.0, %v5034
      %v5036 = vpop.f32.mrf.mxu0
      %v5037 = vpop.f32.mrf.mxu0
      %v5038 = vadd.f32 0.0, %v5037
      %v5039 = vpop.f32.mrf.mxu0
      %5040 = vdwg.mxu0
      %v5041 = vlaneseq
      %v5042 = vshrl.u32 %v5041, 7
      %v5043 = vsub.s32 2, %v5042
      %v5044 = vrot.slane %v4902, %v5043
      %v5045 = vmul.f32 %v5035, %v5044
      %v5046 = vmul.f32 %v5038, %v5044
      %v5047 = vadd.f32 %v4998, %v5045
      %v5048 = vadd.f32 %v4999, %v5046
      %5049 = vmatprep.subr.bf16.mxu0 0
      %5050 = vmatpush1.bf16.msra.mxu0 0
      %5051 = vmatprep.subr.bf16.mxu0 0
      %5052 = vmatpush1.bf16.msra.mxu0 0
      %5053 = vmatprep.subr.bf16.mxu0 0
      %5054 = vmatpush1.bf16.msra.mxu0 0
      %5055 = vmatprep.subr.bf16.mxu0 0
      %5056 = vmatpush1.bf16.msra.mxu0 0
      %5057 = vmatprep.subr.bf16.mxu0 0
      %5058 = vmatpush1.bf16.msra.mxu0 0
      %5059 = vmatprep.subr.bf16.mxu0 0
      %5060 = vmatpush1.bf16.msra.mxu0 0
      %5061 = vmatprep.subr.bf16.mxu0 0
      %5062 = vmatpush1.bf16.msra.mxu0 0
      %5063 = vmatprep.subr.bf16.mxu0 0
      %5064 = vmatpush1.bf16.msra.mxu0 %v4900
      %5065 = vmatprep.subr.bf16.mxu0 0
      %5066 = vmatpush2.bf16.msra.mxu0 0
      %5067 = vmatprep.subr.bf16.mxu0 0
      %5068 = vmatpush2.bf16.msra.mxu0 0
      %5069 = vmatprep.subr.bf16.mxu0 0
      %5070 = vmatpush2.bf16.msra.mxu0 0
      %5071 = vmatprep.subr.bf16.mxu0 0
      %5072 = vmatpush2.bf16.msra.mxu0 0
      %5073 = vmatprep.subr.bf16.mxu0 0
      %5074 = vmatpush2.bf16.msra.mxu0 0
      %5075 = vmatprep.subr.bf16.mxu0 0
      %5076 = vmatpush2.bf16.msra.mxu0 0
      %5077 = vmatprep.subr.bf16.mxu0 0
      %5078 = vmatpush2.bf16.msra.mxu0 0
      %5079 = vmatprep.subr.bf16.mxu0 0
      %5080 = vmatpush2.bf16.msra.mxu0 0
      %5081 = vmatprep.mubr.bf16.mxu0 0
      %5082 = vmatmul.mubr.bf16.gmra.mxu0 %v3489
      %v5083 = vpop.f32.mrf.mxu0
      %v5084 = vadd.f32 0.0, %v5083
      %v5085 = vpop.f32.mrf.mxu0
      %v5086 = vpop.f32.mrf.mxu0
      %v5087 = vadd.f32 0.0, %v5086
      %v5088 = vpop.f32.mrf.mxu0
      %5089 = vdwg.mxu0
      %v5090 = vlaneseq
      %v5091 = vshrl.u32 %v5090, 7
      %v5092 = vsub.s32 3, %v5091
      %v5093 = vrot.slane %v4902, %v5092
      %v5094 = vmul.f32 %v5084, %v5093
      %v5095 = vmul.f32 %v5087, %v5093
      %v5096 = vadd.f32 %v5047, %v5094
      %v5097 = vadd.f32 %v5048, %v5095
      %5098 = vmatprep.subr.bf16.mxu0 0
      %5099 = vmatpush1.bf16.msra.mxu0 0
      %5100 = vmatprep.subr.bf16.mxu0 0
      %5101 = vmatpush1.bf16.msra.mxu0 0
      %5102 = vmatprep.subr.bf16.mxu0 0
      %5103 = vmatpush1.bf16.msra.mxu0 0
      %5104 = vmatprep.subr.bf16.mxu0 0
      %5105 = vmatpush1.bf16.msra.mxu0 0
      %5106 = vmatprep.subr.bf16.mxu0 0
      %5107 = vmatpush1.bf16.msra.mxu0 0
      %5108 = vmatprep.subr.bf16.mxu0 0
      %5109 = vmatpush1.bf16.msra.mxu0 0
      %5110 = vmatprep.subr.bf16.mxu0 0
      %5111 = vmatpush1.bf16.msra.mxu0 0
      %5112 = vmatprep.subr.bf16.mxu0 0
      %5113 = vmatpush1.bf16.msra.mxu0 %v4900
      %5114 = vmatprep.subr.bf16.mxu0 0
      %5115 = vmatpush2.bf16.msra.mxu0 0
      %5116 = vmatprep.subr.bf16.mxu0 0
      %5117 = vmatpush2.bf16.msra.mxu0 0
      %5118 = vmatprep.subr.bf16.mxu0 0
      %5119 = vmatpush2.bf16.msra.mxu0 0
      %5120 = vmatprep.subr.bf16.mxu0 0
      %5121 = vmatpush2.bf16.msra.mxu0 0
      %5122 = vmatprep.subr.bf16.mxu0 0
      %5123 = vmatpush2.bf16.msra.mxu0 0
      %5124 = vmatprep.subr.bf16.mxu0 0
      %5125 = vmatpush2.bf16.msra.mxu0 0
      %5126 = vmatprep.subr.bf16.mxu0 0
      %5127 = vmatpush2.bf16.msra.mxu0 0
      %5128 = vmatprep.subr.bf16.mxu0 0
      %5129 = vmatpush2.bf16.msra.mxu0 0
      %5130 = vmatprep.mubr.bf16.mxu0 0
      %5131 = vmatmul.mubr.bf16.gmra.mxu0 %v3549
      %v5132 = vpop.f32.mrf.mxu0
      %v5133 = vadd.f32 0.0, %v5132
      %v5134 = vpop.f32.mrf.mxu0
      %v5135 = vpop.f32.mrf.mxu0
      %v5136 = vadd.f32 0.0, %v5135
      %v5137 = vpop.f32.mrf.mxu0
      %5138 = vdwg.mxu0
      %v5139 = vlaneseq
      %v5140 = vshrl.u32 %v5139, 7
      %v5141 = vsub.s32 4, %v5140
      %v5142 = vrot.slane %v4902, %v5141
      %v5143 = vmul.f32 %v5133, %v5142
      %v5144 = vmul.f32 %v5136, %v5142
      %v5145 = vadd.f32 %v5096, %v5143
      %v5146 = vadd.f32 %v5097, %v5144
      %5147 = vmatprep.subr.bf16.mxu0 0
      %5148 = vmatpush1.bf16.msra.mxu0 0
      %5149 = vmatprep.subr.bf16.mxu0 0
      %5150 = vmatpush1.bf16.msra.mxu0 0
      %5151 = vmatprep.subr.bf16.mxu0 0
      %5152 = vmatpush1.bf16.msra.mxu0 0
      %5153 = vmatprep.subr.bf16.mxu0 0
      %5154 = vmatpush1.bf16.msra.mxu0 0
      %5155 = vmatprep.subr.bf16.mxu0 0
      %5156 = vmatpush1.bf16.msra.mxu0 0
      %5157 = vmatprep.subr.bf16.mxu0 0
      %5158 = vmatpush1.bf16.msra.mxu0 0
      %5159 = vmatprep.subr.bf16.mxu0 0
      %5160 = vmatpush1.bf16.msra.mxu0 0
      %5161 = vmatprep.subr.bf16.mxu0 0
      %5162 = vmatpush1.bf16.msra.mxu0 %v4900
      %5163 = vmatprep.subr.bf16.mxu0 0
      %5164 = vmatpush2.bf16.msra.mxu0 0
      %5165 = vmatprep.subr.bf16.mxu0 0
      %5166 = vmatpush2.bf16.msra.mxu0 0
      %5167 = vmatprep.subr.bf16.mxu0 0
      %5168 = vmatpush2.bf16.msra.mxu0 0
      %5169 = vmatprep.subr.bf16.mxu0 0
      %5170 = vmatpush2.bf16.msra.mxu0 0
      %5171 = vmatprep.subr.bf16.mxu0 0
      %5172 = vmatpush2.bf16.msra.mxu0 0
      %5173 = vmatprep.subr.bf16.mxu0 0
      %5174 = vmatpush2.bf16.msra.mxu0 0
      %5175 = vmatprep.subr.bf16.mxu0 0
      %5176 = vmatpush2.bf16.msra.mxu0 0
      %5177 = vmatprep.subr.bf16.mxu0 0
      %5178 = vmatpush2.bf16.msra.mxu0 0
      %5179 = vmatprep.mubr.bf16.mxu0 0
      %5180 = vmatmul.mubr.bf16.gmra.mxu0 %v3609
      %v5181 = vpop.f32.mrf.mxu0
      %v5182 = vadd.f32 0.0, %v5181
      %v5183 = vpop.f32.mrf.mxu0
      %v5184 = vpop.f32.mrf.mxu0
      %v5185 = vadd.f32 0.0, %v5184
      %v5186 = vpop.f32.mrf.mxu0
      %5187 = vdwg.mxu0
      %v5188 = vlaneseq
      %v5189 = vshrl.u32 %v5188, 7
      %v5190 = vsub.s32 5, %v5189
      %v5191 = vrot.slane %v4902, %v5190
      %v5192 = vmul.f32 %v5182, %v5191
      %v5193 = vmul.f32 %v5185, %v5191
      %v5194 = vadd.f32 %v5145, %v5192
      %v5195 = vadd.f32 %v5146, %v5193
      %5196 = vmatprep.subr.bf16.mxu0 0
      %5197 = vmatpush1.bf16.msra.mxu0 0
      %5198 = vmatprep.subr.bf16.mxu0 0
      %5199 = vmatpush1.bf16.msra.mxu0 0
      %5200 = vmatprep.subr.bf16.mxu0 0
      %5201 = vmatpush1.bf16.msra.mxu0 0
      %5202 = vmatprep.subr.bf16.mxu0 0
      %5203 = vmatpush1.bf16.msra.mxu0 0
      %5204 = vmatprep.subr.bf16.mxu0 0
      %5205 = vmatpush1.bf16.msra.mxu0 0
      %5206 = vmatprep.subr.bf16.mxu0 0
      %5207 = vmatpush1.bf16.msra.mxu0 0
      %5208 = vmatprep.subr.bf16.mxu0 0
      %5209 = vmatpush1.bf16.msra.mxu0 0
      %5210 = vmatprep.subr.bf16.mxu0 0
      %5211 = vmatpush1.bf16.msra.mxu0 %v4900
      %5212 = vmatprep.subr.bf16.mxu0 0
      %5213 = vmatpush2.bf16.msra.mxu0 0
      %5214 = vmatprep.subr.bf16.mxu0 0
      %5215 = vmatpush2.bf16.msra.mxu0 0
      %5216 = vmatprep.subr.bf16.mxu0 0
      %5217 = vmatpush2.bf16.msra.mxu0 0
      %5218 = vmatprep.subr.bf16.mxu0 0
      %5219 = vmatpush2.bf16.msra.mxu0 0
      %5220 = vmatprep.subr.bf16.mxu0 0
      %5221 = vmatpush2.bf16.msra.mxu0 0
      %5222 = vmatprep.subr.bf16.mxu0 0
      %5223 = vmatpush2.bf16.msra.mxu0 0
      %5224 = vmatprep.subr.bf16.mxu0 0
      %5225 = vmatpush2.bf16.msra.mxu0 0
      %5226 = vmatprep.subr.bf16.mxu0 0
      %5227 = vmatpush2.bf16.msra.mxu0 0
      %5228 = vmatprep.mubr.bf16.mxu0 0
      %5229 = vmatmul.mubr.bf16.gmra.mxu0 %v3669
      %v5230 = vpop.f32.mrf.mxu0
      %v5231 = vadd.f32 0.0, %v5230
      %v5232 = vpop.f32.mrf.mxu0
      %v5233 = vpop.f32.mrf.mxu0
      %v5234 = vadd.f32 0.0, %v5233
      %v5235 = vpop.f32.mrf.mxu0
      %5236 = vdwg.mxu0
      %v5237 = vlaneseq
      %v5238 = vshrl.u32 %v5237, 7
      %v5239 = vsub.s32 6, %v5238
      %v5240 = vrot.slane %v4902, %v5239
      %v5241 = vmul.f32 %v5231, %v5240
      %v5242 = vmul.f32 %v5234, %v5240
      %v5243 = vadd.f32 %v5194, %v5241
      %v5244 = vadd.f32 %v5195, %v5242
      %5245 = vmatprep.subr.bf16.mxu0 0
      %5246 = vmatpush1.bf16.msra.mxu0 0
      %5247 = vmatprep.subr.bf16.mxu0 0
      %5248 = vmatpush1.bf16.msra.mxu0 0
      %5249 = vmatprep.subr.bf16.mxu0 0
      %5250 = vmatpush1.bf16.msra.mxu0 0
      %5251 = vmatprep.subr.bf16.mxu0 0
      %5252 = vmatpush1.bf16.msra.mxu0 0
      %5253 = vmatprep.subr.bf16.mxu0 0
      %5254 = vmatpush1.bf16.msra.mxu0 0
      %5255 = vmatprep.subr.bf16.mxu0 0
      %5256 = vmatpush1.bf16.msra.mxu0 0
      %5257 = vmatprep.subr.bf16.mxu0 0
      %5258 = vmatpush1.bf16.msra.mxu0 0
      %5259 = vmatprep.subr.bf16.mxu0 0
      %5260 = vmatpush1.bf16.msra.mxu0 %v4900
      %5261 = vmatprep.subr.bf16.mxu0 0
      %5262 = vmatpush2.bf16.msra.mxu0 0
      %5263 = vmatprep.subr.bf16.mxu0 0
      %5264 = vmatpush2.bf16.msra.mxu0 0
      %5265 = vmatprep.subr.bf16.mxu0 0
      %5266 = vmatpush2.bf16.msra.mxu0 0
      %5267 = vmatprep.subr.bf16.mxu0 0
      %5268 = vmatpush2.bf16.msra.mxu0 0
      %5269 = vmatprep.subr.bf16.mxu0 0
      %5270 = vmatpush2.bf16.msra.mxu0 0
      %5271 = vmatprep.subr.bf16.mxu0 0
      %5272 = vmatpush2.bf16.msra.mxu0 0
      %5273 = vmatprep.subr.bf16.mxu0 0
      %5274 = vmatpush2.bf16.msra.mxu0 0
      %5275 = vmatprep.subr.bf16.mxu0 0
      %5276 = vmatpush2.bf16.msra.mxu0 0
      %5277 = vmatprep.mubr.bf16.mxu0 0
      %5278 = vmatmul.mubr.bf16.gmra.mxu0 %v3729
      %v5279 = vpop.f32.mrf.mxu0
      %v5280 = vadd.f32 0.0, %v5279
      %v5281 = vpop.f32.mrf.mxu0
      %v5282 = vpop.f32.mrf.mxu0
      %v5283 = vadd.f32 0.0, %v5282
      %v5284 = vpop.f32.mrf.mxu0
      %5285 = vdwg.mxu0
      %v5286 = vlaneseq
      %v5287 = vshrl.u32 %v5286, 7
      %v5288 = vsub.s32 7, %v5287
      %v5289 = vrot.slane %v4902, %v5288
      %v5290 = vmul.f32 %v5280, %v5289
      %v5291 = vmul.f32 %v5283, %v5289
      %v5292 = vadd.f32 %v5243, %v5290
      %v5293 = vadd.f32 %v5244, %v5291
      %5294 = vmatprep.subr.bf16.mxu0 0
      %5295 = vmatpush1.bf16.msra.mxu0 0
      %5296 = vmatprep.subr.bf16.mxu0 0
      %5297 = vmatpush1.bf16.msra.mxu0 0
      %5298 = vmatprep.subr.bf16.mxu0 0
      %5299 = vmatpush1.bf16.msra.mxu0 0
      %5300 = vmatprep.subr.bf16.mxu0 0
      %5301 = vmatpush1.bf16.msra.mxu0 0
      %5302 = vmatprep.subr.bf16.mxu0 0
      %5303 = vmatpush1.bf16.msra.mxu0 0
      %5304 = vmatprep.subr.bf16.mxu0 0
      %5305 = vmatpush1.bf16.msra.mxu0 0
      %5306 = vmatprep.subr.bf16.mxu0 0
      %5307 = vmatpush1.bf16.msra.mxu0 0
      %5308 = vmatprep.subr.bf16.mxu0 0
      %5309 = vmatpush1.bf16.msra.mxu0 %v4900
      %5310 = vmatprep.subr.bf16.mxu0 0
      %5311 = vmatpush2.bf16.msra.mxu0 0
      %5312 = vmatprep.subr.bf16.mxu0 0
      %5313 = vmatpush2.bf16.msra.mxu0 0
      %5314 = vmatprep.subr.bf16.mxu0 0
      %5315 = vmatpush2.bf16.msra.mxu0 0
      %5316 = vmatprep.subr.bf16.mxu0 0
      %5317 = vmatpush2.bf16.msra.mxu0 0
      %5318 = vmatprep.subr.bf16.mxu0 0
      %5319 = vmatpush2.bf16.msra.mxu0 0
      %5320 = vmatprep.subr.bf16.mxu0 0
      %5321 = vmatpush2.bf16.msra.mxu0 0
      %5322 = vmatprep.subr.bf16.mxu0 0
      %5323 = vmatpush2.bf16.msra.mxu0 0
      %5324 = vmatprep.subr.bf16.mxu0 0
      %5325 = vmatpush2.bf16.msra.mxu0 0
      %5326 = vmatprep.mubr.bf16.mxu0 0
      %5327 = vmatmul.mubr.bf16.gmra.mxu0 %v3789
      %v5328 = vpop.f32.mrf.mxu0
      %v5329 = vadd.f32 0.0, %v5328
      %v5330 = vpop.f32.mrf.mxu0
      %v5331 = vpop.f32.mrf.mxu0
      %v5332 = vadd.f32 0.0, %v5331
      %v5333 = vpop.f32.mrf.mxu0
      %5334 = vdwg.mxu0
      %v5335 = vlaneseq
      %v5336 = vshrl.u32 %v5335, 7
      %v5337 = vsub.s32 0, %v5336
      %v5338 = vrot.slane %v4903, %v5337
      %v5339 = vmul.f32 %v5329, %v5338
      %v5340 = vmul.f32 %v5332, %v5338
      %v5341 = vadd.f32 %v5292, %v5339
      %v5342 = vadd.f32 %v5293, %v5340
      %v5343 = vld [vmem:[%s3 + $0xd] sm:$0x1]
      %v5344 = vlaneseq
      %v5345 = vshrl.u32 %v5344, 7
      %v5346 = vsub.s32 0, %v5345
      %v5347 = vrot.slane %v5343, %v5346
      %v5348 = vadd.f32 %v5341, %v5347
      %v5349 = vadd.f32 %v5342, %v5347
      %v5350 = vpack.c.bf16 %v5349, %v5348
      %s5351 = scalar_lea.vmem %s1, 576
      %v5352 = vld [vmem:[%s5351] sm:$0xf]
      %v5353 = vld [vmem:[%s5351 + $0x4] sm:$0xf]
      %v5354 = vld [vmem:[%s5351 + $0x8] sm:$0xf]
      %v5355 = vld [vmem:[%s5351 + $0xc] sm:$0xf]
      %v5356 = vld [vmem:[%s5351 + $0x10] sm:$0xf]
      %v5357 = vld [vmem:[%s5351 + $0x14] sm:$0xf]
      %v5358 = vld [vmem:[%s5351 + $0x18] sm:$0xf]
      %v5359 = vld [vmem:[%s5351 + $0x1c] sm:$0xf]
      %v5360 = vld [vmem:[%s5351 + $0x20] sm:$0xf]
      %v5361 = vld [vmem:[%s5351 + $0x24] sm:$0xf]
      %v5362 = vld [vmem:[%s5351 + $0x28] sm:$0xf]
      %v5363 = vld [vmem:[%s5351 + $0x2c] sm:$0xf]
      %v5364 = vld [vmem:[%s5351 + $0x30] sm:$0xf]
      %v5365 = vld [vmem:[%s5351 + $0x34] sm:$0xf]
      %v5366 = vld [vmem:[%s5351 + $0x38] sm:$0xf]
      %v5367 = vld [vmem:[%s5351 + $0x3c] sm:$0xf]
      %v5368 = vld [vmem:[%s3 + $0xe] sm:$0x1]
      %v5369 = vlaneseq
      %v5370 = vshrl.u32 %v5369, 7
      %v5371 = vsub.s32 0, %v5370
      %v5372 = vrot.slane %v5368, %v5371
      %v5389 = vunpack.c.l.b16 %v5352
      %v5390 = vunpack.c.l.b16 %v5353
      %v5391 = vunpack.c.l.b16 %v5354
      %v5392 = vunpack.c.l.b16 %v5355
      %v5393 = vunpack.c.l.b16 %v5356
      %v5394 = vunpack.c.l.b16 %v5357
      %v5395 = vunpack.c.l.b16 %v5358
      %v5396 = vunpack.c.l.b16 %v5359
      %v5397 = vunpack.c.l.b16 %v5360
      %v5398 = vunpack.c.l.b16 %v5361
      %v5399 = vunpack.c.l.b16 %v5362
      %v5400 = vunpack.c.l.b16 %v5363
      %v5401 = vunpack.c.l.b16 %v5364
      %v5402 = vunpack.c.l.b16 %v5365
      %v5403 = vunpack.c.l.b16 %v5366
      %v5404 = vunpack.c.l.b16 %v5367
      %v5405 = vpack.c.b16 %v5390, %v5389
      %v5406 = vpack.c.b16 %v5392, %v5391
      %v5407 = vpack.c.b16 %v5394, %v5393
      %v5408 = vpack.c.b16 %v5396, %v5395
      %v5409 = vpack.c.b16 %v5398, %v5397
      %v5410 = vpack.c.b16 %v5400, %v5399
      %v5411 = vpack.c.b16 %v5402, %v5401
      %v5412 = vpack.c.b16 %v5404, %v5403
      %5421 = vmatprep.subr.bf16.mxu0 0
      %5422 = vmatpush1.bf16.msra.mxu0 %v5412
      %5423 = vmatprep.subr.bf16.mxu0 0
      %5424 = vmatpush1.bf16.msra.mxu0 %v5411
      %5425 = vmatprep.subr.bf16.mxu0 0
      %5426 = vmatpush1.bf16.msra.mxu0 %v5410
      %5427 = vmatprep.subr.bf16.mxu0 0
      %5428 = vmatpush1.bf16.msra.mxu0 %v5409
      %5429 = vmatprep.subr.bf16.mxu0 0
      %5430 = vmatpush1.bf16.msra.mxu0 %v5408
      %5431 = vmatprep.subr.bf16.mxu0 0
      %5432 = vmatpush1.bf16.msra.mxu0 %v5407
      %5433 = vmatprep.subr.bf16.mxu0 0
      %5434 = vmatpush1.bf16.msra.mxu0 %v5406
      %5435 = vmatprep.subr.bf16.mxu0 0
      %5436 = vmatpush1.bf16.msra.mxu0 %v5405
      %5437 = vmatprep.subr.bf16.mxu0 0
      %5438 = vmatpush2.bf16.msra.mxu0 0
      %5439 = vmatprep.subr.bf16.mxu0 0
      %5440 = vmatpush2.bf16.msra.mxu0 0
      %5441 = vmatprep.subr.bf16.mxu0 0
      %5442 = vmatpush2.bf16.msra.mxu0 0
      %5443 = vmatprep.subr.bf16.mxu0 0
      %5444 = vmatpush2.bf16.msra.mxu0 0
      %5445 = vmatprep.subr.bf16.mxu0 0
      %5446 = vmatpush2.bf16.msra.mxu0 0
      %5447 = vmatprep.subr.bf16.mxu0 0
      %5448 = vmatpush2.bf16.msra.mxu0 0
      %5449 = vmatprep.subr.bf16.mxu0 0
      %5450 = vmatpush2.bf16.msra.mxu0 0
      %5451 = vmatprep.subr.bf16.mxu0 0
      %5452 = vmatpush2.bf16.msra.mxu0 0
      %5453 = vmatprep.mubr.bf16.mxu0 0
      %5454 = vmatmul.mubr.bf16.gmra.mxu0 %v5350
      %v5455 = vpop.f32.mrf.mxu0
      %v5456 = vadd.f32 %v5372, %v5455
      %v5457 = vpop.f32.mrf.mxu0
      %v5458 = vpop.f32.mrf.mxu0
      %v5459 = vadd.f32 %v5372, %v5458
      %v5460 = vpop.f32.mrf.mxu0
      %5461 = vdwg.mxu0
      %v5462 = vmax.f32 %v5456, 0.0
      %v5463 = vmax.f32 %v5459, 0.0
      %5464 = vmatprep.subr.bf16.mxu0 0
      %5465 = vmatpush1.bf16.msra.mxu0 %v4017
      %5466 = vmatprep.subr.bf16.mxu0 0
      %5467 = vmatpush1.bf16.msra.mxu0 %v4016
      %5468 = vmatprep.subr.bf16.mxu0 0
      %5469 = vmatpush1.bf16.msra.mxu0 %v4015
      %5470 = vmatprep.subr.bf16.mxu0 0
      %5471 = vmatpush1.bf16.msra.mxu0 %v4014
      %5472 = vmatprep.subr.bf16.mxu0 0
      %5473 = vmatpush1.bf16.msra.mxu0 %v4013
      %5474 = vmatprep.subr.bf16.mxu0 0
      %5475 = vmatpush1.bf16.msra.mxu0 %v4012
      %5476 = vmatprep.subr.bf16.mxu0 0
      %5477 = vmatpush1.bf16.msra.mxu0 %v4011
      %5478 = vmatprep.subr.bf16.mxu0 0
      %5479 = vmatpush1.bf16.msra.mxu0 %v4010
      %5480 = vmatprep.subr.bf16.mxu0 0
      %5481 = vmatpush2.bf16.msra.mxu0 0
      %5482 = vmatprep.subr.bf16.mxu0 0
      %5483 = vmatpush2.bf16.msra.mxu0 0
      %5484 = vmatprep.subr.bf16.mxu0 0
      %5485 = vmatpush2.bf16.msra.mxu0 0
      %5486 = vmatprep.subr.bf16.mxu0 0
      %5487 = vmatpush2.bf16.msra.mxu0 0
      %5488 = vmatprep.subr.bf16.mxu0 0
      %5489 = vmatpush2.bf16.msra.mxu0 0
      %5490 = vmatprep.subr.bf16.mxu0 0
      %5491 = vmatpush2.bf16.msra.mxu0 0
      %5492 = vmatprep.subr.bf16.mxu0 0
      %5493 = vmatpush2.bf16.msra.mxu0 0
      %5494 = vmatprep.subr.bf16.mxu0 0
      %5495 = vmatpush2.bf16.msra.mxu0 0
      %5496 = vmatprep.mubr.bf16.mxu0 0
      %5497 = vmatmul.mubr.bf16.gmra.mxu0 %v4786
      %v5498 = vpop.f32.mrf.mxu0
      %v5499 = vadd.f32 %v5462, %v5498
      %v5500 = vpop.f32.mrf.mxu0
      %v5501 = vpop.f32.mrf.mxu0
      %v5502 = vadd.f32 %v5463, %v5501
      %v5503 = vpop.f32.mrf.mxu0
      %5504 = vdwg.mxu0
      %5505 = vst [vmem:[%s278] sm:$0xff] %v5499
      %5506 = vst [vmem:[%s278 + $0x8] sm:$0xff] %v5502
      %p5507 = scmp.lt.s32.totalorder %s18, 1
      %s5508 = scalar_select %p5507, %s18, 1
      %s5509 = smul.addr %s5508, 2
      %s5510 = smul.addr %s5509, 8
      %s5511 = scalar_lea.vmem %s7, %s5510
      // Predicated region
      $region49: #{shufflenet_v2_8_forward.1} parent=47 // pred_check
        %p5512 = pneg %p188
      $region50: #{shufflenet_v2_8_forward.1} parent=47 // pred_check_branch
        %5514 = sbr.rel (%p5512) target = $region52
      $region51: #{shufflenet_v2_8_forward.1} parent=47 // pred_region
        _
      $region52: #{shufflenet_v2_8_forward.1} parent=47 // pred_fallthru
        _
    $region48: #{shufflenet_v2_8_forward.1} parent=5 // pred_fallthru
      _
    %p5515 = scmp.le.s32.totalorder 2, %s13
    // Predicated region
    $region53: #{shufflenet_v2_8_forward.1} parent=5 // pred_check
      %p5516 = pneg %p5515
    $region54: #{shufflenet_v2_8_forward.1} parent=5 // pred_check_branch
      %5518 = sbr.rel (%p5516) target = $region56
    $region55: #{shufflenet_v2_8_forward.1} parent=5 // pred_region
      %s5519 = ssub.s32 %s13, 2
      // Predicated region
      $region57: #{shufflenet_v2_8_forward.1} parent=55 // pred_check
        %p5520 = pneg %p194
      $region58: #{shufflenet_v2_8_forward.1} parent=55 // pred_check_branch
        %5522 = sbr.rel (%p5520) target = $region60
      $region59: #{shufflenet_v2_8_forward.1} parent=55 // pred_region
        %p5523 = scmp.lt.s32.totalorder %s19, 1
        %s5524 = scalar_select %p5523, %s19, 1
        %s5525 = smul.addr %s5524, 2
        %s5526 = smul.addr %s5525, 8
        %s5527 = scalar_lea.vmem %s7, %s5526
      $region60: #{shufflenet_v2_8_forward.1} parent=55 // pred_fallthru
        _
    $region56: #{shufflenet_v2_8_forward.1} parent=5 // pred_fallthru
      _
  $region6: #{shufflenet_v2_8_forward.1} parent=0 // loop_footer
    %s17 = sadd.s32 1, %s13
  $region7: #{shufflenet_v2_8_forward.1} parent=0 // loop_footer_branch
    %12 = sbr.rel target = $region3
  $region8: #{shufflenet_v2_8_forward.1} parent=0 // loop_exit
    _

</llo_original>
